<compile_context>
chip_gen: v7x
topology: tpu7x:2x2x1
jax: 0.10.0
libtpu: 0.0.40
codegen_flags: <defaults>
</compile_context>

<pallas_src>
import jax
import jax.numpy as jnp
from jax import lax
from jax.experimental import pallas as pl
from jax.experimental.pallas import tpu as pltpu

# ---------------- model config (mirrors the PyTorch script) ----------------
BATCH = 2
SEQ = 10
D_MODEL = 512
NUM_HEADS = 8
D_K = D_MODEL // NUM_HEADS  # 64


# ---------------- fused MHA kernel ----------------
def _mha_fused_kernel(q_ref, k_ref, v_ref, wq_ref, wk_ref, wv_ref, wo_ref,
                      o_ref, w_ref, attn_sc):
    # q/k/v refs: (B*S, D) f32 activations (all batch rows folded into one tile)
    # w*_ref:     (D, D) bf16 weights in (in, out) layout; softmax scale folded into W_q
    # o_ref:      (B*S, D) output tile
    # w_ref:      (B, H, S, S) attention-weights output
    # attn_sc:    (B*S, D) bf16 VMEM slab for the concatenated per-head outputs
    x_q = q_ref[...].astype(jnp.bfloat16)
    x_k = k_ref[...].astype(jnp.bfloat16)
    x_v = v_ref[...].astype(jnp.bfloat16)

    # Projections on the native bf16 MXU path with f32 accumulation. Cast back to
    # bf16 immediately so only the packed copies stay live (cuts vreg pressure).
    q = jnp.dot(x_q, wq_ref[...], preferred_element_type=jnp.float32).astype(jnp.bfloat16)
    k = jnp.dot(x_k, wk_ref[...], preferred_element_type=jnp.float32).astype(jnp.bfloat16)
    v = jnp.dot(x_v, wv_ref[...], preferred_element_type=jnp.float32).astype(jnp.bfloat16)

    for b in range(BATCH):           # static unroll over batch rows
        r0 = b * SEQ
        for h in range(NUM_HEADS):   # static unroll; heads live in columns [h*D_K, (h+1)*D_K)
            lo = h * D_K
            qh = q[r0:r0 + SEQ, lo:lo + D_K]  # (S, D_K)
            kh = k[r0:r0 + SEQ, lo:lo + D_K]
            vh = v[r0:r0 + SEQ, lo:lo + D_K]

            # q @ k^T without materializing a transpose: contract the D_K dims.
            # The 1/sqrt(d_k) scale is folded into W_q offline.
            scores = lax.dot_general(
                qh, kh, (((1,), (1,)), ((), ())),
                preferred_element_type=jnp.float32,
            )  # (S, S)

            # numerically-stable EXACT softmax (weights are an exposed output)
            m = jnp.max(scores, axis=-1, keepdims=True)
            e = jnp.exp(scores - m)
            p = e / jnp.sum(e, axis=-1, keepdims=True)

            w_ref[b, h] = p.astype(w_ref.dtype)

            head_out = jnp.dot(p.astype(jnp.bfloat16), vh,
                               preferred_element_type=jnp.float32)  # (S, D_K)
            # Write straight into the (B*S, D) slab -> no 8-way concat / relayout,
            # short live ranges.
            attn_sc[r0:r0 + SEQ, lo:lo + D_K] = head_out.astype(attn_sc.dtype)

    out = jnp.dot(attn_sc[...], wo_ref[...], preferred_element_type=jnp.float32)
    o_ref[...] = out.astype(o_ref.dtype)


def multi_head_attention(q_in, k_in, v_in, params_t):
    """q_in, k_in, v_in: [B, S, D_MODEL] (f32).
    params_t: weights already transposed to (in, out), scale-folded, bf16.
    Returns (output [B, S, D_MODEL], attention_weights [B, H, S, S])."""
    B, S, D = q_in.shape
    BS = B * S
    wq, wk, wv, wo = params_t["W_q"], params_t["W_k"], params_t["W_v"], params_t["W_o"]

    # Fold batch into the row dimension: one kernel invocation handles all B*S rows.
    q2 = q_in.reshape(BS, D)
    k2 = k_in.reshape(BS, D)
    v2 = v_in.reshape(BS, D)

    x_spec = pl.BlockSpec((BS, D), lambda i: (0, 0))
    w_spec = pl.BlockSpec((D, D), lambda i: (0, 0))  # constant block -> fetched once

    out_shapes = (
        jax.ShapeDtypeStruct((BS, D), q_in.dtype),
        jax.ShapeDtypeStruct((B, NUM_HEADS, S, S), jnp.float32),
    )

    out2, attn_w = pl.pallas_call(
        _mha_fused_kernel,
        out_shape=out_shapes,
        grid_spec=pltpu.PrefetchScalarGridSpec(
            num_scalar_prefetch=0,
            grid=(1,),
            in_specs=[
                x_spec, x_spec, x_spec,
                w_spec, w_spec, w_spec, w_spec,
            ],
            out_specs=[
                pl.BlockSpec((BS, D), lambda i: (0, 0)),
                pl.BlockSpec((B, NUM_HEADS, S, S), lambda i: (0, 0, 0, 0)),
            ],
            scratch_shapes=[pltpu.VMEM((BS, D), jnp.bfloat16)],
        ),
        compiler_params=pltpu.CompilerParams(
            dimension_semantics=("arbitrary",),
        ),
    )(q2, k2, v2, wq, wk, wv, wo)

    return out2.reshape(B, S, D), attn_w


# ---------------- deterministic parameter init ----------------
def init_params(key):
    """PyTorch nn.Linear convention: W has shape (out_features, in_features), f32."""
    ks = jax.random.split(key, 4)
    bound = 1.0 / jnp.sqrt(jnp.float32(D_MODEL))

    def mk(k):
        return jax.random.uniform(
            k, (D_MODEL, D_MODEL), jnp.float32, minval=-bound, maxval=bound
        )

    return {"W_q": mk(ks[0]), "W_k": mk(ks[1]), "W_v": mk(ks[2]), "W_o": mk(ks[3])}


def prepare_params(params):
    """One-time prep (outside jit):
      * transpose PyTorch (out, in) -> (in, out) so y = x @ W_t == x @ W^T
      * fold the 1/sqrt(d_k) softmax scale into W_q (removes the in-kernel multiply)
      * cast to bf16 (halves the dominant weight HBM->VMEM DMA; MXU is natively bf16)
    """
    scale = 1.0 / jnp.sqrt(jnp.float32(D_K))
    return {
        "W_q": (jnp.asarray(params["W_q"]).T * scale).astype(jnp.bfloat16),
        "W_k": jnp.asarray(params["W_k"]).T.astype(jnp.bfloat16),
        "W_v": jnp.asarray(params["W_v"]).T.astype(jnp.bfloat16),
        "W_o": jnp.asarray(params["W_o"]).T.astype(jnp.bfloat16),
    }


# ---------------- pure-JAX f32 reference (PyTorch semantics, for correctness) ----------------
def _reference_mha(q_in, k_in, v_in, params):
    B, S, D = q_in.shape
    q = q_in @ params["W_q"].T
    k = k_in @ params["W_k"].T
    v = v_in @ params["W_v"].T

    def split(x):
        return x.reshape(B, S, NUM_HEADS, D_K).transpose(0, 2, 1, 3)

    qh, kh, vh = split(q), split(k), split(v)
    scores = jnp.einsum("bhqd,bhkd->bhqk", qh, kh) / jnp.sqrt(jnp.float32(D_K))
    w = jax.nn.softmax(scores, axis=-1)
    o = jnp.einsum("bhqk,bhkd->bhqd", w, vh)
    o = o.transpose(0, 2, 1, 3).reshape(B, S, D)
    return o @ params["W_o"].T, w


if __name__ == "__main__":
    key = jax.random.PRNGKey(0)
    kp, kq, kk, kv = jax.random.split(key, 4)

    params = init_params(kp)            # PyTorch-convention f32 weights
    params_t = prepare_params(params)   # one-time transpose + scale-fold + bf16

    Q = jax.random.uniform(kq, (BATCH, SEQ, D_MODEL), jnp.float32)
    K = jax.random.uniform(kk, (BATCH, SEQ, D_MODEL), jnp.float32)
    V = jax.random.uniform(kv, (BATCH, SEQ, D_MODEL), jnp.float32)

    out, weights = jax.jit(multi_head_attention)(Q, K, V, params_t)
    out = jax.block_until_ready(out)
    weights = jax.block_until_ready(weights)

    assert out.shape == (BATCH, SEQ, D_MODEL)
    assert weights.shape == (BATCH, NUM_HEADS, SEQ, SEQ)

    # softmax rows sum to 1 (exact divide in-kernel)
    row_sums = jnp.sum(weights, axis=-1)
    assert jnp.allclose(row_sums, 1.0, atol=1e-3), float(jnp.max(jnp.abs(row_sums - 1.0)))

    # correctness vs f32 pure-JAX reference (kernel uses bf16 weights/operands)
    ref_out, ref_w = _reference_mha(Q, K, V, params)
    assert jnp.allclose(weights, ref_w, rtol=3e-2, atol=5e-3), float(
        jnp.max(jnp.abs(weights - ref_w))
    )
    assert jnp.allclose(out, ref_out, rtol=3e-2, atol=2e-2), float(
        jnp.max(jnp.abs(out - ref_out))
    )

    print("KERNEL_OK")
</pallas_src>

<mosaic_0001>
module attributes {stable_mosaic.version = 11 : i64} {
  func.func @_mha_fused_kernel(%arg0: i32, %arg1: memref<20x512xf32, #tpu.memory_space<vmem>>, %arg2: memref<20x512xf32, #tpu.memory_space<vmem>>, %arg3: memref<20x512xf32, #tpu.memory_space<vmem>>, %arg4: memref<512x512xbf16, #tpu.memory_space<vmem>>, %arg5: memref<512x512xbf16, #tpu.memory_space<vmem>>, %arg6: memref<512x512xbf16, #tpu.memory_space<vmem>>, %arg7: memref<512x512xbf16, #tpu.memory_space<vmem>>, %arg8: memref<20x512xf32, #tpu.memory_space<vmem>>, %arg9: memref<2x8x10x10xf32, #tpu.memory_space<vmem>>, %arg10: memref<20x512xbf16, #tpu.memory_space<vmem>>) attributes {dimension_semantics = [#tpu.dimension_semantics<arbitrary>], iteration_bounds = array<i64: 1>, scalar_prefetch = 0 : i64, scratch_operands = 1 : i64, tpu.core_type = #tpu.core_type<tc>, window_params = [{pipeline_mode = #tpu.pipeline_mode<synchronous>, transform_indices = @transform_0, window_bounds = array<i64: 20, 512>}, {pipeline_mode = #tpu.pipeline_mode<synchronous>, transform_indices = @transform_1, window_bounds = array<i64: 20, 512>}, {pipeline_mode = #tpu.pipeline_mode<synchronous>, transform_indices = @transform_2, window_bounds = array<i64: 20, 512>}, {pipeline_mode = #tpu.pipeline_mode<synchronous>, transform_indices = @transform_3, window_bounds = array<i64: 512, 512>}, {pipeline_mode = #tpu.pipeline_mode<synchronous>, transform_indices = @transform_4, window_bounds = array<i64: 512, 512>}, {pipeline_mode = #tpu.pipeline_mode<synchronous>, transform_indices = @transform_5, window_bounds = array<i64: 512, 512>}, {pipeline_mode = #tpu.pipeline_mode<synchronous>, transform_indices = @transform_6, window_bounds = array<i64: 512, 512>}, {pipeline_mode = #tpu.pipeline_mode<synchronous>, transform_indices = @transform_7, window_bounds = array<i64: 20, 512>}, {pipeline_mode = #tpu.pipeline_mode<synchronous>, transform_indices = @transform_8, window_bounds = array<i64: 2, 8, 10, 10>}]} {
    %c0 = arith.constant 0 : index
    %c0_0 = arith.constant 0 : index
    %0 = vector.load %arg1[%c0, %c0_0] : memref<20x512xf32, #tpu.memory_space<vmem>>, vector<20x512xf32>
    %1 = arith.truncf %0 : vector<20x512xf32> to vector<20x512xbf16>
    %c0_1 = arith.constant 0 : index
    %c0_2 = arith.constant 0 : index
    %2 = vector.load %arg2[%c0_1, %c0_2] : memref<20x512xf32, #tpu.memory_space<vmem>>, vector<20x512xf32>
    %3 = arith.truncf %2 : vector<20x512xf32> to vector<20x512xbf16>
    %c0_3 = arith.constant 0 : index
    %c0_4 = arith.constant 0 : index
    %4 = vector.load %arg3[%c0_3, %c0_4] : memref<20x512xf32, #tpu.memory_space<vmem>>, vector<20x512xf32>
    %5 = arith.truncf %4 : vector<20x512xf32> to vector<20x512xbf16>
    %c0_5 = arith.constant 0 : index
    %c0_6 = arith.constant 0 : index
    %6 = vector.load %arg4[%c0_5, %c0_6] : memref<512x512xbf16, #tpu.memory_space<vmem>>, vector<512x512xbf16>
    %cst = arith.constant dense<0.000000e+00> : vector<20x512xf32>
    %7 = tpu.matmul %1, %6, %cst {dimension_numbers = #tpu.dot_dimension_numbers<[1], [0], [0], [1], [0, 0, 1, 1], [], []>} : vector<20x512xbf16>, vector<512x512xbf16>, vector<20x512xf32> -> vector<20x512xf32>
    %8 = arith.truncf %7 : vector<20x512xf32> to vector<20x512xbf16>
    %c0_7 = arith.constant 0 : index
    %c0_8 = arith.constant 0 : index
    %9 = vector.load %arg5[%c0_7, %c0_8] : memref<512x512xbf16, #tpu.memory_space<vmem>>, vector<512x512xbf16>
    %cst_9 = arith.constant dense<0.000000e+00> : vector<20x512xf32>
    %10 = tpu.matmul %3, %9, %cst_9 {dimension_numbers = #tpu.dot_dimension_numbers<[1], [0], [0], [1], [0, 0, 1, 1], [], []>} : vector<20x512xbf16>, vector<512x512xbf16>, vector<20x512xf32> -> vector<20x512xf32>
    %11 = arith.truncf %10 : vector<20x512xf32> to vector<20x512xbf16>
    %c0_10 = arith.constant 0 : index
    %c0_11 = arith.constant 0 : index
    %12 = vector.load %arg6[%c0_10, %c0_11] : memref<512x512xbf16, #tpu.memory_space<vmem>>, vector<512x512xbf16>
    %cst_12 = arith.constant dense<0.000000e+00> : vector<20x512xf32>
    %13 = tpu.matmul %5, %12, %cst_12 {dimension_numbers = #tpu.dot_dimension_numbers<[1], [0], [0], [1], [0, 0, 1, 1], [], []>} : vector<20x512xbf16>, vector<512x512xbf16>, vector<20x512xf32> -> vector<20x512xf32>
    %14 = arith.truncf %13 : vector<20x512xf32> to vector<20x512xbf16>
    %15 = vector.extract_strided_slice %8 {offsets = [0, 0], sizes = [10, 64], strides = [1, 1]} : vector<20x512xbf16> to vector<10x64xbf16>
    %16 = vector.extract_strided_slice %11 {offsets = [0, 0], sizes = [10, 64], strides = [1, 1]} : vector<20x512xbf16> to vector<10x64xbf16>
    %17 = vector.extract_strided_slice %14 {offsets = [0, 0], sizes = [10, 64], strides = [1, 1]} : vector<20x512xbf16> to vector<10x64xbf16>
    %cst_13 = arith.constant dense<0.000000e+00> : vector<10x10xf32>
    %18 = tpu.matmul %15, %16, %cst_13 {dimension_numbers = #tpu.dot_dimension_numbers<[1], [1], [0], [0], [0, 0, 1, 0], [], []>} : vector<10x64xbf16>, vector<10x64xbf16>, vector<10x10xf32> -> vector<10x10xf32>
    %cst_14 = arith.constant dense<0xFF800000> : vector<10xf32>
    %19 = vector.multi_reduction <maximumf>, %18, %cst_14 [1] : vector<10x10xf32> to vector<10xf32>
    %20 = vector.shape_cast %19 : vector<10xf32> to vector<10x1xf32>
    %21 = vector.broadcast %20 : vector<10x1xf32> to vector<10x10xf32>
    %22 = arith.subf %18, %21 : vector<10x10xf32>
    %23 = math.exp %22 : vector<10x10xf32>
    %cst_15 = arith.constant dense<0.000000e+00> : vector<10xf32>
    %24 = vector.multi_reduction <add>, %23, %cst_15 [1] : vector<10x10xf32> to vector<10xf32>
    %25 = vector.shape_cast %24 : vector<10xf32> to vector<10x1xf32>
    %26 = vector.broadcast %25 : vector<10x1xf32> to vector<10x10xf32>
    %27 = arith.divf %23, %26 : vector<10x10xf32>
    %c0_16 = arith.constant 0 : index
    %c0_17 = arith.constant 0 : index
    %c0_18 = arith.constant 0 : index
    %c0_19 = arith.constant 0 : index
    %28 = vector.load %arg9[%c0_16, %c0_17, %c0_18, %c0_19] : memref<2x8x10x10xf32, #tpu.memory_space<vmem>>, vector<1x1x10x10xf32>
    %29 = vector.shape_cast %28 : vector<1x1x10x10xf32> to vector<10x10xf32>
    %30 = vector.shape_cast %27 : vector<10x10xf32> to vector<1x1x10x10xf32>
    tpu.vector_store %arg9[%c0_16, %c0_17, %c0_18, %c0_19], %30 {strides = array<i32>} : memref<2x8x10x10xf32, #tpu.memory_space<vmem>>, vector<1x1x10x10xf32>,
    %31 = arith.truncf %27 : vector<10x10xf32> to vector<10x10xbf16>
    %cst_20 = arith.constant dense<0.000000e+00> : vector<10x64xf32>
    %32 = tpu.matmul %31, %17, %cst_20 {dimension_numbers = #tpu.dot_dimension_numbers<[1], [0], [0], [1], [0, 0, 1, 1], [], []>} : vector<10x10xbf16>, vector<10x64xbf16>, vector<10x64xf32> -> vector<10x64xf32>
    %33 = arith.truncf %32 : vector<10x64xf32> to vector<10x64xbf16>
    %c0_21 = arith.constant 0 : index
    %c0_22 = arith.constant 0 : index
    %34 = vector.load %arg10[%c0_21, %c0_22] : memref<20x512xbf16, #tpu.memory_space<vmem>>, vector<10x64xbf16>
    tpu.vector_store %arg10[%c0_21, %c0_22], %33 {strides = array<i32>} : memref<20x512xbf16, #tpu.memory_space<vmem>>, vector<10x64xbf16>,
    %35 = vector.extract_strided_slice %8 {offsets = [0, 64], sizes = [10, 64], strides = [1, 1]} : vector<20x512xbf16> to vector<10x64xbf16>
    %36 = vector.extract_strided_slice %11 {offsets = [0, 64], sizes = [10, 64], strides = [1, 1]} : vector<20x512xbf16> to vector<10x64xbf16>
    %37 = vector.extract_strided_slice %14 {offsets = [0, 64], sizes = [10, 64], strides = [1, 1]} : vector<20x512xbf16> to vector<10x64xbf16>
    %cst_23 = arith.constant dense<0.000000e+00> : vector<10x10xf32>
    %38 = tpu.matmul %35, %36, %cst_23 {dimension_numbers = #tpu.dot_dimension_numbers<[1], [1], [0], [0], [0, 0, 1, 0], [], []>} : vector<10x64xbf16>, vector<10x64xbf16>, vector<10x10xf32> -> vector<10x10xf32>
    %cst_24 = arith.constant dense<0xFF800000> : vector<10xf32>
    %39 = vector.multi_reduction <maximumf>, %38, %cst_24 [1] : vector<10x10xf32> to vector<10xf32>
    %40 = vector.shape_cast %39 : vector<10xf32> to vector<10x1xf32>
    %41 = vector.broadcast %40 : vector<10x1xf32> to vector<10x10xf32>
    %42 = arith.subf %38, %41 : vector<10x10xf32>
    %43 = math.exp %42 : vector<10x10xf32>
    %cst_25 = arith.constant dense<0.000000e+00> : vector<10xf32>
    %44 = vector.multi_reduction <add>, %43, %cst_25 [1] : vector<10x10xf32> to vector<10xf32>
    %45 = vector.shape_cast %44 : vector<10xf32> to vector<10x1xf32>
    %46 = vector.broadcast %45 : vector<10x1xf32> to vector<10x10xf32>
    %47 = arith.divf %43, %46 : vector<10x10xf32>
    %c0_26 = arith.constant 0 : index
    %c1 = arith.constant 1 : index
    %c0_27 = arith.constant 0 : index
    %c0_28 = arith.constant 0 : index
    %48 = vector.load %arg9[%c0_26, %c1, %c0_27, %c0_28] : memref<2x8x10x10xf32, #tpu.memory_space<vmem>>, vector<1x1x10x10xf32>
    %49 = vector.shape_cast %48 : vector<1x1x10x10xf32> to vector<10x10xf32>
    %50 = vector.shape_cast %47 : vector<10x10xf32> to vector<1x1x10x10xf32>
    tpu.vector_store %arg9[%c0_26, %c1, %c0_27, %c0_28], %50 {strides = array<i32>} : memref<2x8x10x10xf32, #tpu.memory_space<vmem>>, vector<1x1x10x10xf32>,
    %51 = arith.truncf %47 : vector<10x10xf32> to vector<10x10xbf16>
    %cst_29 = arith.constant dense<0.000000e+00> : vector<10x64xf32>
    %52 = tpu.matmul %51, %37, %cst_29 {dimension_numbers = #tpu.dot_dimension_numbers<[1], [0], [0], [1], [0, 0, 1, 1], [], []>} : vector<10x10xbf16>, vector<10x64xbf16>, vector<10x64xf32> -> vector<10x64xf32>
    %53 = arith.truncf %52 : vector<10x64xf32> to vector<10x64xbf16>
    %c0_30 = arith.constant 0 : index
    %c64 = arith.constant 64 : index
    %54 = vector.load %arg10[%c0_30, %c64] : memref<20x512xbf16, #tpu.memory_space<vmem>>, vector<10x64xbf16>
    tpu.vector_store %arg10[%c0_30, %c64], %53 {strides = array<i32>} : memref<20x512xbf16, #tpu.memory_space<vmem>>, vector<10x64xbf16>,
    %55 = vector.extract_strided_slice %8 {offsets = [0, 128], sizes = [10, 64], strides = [1, 1]} : vector<20x512xbf16> to vector<10x64xbf16>
    %56 = vector.extract_strided_slice %11 {offsets = [0, 128], sizes = [10, 64], strides = [1, 1]} : vector<20x512xbf16> to vector<10x64xbf16>
    %57 = vector.extract_strided_slice %14 {offsets = [0, 128], sizes = [10, 64], strides = [1, 1]} : vector<20x512xbf16> to vector<10x64xbf16>
    %cst_31 = arith.constant dense<0.000000e+00> : vector<10x10xf32>
    %58 = tpu.matmul %55, %56, %cst_31 {dimension_numbers = #tpu.dot_dimension_numbers<[1], [1], [0], [0], [0, 0, 1, 0], [], []>} : vector<10x64xbf16>, vector<10x64xbf16>, vector<10x10xf32> -> vector<10x10xf32>
    %cst_32 = arith.constant dense<0xFF800000> : vector<10xf32>
    %59 = vector.multi_reduction <maximumf>, %58, %cst_32 [1] : vector<10x10xf32> to vector<10xf32>
    %60 = vector.shape_cast %59 : vector<10xf32> to vector<10x1xf32>
    %61 = vector.broadcast %60 : vector<10x1xf32> to vector<10x10xf32>
    %62 = arith.subf %58, %61 : vector<10x10xf32>
    %63 = math.exp %62 : vector<10x10xf32>
    %cst_33 = arith.constant dense<0.000000e+00> : vector<10xf32>
    %64 = vector.multi_reduction <add>, %63, %cst_33 [1] : vector<10x10xf32> to vector<10xf32>
    %65 = vector.shape_cast %64 : vector<10xf32> to vector<10x1xf32>
    %66 = vector.broadcast %65 : vector<10x1xf32> to vector<10x10xf32>
    %67 = arith.divf %63, %66 : vector<10x10xf32>
    %c0_34 = arith.constant 0 : index
    %c2 = arith.constant 2 : index
    %c0_35 = arith.constant 0 : index
    %c0_36 = arith.constant 0 : index
    %68 = vector.load %arg9[%c0_34, %c2, %c0_35, %c0_36] : memref<2x8x10x10xf32, #tpu.memory_space<vmem>>, vector<1x1x10x10xf32>
    %69 = vector.shape_cast %68 : vector<1x1x10x10xf32> to vector<10x10xf32>
    %70 = vector.shape_cast %67 : vector<10x10xf32> to vector<1x1x10x10xf32>
    tpu.vector_store %arg9[%c0_34, %c2, %c0_35, %c0_36], %70 {strides = array<i32>} : memref<2x8x10x10xf32, #tpu.memory_space<vmem>>, vector<1x1x10x10xf32>,
    %71 = arith.truncf %67 : vector<10x10xf32> to vector<10x10xbf16>
    %cst_37 = arith.constant dense<0.000000e+00> : vector<10x64xf32>
    %72 = tpu.matmul %71, %57, %cst_37 {dimension_numbers = #tpu.dot_dimension_numbers<[1], [0], [0], [1], [0, 0, 1, 1], [], []>} : vector<10x10xbf16>, vector<10x64xbf16>, vector<10x64xf32> -> vector<10x64xf32>
    %73 = arith.truncf %72 : vector<10x64xf32> to vector<10x64xbf16>
    %c0_38 = arith.constant 0 : index
    %c128 = arith.constant 128 : index
    %74 = vector.load %arg10[%c0_38, %c128] : memref<20x512xbf16, #tpu.memory_space<vmem>>, vector<10x64xbf16>
    tpu.vector_store %arg10[%c0_38, %c128], %73 {strides = array<i32>} : memref<20x512xbf16, #tpu.memory_space<vmem>>, vector<10x64xbf16>,
    %75 = vector.extract_strided_slice %8 {offsets = [0, 192], sizes = [10, 64], strides = [1, 1]} : vector<20x512xbf16> to vector<10x64xbf16>
    %76 = vector.extract_strided_slice %11 {offsets = [0, 192], sizes = [10, 64], strides = [1, 1]} : vector<20x512xbf16> to vector<10x64xbf16>
    %77 = vector.extract_strided_slice %14 {offsets = [0, 192], sizes = [10, 64], strides = [1, 1]} : vector<20x512xbf16> to vector<10x64xbf16>
    %cst_39 = arith.constant dense<0.000000e+00> : vector<10x10xf32>
    %78 = tpu.matmul %75, %76, %cst_39 {dimension_numbers = #tpu.dot_dimension_numbers<[1], [1], [0], [0], [0, 0, 1, 0], [], []>} : vector<10x64xbf16>, vector<10x64xbf16>, vector<10x10xf32> -> vector<10x10xf32>
    %cst_40 = arith.constant dense<0xFF800000> : vector<10xf32>
    %79 = vector.multi_reduction <maximumf>, %78, %cst_40 [1] : vector<10x10xf32> to vector<10xf32>
    %80 = vector.shape_cast %79 : vector<10xf32> to vector<10x1xf32>
    %81 = vector.broadcast %80 : vector<10x1xf32> to vector<10x10xf32>
    %82 = arith.subf %78, %81 : vector<10x10xf32>
    %83 = math.exp %82 : vector<10x10xf32>
    %cst_41 = arith.constant dense<0.000000e+00> : vector<10xf32>
    %84 = vector.multi_reduction <add>, %83, %cst_41 [1] : vector<10x10xf32> to vector<10xf32>
    %85 = vector.shape_cast %84 : vector<10xf32> to vector<10x1xf32>
    %86 = vector.broadcast %85 : vector<10x1xf32> to vector<10x10xf32>
    %87 = arith.divf %83, %86 : vector<10x10xf32>
    %c0_42 = arith.constant 0 : index
    %c3 = arith.constant 3 : index
    %c0_43 = arith.constant 0 : index
    %c0_44 = arith.constant 0 : index
    %88 = vector.load %arg9[%c0_42, %c3, %c0_43, %c0_44] : memref<2x8x10x10xf32, #tpu.memory_space<vmem>>, vector<1x1x10x10xf32>
    %89 = vector.shape_cast %88 : vector<1x1x10x10xf32> to vector<10x10xf32>
    %90 = vector.shape_cast %87 : vector<10x10xf32> to vector<1x1x10x10xf32>
    tpu.vector_store %arg9[%c0_42, %c3, %c0_43, %c0_44], %90 {strides = array<i32>} : memref<2x8x10x10xf32, #tpu.memory_space<vmem>>, vector<1x1x10x10xf32>,
    %91 = arith.truncf %87 : vector<10x10xf32> to vector<10x10xbf16>
    %cst_45 = arith.constant dense<0.000000e+00> : vector<10x64xf32>
    %92 = tpu.matmul %91, %77, %cst_45 {dimension_numbers = #tpu.dot_dimension_numbers<[1], [0], [0], [1], [0, 0, 1, 1], [], []>} : vector<10x10xbf16>, vector<10x64xbf16>, vector<10x64xf32> -> vector<10x64xf32>
    %93 = arith.truncf %92 : vector<10x64xf32> to vector<10x64xbf16>
    %c0_46 = arith.constant 0 : index
    %c192 = arith.constant 192 : index
    %94 = vector.load %arg10[%c0_46, %c192] : memref<20x512xbf16, #tpu.memory_space<vmem>>, vector<10x64xbf16>
    tpu.vector_store %arg10[%c0_46, %c192], %93 {strides = array<i32>} : memref<20x512xbf16, #tpu.memory_space<vmem>>, vector<10x64xbf16>,
    %95 = vector.extract_strided_slice %8 {offsets = [0, 256], sizes = [10, 64], strides = [1, 1]} : vector<20x512xbf16> to vector<10x64xbf16>
    %96 = vector.extract_strided_slice %11 {offsets = [0, 256], sizes = [10, 64], strides = [1, 1]} : vector<20x512xbf16> to vector<10x64xbf16>
    %97 = vector.extract_strided_slice %14 {offsets = [0, 256], sizes = [10, 64], strides = [1, 1]} : vector<20x512xbf16> to vector<10x64xbf16>
    %cst_47 = arith.constant dense<0.000000e+00> : vector<10x10xf32>
    %98 = tpu.matmul %95, %96, %cst_47 {dimension_numbers = #tpu.dot_dimension_numbers<[1], [1], [0], [0], [0, 0, 1, 0], [], []>} : vector<10x64xbf16>, vector<10x64xbf16>, vector<10x10xf32> -> vector<10x10xf32>
    %cst_48 = arith.constant dense<0xFF800000> : vector<10xf32>
    %99 = vector.multi_reduction <maximumf>, %98, %cst_48 [1] : vector<10x10xf32> to vector<10xf32>
    %100 = vector.shape_cast %99 : vector<10xf32> to vector<10x1xf32>
    %101 = vector.broadcast %100 : vector<10x1xf32> to vector<10x10xf32>
    %102 = arith.subf %98, %101 : vector<10x10xf32>
    %103 = math.exp %102 : vector<10x10xf32>
    %cst_49 = arith.constant dense<0.000000e+00> : vector<10xf32>
    %104 = vector.multi_reduction <add>, %103, %cst_49 [1] : vector<10x10xf32> to vector<10xf32>
    %105 = vector.shape_cast %104 : vector<10xf32> to vector<10x1xf32>
    %106 = vector.broadcast %105 : vector<10x1xf32> to vector<10x10xf32>
    %107 = arith.divf %103, %106 : vector<10x10xf32>
    %c0_50 = arith.constant 0 : index
    %c4 = arith.constant 4 : index
    %c0_51 = arith.constant 0 : index
    %c0_52 = arith.constant 0 : index
    %108 = vector.load %arg9[%c0_50, %c4, %c0_51, %c0_52] : memref<2x8x10x10xf32, #tpu.memory_space<vmem>>, vector<1x1x10x10xf32>
    %109 = vector.shape_cast %108 : vector<1x1x10x10xf32> to vector<10x10xf32>
    %110 = vector.shape_cast %107 : vector<10x10xf32> to vector<1x1x10x10xf32>
    tpu.vector_store %arg9[%c0_50, %c4, %c0_51, %c0_52], %110 {strides = array<i32>} : memref<2x8x10x10xf32, #tpu.memory_space<vmem>>, vector<1x1x10x10xf32>,
    %111 = arith.truncf %107 : vector<10x10xf32> to vector<10x10xbf16>
    %cst_53 = arith.constant dense<0.000000e+00> : vector<10x64xf32>
    %112 = tpu.matmul %111, %97, %cst_53 {dimension_numbers = #tpu.dot_dimension_numbers<[1], [0], [0], [1], [0, 0, 1, 1], [], []>} : vector<10x10xbf16>, vector<10x64xbf16>, vector<10x64xf32> -> vector<10x64xf32>
    %113 = arith.truncf %112 : vector<10x64xf32> to vector<10x64xbf16>
    %c0_54 = arith.constant 0 : index
    %c256 = arith.constant 256 : index
    %114 = vector.load %arg10[%c0_54, %c256] : memref<20x512xbf16, #tpu.memory_space<vmem>>, vector<10x64xbf16>
    tpu.vector_store %arg10[%c0_54, %c256], %113 {strides = array<i32>} : memref<20x512xbf16, #tpu.memory_space<vmem>>, vector<10x64xbf16>,
    %115 = vector.extract_strided_slice %8 {offsets = [0, 320], sizes = [10, 64], strides = [1, 1]} : vector<20x512xbf16> to vector<10x64xbf16>
    %116 = vector.extract_strided_slice %11 {offsets = [0, 320], sizes = [10, 64], strides = [1, 1]} : vector<20x512xbf16> to vector<10x64xbf16>
    %117 = vector.extract_strided_slice %14 {offsets = [0, 320], sizes = [10, 64], strides = [1, 1]} : vector<20x512xbf16> to vector<10x64xbf16>
    %cst_55 = arith.constant dense<0.000000e+00> : vector<10x10xf32>
    %118 = tpu.matmul %115, %116, %cst_55 {dimension_numbers = #tpu.dot_dimension_numbers<[1], [1], [0], [0], [0, 0, 1, 0], [], []>} : vector<10x64xbf16>, vector<10x64xbf16>, vector<10x10xf32> -> vector<10x10xf32>
    %cst_56 = arith.constant dense<0xFF800000> : vector<10xf32>
    %119 = vector.multi_reduction <maximumf>, %118, %cst_56 [1] : vector<10x10xf32> to vector<10xf32>
    %120 = vector.shape_cast %119 : vector<10xf32> to vector<10x1xf32>
    %121 = vector.broadcast %120 : vector<10x1xf32> to vector<10x10xf32>
    %122 = arith.subf %118, %121 : vector<10x10xf32>
    %123 = math.exp %122 : vector<10x10xf32>
    %cst_57 = arith.constant dense<0.000000e+00> : vector<10xf32>
    %124 = vector.multi_reduction <add>, %123, %cst_57 [1] : vector<10x10xf32> to vector<10xf32>
    %125 = vector.shape_cast %124 : vector<10xf32> to vector<10x1xf32>
    %126 = vector.broadcast %125 : vector<10x1xf32> to vector<10x10xf32>
    %127 = arith.divf %123, %126 : vector<10x10xf32>
    %c0_58 = arith.constant 0 : index
    %c5 = arith.constant 5 : index
    %c0_59 = arith.constant 0 : index
    %c0_60 = arith.constant 0 : index
    %128 = vector.load %arg9[%c0_58, %c5, %c0_59, %c0_60] : memref<2x8x10x10xf32, #tpu.memory_space<vmem>>, vector<1x1x10x10xf32>
    %129 = vector.shape_cast %128 : vector<1x1x10x10xf32> to vector<10x10xf32>
    %130 = vector.shape_cast %127 : vector<10x10xf32> to vector<1x1x10x10xf32>
    tpu.vector_store %arg9[%c0_58, %c5, %c0_59, %c0_60], %130 {strides = array<i32>} : memref<2x8x10x10xf32, #tpu.memory_space<vmem>>, vector<1x1x10x10xf32>,
    %131 = arith.truncf %127 : vector<10x10xf32> to vector<10x10xbf16>
    %cst_61 = arith.constant dense<0.000000e+00> : vector<10x64xf32>
    %132 = tpu.matmul %131, %117, %cst_61 {dimension_numbers = #tpu.dot_dimension_numbers<[1], [0], [0], [1], [0, 0, 1, 1], [], []>} : vector<10x10xbf16>, vector<10x64xbf16>, vector<10x64xf32> -> vector<10x64xf32>
    %133 = arith.truncf %132 : vector<10x64xf32> to vector<10x64xbf16>
    %c0_62 = arith.constant 0 : index
    %c320 = arith.constant 320 : index
    %134 = vector.load %arg10[%c0_62, %c320] : memref<20x512xbf16, #tpu.memory_space<vmem>>, vector<10x64xbf16>
    tpu.vector_store %arg10[%c0_62, %c320], %133 {strides = array<i32>} : memref<20x512xbf16, #tpu.memory_space<vmem>>, vector<10x64xbf16>,
    %135 = vector.extract_strided_slice %8 {offsets = [0, 384], sizes = [10, 64], strides = [1, 1]} : vector<20x512xbf16> to vector<10x64xbf16>
    %136 = vector.extract_strided_slice %11 {offsets = [0, 384], sizes = [10, 64], strides = [1, 1]} : vector<20x512xbf16> to vector<10x64xbf16>
    %137 = vector.extract_strided_slice %14 {offsets = [0, 384], sizes = [10, 64], strides = [1, 1]} : vector<20x512xbf16> to vector<10x64xbf16>
    %cst_63 = arith.constant dense<0.000000e+00> : vector<10x10xf32>
    %138 = tpu.matmul %135, %136, %cst_63 {dimension_numbers = #tpu.dot_dimension_numbers<[1], [1], [0], [0], [0, 0, 1, 0], [], []>} : vector<10x64xbf16>, vector<10x64xbf16>, vector<10x10xf32> -> vector<10x10xf32>
    %cst_64 = arith.constant dense<0xFF800000> : vector<10xf32>
    %139 = vector.multi_reduction <maximumf>, %138, %cst_64 [1] : vector<10x10xf32> to vector<10xf32>
    %140 = vector.shape_cast %139 : vector<10xf32> to vector<10x1xf32>
    %141 = vector.broadcast %140 : vector<10x1xf32> to vector<10x10xf32>
    %142 = arith.subf %138, %141 : vector<10x10xf32>
    %143 = math.exp %142 : vector<10x10xf32>
    %cst_65 = arith.constant dense<0.000000e+00> : vector<10xf32>
    %144 = vector.multi_reduction <add>, %143, %cst_65 [1] : vector<10x10xf32> to vector<10xf32>
    %145 = vector.shape_cast %144 : vector<10xf32> to vector<10x1xf32>
    %146 = vector.broadcast %145 : vector<10x1xf32> to vector<10x10xf32>
    %147 = arith.divf %143, %146 : vector<10x10xf32>
    %c0_66 = arith.constant 0 : index
    %c6 = arith.constant 6 : index
    %c0_67 = arith.constant 0 : index
    %c0_68 = arith.constant 0 : index
    %148 = vector.load %arg9[%c0_66, %c6, %c0_67, %c0_68] : memref<2x8x10x10xf32, #tpu.memory_space<vmem>>, vector<1x1x10x10xf32>
    %149 = vector.shape_cast %148 : vector<1x1x10x10xf32> to vector<10x10xf32>
    %150 = vector.shape_cast %147 : vector<10x10xf32> to vector<1x1x10x10xf32>
    tpu.vector_store %arg9[%c0_66, %c6, %c0_67, %c0_68], %150 {strides = array<i32>} : memref<2x8x10x10xf32, #tpu.memory_space<vmem>>, vector<1x1x10x10xf32>,
    %151 = arith.truncf %147 : vector<10x10xf32> to vector<10x10xbf16>
    %cst_69 = arith.constant dense<0.000000e+00> : vector<10x64xf32>
    %152 = tpu.matmul %151, %137, %cst_69 {dimension_numbers = #tpu.dot_dimension_numbers<[1], [0], [0], [1], [0, 0, 1, 1], [], []>} : vector<10x10xbf16>, vector<10x64xbf16>, vector<10x64xf32> -> vector<10x64xf32>
    %153 = arith.truncf %152 : vector<10x64xf32> to vector<10x64xbf16>
    %c0_70 = arith.constant 0 : index
    %c384 = arith.constant 384 : index
    %154 = vector.load %arg10[%c0_70, %c384] : memref<20x512xbf16, #tpu.memory_space<vmem>>, vector<10x64xbf16>
    tpu.vector_store %arg10[%c0_70, %c384], %153 {strides = array<i32>} : memref<20x512xbf16, #tpu.memory_space<vmem>>, vector<10x64xbf16>,
    %155 = vector.extract_strided_slice %8 {offsets = [0, 448], sizes = [10, 64], strides = [1, 1]} : vector<20x512xbf16> to vector<10x64xbf16>
    %156 = vector.extract_strided_slice %11 {offsets = [0, 448], sizes = [10, 64], strides = [1, 1]} : vector<20x512xbf16> to vector<10x64xbf16>
    %157 = vector.extract_strided_slice %14 {offsets = [0, 448], sizes = [10, 64], strides = [1, 1]} : vector<20x512xbf16> to vector<10x64xbf16>
    %cst_71 = arith.constant dense<0.000000e+00> : vector<10x10xf32>
    %158 = tpu.matmul %155, %156, %cst_71 {dimension_numbers = #tpu.dot_dimension_numbers<[1], [1], [0], [0], [0, 0, 1, 0], [], []>} : vector<10x64xbf16>, vector<10x64xbf16>, vector<10x10xf32> -> vector<10x10xf32>
    %cst_72 = arith.constant dense<0xFF800000> : vector<10xf32>
    %159 = vector.multi_reduction <maximumf>, %158, %cst_72 [1] : vector<10x10xf32> to vector<10xf32>
    %160 = vector.shape_cast %159 : vector<10xf32> to vector<10x1xf32>
    %161 = vector.broadcast %160 : vector<10x1xf32> to vector<10x10xf32>
    %162 = arith.subf %158, %161 : vector<10x10xf32>
    %163 = math.exp %162 : vector<10x10xf32>
    %cst_73 = arith.constant dense<0.000000e+00> : vector<10xf32>
    %164 = vector.multi_reduction <add>, %163, %cst_73 [1] : vector<10x10xf32> to vector<10xf32>
    %165 = vector.shape_cast %164 : vector<10xf32> to vector<10x1xf32>
    %166 = vector.broadcast %165 : vector<10x1xf32> to vector<10x10xf32>
    %167 = arith.divf %163, %166 : vector<10x10xf32>
    %c0_74 = arith.constant 0 : index
    %c7 = arith.constant 7 : index
    %c0_75 = arith.constant 0 : index
    %c0_76 = arith.constant 0 : index
    %168 = vector.load %arg9[%c0_74, %c7, %c0_75, %c0_76] : memref<2x8x10x10xf32, #tpu.memory_space<vmem>>, vector<1x1x10x10xf32>
    %169 = vector.shape_cast %168 : vector<1x1x10x10xf32> to vector<10x10xf32>
    %170 = vector.shape_cast %167 : vector<10x10xf32> to vector<1x1x10x10xf32>
    tpu.vector_store %arg9[%c0_74, %c7, %c0_75, %c0_76], %170 {strides = array<i32>} : memref<2x8x10x10xf32, #tpu.memory_space<vmem>>, vector<1x1x10x10xf32>,
    %171 = arith.truncf %167 : vector<10x10xf32> to vector<10x10xbf16>
    %cst_77 = arith.constant dense<0.000000e+00> : vector<10x64xf32>
    %172 = tpu.matmul %171, %157, %cst_77 {dimension_numbers = #tpu.dot_dimension_numbers<[1], [0], [0], [1], [0, 0, 1, 1], [], []>} : vector<10x10xbf16>, vector<10x64xbf16>, vector<10x64xf32> -> vector<10x64xf32>
    %173 = arith.truncf %172 : vector<10x64xf32> to vector<10x64xbf16>
    %c0_78 = arith.constant 0 : index
    %c448 = arith.constant 448 : index
    %174 = vector.load %arg10[%c0_78, %c448] : memref<20x512xbf16, #tpu.memory_space<vmem>>, vector<10x64xbf16>
    tpu.vector_store %arg10[%c0_78, %c448], %173 {strides = array<i32>} : memref<20x512xbf16, #tpu.memory_space<vmem>>, vector<10x64xbf16>,
    %175 = vector.extract_strided_slice %8 {offsets = [10, 0], sizes = [10, 64], strides = [1, 1]} : vector<20x512xbf16> to vector<10x64xbf16>
    %176 = vector.extract_strided_slice %11 {offsets = [10, 0], sizes = [10, 64], strides = [1, 1]} : vector<20x512xbf16> to vector<10x64xbf16>
    %177 = vector.extract_strided_slice %14 {offsets = [10, 0], sizes = [10, 64], strides = [1, 1]} : vector<20x512xbf16> to vector<10x64xbf16>
    %cst_79 = arith.constant dense<0.000000e+00> : vector<10x10xf32>
    %178 = tpu.matmul %175, %176, %cst_79 {dimension_numbers = #tpu.dot_dimension_numbers<[1], [1], [0], [0], [0, 0, 1, 0], [], []>} : vector<10x64xbf16>, vector<10x64xbf16>, vector<10x10xf32> -> vector<10x10xf32>
    %cst_80 = arith.constant dense<0xFF800000> : vector<10xf32>
    %179 = vector.multi_reduction <maximumf>, %178, %cst_80 [1] : vector<10x10xf32> to vector<10xf32>
    %180 = vector.shape_cast %179 : vector<10xf32> to vector<10x1xf32>
    %181 = vector.broadcast %180 : vector<10x1xf32> to vector<10x10xf32>
    %182 = arith.subf %178, %181 : vector<10x10xf32>
    %183 = math.exp %182 : vector<10x10xf32>
    %cst_81 = arith.constant dense<0.000000e+00> : vector<10xf32>
    %184 = vector.multi_reduction <add>, %183, %cst_81 [1] : vector<10x10xf32> to vector<10xf32>
    %185 = vector.shape_cast %184 : vector<10xf32> to vector<10x1xf32>
    %186 = vector.broadcast %185 : vector<10x1xf32> to vector<10x10xf32>
    %187 = arith.divf %183, %186 : vector<10x10xf32>
    %c1_82 = arith.constant 1 : index
    %c0_83 = arith.constant 0 : index
    %c0_84 = arith.constant 0 : index
    %c0_85 = arith.constant 0 : index
    %188 = vector.load %arg9[%c1_82, %c0_83, %c0_84, %c0_85] : memref<2x8x10x10xf32, #tpu.memory_space<vmem>>, vector<1x1x10x10xf32>
    %189 = vector.shape_cast %188 : vector<1x1x10x10xf32> to vector<10x10xf32>
    %190 = vector.shape_cast %187 : vector<10x10xf32> to vector<1x1x10x10xf32>
    tpu.vector_store %arg9[%c1_82, %c0_83, %c0_84, %c0_85], %190 {strides = array<i32>} : memref<2x8x10x10xf32, #tpu.memory_space<vmem>>, vector<1x1x10x10xf32>,
    %191 = arith.truncf %187 : vector<10x10xf32> to vector<10x10xbf16>
    %cst_86 = arith.constant dense<0.000000e+00> : vector<10x64xf32>
    %192 = tpu.matmul %191, %177, %cst_86 {dimension_numbers = #tpu.dot_dimension_numbers<[1], [0], [0], [1], [0, 0, 1, 1], [], []>} : vector<10x10xbf16>, vector<10x64xbf16>, vector<10x64xf32> -> vector<10x64xf32>
    %193 = arith.truncf %192 : vector<10x64xf32> to vector<10x64xbf16>
    %c10 = arith.constant 10 : index
    %c0_87 = arith.constant 0 : index
    %194 = vector.load %arg10[%c10, %c0_87] : memref<20x512xbf16, #tpu.memory_space<vmem>>, vector<10x64xbf16>
    tpu.vector_store %arg10[%c10, %c0_87], %193 {strides = array<i32>} : memref<20x512xbf16, #tpu.memory_space<vmem>>, vector<10x64xbf16>,
    %195 = vector.extract_strided_slice %8 {offsets = [10, 64], sizes = [10, 64], strides = [1, 1]} : vector<20x512xbf16> to vector<10x64xbf16>
    %196 = vector.extract_strided_slice %11 {offsets = [10, 64], sizes = [10, 64], strides = [1, 1]} : vector<20x512xbf16> to vector<10x64xbf16>
    %197 = vector.extract_strided_slice %14 {offsets = [10, 64], sizes = [10, 64], strides = [1, 1]} : vector<20x512xbf16> to vector<10x64xbf16>
    %cst_88 = arith.constant dense<0.000000e+00> : vector<10x10xf32>
    %198 = tpu.matmul %195, %196, %cst_88 {dimension_numbers = #tpu.dot_dimension_numbers<[1], [1], [0], [0], [0, 0, 1, 0], [], []>} : vector<10x64xbf16>, vector<10x64xbf16>, vector<10x10xf32> -> vector<10x10xf32>
    %cst_89 = arith.constant dense<0xFF800000> : vector<10xf32>
    %199 = vector.multi_reduction <maximumf>, %198, %cst_89 [1] : vector<10x10xf32> to vector<10xf32>
    %200 = vector.shape_cast %199 : vector<10xf32> to vector<10x1xf32>
    %201 = vector.broadcast %200 : vector<10x1xf32> to vector<10x10xf32>
    %202 = arith.subf %198, %201 : vector<10x10xf32>
    %203 = math.exp %202 : vector<10x10xf32>
    %cst_90 = arith.constant dense<0.000000e+00> : vector<10xf32>
    %204 = vector.multi_reduction <add>, %203, %cst_90 [1] : vector<10x10xf32> to vector<10xf32>
    %205 = vector.shape_cast %204 : vector<10xf32> to vector<10x1xf32>
    %206 = vector.broadcast %205 : vector<10x1xf32> to vector<10x10xf32>
    %207 = arith.divf %203, %206 : vector<10x10xf32>
    %c1_91 = arith.constant 1 : index
    %c1_92 = arith.constant 1 : index
    %c0_93 = arith.constant 0 : index
    %c0_94 = arith.constant 0 : index
    %208 = vector.load %arg9[%c1_91, %c1_92, %c0_93, %c0_94] : memref<2x8x10x10xf32, #tpu.memory_space<vmem>>, vector<1x1x10x10xf32>
    %209 = vector.shape_cast %208 : vector<1x1x10x10xf32> to vector<10x10xf32>
    %210 = vector.shape_cast %207 : vector<10x10xf32> to vector<1x1x10x10xf32>
    tpu.vector_store %arg9[%c1_91, %c1_92, %c0_93, %c0_94], %210 {strides = array<i32>} : memref<2x8x10x10xf32, #tpu.memory_space<vmem>>, vector<1x1x10x10xf32>,
    %211 = arith.truncf %207 : vector<10x10xf32> to vector<10x10xbf16>
    %cst_95 = arith.constant dense<0.000000e+00> : vector<10x64xf32>
    %212 = tpu.matmul %211, %197, %cst_95 {dimension_numbers = #tpu.dot_dimension_numbers<[1], [0], [0], [1], [0, 0, 1, 1], [], []>} : vector<10x10xbf16>, vector<10x64xbf16>, vector<10x64xf32> -> vector<10x64xf32>
    %213 = arith.truncf %212 : vector<10x64xf32> to vector<10x64xbf16>
    %c10_96 = arith.constant 10 : index
    %c64_97 = arith.constant 64 : index
    %214 = vector.load %arg10[%c10_96, %c64_97] : memref<20x512xbf16, #tpu.memory_space<vmem>>, vector<10x64xbf16>
    tpu.vector_store %arg10[%c10_96, %c64_97], %213 {strides = array<i32>} : memref<20x512xbf16, #tpu.memory_space<vmem>>, vector<10x64xbf16>,
    %215 = vector.extract_strided_slice %8 {offsets = [10, 128], sizes = [10, 64], strides = [1, 1]} : vector<20x512xbf16> to vector<10x64xbf16>
    %216 = vector.extract_strided_slice %11 {offsets = [10, 128], sizes = [10, 64], strides = [1, 1]} : vector<20x512xbf16> to vector<10x64xbf16>
    %217 = vector.extract_strided_slice %14 {offsets = [10, 128], sizes = [10, 64], strides = [1, 1]} : vector<20x512xbf16> to vector<10x64xbf16>
    %cst_98 = arith.constant dense<0.000000e+00> : vector<10x10xf32>
    %218 = tpu.matmul %215, %216, %cst_98 {dimension_numbers = #tpu.dot_dimension_numbers<[1], [1], [0], [0], [0, 0, 1, 0], [], []>} : vector<10x64xbf16>, vector<10x64xbf16>, vector<10x10xf32> -> vector<10x10xf32>
    %cst_99 = arith.constant dense<0xFF800000> : vector<10xf32>
    %219 = vector.multi_reduction <maximumf>, %218, %cst_99 [1] : vector<10x10xf32> to vector<10xf32>
    %220 = vector.shape_cast %219 : vector<10xf32> to vector<10x1xf32>
    %221 = vector.broadcast %220 : vector<10x1xf32> to vector<10x10xf32>
    %222 = arith.subf %218, %221 : vector<10x10xf32>
    %223 = math.exp %222 : vector<10x10xf32>
    %cst_100 = arith.constant dense<0.000000e+00> : vector<10xf32>
    %224 = vector.multi_reduction <add>, %223, %cst_100 [1] : vector<10x10xf32> to vector<10xf32>
    %225 = vector.shape_cast %224 : vector<10xf32> to vector<10x1xf32>
    %226 = vector.broadcast %225 : vector<10x1xf32> to vector<10x10xf32>
    %227 = arith.divf %223, %226 : vector<10x10xf32>
    %c1_101 = arith.constant 1 : index
    %c2_102 = arith.constant 2 : index
    %c0_103 = arith.constant 0 : index
    %c0_104 = arith.constant 0 : index
    %228 = vector.load %arg9[%c1_101, %c2_102, %c0_103, %c0_104] : memref<2x8x10x10xf32, #tpu.memory_space<vmem>>, vector<1x1x10x10xf32>
    %229 = vector.shape_cast %228 : vector<1x1x10x10xf32> to vector<10x10xf32>
    %230 = vector.shape_cast %227 : vector<10x10xf32> to vector<1x1x10x10xf32>
    tpu.vector_store %arg9[%c1_101, %c2_102, %c0_103, %c0_104], %230 {strides = array<i32>} : memref<2x8x10x10xf32, #tpu.memory_space<vmem>>, vector<1x1x10x10xf32>,
    %231 = arith.truncf %227 : vector<10x10xf32> to vector<10x10xbf16>
    %cst_105 = arith.constant dense<0.000000e+00> : vector<10x64xf32>
    %232 = tpu.matmul %231, %217, %cst_105 {dimension_numbers = #tpu.dot_dimension_numbers<[1], [0], [0], [1], [0, 0, 1, 1], [], []>} : vector<10x10xbf16>, vector<10x64xbf16>, vector<10x64xf32> -> vector<10x64xf32>
    %233 = arith.truncf %232 : vector<10x64xf32> to vector<10x64xbf16>
    %c10_106 = arith.constant 10 : index
    %c128_107 = arith.constant 128 : index
    %234 = vector.load %arg10[%c10_106, %c128_107] : memref<20x512xbf16, #tpu.memory_space<vmem>>, vector<10x64xbf16>
    tpu.vector_store %arg10[%c10_106, %c128_107], %233 {strides = array<i32>} : memref<20x512xbf16, #tpu.memory_space<vmem>>, vector<10x64xbf16>,
    %235 = vector.extract_strided_slice %8 {offsets = [10, 192], sizes = [10, 64], strides = [1, 1]} : vector<20x512xbf16> to vector<10x64xbf16>
    %236 = vector.extract_strided_slice %11 {offsets = [10, 192], sizes = [10, 64], strides = [1, 1]} : vector<20x512xbf16> to vector<10x64xbf16>
    %237 = vector.extract_strided_slice %14 {offsets = [10, 192], sizes = [10, 64], strides = [1, 1]} : vector<20x512xbf16> to vector<10x64xbf16>
    %cst_108 = arith.constant dense<0.000000e+00> : vector<10x10xf32>
    %238 = tpu.matmul %235, %236, %cst_108 {dimension_numbers = #tpu.dot_dimension_numbers<[1], [1], [0], [0], [0, 0, 1, 0], [], []>} : vector<10x64xbf16>, vector<10x64xbf16>, vector<10x10xf32> -> vector<10x10xf32>
    %cst_109 = arith.constant dense<0xFF800000> : vector<10xf32>
    %239 = vector.multi_reduction <maximumf>, %238, %cst_109 [1] : vector<10x10xf32> to vector<10xf32>
    %240 = vector.shape_cast %239 : vector<10xf32> to vector<10x1xf32>
    %241 = vector.broadcast %240 : vector<10x1xf32> to vector<10x10xf32>
    %242 = arith.subf %238, %241 : vector<10x10xf32>
    %243 = math.exp %242 : vector<10x10xf32>
    %cst_110 = arith.constant dense<0.000000e+00> : vector<10xf32>
    %244 = vector.multi_reduction <add>, %243, %cst_110 [1] : vector<10x10xf32> to vector<10xf32>
    %245 = vector.shape_cast %244 : vector<10xf32> to vector<10x1xf32>
    %246 = vector.broadcast %245 : vector<10x1xf32> to vector<10x10xf32>
    %247 = arith.divf %243, %246 : vector<10x10xf32>
    %c1_111 = arith.constant 1 : index
    %c3_112 = arith.constant 3 : index
    %c0_113 = arith.constant 0 : index
    %c0_114 = arith.constant 0 : index
    %248 = vector.load %arg9[%c1_111, %c3_112, %c0_113, %c0_114] : memref<2x8x10x10xf32, #tpu.memory_space<vmem>>, vector<1x1x10x10xf32>
    %249 = vector.shape_cast %248 : vector<1x1x10x10xf32> to vector<10x10xf32>
    %250 = vector.shape_cast %247 : vector<10x10xf32> to vector<1x1x10x10xf32>
    tpu.vector_store %arg9[%c1_111, %c3_112, %c0_113, %c0_114], %250 {strides = array<i32>} : memref<2x8x10x10xf32, #tpu.memory_space<vmem>>, vector<1x1x10x10xf32>,
    %251 = arith.truncf %247 : vector<10x10xf32> to vector<10x10xbf16>
    %cst_115 = arith.constant dense<0.000000e+00> : vector<10x64xf32>
    %252 = tpu.matmul %251, %237, %cst_115 {dimension_numbers = #tpu.dot_dimension_numbers<[1], [0], [0], [1], [0, 0, 1, 1], [], []>} : vector<10x10xbf16>, vector<10x64xbf16>, vector<10x64xf32> -> vector<10x64xf32>
    %253 = arith.truncf %252 : vector<10x64xf32> to vector<10x64xbf16>
    %c10_116 = arith.constant 10 : index
    %c192_117 = arith.constant 192 : index
    %254 = vector.load %arg10[%c10_116, %c192_117] : memref<20x512xbf16, #tpu.memory_space<vmem>>, vector<10x64xbf16>
    tpu.vector_store %arg10[%c10_116, %c192_117], %253 {strides = array<i32>} : memref<20x512xbf16, #tpu.memory_space<vmem>>, vector<10x64xbf16>,
    %255 = vector.extract_strided_slice %8 {offsets = [10, 256], sizes = [10, 64], strides = [1, 1]} : vector<20x512xbf16> to vector<10x64xbf16>
    %256 = vector.extract_strided_slice %11 {offsets = [10, 256], sizes = [10, 64], strides = [1, 1]} : vector<20x512xbf16> to vector<10x64xbf16>
    %257 = vector.extract_strided_slice %14 {offsets = [10, 256], sizes = [10, 64], strides = [1, 1]} : vector<20x512xbf16> to vector<10x64xbf16>
    %cst_118 = arith.constant dense<0.000000e+00> : vector<10x10xf32>
    %258 = tpu.matmul %255, %256, %cst_118 {dimension_numbers = #tpu.dot_dimension_numbers<[1], [1], [0], [0], [0, 0, 1, 0], [], []>} : vector<10x64xbf16>, vector<10x64xbf16>, vector<10x10xf32> -> vector<10x10xf32>
    %cst_119 = arith.constant dense<0xFF800000> : vector<10xf32>
    %259 = vector.multi_reduction <maximumf>, %258, %cst_119 [1] : vector<10x10xf32> to vector<10xf32>
    %260 = vector.shape_cast %259 : vector<10xf32> to vector<10x1xf32>
    %261 = vector.broadcast %260 : vector<10x1xf32> to vector<10x10xf32>
    %262 = arith.subf %258, %261 : vector<10x10xf32>
    %263 = math.exp %262 : vector<10x10xf32>
    %cst_120 = arith.constant dense<0.000000e+00> : vector<10xf32>
    %264 = vector.multi_reduction <add>, %263, %cst_120 [1] : vector<10x10xf32> to vector<10xf32>
    %265 = vector.shape_cast %264 : vector<10xf32> to vector<10x1xf32>
    %266 = vector.broadcast %265 : vector<10x1xf32> to vector<10x10xf32>
    %267 = arith.divf %263, %266 : vector<10x10xf32>
    %c1_121 = arith.constant 1 : index
    %c4_122 = arith.constant 4 : index
    %c0_123 = arith.constant 0 : index
    %c0_124 = arith.constant 0 : index
    %268 = vector.load %arg9[%c1_121, %c4_122, %c0_123, %c0_124] : memref<2x8x10x10xf32, #tpu.memory_space<vmem>>, vector<1x1x10x10xf32>
    %269 = vector.shape_cast %268 : vector<1x1x10x10xf32> to vector<10x10xf32>
    %270 = vector.shape_cast %267 : vector<10x10xf32> to vector<1x1x10x10xf32>
    tpu.vector_store %arg9[%c1_121, %c4_122, %c0_123, %c0_124], %270 {strides = array<i32>} : memref<2x8x10x10xf32, #tpu.memory_space<vmem>>, vector<1x1x10x10xf32>,
    %271 = arith.truncf %267 : vector<10x10xf32> to vector<10x10xbf16>
    %cst_125 = arith.constant dense<0.000000e+00> : vector<10x64xf32>
    %272 = tpu.matmul %271, %257, %cst_125 {dimension_numbers = #tpu.dot_dimension_numbers<[1], [0], [0], [1], [0, 0, 1, 1], [], []>} : vector<10x10xbf16>, vector<10x64xbf16>, vector<10x64xf32> -> vector<10x64xf32>
    %273 = arith.truncf %272 : vector<10x64xf32> to vector<10x64xbf16>
    %c10_126 = arith.constant 10 : index
    %c256_127 = arith.constant 256 : index
    %274 = vector.load %arg10[%c10_126, %c256_127] : memref<20x512xbf16, #tpu.memory_space<vmem>>, vector<10x64xbf16>
    tpu.vector_store %arg10[%c10_126, %c256_127], %273 {strides = array<i32>} : memref<20x512xbf16, #tpu.memory_space<vmem>>, vector<10x64xbf16>,
    %275 = vector.extract_strided_slice %8 {offsets = [10, 320], sizes = [10, 64], strides = [1, 1]} : vector<20x512xbf16> to vector<10x64xbf16>
    %276 = vector.extract_strided_slice %11 {offsets = [10, 320], sizes = [10, 64], strides = [1, 1]} : vector<20x512xbf16> to vector<10x64xbf16>
    %277 = vector.extract_strided_slice %14 {offsets = [10, 320], sizes = [10, 64], strides = [1, 1]} : vector<20x512xbf16> to vector<10x64xbf16>
    %cst_128 = arith.constant dense<0.000000e+00> : vector<10x10xf32>
    %278 = tpu.matmul %275, %276, %cst_128 {dimension_numbers = #tpu.dot_dimension_numbers<[1], [1], [0], [0], [0, 0, 1, 0], [], []>} : vector<10x64xbf16>, vector<10x64xbf16>, vector<10x10xf32> -> vector<10x10xf32>
    %cst_129 = arith.constant dense<0xFF800000> : vector<10xf32>
    %279 = vector.multi_reduction <maximumf>, %278, %cst_129 [1] : vector<10x10xf32> to vector<10xf32>
    %280 = vector.shape_cast %279 : vector<10xf32> to vector<10x1xf32>
    %281 = vector.broadcast %280 : vector<10x1xf32> to vector<10x10xf32>
    %282 = arith.subf %278, %281 : vector<10x10xf32>
    %283 = math.exp %282 : vector<10x10xf32>
    %cst_130 = arith.constant dense<0.000000e+00> : vector<10xf32>
    %284 = vector.multi_reduction <add>, %283, %cst_130 [1] : vector<10x10xf32> to vector<10xf32>
    %285 = vector.shape_cast %284 : vector<10xf32> to vector<10x1xf32>
    %286 = vector.broadcast %285 : vector<10x1xf32> to vector<10x10xf32>
    %287 = arith.divf %283, %286 : vector<10x10xf32>
    %c1_131 = arith.constant 1 : index
    %c5_132 = arith.constant 5 : index
    %c0_133 = arith.constant 0 : index
    %c0_134 = arith.constant 0 : index
    %288 = vector.load %arg9[%c1_131, %c5_132, %c0_133, %c0_134] : memref<2x8x10x10xf32, #tpu.memory_space<vmem>>, vector<1x1x10x10xf32>
    %289 = vector.shape_cast %288 : vector<1x1x10x10xf32> to vector<10x10xf32>
    %290 = vector.shape_cast %287 : vector<10x10xf32> to vector<1x1x10x10xf32>
    tpu.vector_store %arg9[%c1_131, %c5_132, %c0_133, %c0_134], %290 {strides = array<i32>} : memref<2x8x10x10xf32, #tpu.memory_space<vmem>>, vector<1x1x10x10xf32>,
    %291 = arith.truncf %287 : vector<10x10xf32> to vector<10x10xbf16>
    %cst_135 = arith.constant dense<0.000000e+00> : vector<10x64xf32>
    %292 = tpu.matmul %291, %277, %cst_135 {dimension_numbers = #tpu.dot_dimension_numbers<[1], [0], [0], [1], [0, 0, 1, 1], [], []>} : vector<10x10xbf16>, vector<10x64xbf16>, vector<10x64xf32> -> vector<10x64xf32>
    %293 = arith.truncf %292 : vector<10x64xf32> to vector<10x64xbf16>
    %c10_136 = arith.constant 10 : index
    %c320_137 = arith.constant 320 : index
    %294 = vector.load %arg10[%c10_136, %c320_137] : memref<20x512xbf16, #tpu.memory_space<vmem>>, vector<10x64xbf16>
    tpu.vector_store %arg10[%c10_136, %c320_137], %293 {strides = array<i32>} : memref<20x512xbf16, #tpu.memory_space<vmem>>, vector<10x64xbf16>,
    %295 = vector.extract_strided_slice %8 {offsets = [10, 384], sizes = [10, 64], strides = [1, 1]} : vector<20x512xbf16> to vector<10x64xbf16>
    %296 = vector.extract_strided_slice %11 {offsets = [10, 384], sizes = [10, 64], strides = [1, 1]} : vector<20x512xbf16> to vector<10x64xbf16>
    %297 = vector.extract_strided_slice %14 {offsets = [10, 384], sizes = [10, 64], strides = [1, 1]} : vector<20x512xbf16> to vector<10x64xbf16>
    %cst_138 = arith.constant dense<0.000000e+00> : vector<10x10xf32>
    %298 = tpu.matmul %295, %296, %cst_138 {dimension_numbers = #tpu.dot_dimension_numbers<[1], [1], [0], [0], [0, 0, 1, 0], [], []>} : vector<10x64xbf16>, vector<10x64xbf16>, vector<10x10xf32> -> vector<10x10xf32>
    %cst_139 = arith.constant dense<0xFF800000> : vector<10xf32>
    %299 = vector.multi_reduction <maximumf>, %298, %cst_139 [1] : vector<10x10xf32> to vector<10xf32>
    %300 = vector.shape_cast %299 : vector<10xf32> to vector<10x1xf32>
    %301 = vector.broadcast %300 : vector<10x1xf32> to vector<10x10xf32>
    %302 = arith.subf %298, %301 : vector<10x10xf32>
    %303 = math.exp %302 : vector<10x10xf32>
    %cst_140 = arith.constant dense<0.000000e+00> : vector<10xf32>
    %304 = vector.multi_reduction <add>, %303, %cst_140 [1] : vector<10x10xf32> to vector<10xf32>
    %305 = vector.shape_cast %304 : vector<10xf32> to vector<10x1xf32>
    %306 = vector.broadcast %305 : vector<10x1xf32> to vector<10x10xf32>
    %307 = arith.divf %303, %306 : vector<10x10xf32>
    %c1_141 = arith.constant 1 : index
    %c6_142 = arith.constant 6 : index
    %c0_143 = arith.constant 0 : index
    %c0_144 = arith.constant 0 : index
    %308 = vector.load %arg9[%c1_141, %c6_142, %c0_143, %c0_144] : memref<2x8x10x10xf32, #tpu.memory_space<vmem>>, vector<1x1x10x10xf32>
    %309 = vector.shape_cast %308 : vector<1x1x10x10xf32> to vector<10x10xf32>
    %310 = vector.shape_cast %307 : vector<10x10xf32> to vector<1x1x10x10xf32>
    tpu.vector_store %arg9[%c1_141, %c6_142, %c0_143, %c0_144], %310 {strides = array<i32>} : memref<2x8x10x10xf32, #tpu.memory_space<vmem>>, vector<1x1x10x10xf32>,
    %311 = arith.truncf %307 : vector<10x10xf32> to vector<10x10xbf16>
    %cst_145 = arith.constant dense<0.000000e+00> : vector<10x64xf32>
    %312 = tpu.matmul %311, %297, %cst_145 {dimension_numbers = #tpu.dot_dimension_numbers<[1], [0], [0], [1], [0, 0, 1, 1], [], []>} : vector<10x10xbf16>, vector<10x64xbf16>, vector<10x64xf32> -> vector<10x64xf32>
    %313 = arith.truncf %312 : vector<10x64xf32> to vector<10x64xbf16>
    %c10_146 = arith.constant 10 : index
    %c384_147 = arith.constant 384 : index
    %314 = vector.load %arg10[%c10_146, %c384_147] : memref<20x512xbf16, #tpu.memory_space<vmem>>, vector<10x64xbf16>
    tpu.vector_store %arg10[%c10_146, %c384_147], %313 {strides = array<i32>} : memref<20x512xbf16, #tpu.memory_space<vmem>>, vector<10x64xbf16>,
    %315 = vector.extract_strided_slice %8 {offsets = [10, 448], sizes = [10, 64], strides = [1, 1]} : vector<20x512xbf16> to vector<10x64xbf16>
    %316 = vector.extract_strided_slice %11 {offsets = [10, 448], sizes = [10, 64], strides = [1, 1]} : vector<20x512xbf16> to vector<10x64xbf16>
    %317 = vector.extract_strided_slice %14 {offsets = [10, 448], sizes = [10, 64], strides = [1, 1]} : vector<20x512xbf16> to vector<10x64xbf16>
    %cst_148 = arith.constant dense<0.000000e+00> : vector<10x10xf32>
    %318 = tpu.matmul %315, %316, %cst_148 {dimension_numbers = #tpu.dot_dimension_numbers<[1], [1], [0], [0], [0, 0, 1, 0], [], []>} : vector<10x64xbf16>, vector<10x64xbf16>, vector<10x10xf32> -> vector<10x10xf32>
    %cst_149 = arith.constant dense<0xFF800000> : vector<10xf32>
    %319 = vector.multi_reduction <maximumf>, %318, %cst_149 [1] : vector<10x10xf32> to vector<10xf32>
    %320 = vector.shape_cast %319 : vector<10xf32> to vector<10x1xf32>
    %321 = vector.broadcast %320 : vector<10x1xf32> to vector<10x10xf32>
    %322 = arith.subf %318, %321 : vector<10x10xf32>
    %323 = math.exp %322 : vector<10x10xf32>
    %cst_150 = arith.constant dense<0.000000e+00> : vector<10xf32>
    %324 = vector.multi_reduction <add>, %323, %cst_150 [1] : vector<10x10xf32> to vector<10xf32>
    %325 = vector.shape_cast %324 : vector<10xf32> to vector<10x1xf32>
    %326 = vector.broadcast %325 : vector<10x1xf32> to vector<10x10xf32>
    %327 = arith.divf %323, %326 : vector<10x10xf32>
    %c1_151 = arith.constant 1 : index
    %c7_152 = arith.constant 7 : index
    %c0_153 = arith.constant 0 : index
    %c0_154 = arith.constant 0 : index
    %328 = vector.load %arg9[%c1_151, %c7_152, %c0_153, %c0_154] : memref<2x8x10x10xf32, #tpu.memory_space<vmem>>, vector<1x1x10x10xf32>
    %329 = vector.shape_cast %328 : vector<1x1x10x10xf32> to vector<10x10xf32>
    %330 = vector.shape_cast %327 : vector<10x10xf32> to vector<1x1x10x10xf32>
    tpu.vector_store %arg9[%c1_151, %c7_152, %c0_153, %c0_154], %330 {strides = array<i32>} : memref<2x8x10x10xf32, #tpu.memory_space<vmem>>, vector<1x1x10x10xf32>,
    %331 = arith.truncf %327 : vector<10x10xf32> to vector<10x10xbf16>
    %cst_155 = arith.constant dense<0.000000e+00> : vector<10x64xf32>
    %332 = tpu.matmul %331, %317, %cst_155 {dimension_numbers = #tpu.dot_dimension_numbers<[1], [0], [0], [1], [0, 0, 1, 1], [], []>} : vector<10x10xbf16>, vector<10x64xbf16>, vector<10x64xf32> -> vector<10x64xf32>
    %333 = arith.truncf %332 : vector<10x64xf32> to vector<10x64xbf16>
    %c10_156 = arith.constant 10 : index
    %c448_157 = arith.constant 448 : index
    %334 = vector.load %arg10[%c10_156, %c448_157] : memref<20x512xbf16, #tpu.memory_space<vmem>>, vector<10x64xbf16>
    tpu.vector_store %arg10[%c10_156, %c448_157], %333 {strides = array<i32>} : memref<20x512xbf16, #tpu.memory_space<vmem>>, vector<10x64xbf16>,
    %c0_158 = arith.constant 0 : index
    %c0_159 = arith.constant 0 : index
    %335 = vector.load %arg10[%c0_158, %c0_159] : memref<20x512xbf16, #tpu.memory_space<vmem>>, vector<20x512xbf16>
    %c0_160 = arith.constant 0 : index
    %c0_161 = arith.constant 0 : index
    %336 = vector.load %arg7[%c0_160, %c0_161] : memref<512x512xbf16, #tpu.memory_space<vmem>>, vector<512x512xbf16>
    %cst_162 = arith.constant dense<0.000000e+00> : vector<20x512xf32>
    %337 = tpu.matmul %335, %336, %cst_162 {dimension_numbers = #tpu.dot_dimension_numbers<[1], [0], [0], [1], [0, 0, 1, 1], [], []>} : vector<20x512xbf16>, vector<512x512xbf16>, vector<20x512xf32> -> vector<20x512xf32>
    %c0_163 = arith.constant 0 : index
    %c0_164 = arith.constant 0 : index
    %338 = vector.load %arg8[%c0_163, %c0_164] : memref<20x512xf32, #tpu.memory_space<vmem>>, vector<20x512xf32>
    tpu.vector_store %arg8[%c0_163, %c0_164], %337 {strides = array<i32>} : memref<20x512xf32, #tpu.memory_space<vmem>>, vector<20x512xf32>,
    return
  }
  func.func @transform_0(%arg0: i32) -> (i32, i32) {
    %c0_i32 = arith.constant 0 : i32
    %c0_i32_0 = arith.constant 0 : i32
    %c0_i32_1 = arith.constant 0 : i32
    return %c0_i32, %c0_i32_0 : i32, i32
  }
  func.func @transform_1(%arg0: i32) -> (i32, i32) {
    %c0_i32 = arith.constant 0 : i32
    %c0_i32_0 = arith.constant 0 : i32
    %c0_i32_1 = arith.constant 0 : i32
    return %c0_i32, %c0_i32_0 : i32, i32
  }
  func.func @transform_2(%arg0: i32) -> (i32, i32) {
    %c0_i32 = arith.constant 0 : i32
    %c0_i32_0 = arith.constant 0 : i32
    %c0_i32_1 = arith.constant 0 : i32
    return %c0_i32, %c0_i32_0 : i32, i32
  }
  func.func @transform_3(%arg0: i32) -> (i32, i32) {
    %c0_i32 = arith.constant 0 : i32
    %c0_i32_0 = arith.constant 0 : i32
    %c0_i32_1 = arith.constant 0 : i32
    return %c0_i32, %c0_i32_0 : i32, i32
  }
  func.func @transform_4(%arg0: i32) -> (i32, i32) {
    %c0_i32 = arith.constant 0 : i32
    %c0_i32_0 = arith.constant 0 : i32
    %c0_i32_1 = arith.constant 0 : i32
    return %c0_i32, %c0_i32_0 : i32, i32
  }
  func.func @transform_5(%arg0: i32) -> (i32, i32) {
    %c0_i32 = arith.constant 0 : i32
    %c0_i32_0 = arith.constant 0 : i32
    %c0_i32_1 = arith.constant 0 : i32
    return %c0_i32, %c0_i32_0 : i32, i32
  }
  func.func @transform_6(%arg0: i32) -> (i32, i32) {
    %c0_i32 = arith.constant 0 : i32
    %c0_i32_0 = arith.constant 0 : i32
    %c0_i32_1 = arith.constant 0 : i32
    return %c0_i32, %c0_i32_0 : i32, i32
  }
  func.func @transform_7(%arg0: i32) -> (i32, i32) {
    %c0_i32 = arith.constant 0 : i32
    %c0_i32_0 = arith.constant 0 : i32
    %c0_i32_1 = arith.constant 0 : i32
    return %c0_i32, %c0_i32_0 : i32, i32
  }
  func.func @transform_8(%arg0: i32) -> (i32, i32, i32, i32) {
    %c0_i32 = arith.constant 0 : i32
    %c0_i32_0 = arith.constant 0 : i32
    %c0_i32_1 = arith.constant 0 : i32
    %c0_i32_2 = arith.constant 0 : i32
    %c0_i32_3 = arith.constant 0 : i32
    return %c0_i32, %c0_i32_0, %c0_i32_1, %c0_i32_2 : i32, i32, i32, i32
  }
}

</mosaic_0001>

<llo_original>
// kernel: multi_head_attention.1
$region0: #{multi_head_attention.1}
  #allocation0 [shape = 'u32[]', space=smem, size = 0x4, offset = 0x4, fixed_abs, tag = 'smem constant byte address 0x4 - core index']
  #allocation1 [shape = 'u32[144,128]{1,0:T(1,128)}', space=vmem, size = 0x12000, scoped, tag = 'internal scratch']
  #allocation2 [shape = 'bf16[20,512]{1,0:T(8,128)(2,1)}', space=vmem, size = 0x6000, scoped, tag = 'scratch operand']
  %s0 = inlined_call_operand.vmem [shape: f32[20,512], index: 0, kind: input, shape index: {}]
  %s1 = inlined_call_operand.vmem [shape: f32[20,512], index: 1, kind: input, shape index: {}]
  %s2 = inlined_call_operand.vmem [shape: f32[20,512], index: 2, kind: input, shape index: {}]
  %s3 = inlined_call_operand.vmem [shape: bf16[512,512], index: 3, kind: input, shape index: {}]
  %s4 = inlined_call_operand.hbm [shape: bf16[512,512], index: 4, kind: input, shape index: {}]
  %s5 = inlined_call_operand.hbm [shape: bf16[512,512], index: 5, kind: input, shape index: {}]
  %s6 = inlined_call_operand.hbm [shape: bf16[512,512], index: 6, kind: input, shape index: {}]
  %s7 = inlined_call_operand.vmem [shape: f32[20,512], index: 7, kind: output, shape index: {0}]
  %s8 = inlined_call_operand.vmem [shape: f32[2,8,10,10], index: 8, kind: output, shape index: {1}]
  %9 = xla_tuple %s7, %s8
  %s10 = sld [smem:[#allocation0]]
  $region58: #{multi_head_attention.1} parent=0
    _
  %s12 = ssub.s32 1, %s10
  %s13 = scalar_select 0, %s12, %s10
  $region1: #{multi_head_attention.1} parent=0
    #allocation3 [shape = 'u8[524288]{0}', space=vmem, size = 0x80000, scoped, tag = 'input window, operand 4, single buffered']
    #allocation4 [shape = 's32[1]{0}', space=sflag, size = 0x4, scoped, tag = 'scoped memory for multi_head_attention.1']
    #allocation5 [shape = 'u8[524288]{0}', space=vmem, size = 0x80000, scoped, tag = 'input window, operand 5, single buffered']
    #allocation6 [shape = 's32[1]{0}', space=sflag, size = 0x4, scoped, tag = 'scoped memory for multi_head_attention.1']
    #allocation7 [shape = 'u8[524288]{0}', space=vmem, size = 0x80000, scoped, tag = 'input window, operand 6, single buffered']
    %14 = vsyncpa [#allocation4], 0
    %15 = vsyncpa [#allocation6], 0
    // Predicated region
    $region2: #{multi_head_attention.1} parent=1 // pred_check
      _
    $region3: #{multi_head_attention.1} parent=1 // pred_check_branch
      %17 = sbr.rel (0) target = $region5
    $region4: #{multi_head_attention.1} parent=1 // pred_region
      _
    $region5: #{multi_head_attention.1} parent=1 // pred_fallthru
      _
    // Predicated region
    $region6: #{multi_head_attention.1} parent=1 // pred_check
      _
    $region7: #{multi_head_attention.1} parent=1 // pred_check_branch
      %19 = sbr.rel (0) target = $region9
    $region8: #{multi_head_attention.1} parent=1 // pred_region
      _
    $region9: #{multi_head_attention.1} parent=1 // pred_fallthru
      _
    // Predicated region
    $region10: #{multi_head_attention.1} parent=1 // pred_check
      _
    $region11: #{multi_head_attention.1} parent=1 // pred_check_branch
      %21 = sbr.rel (0) target = $region13
    $region12: #{multi_head_attention.1} parent=1 // pred_region
      _
    $region13: #{multi_head_attention.1} parent=1 // pred_fallthru
      _
    // Predicated region
    $region14: #{multi_head_attention.1} parent=1 // pred_check
      _
    $region15: #{multi_head_attention.1} parent=1 // pred_check_branch
      %23 = sbr.rel (0) target = $region17
    $region16: #{multi_head_attention.1} parent=1 // pred_region
      _
    $region17: #{multi_head_attention.1} parent=1 // pred_fallthru
      _
    // Predicated region
    $region18: #{multi_head_attention.1} parent=1 // pred_check
      _
    $region19: #{multi_head_attention.1} parent=1 // pred_check_branch
      %25 = sbr.rel (0) target = $region21
    $region20: #{multi_head_attention.1} parent=1 // pred_region
      %s27 = ssub.s32 16384, 16384
      %28 = vsyncadd [#allocation4], %s27
      %s29 = sshll.u32 [#allocation3], 4
      %s30 = int_to_ptr.vmem [resolvable:$true] %s29
      %35 = dma.hbm_to_vmem [thread:$0]  %s4, 16384, %s30, [#allocation4], 256, 256, 16
    $region21: #{multi_head_attention.1} parent=1 // pred_fallthru
      _
    // Predicated region
    $region22: #{multi_head_attention.1} parent=1 // pred_check
      _
    $region23: #{multi_head_attention.1} parent=1 // pred_check_branch
      %37 = sbr.rel (0) target = $region25
    $region24: #{multi_head_attention.1} parent=1 // pred_region
      %s39 = ssub.s32 16384, 16384
      %40 = vsyncadd [#allocation6], %s39
      %s41 = sshll.u32 [#allocation5], 4
      %s42 = int_to_ptr.vmem [resolvable:$true] %s41
      %47 = dma.hbm_to_vmem [thread:$0]  %s5, 16384, %s42, [#allocation6], 256, 256, 16
    $region25: #{multi_head_attention.1} parent=1 // pred_fallthru
      _
    // Predicated region
    $region26: #{multi_head_attention.1} parent=1 // pred_check
      _
    $region27: #{multi_head_attention.1} parent=1 // pred_check_branch
      %49 = sbr.rel (0) target = $region29
    $region28: #{multi_head_attention.1} parent=1 // pred_region
      %s51 = ssub.s32 16384, 16384
      %52 = vsyncadd [#allocation6], %s51
      %s53 = sshll.u32 [#allocation7], 4
      %s54 = int_to_ptr.vmem [resolvable:$true] %s53
      %59 = dma.hbm_to_vmem [thread:$0]  %s6, 16384, %s54, [#allocation6], 256, 256, 16
    $region29: #{multi_head_attention.1} parent=1 // pred_fallthru
      _
    // Predicated region
    $region30: #{multi_head_attention.1} parent=1 // pred_check
      _
    $region31: #{multi_head_attention.1} parent=1 // pred_check_branch
      %61 = sbr.rel (0) target = $region33
    $region32: #{multi_head_attention.1} parent=1 // pred_region
      %62 = dma.done [#allocation4], 16384
    $region33: #{multi_head_attention.1} parent=1 // pred_fallthru
      _
    // Predicated region
    $region34: #{multi_head_attention.1} parent=1 // pred_check
      _
    $region35: #{multi_head_attention.1} parent=1 // pred_check_branch
      %64 = sbr.rel (0) target = $region37
    $region36: #{multi_head_attention.1} parent=1 // pred_region
      %65 = dma.done [#allocation6], 16384
    $region37: #{multi_head_attention.1} parent=1 // pred_fallthru
      _
    // Predicated region
    $region38: #{multi_head_attention.1} parent=1 // pred_check
      _
    $region39: #{multi_head_attention.1} parent=1 // pred_check_branch
      %67 = sbr.rel (0) target = $region41
    $region40: #{multi_head_attention.1} parent=1 // pred_region
      %68 = dma.done [#allocation6], 16384
    $region41: #{multi_head_attention.1} parent=1 // pred_fallthru
      _
    %v70 = vld [vmem:[%s0] sm:$0xff]
    %v71 = vld [vmem:[%s0 + $0x8] sm:$0xff]
    %v72 = vld [vmem:[%s0 + $0x10] sm:$0xff]
    %v73 = vld [vmem:[%s0 + $0x18] sm:$0xff]
    %v74 = vld [vmem:[%s0 + $0x20] sm:$0xff]
    %v75 = vld [vmem:[%s0 + $0x28] sm:$0xff]
    %v76 = vld [vmem:[%s0 + $0x30] sm:$0xff]
    %v77 = vld [vmem:[%s0 + $0x38] sm:$0xff]
    %v78 = vld [vmem:[%s0 + $0x40] sm:$0xf]
    %v79 = vld [vmem:[%s0 + $0x48] sm:$0xf]
    %v80 = vld [vmem:[%s0 + $0x50] sm:$0xf]
    %v81 = vld [vmem:[%s0 + $0x58] sm:$0xf]
    %v82 = vpack.c.bf16 %v74, %v70
    %v83 = vpack.c.bf16 %v75, %v71
    %v84 = vpack.c.bf16 %v76, %v72
    %v85 = vpack.c.bf16 %v77, %v73
    %v86 = vpack.c.bf16 %v78, %v78
    %v87 = vpack.c.bf16 %v79, %v79
    %v88 = vpack.c.bf16 %v80, %v80
    %v89 = vpack.c.bf16 %v81, %v81
    %v90 = vld [vmem:[%s1] sm:$0xff]
    %v91 = vld [vmem:[%s1 + $0x8] sm:$0xff]
    %v92 = vld [vmem:[%s1 + $0x10] sm:$0xff]
    %v93 = vld [vmem:[%s1 + $0x18] sm:$0xff]
    %v94 = vld [vmem:[%s1 + $0x20] sm:$0xff]
    %v95 = vld [vmem:[%s1 + $0x28] sm:$0xff]
    %v96 = vld [vmem:[%s1 + $0x30] sm:$0xff]
    %v97 = vld [vmem:[%s1 + $0x38] sm:$0xff]
    %v98 = vld [vmem:[%s1 + $0x40] sm:$0xf]
    %v99 = vld [vmem:[%s1 + $0x48] sm:$0xf]
    %v100 = vld [vmem:[%s1 + $0x50] sm:$0xf]
    %v101 = vld [vmem:[%s1 + $0x58] sm:$0xf]
    %v102 = vpack.c.bf16 %v94, %v90
    %v103 = vpack.c.bf16 %v95, %v91
    %v104 = vpack.c.bf16 %v96, %v92
    %v105 = vpack.c.bf16 %v97, %v93
    %v106 = vpack.c.bf16 %v98, %v98
    %v107 = vpack.c.bf16 %v99, %v99
    %v108 = vpack.c.bf16 %v100, %v100
    %v109 = vpack.c.bf16 %v101, %v101
    %v110 = vld [vmem:[%s2] sm:$0xff]
    %v111 = vld [vmem:[%s2 + $0x8] sm:$0xff]
    %v112 = vld [vmem:[%s2 + $0x10] sm:$0xff]
    %v113 = vld [vmem:[%s2 + $0x18] sm:$0xff]
    %v114 = vld [vmem:[%s2 + $0x20] sm:$0xff]
    %v115 = vld [vmem:[%s2 + $0x28] sm:$0xff]
    %v116 = vld [vmem:[%s2 + $0x30] sm:$0xff]
    %v117 = vld [vmem:[%s2 + $0x38] sm:$0xff]
    %v118 = vld [vmem:[%s2 + $0x40] sm:$0xf]
    %v119 = vld [vmem:[%s2 + $0x48] sm:$0xf]
    %v120 = vld [vmem:[%s2 + $0x50] sm:$0xf]
    %v121 = vld [vmem:[%s2 + $0x58] sm:$0xf]
    %v122 = vpack.c.bf16 %v114, %v110
    %v123 = vpack.c.bf16 %v115, %v111
    %v124 = vpack.c.bf16 %v116, %v112
    %v125 = vpack.c.bf16 %v117, %v113
    %v126 = vpack.c.bf16 %v118, %v118
    %v127 = vpack.c.bf16 %v119, %v119
    %v128 = vpack.c.bf16 %v120, %v120
    %v129 = vpack.c.bf16 %v121, %v121
    %v130 = vld [vmem:[%s3] sm:$0xff]
    %v131 = vld [vmem:[%s3 + $0x8] sm:$0xff]
    %v132 = vld [vmem:[%s3 + $0x10] sm:$0xff]
    %v133 = vld [vmem:[%s3 + $0x18] sm:$0xff]
    %v134 = vld [vmem:[%s3 + $0x20] sm:$0xff]
    %v135 = vld [vmem:[%s3 + $0x28] sm:$0xff]
    %v136 = vld [vmem:[%s3 + $0x30] sm:$0xff]
    %v137 = vld [vmem:[%s3 + $0x38] sm:$0xff]
    %v138 = vld [vmem:[%s3 + $0x40] sm:$0xff]
    %v139 = vld [vmem:[%s3 + $0x48] sm:$0xff]
    %v140 = vld [vmem:[%s3 + $0x50] sm:$0xff]
    %v141 = vld [vmem:[%s3 + $0x58] sm:$0xff]
    %v142 = vld [vmem:[%s3 + $0x60] sm:$0xff]
    %v143 = vld [vmem:[%s3 + $0x68] sm:$0xff]
    %v144 = vld [vmem:[%s3 + $0x70] sm:$0xff]
    %v145 = vld [vmem:[%s3 + $0x78] sm:$0xff]
    %v146 = vld [vmem:[%s3 + $0x80] sm:$0xff]
    %v147 = vld [vmem:[%s3 + $0x88] sm:$0xff]
    %v148 = vld [vmem:[%s3 + $0x90] sm:$0xff]
    %v149 = vld [vmem:[%s3 + $0x98] sm:$0xff]
    %v150 = vld [vmem:[%s3 + $0xa0] sm:$0xff]
    %v151 = vld [vmem:[%s3 + $0xa8] sm:$0xff]
    %v152 = vld [vmem:[%s3 + $0xb0] sm:$0xff]
    %v153 = vld [vmem:[%s3 + $0xb8] sm:$0xff]
    %v154 = vld [vmem:[%s3 + $0xc0] sm:$0xff]
    %v155 = vld [vmem:[%s3 + $0xc8] sm:$0xff]
    %v156 = vld [vmem:[%s3 + $0xd0] sm:$0xff]
    %v157 = vld [vmem:[%s3 + $0xd8] sm:$0xff]
    %v158 = vld [vmem:[%s3 + $0xe0] sm:$0xff]
    %v159 = vld [vmem:[%s3 + $0xe8] sm:$0xff]
    %v160 = vld [vmem:[%s3 + $0xf0] sm:$0xff]
    %v161 = vld [vmem:[%s3 + $0xf8] sm:$0xff]
    %v162 = vld [vmem:[%s3 + $0x100] sm:$0xff]
    %v163 = vld [vmem:[%s3 + $0x108] sm:$0xff]
    %v164 = vld [vmem:[%s3 + $0x110] sm:$0xff]
    %v165 = vld [vmem:[%s3 + $0x118] sm:$0xff]
    %v166 = vld [vmem:[%s3 + $0x120] sm:$0xff]
    %v167 = vld [vmem:[%s3 + $0x128] sm:$0xff]
    %v168 = vld [vmem:[%s3 + $0x130] sm:$0xff]
    %v169 = vld [vmem:[%s3 + $0x138] sm:$0xff]
    %v170 = vld [vmem:[%s3 + $0x140] sm:$0xff]
    %v171 = vld [vmem:[%s3 + $0x148] sm:$0xff]
    %v172 = vld [vmem:[%s3 + $0x150] sm:$0xff]
    %v173 = vld [vmem:[%s3 + $0x158] sm:$0xff]
    %v174 = vld [vmem:[%s3 + $0x160] sm:$0xff]
    %v175 = vld [vmem:[%s3 + $0x168] sm:$0xff]
    %v176 = vld [vmem:[%s3 + $0x170] sm:$0xff]
    %v177 = vld [vmem:[%s3 + $0x178] sm:$0xff]
    %v178 = vld [vmem:[%s3 + $0x180] sm:$0xff]
    %v179 = vld [vmem:[%s3 + $0x188] sm:$0xff]
    %v180 = vld [vmem:[%s3 + $0x190] sm:$0xff]
    %v181 = vld [vmem:[%s3 + $0x198] sm:$0xff]
    %v182 = vld [vmem:[%s3 + $0x1a0] sm:$0xff]
    %v183 = vld [vmem:[%s3 + $0x1a8] sm:$0xff]
    %v184 = vld [vmem:[%s3 + $0x1b0] sm:$0xff]
    %v185 = vld [vmem:[%s3 + $0x1b8] sm:$0xff]
    %v186 = vld [vmem:[%s3 + $0x1c0] sm:$0xff]
    %v187 = vld [vmem:[%s3 + $0x1c8] sm:$0xff]
    %v188 = vld [vmem:[%s3 + $0x1d0] sm:$0xff]
    %v189 = vld [vmem:[%s3 + $0x1d8] sm:$0xff]
    %v190 = vld [vmem:[%s3 + $0x1e0] sm:$0xff]
    %v191 = vld [vmem:[%s3 + $0x1e8] sm:$0xff]
    %v192 = vld [vmem:[%s3 + $0x1f0] sm:$0xff]
    %v193 = vld [vmem:[%s3 + $0x1f8] sm:$0xff]
    %v194 = vld [vmem:[%s3 + $0x200] sm:$0xff]
    %v195 = vld [vmem:[%s3 + $0x208] sm:$0xff]
    %v196 = vld [vmem:[%s3 + $0x210] sm:$0xff]
    %v197 = vld [vmem:[%s3 + $0x218] sm:$0xff]
    %v198 = vld [vmem:[%s3 + $0x220] sm:$0xff]
    %v199 = vld [vmem:[%s3 + $0x228] sm:$0xff]
    %v200 = vld [vmem:[%s3 + $0x230] sm:$0xff]
    %v201 = vld [vmem:[%s3 + $0x238] sm:$0xff]
    %v202 = vld [vmem:[%s3 + $0x240] sm:$0xff]
    %v203 = vld [vmem:[%s3 + $0x248] sm:$0xff]
    %v204 = vld [vmem:[%s3 + $0x250] sm:$0xff]
    %v205 = vld [vmem:[%s3 + $0x258] sm:$0xff]
    %v206 = vld [vmem:[%s3 + $0x260] sm:$0xff]
    %v207 = vld [vmem:[%s3 + $0x268] sm:$0xff]
    %v208 = vld [vmem:[%s3 + $0x270] sm:$0xff]
    %v209 = vld [vmem:[%s3 + $0x278] sm:$0xff]
    %v210 = vld [vmem:[%s3 + $0x280] sm:$0xff]
    %v211 = vld [vmem:[%s3 + $0x288] sm:$0xff]
    %v212 = vld [vmem:[%s3 + $0x290] sm:$0xff]
    %v213 = vld [vmem:[%s3 + $0x298] sm:$0xff]
    %v214 = vld [vmem:[%s3 + $0x2a0] sm:$0xff]
    %v215 = vld [vmem:[%s3 + $0x2a8] sm:$0xff]
    %v216 = vld [vmem:[%s3 + $0x2b0] sm:$0xff]
    %v217 = vld [vmem:[%s3 + $0x2b8] sm:$0xff]
    %v218 = vld [vmem:[%s3 + $0x2c0] sm:$0xff]
    %v219 = vld [vmem:[%s3 + $0x2c8] sm:$0xff]
    %v220 = vld [vmem:[%s3 + $0x2d0] sm:$0xff]
    %v221 = vld [vmem:[%s3 + $0x2d8] sm:$0xff]
    %v222 = vld [vmem:[%s3 + $0x2e0] sm:$0xff]
    %v223 = vld [vmem:[%s3 + $0x2e8] sm:$0xff]
    %v224 = vld [vmem:[%s3 + $0x2f0] sm:$0xff]
    %v225 = vld [vmem:[%s3 + $0x2f8] sm:$0xff]
    %v226 = vld [vmem:[%s3 + $0x300] sm:$0xff]
    %v227 = vld [vmem:[%s3 + $0x308] sm:$0xff]
    %v228 = vld [vmem:[%s3 + $0x310] sm:$0xff]
    %v229 = vld [vmem:[%s3 + $0x318] sm:$0xff]
    %v230 = vld [vmem:[%s3 + $0x320] sm:$0xff]
    %v231 = vld [vmem:[%s3 + $0x328] sm:$0xff]
    %v232 = vld [vmem:[%s3 + $0x330] sm:$0xff]
    %v233 = vld [vmem:[%s3 + $0x338] sm:$0xff]
    %v234 = vld [vmem:[%s3 + $0x340] sm:$0xff]
    %v235 = vld [vmem:[%s3 + $0x348] sm:$0xff]
    %v236 = vld [vmem:[%s3 + $0x350] sm:$0xff]
    %v237 = vld [vmem:[%s3 + $0x358] sm:$0xff]
    %v238 = vld [vmem:[%s3 + $0x360] sm:$0xff]
    %v239 = vld [vmem:[%s3 + $0x368] sm:$0xff]
    %v240 = vld [vmem:[%s3 + $0x370] sm:$0xff]
    %v241 = vld [vmem:[%s3 + $0x378] sm:$0xff]
    %v242 = vld [vmem:[%s3 + $0x380] sm:$0xff]
    %v243 = vld [vmem:[%s3 + $0x388] sm:$0xff]
    %v244 = vld [vmem:[%s3 + $0x390] sm:$0xff]
    %v245 = vld [vmem:[%s3 + $0x398] sm:$0xff]
    %v246 = vld [vmem:[%s3 + $0x3a0] sm:$0xff]
    %v247 = vld [vmem:[%s3 + $0x3a8] sm:$0xff]
    %v248 = vld [vmem:[%s3 + $0x3b0] sm:$0xff]
    %v249 = vld [vmem:[%s3 + $0x3b8] sm:$0xff]
    %v250 = vld [vmem:[%s3 + $0x3c0] sm:$0xff]
    %v251 = vld [vmem:[%s3 + $0x3c8] sm:$0xff]
    %v252 = vld [vmem:[%s3 + $0x3d0] sm:$0xff]
    %v253 = vld [vmem:[%s3 + $0x3d8] sm:$0xff]
    %v254 = vld [vmem:[%s3 + $0x3e0] sm:$0xff]
    %v255 = vld [vmem:[%s3 + $0x3e8] sm:$0xff]
    %v256 = vld [vmem:[%s3 + $0x3f0] sm:$0xff]
    %v257 = vld [vmem:[%s3 + $0x3f8] sm:$0xff]
    %v386 = vunpack.c.l.b16 %v130
    %v387 = vunpack.c.h.b16 %v130
    %v388 = vunpack.c.l.b16 %v131
    %v389 = vunpack.c.h.b16 %v131
    %v390 = vunpack.c.l.b16 %v132
    %v391 = vunpack.c.h.b16 %v132
    %v392 = vunpack.c.l.b16 %v133
    %v393 = vunpack.c.h.b16 %v133
    %v394 = vunpack.c.l.b16 %v134
    %v395 = vunpack.c.h.b16 %v134
    %v396 = vunpack.c.l.b16 %v135
    %v397 = vunpack.c.h.b16 %v135
    %v398 = vunpack.c.l.b16 %v136
    %v399 = vunpack.c.h.b16 %v136
    %v400 = vunpack.c.l.b16 %v137
    %v401 = vunpack.c.h.b16 %v137
    %v402 = vunpack.c.l.b16 %v138
    %v403 = vunpack.c.h.b16 %v138
    %v404 = vunpack.c.l.b16 %v139
    %v405 = vunpack.c.h.b16 %v139
    %v406 = vunpack.c.l.b16 %v140
    %v407 = vunpack.c.h.b16 %v140
    %v408 = vunpack.c.l.b16 %v141
    %v409 = vunpack.c.h.b16 %v141
    %v410 = vunpack.c.l.b16 %v142
    %v411 = vunpack.c.h.b16 %v142
    %v412 = vunpack.c.l.b16 %v143
    %v413 = vunpack.c.h.b16 %v143
    %v414 = vunpack.c.l.b16 %v144
    %v415 = vunpack.c.h.b16 %v144
    %v416 = vunpack.c.l.b16 %v145
    %v417 = vunpack.c.h.b16 %v145
    %v418 = vunpack.c.l.b16 %v146
    %v419 = vunpack.c.h.b16 %v146
    %v420 = vunpack.c.l.b16 %v147
    %v421 = vunpack.c.h.b16 %v147
    %v422 = vunpack.c.l.b16 %v148
    %v423 = vunpack.c.h.b16 %v148
    %v424 = vunpack.c.l.b16 %v149
    %v425 = vunpack.c.h.b16 %v149
    %v426 = vunpack.c.l.b16 %v150
    %v427 = vunpack.c.h.b16 %v150
    %v428 = vunpack.c.l.b16 %v151
    %v429 = vunpack.c.h.b16 %v151
    %v430 = vunpack.c.l.b16 %v152
    %v431 = vunpack.c.h.b16 %v152
    %v432 = vunpack.c.l.b16 %v153
    %v433 = vunpack.c.h.b16 %v153
    %v434 = vunpack.c.l.b16 %v154
    %v435 = vunpack.c.h.b16 %v154
    %v436 = vunpack.c.l.b16 %v155
    %v437 = vunpack.c.h.b16 %v155
    %v438 = vunpack.c.l.b16 %v156
    %v439 = vunpack.c.h.b16 %v156
    %v440 = vunpack.c.l.b16 %v157
    %v441 = vunpack.c.h.b16 %v157
    %v442 = vunpack.c.l.b16 %v158
    %v443 = vunpack.c.h.b16 %v158
    %v444 = vunpack.c.l.b16 %v159
    %v445 = vunpack.c.h.b16 %v159
    %v446 = vunpack.c.l.b16 %v160
    %v447 = vunpack.c.h.b16 %v160
    %v448 = vunpack.c.l.b16 %v161
    %v449 = vunpack.c.h.b16 %v161
    %v450 = vunpack.c.l.b16 %v162
    %v451 = vunpack.c.h.b16 %v162
    %v452 = vunpack.c.l.b16 %v163
    %v453 = vunpack.c.h.b16 %v163
    %v454 = vunpack.c.l.b16 %v164
    %v455 = vunpack.c.h.b16 %v164
    %v456 = vunpack.c.l.b16 %v165
    %v457 = vunpack.c.h.b16 %v165
    %v458 = vunpack.c.l.b16 %v166
    %v459 = vunpack.c.h.b16 %v166
    %v460 = vunpack.c.l.b16 %v167
    %v461 = vunpack.c.h.b16 %v167
    %v462 = vunpack.c.l.b16 %v168
    %v463 = vunpack.c.h.b16 %v168
    %v464 = vunpack.c.l.b16 %v169
    %v465 = vunpack.c.h.b16 %v169
    %v466 = vunpack.c.l.b16 %v170
    %v467 = vunpack.c.h.b16 %v170
    %v468 = vunpack.c.l.b16 %v171
    %v469 = vunpack.c.h.b16 %v171
    %v470 = vunpack.c.l.b16 %v172
    %v471 = vunpack.c.h.b16 %v172
    %v472 = vunpack.c.l.b16 %v173
    %v473 = vunpack.c.h.b16 %v173
    %v474 = vunpack.c.l.b16 %v174
    %v475 = vunpack.c.h.b16 %v174
    %v476 = vunpack.c.l.b16 %v175
    %v477 = vunpack.c.h.b16 %v175
    %v478 = vunpack.c.l.b16 %v176
    %v479 = vunpack.c.h.b16 %v176
    %v480 = vunpack.c.l.b16 %v177
    %v481 = vunpack.c.h.b16 %v177
    %v482 = vunpack.c.l.b16 %v178
    %v483 = vunpack.c.h.b16 %v178
    %v484 = vunpack.c.l.b16 %v179
    %v485 = vunpack.c.h.b16 %v179
    %v486 = vunpack.c.l.b16 %v180
    %v487 = vunpack.c.h.b16 %v180
    %v488 = vunpack.c.l.b16 %v181
    %v489 = vunpack.c.h.b16 %v181
    %v490 = vunpack.c.l.b16 %v182
    %v491 = vunpack.c.h.b16 %v182
    %v492 = vunpack.c.l.b16 %v183
    %v493 = vunpack.c.h.b16 %v183
    %v494 = vunpack.c.l.b16 %v184
    %v495 = vunpack.c.h.b16 %v184
    %v496 = vunpack.c.l.b16 %v185
    %v497 = vunpack.c.h.b16 %v185
    %v498 = vunpack.c.l.b16 %v186
    %v499 = vunpack.c.h.b16 %v186
    %v500 = vunpack.c.l.b16 %v187
    %v501 = vunpack.c.h.b16 %v187
    %v502 = vunpack.c.l.b16 %v188
    %v503 = vunpack.c.h.b16 %v188
    %v504 = vunpack.c.l.b16 %v189
    %v505 = vunpack.c.h.b16 %v189
    %v506 = vunpack.c.l.b16 %v190
    %v507 = vunpack.c.h.b16 %v190
    %v508 = vunpack.c.l.b16 %v191
    %v509 = vunpack.c.h.b16 %v191
    %v510 = vunpack.c.l.b16 %v192
    %v511 = vunpack.c.h.b16 %v192
    %v512 = vunpack.c.l.b16 %v193
    %v513 = vunpack.c.h.b16 %v193
    %v514 = vunpack.c.l.b16 %v194
    %v515 = vunpack.c.h.b16 %v194
    %v516 = vunpack.c.l.b16 %v195
    %v517 = vunpack.c.h.b16 %v195
    %v518 = vunpack.c.l.b16 %v196
    %v519 = vunpack.c.h.b16 %v196
    %v520 = vunpack.c.l.b16 %v197
    %v521 = vunpack.c.h.b16 %v197
    %v522 = vunpack.c.l.b16 %v198
    %v523 = vunpack.c.h.b16 %v198
    %v524 = vunpack.c.l.b16 %v199
    %v525 = vunpack.c.h.b16 %v199
    %v526 = vunpack.c.l.b16 %v200
    %v527 = vunpack.c.h.b16 %v200
    %v528 = vunpack.c.l.b16 %v201
    %v529 = vunpack.c.h.b16 %v201
    %v530 = vunpack.c.l.b16 %v202
    %v531 = vunpack.c.h.b16 %v202
    %v532 = vunpack.c.l.b16 %v203
    %v533 = vunpack.c.h.b16 %v203
    %v534 = vunpack.c.l.b16 %v204
    %v535 = vunpack.c.h.b16 %v204
    %v536 = vunpack.c.l.b16 %v205
    %v537 = vunpack.c.h.b16 %v205
    %v538 = vunpack.c.l.b16 %v206
    %v539 = vunpack.c.h.b16 %v206
    %v540 = vunpack.c.l.b16 %v207
    %v541 = vunpack.c.h.b16 %v207
    %v542 = vunpack.c.l.b16 %v208
    %v543 = vunpack.c.h.b16 %v208
    %v544 = vunpack.c.l.b16 %v209
    %v545 = vunpack.c.h.b16 %v209
    %v546 = vunpack.c.l.b16 %v210
    %v547 = vunpack.c.h.b16 %v210
    %v548 = vunpack.c.l.b16 %v211
    %v549 = vunpack.c.h.b16 %v211
    %v550 = vunpack.c.l.b16 %v212
    %v551 = vunpack.c.h.b16 %v212
    %v552 = vunpack.c.l.b16 %v213
    %v553 = vunpack.c.h.b16 %v213
    %v554 = vunpack.c.l.b16 %v214
    %v555 = vunpack.c.h.b16 %v214
    %v556 = vunpack.c.l.b16 %v215
    %v557 = vunpack.c.h.b16 %v215
    %v558 = vunpack.c.l.b16 %v216
    %v559 = vunpack.c.h.b16 %v216
    %v560 = vunpack.c.l.b16 %v217
    %v561 = vunpack.c.h.b16 %v217
    %v562 = vunpack.c.l.b16 %v218
    %v563 = vunpack.c.h.b16 %v218
    %v564 = vunpack.c.l.b16 %v219
    %v565 = vunpack.c.h.b16 %v219
    %v566 = vunpack.c.l.b16 %v220
    %v567 = vunpack.c.h.b16 %v220
    %v568 = vunpack.c.l.b16 %v221
    %v569 = vunpack.c.h.b16 %v221
    %v570 = vunpack.c.l.b16 %v222
    %v571 = vunpack.c.h.b16 %v222
    %v572 = vunpack.c.l.b16 %v223
    %v573 = vunpack.c.h.b16 %v223
    %v574 = vunpack.c.l.b16 %v224
    %v575 = vunpack.c.h.b16 %v224
    %v576 = vunpack.c.l.b16 %v225
    %v577 = vunpack.c.h.b16 %v225
    %v578 = vunpack.c.l.b16 %v226
    %v579 = vunpack.c.h.b16 %v226
    %v580 = vunpack.c.l.b16 %v227
    %v581 = vunpack.c.h.b16 %v227
    %v582 = vunpack.c.l.b16 %v228
    %v583 = vunpack.c.h.b16 %v228
    %v584 = vunpack.c.l.b16 %v229
    %v585 = vunpack.c.h.b16 %v229
    %v586 = vunpack.c.l.b16 %v230
    %v587 = vunpack.c.h.b16 %v230
    %v588 = vunpack.c.l.b16 %v231
    %v589 = vunpack.c.h.b16 %v231
    %v590 = vunpack.c.l.b16 %v232
    %v591 = vunpack.c.h.b16 %v232
    %v592 = vunpack.c.l.b16 %v233
    %v593 = vunpack.c.h.b16 %v233
    %v594 = vunpack.c.l.b16 %v234
    %v595 = vunpack.c.h.b16 %v234
    %v596 = vunpack.c.l.b16 %v235
    %v597 = vunpack.c.h.b16 %v235
    %v598 = vunpack.c.l.b16 %v236
    %v599 = vunpack.c.h.b16 %v236
    %v600 = vunpack.c.l.b16 %v237
    %v601 = vunpack.c.h.b16 %v237
    %v602 = vunpack.c.l.b16 %v238
    %v603 = vunpack.c.h.b16 %v238
    %v604 = vunpack.c.l.b16 %v239
    %v605 = vunpack.c.h.b16 %v239
    %v606 = vunpack.c.l.b16 %v240
    %v607 = vunpack.c.h.b16 %v240
    %v608 = vunpack.c.l.b16 %v241
    %v609 = vunpack.c.h.b16 %v241
    %v610 = vunpack.c.l.b16 %v242
    %v611 = vunpack.c.h.b16 %v242
    %v612 = vunpack.c.l.b16 %v243
    %v613 = vunpack.c.h.b16 %v243
    %v614 = vunpack.c.l.b16 %v244
    %v615 = vunpack.c.h.b16 %v244
    %v616 = vunpack.c.l.b16 %v245
    %v617 = vunpack.c.h.b16 %v245
    %v618 = vunpack.c.l.b16 %v246
    %v619 = vunpack.c.h.b16 %v246
    %v620 = vunpack.c.l.b16 %v247
    %v621 = vunpack.c.h.b16 %v247
    %v622 = vunpack.c.l.b16 %v248
    %v623 = vunpack.c.h.b16 %v248
    %v624 = vunpack.c.l.b16 %v249
    %v625 = vunpack.c.h.b16 %v249
    %v626 = vunpack.c.l.b16 %v250
    %v627 = vunpack.c.h.b16 %v250
    %v628 = vunpack.c.l.b16 %v251
    %v629 = vunpack.c.h.b16 %v251
    %v630 = vunpack.c.l.b16 %v252
    %v631 = vunpack.c.h.b16 %v252
    %v632 = vunpack.c.l.b16 %v253
    %v633 = vunpack.c.h.b16 %v253
    %v634 = vunpack.c.l.b16 %v254
    %v635 = vunpack.c.h.b16 %v254
    %v636 = vunpack.c.l.b16 %v255
    %v637 = vunpack.c.h.b16 %v255
    %v638 = vunpack.c.l.b16 %v256
    %v639 = vunpack.c.h.b16 %v256
    %v640 = vunpack.c.l.b16 %v257
    %v641 = vunpack.c.h.b16 %v257
    %v642 = vpack.c.b16 %v390, %v386
    %v643 = vpack.c.b16 %v391, %v387
    %v644 = vpack.c.b16 %v392, %v388
    %v645 = vpack.c.b16 %v393, %v389
    %v646 = vpack.c.b16 %v398, %v394
    %v647 = vpack.c.b16 %v399, %v395
    %v648 = vpack.c.b16 %v400, %v396
    %v649 = vpack.c.b16 %v401, %v397
    %v650 = vpack.c.b16 %v406, %v402
    %v651 = vpack.c.b16 %v407, %v403
    %v652 = vpack.c.b16 %v408, %v404
    %v653 = vpack.c.b16 %v409, %v405
    %v654 = vpack.c.b16 %v414, %v410
    %v655 = vpack.c.b16 %v415, %v411
    %v656 = vpack.c.b16 %v416, %v412
    %v657 = vpack.c.b16 %v417, %v413
    %v658 = vpack.c.b16 %v422, %v418
    %v659 = vpack.c.b16 %v423, %v419
    %v660 = vpack.c.b16 %v424, %v420
    %v661 = vpack.c.b16 %v425, %v421
    %v662 = vpack.c.b16 %v430, %v426
    %v663 = vpack.c.b16 %v431, %v427
    %v664 = vpack.c.b16 %v432, %v428
    %v665 = vpack.c.b16 %v433, %v429
    %v666 = vpack.c.b16 %v438, %v434
    %v667 = vpack.c.b16 %v439, %v435
    %v668 = vpack.c.b16 %v440, %v436
    %v669 = vpack.c.b16 %v441, %v437
    %v670 = vpack.c.b16 %v446, %v442
    %v671 = vpack.c.b16 %v447, %v443
    %v672 = vpack.c.b16 %v448, %v444
    %v673 = vpack.c.b16 %v449, %v445
    %v674 = vpack.c.b16 %v454, %v450
    %v675 = vpack.c.b16 %v455, %v451
    %v676 = vpack.c.b16 %v456, %v452
    %v677 = vpack.c.b16 %v457, %v453
    %v678 = vpack.c.b16 %v462, %v458
    %v679 = vpack.c.b16 %v463, %v459
    %v680 = vpack.c.b16 %v464, %v460
    %v681 = vpack.c.b16 %v465, %v461
    %v682 = vpack.c.b16 %v470, %v466
    %v683 = vpack.c.b16 %v471, %v467
    %v684 = vpack.c.b16 %v472, %v468
    %v685 = vpack.c.b16 %v473, %v469
    %v686 = vpack.c.b16 %v478, %v474
    %v687 = vpack.c.b16 %v479, %v475
    %v688 = vpack.c.b16 %v480, %v476
    %v689 = vpack.c.b16 %v481, %v477
    %v690 = vpack.c.b16 %v486, %v482
    %v691 = vpack.c.b16 %v487, %v483
    %v692 = vpack.c.b16 %v488, %v484
    %v693 = vpack.c.b16 %v489, %v485
    %v694 = vpack.c.b16 %v494, %v490
    %v695 = vpack.c.b16 %v495, %v491
    %v696 = vpack.c.b16 %v496, %v492
    %v697 = vpack.c.b16 %v497, %v493
    %v698 = vpack.c.b16 %v502, %v498
    %v699 = vpack.c.b16 %v503, %v499
    %v700 = vpack.c.b16 %v504, %v500
    %v701 = vpack.c.b16 %v505, %v501
    %v702 = vpack.c.b16 %v510, %v506
    %v703 = vpack.c.b16 %v511, %v507
    %v704 = vpack.c.b16 %v512, %v508
    %v705 = vpack.c.b16 %v513, %v509
    %v706 = vpack.c.b16 %v518, %v514
    %v707 = vpack.c.b16 %v519, %v515
    %v708 = vpack.c.b16 %v520, %v516
    %v709 = vpack.c.b16 %v521, %v517
    %v710 = vpack.c.b16 %v526, %v522
    %v711 = vpack.c.b16 %v527, %v523
    %v712 = vpack.c.b16 %v528, %v524
    %v713 = vpack.c.b16 %v529, %v525
    %v714 = vpack.c.b16 %v534, %v530
    %v715 = vpack.c.b16 %v535, %v531
    %v716 = vpack.c.b16 %v536, %v532
    %v717 = vpack.c.b16 %v537, %v533
    %v718 = vpack.c.b16 %v542, %v538
    %v719 = vpack.c.b16 %v543, %v539
    %v720 = vpack.c.b16 %v544, %v540
    %v721 = vpack.c.b16 %v545, %v541
    %v722 = vpack.c.b16 %v550, %v546
    %v723 = vpack.c.b16 %v551, %v547
    %v724 = vpack.c.b16 %v552, %v548
    %v725 = vpack.c.b16 %v553, %v549
    %v726 = vpack.c.b16 %v558, %v554
    %v727 = vpack.c.b16 %v559, %v555
    %v728 = vpack.c.b16 %v560, %v556
    %v729 = vpack.c.b16 %v561, %v557
    %v730 = vpack.c.b16 %v566, %v562
    %v731 = vpack.c.b16 %v567, %v563
    %v732 = vpack.c.b16 %v568, %v564
    %v733 = vpack.c.b16 %v569, %v565
    %v734 = vpack.c.b16 %v574, %v570
    %v735 = vpack.c.b16 %v575, %v571
    %v736 = vpack.c.b16 %v576, %v572
    %v737 = vpack.c.b16 %v577, %v573
    %v738 = vpack.c.b16 %v582, %v578
    %v739 = vpack.c.b16 %v583, %v579
    %v740 = vpack.c.b16 %v584, %v580
    %v741 = vpack.c.b16 %v585, %v581
    %v742 = vpack.c.b16 %v590, %v586
    %v743 = vpack.c.b16 %v591, %v587
    %v744 = vpack.c.b16 %v592, %v588
    %v745 = vpack.c.b16 %v593, %v589
    %v746 = vpack.c.b16 %v598, %v594
    %v747 = vpack.c.b16 %v599, %v595
    %v748 = vpack.c.b16 %v600, %v596
    %v749 = vpack.c.b16 %v601, %v597
    %v750 = vpack.c.b16 %v606, %v602
    %v751 = vpack.c.b16 %v607, %v603
    %v752 = vpack.c.b16 %v608, %v604
    %v753 = vpack.c.b16 %v609, %v605
    %v754 = vpack.c.b16 %v614, %v610
    %v755 = vpack.c.b16 %v615, %v611
    %v756 = vpack.c.b16 %v616, %v612
    %v757 = vpack.c.b16 %v617, %v613
    %v758 = vpack.c.b16 %v622, %v618
    %v759 = vpack.c.b16 %v623, %v619
    %v760 = vpack.c.b16 %v624, %v620
    %v761 = vpack.c.b16 %v625, %v621
    %v762 = vpack.c.b16 %v630, %v626
    %v763 = vpack.c.b16 %v631, %v627
    %v764 = vpack.c.b16 %v632, %v628
    %v765 = vpack.c.b16 %v633, %v629
    %v766 = vpack.c.b16 %v638, %v634
    %v767 = vpack.c.b16 %v639, %v635
    %v768 = vpack.c.b16 %v640, %v636
    %v769 = vpack.c.b16 %v641, %v637
    %898 = vmatprep.subr.bf16.mxu0 %v643
    %899 = vmatpush1.bf16.msra.mxu0 %v642
    %900 = vmatprep.subr.bf16.mxu0 %v647
    %901 = vmatpush1.bf16.msra.mxu0 %v646
    %902 = vmatprep.subr.bf16.mxu0 %v651
    %903 = vmatpush1.bf16.msra.mxu0 %v650
    %904 = vmatprep.subr.bf16.mxu0 %v655
    %905 = vmatpush1.bf16.msra.mxu0 %v654
    %906 = vmatprep.subr.bf16.mxu0 %v659
    %907 = vmatpush1.bf16.msra.mxu0 %v658
    %908 = vmatprep.subr.bf16.mxu0 %v663
    %909 = vmatpush1.bf16.msra.mxu0 %v662
    %910 = vmatprep.subr.bf16.mxu0 %v667
    %911 = vmatpush1.bf16.msra.mxu0 %v666
    %912 = vmatprep.subr.bf16.mxu0 %v671
    %913 = vmatpush1.bf16.msra.mxu0 %v670
    %914 = vmatprep.subr.bf16.mxu0 %v675
    %915 = vmatpush1.bf16.msra.mxu0 %v674
    %916 = vmatprep.subr.bf16.mxu0 %v679
    %917 = vmatpush1.bf16.msra.mxu0 %v678
    %918 = vmatprep.subr.bf16.mxu0 %v683
    %919 = vmatpush1.bf16.msra.mxu0 %v682
    %920 = vmatprep.subr.bf16.mxu0 %v687
    %921 = vmatpush1.bf16.msra.mxu0 %v686
    %922 = vmatprep.subr.bf16.mxu0 %v691
    %923 = vmatpush1.bf16.msra.mxu0 %v690
    %924 = vmatprep.subr.bf16.mxu0 %v695
    %925 = vmatpush1.bf16.msra.mxu0 %v694
    %926 = vmatprep.subr.bf16.mxu0 %v699
    %927 = vmatpush1.bf16.msra.mxu0 %v698
    %928 = vmatprep.subr.bf16.mxu0 %v703
    %929 = vmatpush1.bf16.msra.mxu0 %v702
    %930 = vmatprep.mubr.bf16.mxu0 %v83
    %931 = vmatmul.mubr.bf16.gmra.mrb[0].mxu0 %v82
    %v932 = vpop.f32.mrb[0].mxu0
    %v933 = vadd.f32 0.0, %v932
    %v934 = vpop.f32.mrb[0].mxu0
    %v935 = vadd.f32 0.0, %v934
    %v936 = vpop.f32.mrb[0].mxu0
    %v937 = vadd.f32 0.0, %v936
    %v938 = vpop.f32.mrb[0].mxu0
    %v939 = vadd.f32 0.0, %v938
    %940 = vmatprep.mubr.bf16.mxu0 %v87
    %941 = vmatmul.mubr.bf16.gmra.mrb[0].mxu0 %v86
    %v942 = vpop.f32.mrb[0].mxu0
    %v943 = vadd.f32 0.0, %v942
    %v944 = vpop.f32.mrb[0].mxu0
    %v945 = vadd.f32 0.0, %v944
    %v946 = vpop.f32.mrb[0].mxu0
    %v947 = vpop.f32.mrb[0].mxu0
    %948 = vdwg.mxu0
    %949 = vmatprep.subr.bf16.mxu0 %v707
    %950 = vmatpush1.bf16.msra.mxu0 %v706
    %951 = vmatprep.subr.bf16.mxu0 %v711
    %952 = vmatpush1.bf16.msra.mxu0 %v710
    %953 = vmatprep.subr.bf16.mxu0 %v715
    %954 = vmatpush1.bf16.msra.mxu0 %v714
    %955 = vmatprep.subr.bf16.mxu0 %v719
    %956 = vmatpush1.bf16.msra.mxu0 %v718
    %957 = vmatprep.subr.bf16.mxu0 %v723
    %958 = vmatpush1.bf16.msra.mxu0 %v722
    %959 = vmatprep.subr.bf16.mxu0 %v727
    %960 = vmatpush1.bf16.msra.mxu0 %v726
    %961 = vmatprep.subr.bf16.mxu0 %v731
    %962 = vmatpush1.bf16.msra.mxu0 %v730
    %963 = vmatprep.subr.bf16.mxu0 %v735
    %964 = vmatpush1.bf16.msra.mxu0 %v734
    %965 = vmatprep.subr.bf16.mxu0 %v739
    %966 = vmatpush1.bf16.msra.mxu0 %v738
    %967 = vmatprep.subr.bf16.mxu0 %v743
    %968 = vmatpush1.bf16.msra.mxu0 %v742
    %969 = vmatprep.subr.bf16.mxu0 %v747
    %970 = vmatpush1.bf16.msra.mxu0 %v746
    %971 = vmatprep.subr.bf16.mxu0 %v751
    %972 = vmatpush1.bf16.msra.mxu0 %v750
    %973 = vmatprep.subr.bf16.mxu0 %v755
    %974 = vmatpush1.bf16.msra.mxu0 %v754
    %975 = vmatprep.subr.bf16.mxu0 %v759
    %976 = vmatpush1.bf16.msra.mxu0 %v758
    %977 = vmatprep.subr.bf16.mxu0 %v763
    %978 = vmatpush1.bf16.msra.mxu0 %v762
    %979 = vmatprep.subr.bf16.mxu0 %v767
    %980 = vmatpush1.bf16.msra.mxu0 %v766
    %981 = vmatprep.mubr.bf16.mxu0 %v85
    %982 = vmatmul.mubr.bf16.gmra.mrb[0].mxu0 %v84
    %v983 = vpop.f32.mrb[0].mxu0
    %v984 = vadd.f32 %v933, %v983
    %v985 = vpop.f32.mrb[0].mxu0
    %v986 = vadd.f32 %v935, %v985
    %v987 = vpop.f32.mrb[0].mxu0
    %v988 = vadd.f32 %v937, %v987
    %v989 = vpop.f32.mrb[0].mxu0
    %v990 = vadd.f32 %v939, %v989
    %991 = vmatprep.mubr.bf16.mxu0 %v89
    %992 = vmatmul.mubr.bf16.gmra.mrb[0].mxu0 %v88
    %v993 = vpop.f32.mrb[0].mxu0
    %v994 = vadd.f32 %v943, %v993
    %v995 = vpop.f32.mrb[0].mxu0
    %v996 = vadd.f32 %v945, %v995
    %v997 = vpop.f32.mrb[0].mxu0
    %v998 = vpop.f32.mrb[0].mxu0
    %999 = vdwg.mxu0
    %1000 = vmatprep.subr.bf16.mxu0 %v645
    %1001 = vmatpush1.bf16.msra.mxu0 %v644
    %1002 = vmatprep.subr.bf16.mxu0 %v649
    %1003 = vmatpush1.bf16.msra.mxu0 %v648
    %1004 = vmatprep.subr.bf16.mxu0 %v653
    %1005 = vmatpush1.bf16.msra.mxu0 %v652
    %1006 = vmatprep.subr.bf16.mxu0 %v657
    %1007 = vmatpush1.bf16.msra.mxu0 %v656
    %1008 = vmatprep.subr.bf16.mxu0 %v661
    %1009 = vmatpush1.bf16.msra.mxu0 %v660
    %1010 = vmatprep.subr.bf16.mxu0 %v665
    %1011 = vmatpush1.bf16.msra.mxu0 %v664
    %1012 = vmatprep.subr.bf16.mxu0 %v669
    %1013 = vmatpush1.bf16.msra.mxu0 %v668
    %1014 = vmatprep.subr.bf16.mxu0 %v673
    %1015 = vmatpush1.bf16.msra.mxu0 %v672
    %1016 = vmatprep.subr.bf16.mxu0 %v677
    %1017 = vmatpush1.bf16.msra.mxu0 %v676
    %1018 = vmatprep.subr.bf16.mxu0 %v681
    %1019 = vmatpush1.bf16.msra.mxu0 %v680
    %1020 = vmatprep.subr.bf16.mxu0 %v685
    %1021 = vmatpush1.bf16.msra.mxu0 %v684
    %1022 = vmatprep.subr.bf16.mxu0 %v689
    %1023 = vmatpush1.bf16.msra.mxu0 %v688
    %1024 = vmatprep.subr.bf16.mxu0 %v693
    %1025 = vmatpush1.bf16.msra.mxu0 %v692
    %1026 = vmatprep.subr.bf16.mxu0 %v697
    %1027 = vmatpush1.bf16.msra.mxu0 %v696
    %1028 = vmatprep.subr.bf16.mxu0 %v701
    %1029 = vmatpush1.bf16.msra.mxu0 %v700
    %1030 = vmatprep.subr.bf16.mxu0 %v705
    %1031 = vmatpush1.bf16.msra.mxu0 %v704
    %1032 = vmatprep.mubr.bf16.mxu0 %v83
    %1033 = vmatmul.mubr.bf16.gmra.mrb[0].mxu0 %v82
    %v1034 = vpop.f32.mrb[0].mxu0
    %v1035 = vadd.f32 0.0, %v1034
    %v1036 = vpop.f32.mrb[0].mxu0
    %v1037 = vadd.f32 0.0, %v1036
    %v1038 = vpop.f32.mrb[0].mxu0
    %v1039 = vadd.f32 0.0, %v1038
    %v1040 = vpop.f32.mrb[0].mxu0
    %v1041 = vadd.f32 0.0, %v1040
    %1042 = vmatprep.mubr.bf16.mxu0 %v87
    %1043 = vmatmul.mubr.bf16.gmra.mrb[0].mxu0 %v86
    %v1044 = vpop.f32.mrb[0].mxu0
    %v1045 = vadd.f32 0.0, %v1044
    %v1046 = vpop.f32.mrb[0].mxu0
    %v1047 = vadd.f32 0.0, %v1046
    %v1048 = vpop.f32.mrb[0].mxu0
    %v1049 = vpop.f32.mrb[0].mxu0
    %1050 = vdwg.mxu0
    %1051 = vmatprep.subr.bf16.mxu0 %v709
    %1052 = vmatpush1.bf16.msra.mxu0 %v708
    %1053 = vmatprep.subr.bf16.mxu0 %v713
    %1054 = vmatpush1.bf16.msra.mxu0 %v712
    %1055 = vmatprep.subr.bf16.mxu0 %v717
    %1056 = vmatpush1.bf16.msra.mxu0 %v716
    %1057 = vmatprep.subr.bf16.mxu0 %v721
    %1058 = vmatpush1.bf16.msra.mxu0 %v720
    %1059 = vmatprep.subr.bf16.mxu0 %v725
    %1060 = vmatpush1.bf16.msra.mxu0 %v724
    %1061 = vmatprep.subr.bf16.mxu0 %v729
    %1062 = vmatpush1.bf16.msra.mxu0 %v728
    %1063 = vmatprep.subr.bf16.mxu0 %v733
    %1064 = vmatpush1.bf16.msra.mxu0 %v732
    %1065 = vmatprep.subr.bf16.mxu0 %v737
    %1066 = vmatpush1.bf16.msra.mxu0 %v736
    %1067 = vmatprep.subr.bf16.mxu0 %v741
    %1068 = vmatpush1.bf16.msra.mxu0 %v740
    %1069 = vmatprep.subr.bf16.mxu0 %v745
    %1070 = vmatpush1.bf16.msra.mxu0 %v744
    %1071 = vmatprep.subr.bf16.mxu0 %v749
    %1072 = vmatpush1.bf16.msra.mxu0 %v748
    %1073 = vmatprep.subr.bf16.mxu0 %v753
    %1074 = vmatpush1.bf16.msra.mxu0 %v752
    %1075 = vmatprep.subr.bf16.mxu0 %v757
    %1076 = vmatpush1.bf16.msra.mxu0 %v756
    %1077 = vmatprep.subr.bf16.mxu0 %v761
    %1078 = vmatpush1.bf16.msra.mxu0 %v760
    %1079 = vmatprep.subr.bf16.mxu0 %v765
    %1080 = vmatpush1.bf16.msra.mxu0 %v764
    %1081 = vmatprep.subr.bf16.mxu0 %v769
    %1082 = vmatpush1.bf16.msra.mxu0 %v768
    %1083 = vmatprep.mubr.bf16.mxu0 %v85
    %1084 = vmatmul.mubr.bf16.gmra.mrb[0].mxu0 %v84
    %v1085 = vpop.f32.mrb[0].mxu0
    %v1086 = vadd.f32 %v1035, %v1085
    %v1087 = vpop.f32.mrb[0].mxu0
    %v1088 = vadd.f32 %v1037, %v1087
    %v1089 = vpop.f32.mrb[0].mxu0
    %v1090 = vadd.f32 %v1039, %v1089
    %v1091 = vpop.f32.mrb[0].mxu0
    %v1092 = vadd.f32 %v1041, %v1091
    %1093 = vmatprep.mubr.bf16.mxu0 %v89
    %1094 = vmatmul.mubr.bf16.gmra.mrb[0].mxu0 %v88
    %v1095 = vpop.f32.mrb[0].mxu0
    %v1096 = vadd.f32 %v1045, %v1095
    %v1097 = vpop.f32.mrb[0].mxu0
    %v1098 = vadd.f32 %v1047, %v1097
    %v1099 = vpop.f32.mrb[0].mxu0
    %v1100 = vpop.f32.mrb[0].mxu0
    %1101 = vdwg.mxu0
    %v1102 = vpack.c.bf16 %v988, %v984
    %v1103 = vpack.c.bf16 %v990, %v986
    %v1104 = vpack.c.bf16 %v1090, %v1086
    %v1105 = vpack.c.bf16 %v1092, %v1088
    %v1106 = vpack.c.bf16 %v994, %v994
    %v1107 = vpack.c.bf16 %v996, %v996
    %v1108 = vpack.c.bf16 %v1096, %v1096
    %v1109 = vpack.c.bf16 %v1098, %v1098
    %v1110 = vld [vmem:[#allocation3] sm:$0xff]
    %v1111 = vld [vmem:[#allocation3 + $0x8] sm:$0xff]
    %v1112 = vld [vmem:[#allocation3 + $0x10] sm:$0xff]
    %v1113 = vld [vmem:[#allocation3 + $0x18] sm:$0xff]
    %v1114 = vld [vmem:[#allocation3 + $0x20] sm:$0xff]
    %v1115 = vld [vmem:[#allocation3 + $0x28] sm:$0xff]
    %v1116 = vld [vmem:[#allocation3 + $0x30] sm:$0xff]
    %v1117 = vld [vmem:[#allocation3 + $0x38] sm:$0xff]
    %v1118 = vld [vmem:[#allocation3 + $0x40] sm:$0xff]
    %v1119 = vld [vmem:[#allocation3 + $0x48] sm:$0xff]
    %v1120 = vld [vmem:[#allocation3 + $0x50] sm:$0xff]
    %v1121 = vld [vmem:[#allocation3 + $0x58] sm:$0xff]
    %v1122 = vld [vmem:[#allocation3 + $0x60] sm:$0xff]
    %v1123 = vld [vmem:[#allocation3 + $0x68] sm:$0xff]
    %v1124 = vld [vmem:[#allocation3 + $0x70] sm:$0xff]
    %v1125 = vld [vmem:[#allocation3 + $0x78] sm:$0xff]
    %v1126 = vld [vmem:[#allocation3 + $0x80] sm:$0xff]
    %v1127 = vld [vmem:[#allocation3 + $0x88] sm:$0xff]
    %v1128 = vld [vmem:[#allocation3 + $0x90] sm:$0xff]
    %v1129 = vld [vmem:[#allocation3 + $0x98] sm:$0xff]
    %v1130 = vld [vmem:[#allocation3 + $0xa0] sm:$0xff]
    %v1131 = vld [vmem:[#allocation3 + $0xa8] sm:$0xff]
    %v1132 = vld [vmem:[#allocation3 + $0xb0] sm:$0xff]
    %v1133 = vld [vmem:[#allocation3 + $0xb8] sm:$0xff]
    %v1134 = vld [vmem:[#allocation3 + $0xc0] sm:$0xff]
    %v1135 = vld [vmem:[#allocation3 + $0xc8] sm:$0xff]
    %v1136 = vld [vmem:[#allocation3 + $0xd0] sm:$0xff]
    %v1137 = vld [vmem:[#allocation3 + $0xd8] sm:$0xff]
    %v1138 = vld [vmem:[#allocation3 + $0xe0] sm:$0xff]
    %v1139 = vld [vmem:[#allocation3 + $0xe8] sm:$0xff]
    %v1140 = vld [vmem:[#allocation3 + $0xf0] sm:$0xff]
    %v1141 = vld [vmem:[#allocation3 + $0xf8] sm:$0xff]
    %v1142 = vld [vmem:[#allocation3 + $0x100] sm:$0xff]
    %v1143 = vld [vmem:[#allocation3 + $0x108] sm:$0xff]
    %v1144 = vld [vmem:[#allocation3 + $0x110] sm:$0xff]
    %v1145 = vld [vmem:[#allocation3 + $0x118] sm:$0xff]
    %v1146 = vld [vmem:[#allocation3 + $0x120] sm:$0xff]
    %v1147 = vld [vmem:[#allocation3 + $0x128] sm:$0xff]
    %v1148 = vld [vmem:[#allocation3 + $0x130] sm:$0xff]
    %v1149 = vld [vmem:[#allocation3 + $0x138] sm:$0xff]
    %v1150 = vld [vmem:[#allocation3 + $0x140] sm:$0xff]
    %v1151 = vld [vmem:[#allocation3 + $0x148] sm:$0xff]
    %v1152 = vld [vmem:[#allocation3 + $0x150] sm:$0xff]
    %v1153 = vld [vmem:[#allocation3 + $0x158] sm:$0xff]
    %v1154 = vld [vmem:[#allocation3 + $0x160] sm:$0xff]
    %v1155 = vld [vmem:[#allocation3 + $0x168] sm:$0xff]
    %v1156 = vld [vmem:[#allocation3 + $0x170] sm:$0xff]
    %v1157 = vld [vmem:[#allocation3 + $0x178] sm:$0xff]
    %v1158 = vld [vmem:[#allocation3 + $0x180] sm:$0xff]
    %v1159 = vld [vmem:[#allocation3 + $0x188] sm:$0xff]
    %v1160 = vld [vmem:[#allocation3 + $0x190] sm:$0xff]
    %v1161 = vld [vmem:[#allocation3 + $0x198] sm:$0xff]
    %v1162 = vld [vmem:[#allocation3 + $0x1a0] sm:$0xff]
    %v1163 = vld [vmem:[#allocation3 + $0x1a8] sm:$0xff]
    %v1164 = vld [vmem:[#allocation3 + $0x1b0] sm:$0xff]
    %v1165 = vld [vmem:[#allocation3 + $0x1b8] sm:$0xff]
    %v1166 = vld [vmem:[#allocation3 + $0x1c0] sm:$0xff]
    %v1167 = vld [vmem:[#allocation3 + $0x1c8] sm:$0xff]
    %v1168 = vld [vmem:[#allocation3 + $0x1d0] sm:$0xff]
    %v1169 = vld [vmem:[#allocation3 + $0x1d8] sm:$0xff]
    %v1170 = vld [vmem:[#allocation3 + $0x1e0] sm:$0xff]
    %v1171 = vld [vmem:[#allocation3 + $0x1e8] sm:$0xff]
    %v1172 = vld [vmem:[#allocation3 + $0x1f0] sm:$0xff]
    %v1173 = vld [vmem:[#allocation3 + $0x1f8] sm:$0xff]
    %v1174 = vld [vmem:[#allocation3 + $0x200] sm:$0xff]
    %v1175 = vld [vmem:[#allocation3 + $0x208] sm:$0xff]
    %v1176 = vld [vmem:[#allocation3 + $0x210] sm:$0xff]
    %v1177 = vld [vmem:[#allocation3 + $0x218] sm:$0xff]
    %v1178 = vld [vmem:[#allocation3 + $0x220] sm:$0xff]
    %v1179 = vld [vmem:[#allocation3 + $0x228] sm:$0xff]
    %v1180 = vld [vmem:[#allocation3 + $0x230] sm:$0xff]
    %v1181 = vld [vmem:[#allocation3 + $0x238] sm:$0xff]
    %v1182 = vld [vmem:[#allocation3 + $0x240] sm:$0xff]
    %v1183 = vld [vmem:[#allocation3 + $0x248] sm:$0xff]
    %v1184 = vld [vmem:[#allocation3 + $0x250] sm:$0xff]
    %v1185 = vld [vmem:[#allocation3 + $0x258] sm:$0xff]
    %v1186 = vld [vmem:[#allocation3 + $0x260] sm:$0xff]
    %v1187 = vld [vmem:[#allocation3 + $0x268] sm:$0xff]
    %v1188 = vld [vmem:[#allocation3 + $0x270] sm:$0xff]
    %v1189 = vld [vmem:[#allocation3 + $0x278] sm:$0xff]
    %v1190 = vld [vmem:[#allocation3 + $0x280] sm:$0xff]
    %v1191 = vld [vmem:[#allocation3 + $0x288] sm:$0xff]
    %v1192 = vld [vmem:[#allocation3 + $0x290] sm:$0xff]
    %v1193 = vld [vmem:[#allocation3 + $0x298] sm:$0xff]
    %v1194 = vld [vmem:[#allocation3 + $0x2a0] sm:$0xff]
    %v1195 = vld [vmem:[#allocation3 + $0x2a8] sm:$0xff]
    %v1196 = vld [vmem:[#allocation3 + $0x2b0] sm:$0xff]
    %v1197 = vld [vmem:[#allocation3 + $0x2b8] sm:$0xff]
    %v1198 = vld [vmem:[#allocation3 + $0x2c0] sm:$0xff]
    %v1199 = vld [vmem:[#allocation3 + $0x2c8] sm:$0xff]
    %v1200 = vld [vmem:[#allocation3 + $0x2d0] sm:$0xff]
    %v1201 = vld [vmem:[#allocation3 + $0x2d8] sm:$0xff]
    %v1202 = vld [vmem:[#allocation3 + $0x2e0] sm:$0xff]
    %v1203 = vld [vmem:[#allocation3 + $0x2e8] sm:$0xff]
    %v1204 = vld [vmem:[#allocation3 + $0x2f0] sm:$0xff]
    %v1205 = vld [vmem:[#allocation3 + $0x2f8] sm:$0xff]
    %v1206 = vld [vmem:[#allocation3 + $0x300] sm:$0xff]
    %v1207 = vld [vmem:[#allocation3 + $0x308] sm:$0xff]
    %v1208 = vld [vmem:[#allocation3 + $0x310] sm:$0xff]
    %v1209 = vld [vmem:[#allocation3 + $0x318] sm:$0xff]
    %v1210 = vld [vmem:[#allocation3 + $0x320] sm:$0xff]
    %v1211 = vld [vmem:[#allocation3 + $0x328] sm:$0xff]
    %v1212 = vld [vmem:[#allocation3 + $0x330] sm:$0xff]
    %v1213 = vld [vmem:[#allocation3 + $0x338] sm:$0xff]
    %v1214 = vld [vmem:[#allocation3 + $0x340] sm:$0xff]
    %v1215 = vld [vmem:[#allocation3 + $0x348] sm:$0xff]
    %v1216 = vld [vmem:[#allocation3 + $0x350] sm:$0xff]
    %v1217 = vld [vmem:[#allocation3 + $0x358] sm:$0xff]
    %v1218 = vld [vmem:[#allocation3 + $0x360] sm:$0xff]
    %v1219 = vld [vmem:[#allocation3 + $0x368] sm:$0xff]
    %v1220 = vld [vmem:[#allocation3 + $0x370] sm:$0xff]
    %v1221 = vld [vmem:[#allocation3 + $0x378] sm:$0xff]
    %v1222 = vld [vmem:[#allocation3 + $0x380] sm:$0xff]
    %v1223 = vld [vmem:[#allocation3 + $0x388] sm:$0xff]
    %v1224 = vld [vmem:[#allocation3 + $0x390] sm:$0xff]
    %v1225 = vld [vmem:[#allocation3 + $0x398] sm:$0xff]
    %v1226 = vld [vmem:[#allocation3 + $0x3a0] sm:$0xff]
    %v1227 = vld [vmem:[#allocation3 + $0x3a8] sm:$0xff]
    %v1228 = vld [vmem:[#allocation3 + $0x3b0] sm:$0xff]
    %v1229 = vld [vmem:[#allocation3 + $0x3b8] sm:$0xff]
    %v1230 = vld [vmem:[#allocation3 + $0x3c0] sm:$0xff]
    %v1231 = vld [vmem:[#allocation3 + $0x3c8] sm:$0xff]
    %v1232 = vld [vmem:[#allocation3 + $0x3d0] sm:$0xff]
    %v1233 = vld [vmem:[#allocation3 + $0x3d8] sm:$0xff]
    %v1234 = vld [vmem:[#allocation3 + $0x3e0] sm:$0xff]
    %v1235 = vld [vmem:[#allocation3 + $0x3e8] sm:$0xff]
    %v1236 = vld [vmem:[#allocation3 + $0x3f0] sm:$0xff]
    %v1237 = vld [vmem:[#allocation3 + $0x3f8] sm:$0xff]
    %v1366 = vunpack.c.l.b16 %v1110
    %v1367 = vunpack.c.h.b16 %v1110
    %v1368 = vunpack.c.l.b16 %v1111
    %v1369 = vunpack.c.h.b16 %v1111
    %v1370 = vunpack.c.l.b16 %v1112
    %v1371 = vunpack.c.h.b16 %v1112
    %v1372 = vunpack.c.l.b16 %v1113
    %v1373 = vunpack.c.h.b16 %v1113
    %v1374 = vunpack.c.l.b16 %v1114
    %v1375 = vunpack.c.h.b16 %v1114
    %v1376 = vunpack.c.l.b16 %v1115
    %v1377 = vunpack.c.h.b16 %v1115
    %v1378 = vunpack.c.l.b16 %v1116
    %v1379 = vunpack.c.h.b16 %v1116
    %v1380 = vunpack.c.l.b16 %v1117
    %v1381 = vunpack.c.h.b16 %v1117
    %v1382 = vunpack.c.l.b16 %v1118
    %v1383 = vunpack.c.h.b16 %v1118
    %v1384 = vunpack.c.l.b16 %v1119
    %v1385 = vunpack.c.h.b16 %v1119
    %v1386 = vunpack.c.l.b16 %v1120
    %v1387 = vunpack.c.h.b16 %v1120
    %v1388 = vunpack.c.l.b16 %v1121
    %v1389 = vunpack.c.h.b16 %v1121
    %v1390 = vunpack.c.l.b16 %v1122
    %v1391 = vunpack.c.h.b16 %v1122
    %v1392 = vunpack.c.l.b16 %v1123
    %v1393 = vunpack.c.h.b16 %v1123
    %v1394 = vunpack.c.l.b16 %v1124
    %v1395 = vunpack.c.h.b16 %v1124
    %v1396 = vunpack.c.l.b16 %v1125
    %v1397 = vunpack.c.h.b16 %v1125
    %v1398 = vunpack.c.l.b16 %v1126
    %v1399 = vunpack.c.h.b16 %v1126
    %v1400 = vunpack.c.l.b16 %v1127
    %v1401 = vunpack.c.h.b16 %v1127
    %v1402 = vunpack.c.l.b16 %v1128
    %v1403 = vunpack.c.h.b16 %v1128
    %v1404 = vunpack.c.l.b16 %v1129
    %v1405 = vunpack.c.h.b16 %v1129
    %v1406 = vunpack.c.l.b16 %v1130
    %v1407 = vunpack.c.h.b16 %v1130
    %v1408 = vunpack.c.l.b16 %v1131
    %v1409 = vunpack.c.h.b16 %v1131
    %v1410 = vunpack.c.l.b16 %v1132
    %v1411 = vunpack.c.h.b16 %v1132
    %v1412 = vunpack.c.l.b16 %v1133
    %v1413 = vunpack.c.h.b16 %v1133
    %v1414 = vunpack.c.l.b16 %v1134
    %v1415 = vunpack.c.h.b16 %v1134
    %v1416 = vunpack.c.l.b16 %v1135
    %v1417 = vunpack.c.h.b16 %v1135
    %v1418 = vunpack.c.l.b16 %v1136
    %v1419 = vunpack.c.h.b16 %v1136
    %v1420 = vunpack.c.l.b16 %v1137
    %v1421 = vunpack.c.h.b16 %v1137
    %v1422 = vunpack.c.l.b16 %v1138
    %v1423 = vunpack.c.h.b16 %v1138
    %v1424 = vunpack.c.l.b16 %v1139
    %v1425 = vunpack.c.h.b16 %v1139
    %v1426 = vunpack.c.l.b16 %v1140
    %v1427 = vunpack.c.h.b16 %v1140
    %v1428 = vunpack.c.l.b16 %v1141
    %v1429 = vunpack.c.h.b16 %v1141
    %v1430 = vunpack.c.l.b16 %v1142
    %v1431 = vunpack.c.h.b16 %v1142
    %v1432 = vunpack.c.l.b16 %v1143
    %v1433 = vunpack.c.h.b16 %v1143
    %v1434 = vunpack.c.l.b16 %v1144
    %v1435 = vunpack.c.h.b16 %v1144
    %v1436 = vunpack.c.l.b16 %v1145
    %v1437 = vunpack.c.h.b16 %v1145
    %v1438 = vunpack.c.l.b16 %v1146
    %v1439 = vunpack.c.h.b16 %v1146
    %v1440 = vunpack.c.l.b16 %v1147
    %v1441 = vunpack.c.h.b16 %v1147
    %v1442 = vunpack.c.l.b16 %v1148
    %v1443 = vunpack.c.h.b16 %v1148
    %v1444 = vunpack.c.l.b16 %v1149
    %v1445 = vunpack.c.h.b16 %v1149
    %v1446 = vunpack.c.l.b16 %v1150
    %v1447 = vunpack.c.h.b16 %v1150
    %v1448 = vunpack.c.l.b16 %v1151
    %v1449 = vunpack.c.h.b16 %v1151
    %v1450 = vunpack.c.l.b16 %v1152
    %v1451 = vunpack.c.h.b16 %v1152
    %v1452 = vunpack.c.l.b16 %v1153
    %v1453 = vunpack.c.h.b16 %v1153
    %v1454 = vunpack.c.l.b16 %v1154
    %v1455 = vunpack.c.h.b16 %v1154
    %v1456 = vunpack.c.l.b16 %v1155
    %v1457 = vunpack.c.h.b16 %v1155
    %v1458 = vunpack.c.l.b16 %v1156
    %v1459 = vunpack.c.h.b16 %v1156
    %v1460 = vunpack.c.l.b16 %v1157
    %v1461 = vunpack.c.h.b16 %v1157
    %v1462 = vunpack.c.l.b16 %v1158
    %v1463 = vunpack.c.h.b16 %v1158
    %v1464 = vunpack.c.l.b16 %v1159
    %v1465 = vunpack.c.h.b16 %v1159
    %v1466 = vunpack.c.l.b16 %v1160
    %v1467 = vunpack.c.h.b16 %v1160
    %v1468 = vunpack.c.l.b16 %v1161
    %v1469 = vunpack.c.h.b16 %v1161
    %v1470 = vunpack.c.l.b16 %v1162
    %v1471 = vunpack.c.h.b16 %v1162
    %v1472 = vunpack.c.l.b16 %v1163
    %v1473 = vunpack.c.h.b16 %v1163
    %v1474 = vunpack.c.l.b16 %v1164
    %v1475 = vunpack.c.h.b16 %v1164
    %v1476 = vunpack.c.l.b16 %v1165
    %v1477 = vunpack.c.h.b16 %v1165
    %v1478 = vunpack.c.l.b16 %v1166
    %v1479 = vunpack.c.h.b16 %v1166
    %v1480 = vunpack.c.l.b16 %v1167
    %v1481 = vunpack.c.h.b16 %v1167
    %v1482 = vunpack.c.l.b16 %v1168
    %v1483 = vunpack.c.h.b16 %v1168
    %v1484 = vunpack.c.l.b16 %v1169
    %v1485 = vunpack.c.h.b16 %v1169
    %v1486 = vunpack.c.l.b16 %v1170
    %v1487 = vunpack.c.h.b16 %v1170
    %v1488 = vunpack.c.l.b16 %v1171
    %v1489 = vunpack.c.h.b16 %v1171
    %v1490 = vunpack.c.l.b16 %v1172
    %v1491 = vunpack.c.h.b16 %v1172
    %v1492 = vunpack.c.l.b16 %v1173
    %v1493 = vunpack.c.h.b16 %v1173
    %v1494 = vunpack.c.l.b16 %v1174
    %v1495 = vunpack.c.h.b16 %v1174
    %v1496 = vunpack.c.l.b16 %v1175
    %v1497 = vunpack.c.h.b16 %v1175
    %v1498 = vunpack.c.l.b16 %v1176
    %v1499 = vunpack.c.h.b16 %v1176
    %v1500 = vunpack.c.l.b16 %v1177
    %v1501 = vunpack.c.h.b16 %v1177
    %v1502 = vunpack.c.l.b16 %v1178
    %v1503 = vunpack.c.h.b16 %v1178
    %v1504 = vunpack.c.l.b16 %v1179
    %v1505 = vunpack.c.h.b16 %v1179
    %v1506 = vunpack.c.l.b16 %v1180
    %v1507 = vunpack.c.h.b16 %v1180
    %v1508 = vunpack.c.l.b16 %v1181
    %v1509 = vunpack.c.h.b16 %v1181
    %v1510 = vunpack.c.l.b16 %v1182
    %v1511 = vunpack.c.h.b16 %v1182
    %v1512 = vunpack.c.l.b16 %v1183
    %v1513 = vunpack.c.h.b16 %v1183
    %v1514 = vunpack.c.l.b16 %v1184
    %v1515 = vunpack.c.h.b16 %v1184
    %v1516 = vunpack.c.l.b16 %v1185
    %v1517 = vunpack.c.h.b16 %v1185
    %v1518 = vunpack.c.l.b16 %v1186
    %v1519 = vunpack.c.h.b16 %v1186
    %v1520 = vunpack.c.l.b16 %v1187
    %v1521 = vunpack.c.h.b16 %v1187
    %v1522 = vunpack.c.l.b16 %v1188
    %v1523 = vunpack.c.h.b16 %v1188
    %v1524 = vunpack.c.l.b16 %v1189
    %v1525 = vunpack.c.h.b16 %v1189
    %v1526 = vunpack.c.l.b16 %v1190
    %v1527 = vunpack.c.h.b16 %v1190
    %v1528 = vunpack.c.l.b16 %v1191
    %v1529 = vunpack.c.h.b16 %v1191
    %v1530 = vunpack.c.l.b16 %v1192
    %v1531 = vunpack.c.h.b16 %v1192
    %v1532 = vunpack.c.l.b16 %v1193
    %v1533 = vunpack.c.h.b16 %v1193
    %v1534 = vunpack.c.l.b16 %v1194
    %v1535 = vunpack.c.h.b16 %v1194
    %v1536 = vunpack.c.l.b16 %v1195
    %v1537 = vunpack.c.h.b16 %v1195
    %v1538 = vunpack.c.l.b16 %v1196
    %v1539 = vunpack.c.h.b16 %v1196
    %v1540 = vunpack.c.l.b16 %v1197
    %v1541 = vunpack.c.h.b16 %v1197
    %v1542 = vunpack.c.l.b16 %v1198
    %v1543 = vunpack.c.h.b16 %v1198
    %v1544 = vunpack.c.l.b16 %v1199
    %v1545 = vunpack.c.h.b16 %v1199
    %v1546 = vunpack.c.l.b16 %v1200
    %v1547 = vunpack.c.h.b16 %v1200
    %v1548 = vunpack.c.l.b16 %v1201
    %v1549 = vunpack.c.h.b16 %v1201
    %v1550 = vunpack.c.l.b16 %v1202
    %v1551 = vunpack.c.h.b16 %v1202
    %v1552 = vunpack.c.l.b16 %v1203
    %v1553 = vunpack.c.h.b16 %v1203
    %v1554 = vunpack.c.l.b16 %v1204
    %v1555 = vunpack.c.h.b16 %v1204
    %v1556 = vunpack.c.l.b16 %v1205
    %v1557 = vunpack.c.h.b16 %v1205
    %v1558 = vunpack.c.l.b16 %v1206
    %v1559 = vunpack.c.h.b16 %v1206
    %v1560 = vunpack.c.l.b16 %v1207
    %v1561 = vunpack.c.h.b16 %v1207
    %v1562 = vunpack.c.l.b16 %v1208
    %v1563 = vunpack.c.h.b16 %v1208
    %v1564 = vunpack.c.l.b16 %v1209
    %v1565 = vunpack.c.h.b16 %v1209
    %v1566 = vunpack.c.l.b16 %v1210
    %v1567 = vunpack.c.h.b16 %v1210
    %v1568 = vunpack.c.l.b16 %v1211
    %v1569 = vunpack.c.h.b16 %v1211
    %v1570 = vunpack.c.l.b16 %v1212
    %v1571 = vunpack.c.h.b16 %v1212
    %v1572 = vunpack.c.l.b16 %v1213
    %v1573 = vunpack.c.h.b16 %v1213
    %v1574 = vunpack.c.l.b16 %v1214
    %v1575 = vunpack.c.h.b16 %v1214
    %v1576 = vunpack.c.l.b16 %v1215
    %v1577 = vunpack.c.h.b16 %v1215
    %v1578 = vunpack.c.l.b16 %v1216
    %v1579 = vunpack.c.h.b16 %v1216
    %v1580 = vunpack.c.l.b16 %v1217
    %v1581 = vunpack.c.h.b16 %v1217
    %v1582 = vunpack.c.l.b16 %v1218
    %v1583 = vunpack.c.h.b16 %v1218
    %v1584 = vunpack.c.l.b16 %v1219
    %v1585 = vunpack.c.h.b16 %v1219
    %v1586 = vunpack.c.l.b16 %v1220
    %v1587 = vunpack.c.h.b16 %v1220
    %v1588 = vunpack.c.l.b16 %v1221
    %v1589 = vunpack.c.h.b16 %v1221
    %v1590 = vunpack.c.l.b16 %v1222
    %v1591 = vunpack.c.h.b16 %v1222
    %v1592 = vunpack.c.l.b16 %v1223
    %v1593 = vunpack.c.h.b16 %v1223
    %v1594 = vunpack.c.l.b16 %v1224
    %v1595 = vunpack.c.h.b16 %v1224
    %v1596 = vunpack.c.l.b16 %v1225
    %v1597 = vunpack.c.h.b16 %v1225
    %v1598 = vunpack.c.l.b16 %v1226
    %v1599 = vunpack.c.h.b16 %v1226
    %v1600 = vunpack.c.l.b16 %v1227
    %v1601 = vunpack.c.h.b16 %v1227
    %v1602 = vunpack.c.l.b16 %v1228
    %v1603 = vunpack.c.h.b16 %v1228
    %v1604 = vunpack.c.l.b16 %v1229
    %v1605 = vunpack.c.h.b16 %v1229
    %v1606 = vunpack.c.l.b16 %v1230
    %v1607 = vunpack.c.h.b16 %v1230
    %v1608 = vunpack.c.l.b16 %v1231
    %v1609 = vunpack.c.h.b16 %v1231
    %v1610 = vunpack.c.l.b16 %v1232
    %v1611 = vunpack.c.h.b16 %v1232
    %v1612 = vunpack.c.l.b16 %v1233
    %v1613 = vunpack.c.h.b16 %v1233
    %v1614 = vunpack.c.l.b16 %v1234
    %v1615 = vunpack.c.h.b16 %v1234
    %v1616 = vunpack.c.l.b16 %v1235
    %v1617 = vunpack.c.h.b16 %v1235
    %v1618 = vunpack.c.l.b16 %v1236
    %v1619 = vunpack.c.h.b16 %v1236
    %v1620 = vunpack.c.l.b16 %v1237
    %v1621 = vunpack.c.h.b16 %v1237
    %v1622 = vpack.c.b16 %v1370, %v1366
    %v1623 = vpack.c.b16 %v1371, %v1367
    %v1624 = vpack.c.b16 %v1372, %v1368
    %v1625 = vpack.c.b16 %v1373, %v1369
    %v1626 = vpack.c.b16 %v1378, %v1374
    %v1627 = vpack.c.b16 %v1379, %v1375
    %v1628 = vpack.c.b16 %v1380, %v1376
    %v1629 = vpack.c.b16 %v1381, %v1377
    %v1630 = vpack.c.b16 %v1386, %v1382
    %v1631 = vpack.c.b16 %v1387, %v1383
    %v1632 = vpack.c.b16 %v1388, %v1384
    %v1633 = vpack.c.b16 %v1389, %v1385
    %v1634 = vpack.c.b16 %v1394, %v1390
    %v1635 = vpack.c.b16 %v1395, %v1391
    %v1636 = vpack.c.b16 %v1396, %v1392
    %v1637 = vpack.c.b16 %v1397, %v1393
    %v1638 = vpack.c.b16 %v1402, %v1398
    %v1639 = vpack.c.b16 %v1403, %v1399
    %v1640 = vpack.c.b16 %v1404, %v1400
    %v1641 = vpack.c.b16 %v1405, %v1401
    %v1642 = vpack.c.b16 %v1410, %v1406
    %v1643 = vpack.c.b16 %v1411, %v1407
    %v1644 = vpack.c.b16 %v1412, %v1408
    %v1645 = vpack.c.b16 %v1413, %v1409
    %v1646 = vpack.c.b16 %v1418, %v1414
    %v1647 = vpack.c.b16 %v1419, %v1415
    %v1648 = vpack.c.b16 %v1420, %v1416
    %v1649 = vpack.c.b16 %v1421, %v1417
    %v1650 = vpack.c.b16 %v1426, %v1422
    %v1651 = vpack.c.b16 %v1427, %v1423
    %v1652 = vpack.c.b16 %v1428, %v1424
    %v1653 = vpack.c.b16 %v1429, %v1425
    %v1654 = vpack.c.b16 %v1434, %v1430
    %v1655 = vpack.c.b16 %v1435, %v1431
    %v1656 = vpack.c.b16 %v1436, %v1432
    %v1657 = vpack.c.b16 %v1437, %v1433
    %v1658 = vpack.c.b16 %v1442, %v1438
    %v1659 = vpack.c.b16 %v1443, %v1439
    %v1660 = vpack.c.b16 %v1444, %v1440
    %v1661 = vpack.c.b16 %v1445, %v1441
    %v1662 = vpack.c.b16 %v1450, %v1446
    %v1663 = vpack.c.b16 %v1451, %v1447
    %v1664 = vpack.c.b16 %v1452, %v1448
    %v1665 = vpack.c.b16 %v1453, %v1449
    %v1666 = vpack.c.b16 %v1458, %v1454
    %v1667 = vpack.c.b16 %v1459, %v1455
    %v1668 = vpack.c.b16 %v1460, %v1456
    %v1669 = vpack.c.b16 %v1461, %v1457
    %v1670 = vpack.c.b16 %v1466, %v1462
    %v1671 = vpack.c.b16 %v1467, %v1463
    %v1672 = vpack.c.b16 %v1468, %v1464
    %v1673 = vpack.c.b16 %v1469, %v1465
    %v1674 = vpack.c.b16 %v1474, %v1470
    %v1675 = vpack.c.b16 %v1475, %v1471
    %v1676 = vpack.c.b16 %v1476, %v1472
    %v1677 = vpack.c.b16 %v1477, %v1473
    %v1678 = vpack.c.b16 %v1482, %v1478
    %v1679 = vpack.c.b16 %v1483, %v1479
    %v1680 = vpack.c.b16 %v1484, %v1480
    %v1681 = vpack.c.b16 %v1485, %v1481
    %v1682 = vpack.c.b16 %v1490, %v1486
    %v1683 = vpack.c.b16 %v1491, %v1487
    %v1684 = vpack.c.b16 %v1492, %v1488
    %v1685 = vpack.c.b16 %v1493, %v1489
    %v1686 = vpack.c.b16 %v1498, %v1494
    %v1687 = vpack.c.b16 %v1499, %v1495
    %v1688 = vpack.c.b16 %v1500, %v1496
    %v1689 = vpack.c.b16 %v1501, %v1497
    %v1690 = vpack.c.b16 %v1506, %v1502
    %v1691 = vpack.c.b16 %v1507, %v1503
    %v1692 = vpack.c.b16 %v1508, %v1504
    %v1693 = vpack.c.b16 %v1509, %v1505
    %v1694 = vpack.c.b16 %v1514, %v1510
    %v1695 = vpack.c.b16 %v1515, %v1511
    %v1696 = vpack.c.b16 %v1516, %v1512
    %v1697 = vpack.c.b16 %v1517, %v1513
    %v1698 = vpack.c.b16 %v1522, %v1518
    %v1699 = vpack.c.b16 %v1523, %v1519
    %v1700 = vpack.c.b16 %v1524, %v1520
    %v1701 = vpack.c.b16 %v1525, %v1521
    %v1702 = vpack.c.b16 %v1530, %v1526
    %v1703 = vpack.c.b16 %v1531, %v1527
    %v1704 = vpack.c.b16 %v1532, %v1528
    %v1705 = vpack.c.b16 %v1533, %v1529
    %v1706 = vpack.c.b16 %v1538, %v1534
    %v1707 = vpack.c.b16 %v1539, %v1535
    %v1708 = vpack.c.b16 %v1540, %v1536
    %v1709 = vpack.c.b16 %v1541, %v1537
    %v1710 = vpack.c.b16 %v1546, %v1542
    %v1711 = vpack.c.b16 %v1547, %v1543
    %v1712 = vpack.c.b16 %v1548, %v1544
    %v1713 = vpack.c.b16 %v1549, %v1545
    %v1714 = vpack.c.b16 %v1554, %v1550
    %v1715 = vpack.c.b16 %v1555, %v1551
    %v1716 = vpack.c.b16 %v1556, %v1552
    %v1717 = vpack.c.b16 %v1557, %v1553
    %v1718 = vpack.c.b16 %v1562, %v1558
    %v1719 = vpack.c.b16 %v1563, %v1559
    %v1720 = vpack.c.b16 %v1564, %v1560
    %v1721 = vpack.c.b16 %v1565, %v1561
    %v1722 = vpack.c.b16 %v1570, %v1566
    %v1723 = vpack.c.b16 %v1571, %v1567
    %v1724 = vpack.c.b16 %v1572, %v1568
    %v1725 = vpack.c.b16 %v1573, %v1569
    %v1726 = vpack.c.b16 %v1578, %v1574
    %v1727 = vpack.c.b16 %v1579, %v1575
    %v1728 = vpack.c.b16 %v1580, %v1576
    %v1729 = vpack.c.b16 %v1581, %v1577
    %v1730 = vpack.c.b16 %v1586, %v1582
    %v1731 = vpack.c.b16 %v1587, %v1583
    %v1732 = vpack.c.b16 %v1588, %v1584
    %v1733 = vpack.c.b16 %v1589, %v1585
    %v1734 = vpack.c.b16 %v1594, %v1590
    %v1735 = vpack.c.b16 %v1595, %v1591
    %v1736 = vpack.c.b16 %v1596, %v1592
    %v1737 = vpack.c.b16 %v1597, %v1593
    %v1738 = vpack.c.b16 %v1602, %v1598
    %v1739 = vpack.c.b16 %v1603, %v1599
    %v1740 = vpack.c.b16 %v1604, %v1600
    %v1741 = vpack.c.b16 %v1605, %v1601
    %v1742 = vpack.c.b16 %v1610, %v1606
    %v1743 = vpack.c.b16 %v1611, %v1607
    %v1744 = vpack.c.b16 %v1612, %v1608
    %v1745 = vpack.c.b16 %v1613, %v1609
    %v1746 = vpack.c.b16 %v1618, %v1614
    %v1747 = vpack.c.b16 %v1619, %v1615
    %v1748 = vpack.c.b16 %v1620, %v1616
    %v1749 = vpack.c.b16 %v1621, %v1617
    %1878 = vmatprep.subr.bf16.mxu0 %v1623
    %1879 = vmatpush1.bf16.msra.mxu0 %v1622
    %1880 = vmatprep.subr.bf16.mxu0 %v1627
    %1881 = vmatpush1.bf16.msra.mxu0 %v1626
    %1882 = vmatprep.subr.bf16.mxu0 %v1631
    %1883 = vmatpush1.bf16.msra.mxu0 %v1630
    %1884 = vmatprep.subr.bf16.mxu0 %v1635
    %1885 = vmatpush1.bf16.msra.mxu0 %v1634
    %1886 = vmatprep.subr.bf16.mxu0 %v1639
    %1887 = vmatpush1.bf16.msra.mxu0 %v1638
    %1888 = vmatprep.subr.bf16.mxu0 %v1643
    %1889 = vmatpush1.bf16.msra.mxu0 %v1642
    %1890 = vmatprep.subr.bf16.mxu0 %v1647
    %1891 = vmatpush1.bf16.msra.mxu0 %v1646
    %1892 = vmatprep.subr.bf16.mxu0 %v1651
    %1893 = vmatpush1.bf16.msra.mxu0 %v1650
    %1894 = vmatprep.subr.bf16.mxu0 %v1655
    %1895 = vmatpush1.bf16.msra.mxu0 %v1654
    %1896 = vmatprep.subr.bf16.mxu0 %v1659
    %1897 = vmatpush1.bf16.msra.mxu0 %v1658
    %1898 = vmatprep.subr.bf16.mxu0 %v1663
    %1899 = vmatpush1.bf16.msra.mxu0 %v1662
    %1900 = vmatprep.subr.bf16.mxu0 %v1667
    %1901 = vmatpush1.bf16.msra.mxu0 %v1666
    %1902 = vmatprep.subr.bf16.mxu0 %v1671
    %1903 = vmatpush1.bf16.msra.mxu0 %v1670
    %1904 = vmatprep.subr.bf16.mxu0 %v1675
    %1905 = vmatpush1.bf16.msra.mxu0 %v1674
    %1906 = vmatprep.subr.bf16.mxu0 %v1679
    %1907 = vmatpush1.bf16.msra.mxu0 %v1678
    %1908 = vmatprep.subr.bf16.mxu0 %v1683
    %1909 = vmatpush1.bf16.msra.mxu0 %v1682
    %1910 = vmatprep.mubr.bf16.mxu0 %v103
    %1911 = vmatmul.mubr.bf16.gmra.mrb[0].mxu0 %v102
    %v1912 = vpop.f32.mrb[0].mxu0
    %v1913 = vadd.f32 0.0, %v1912
    %v1914 = vpop.f32.mrb[0].mxu0
    %v1915 = vadd.f32 0.0, %v1914
    %v1916 = vpop.f32.mrb[0].mxu0
    %v1917 = vadd.f32 0.0, %v1916
    %v1918 = vpop.f32.mrb[0].mxu0
    %v1919 = vadd.f32 0.0, %v1918
    %1920 = vmatprep.mubr.bf16.mxu0 %v107
    %1921 = vmatmul.mubr.bf16.gmra.mrb[0].mxu0 %v106
    %v1922 = vpop.f32.mrb[0].mxu0
    %v1923 = vadd.f32 0.0, %v1922
    %v1924 = vpop.f32.mrb[0].mxu0
    %v1925 = vadd.f32 0.0, %v1924
    %v1926 = vpop.f32.mrb[0].mxu0
    %v1927 = vpop.f32.mrb[0].mxu0
    %1928 = vdwg.mxu0
    %1929 = vmatprep.subr.bf16.mxu0 %v1687
    %1930 = vmatpush1.bf16.msra.mxu0 %v1686
    %1931 = vmatprep.subr.bf16.mxu0 %v1691
    %1932 = vmatpush1.bf16.msra.mxu0 %v1690
    %1933 = vmatprep.subr.bf16.mxu0 %v1695
    %1934 = vmatpush1.bf16.msra.mxu0 %v1694
    %1935 = vmatprep.subr.bf16.mxu0 %v1699
    %1936 = vmatpush1.bf16.msra.mxu0 %v1698
    %1937 = vmatprep.subr.bf16.mxu0 %v1703
    %1938 = vmatpush1.bf16.msra.mxu0 %v1702
    %1939 = vmatprep.subr.bf16.mxu0 %v1707
    %1940 = vmatpush1.bf16.msra.mxu0 %v1706
    %1941 = vmatprep.subr.bf16.mxu0 %v1711
    %1942 = vmatpush1.bf16.msra.mxu0 %v1710
    %1943 = vmatprep.subr.bf16.mxu0 %v1715
    %1944 = vmatpush1.bf16.msra.mxu0 %v1714
    %1945 = vmatprep.subr.bf16.mxu0 %v1719
    %1946 = vmatpush1.bf16.msra.mxu0 %v1718
    %1947 = vmatprep.subr.bf16.mxu0 %v1723
    %1948 = vmatpush1.bf16.msra.mxu0 %v1722
    %1949 = vmatprep.subr.bf16.mxu0 %v1727
    %1950 = vmatpush1.bf16.msra.mxu0 %v1726
    %1951 = vmatprep.subr.bf16.mxu0 %v1731
    %1952 = vmatpush1.bf16.msra.mxu0 %v1730
    %1953 = vmatprep.subr.bf16.mxu0 %v1735
    %1954 = vmatpush1.bf16.msra.mxu0 %v1734
    %1955 = vmatprep.subr.bf16.mxu0 %v1739
    %1956 = vmatpush1.bf16.msra.mxu0 %v1738
    %1957 = vmatprep.subr.bf16.mxu0 %v1743
    %1958 = vmatpush1.bf16.msra.mxu0 %v1742
    %1959 = vmatprep.subr.bf16.mxu0 %v1747
    %1960 = vmatpush1.bf16.msra.mxu0 %v1746
    %1961 = vmatprep.mubr.bf16.mxu0 %v105
    %1962 = vmatmul.mubr.bf16.gmra.mrb[0].mxu0 %v104
    %v1963 = vpop.f32.mrb[0].mxu0
    %v1964 = vadd.f32 %v1913, %v1963
    %v1965 = vpop.f32.mrb[0].mxu0
    %v1966 = vadd.f32 %v1915, %v1965
    %v1967 = vpop.f32.mrb[0].mxu0
    %v1968 = vadd.f32 %v1917, %v1967
    %v1969 = vpop.f32.mrb[0].mxu0
    %v1970 = vadd.f32 %v1919, %v1969
    %1971 = vmatprep.mubr.bf16.mxu0 %v109
    %1972 = vmatmul.mubr.bf16.gmra.mrb[0].mxu0 %v108
    %v1973 = vpop.f32.mrb[0].mxu0
    %v1974 = vadd.f32 %v1923, %v1973
    %v1975 = vpop.f32.mrb[0].mxu0
    %v1976 = vadd.f32 %v1925, %v1975
    %v1977 = vpop.f32.mrb[0].mxu0
    %v1978 = vpop.f32.mrb[0].mxu0
    %1979 = vdwg.mxu0
    %1980 = vmatprep.subr.bf16.mxu0 %v1625
    %1981 = vmatpush1.bf16.msra.mxu0 %v1624
    %1982 = vmatprep.subr.bf16.mxu0 %v1629
    %1983 = vmatpush1.bf16.msra.mxu0 %v1628
    %1984 = vmatprep.subr.bf16.mxu0 %v1633
    %1985 = vmatpush1.bf16.msra.mxu0 %v1632
    %1986 = vmatprep.subr.bf16.mxu0 %v1637
    %1987 = vmatpush1.bf16.msra.mxu0 %v1636
    %1988 = vmatprep.subr.bf16.mxu0 %v1641
    %1989 = vmatpush1.bf16.msra.mxu0 %v1640
    %1990 = vmatprep.subr.bf16.mxu0 %v1645
    %1991 = vmatpush1.bf16.msra.mxu0 %v1644
    %1992 = vmatprep.subr.bf16.mxu0 %v1649
    %1993 = vmatpush1.bf16.msra.mxu0 %v1648
    %1994 = vmatprep.subr.bf16.mxu0 %v1653
    %1995 = vmatpush1.bf16.msra.mxu0 %v1652
    %1996 = vmatprep.subr.bf16.mxu0 %v1657
    %1997 = vmatpush1.bf16.msra.mxu0 %v1656
    %1998 = vmatprep.subr.bf16.mxu0 %v1661
    %1999 = vmatpush1.bf16.msra.mxu0 %v1660
    %2000 = vmatprep.subr.bf16.mxu0 %v1665
    %2001 = vmatpush1.bf16.msra.mxu0 %v1664
    %2002 = vmatprep.subr.bf16.mxu0 %v1669
    %2003 = vmatpush1.bf16.msra.mxu0 %v1668
    %2004 = vmatprep.subr.bf16.mxu0 %v1673
    %2005 = vmatpush1.bf16.msra.mxu0 %v1672
    %2006 = vmatprep.subr.bf16.mxu0 %v1677
    %2007 = vmatpush1.bf16.msra.mxu0 %v1676
    %2008 = vmatprep.subr.bf16.mxu0 %v1681
    %2009 = vmatpush1.bf16.msra.mxu0 %v1680
    %2010 = vmatprep.subr.bf16.mxu0 %v1685
    %2011 = vmatpush1.bf16.msra.mxu0 %v1684
    %2012 = vmatprep.mubr.bf16.mxu0 %v103
    %2013 = vmatmul.mubr.bf16.gmra.mrb[0].mxu0 %v102
    %v2014 = vpop.f32.mrb[0].mxu0
    %v2015 = vadd.f32 0.0, %v2014
    %v2016 = vpop.f32.mrb[0].mxu0
    %v2017 = vadd.f32 0.0, %v2016
    %v2018 = vpop.f32.mrb[0].mxu0
    %v2019 = vadd.f32 0.0, %v2018
    %v2020 = vpop.f32.mrb[0].mxu0
    %v2021 = vadd.f32 0.0, %v2020
    %2022 = vmatprep.mubr.bf16.mxu0 %v107
    %2023 = vmatmul.mubr.bf16.gmra.mrb[0].mxu0 %v106
    %v2024 = vpop.f32.mrb[0].mxu0
    %v2025 = vadd.f32 0.0, %v2024
    %v2026 = vpop.f32.mrb[0].mxu0
    %v2027 = vadd.f32 0.0, %v2026
    %v2028 = vpop.f32.mrb[0].mxu0
    %v2029 = vpop.f32.mrb[0].mxu0
    %2030 = vdwg.mxu0
    %2031 = vmatprep.subr.bf16.mxu0 %v1689
    %2032 = vmatpush1.bf16.msra.mxu0 %v1688
    %2033 = vmatprep.subr.bf16.mxu0 %v1693
    %2034 = vmatpush1.bf16.msra.mxu0 %v1692
    %2035 = vmatprep.subr.bf16.mxu0 %v1697
    %2036 = vmatpush1.bf16.msra.mxu0 %v1696
    %2037 = vmatprep.subr.bf16.mxu0 %v1701
    %2038 = vmatpush1.bf16.msra.mxu0 %v1700
    %2039 = vmatprep.subr.bf16.mxu0 %v1705
    %2040 = vmatpush1.bf16.msra.mxu0 %v1704
    %2041 = vmatprep.subr.bf16.mxu0 %v1709
    %2042 = vmatpush1.bf16.msra.mxu0 %v1708
    %2043 = vmatprep.subr.bf16.mxu0 %v1713
    %2044 = vmatpush1.bf16.msra.mxu0 %v1712
    %2045 = vmatprep.subr.bf16.mxu0 %v1717
    %2046 = vmatpush1.bf16.msra.mxu0 %v1716
    %2047 = vmatprep.subr.bf16.mxu0 %v1721
    %2048 = vmatpush1.bf16.msra.mxu0 %v1720
    %2049 = vmatprep.subr.bf16.mxu0 %v1725
    %2050 = vmatpush1.bf16.msra.mxu0 %v1724
    %2051 = vmatprep.subr.bf16.mxu0 %v1729
    %2052 = vmatpush1.bf16.msra.mxu0 %v1728
    %2053 = vmatprep.subr.bf16.mxu0 %v1733
    %2054 = vmatpush1.bf16.msra.mxu0 %v1732
    %2055 = vmatprep.subr.bf16.mxu0 %v1737
    %2056 = vmatpush1.bf16.msra.mxu0 %v1736
    %2057 = vmatprep.subr.bf16.mxu0 %v1741
    %2058 = vmatpush1.bf16.msra.mxu0 %v1740
    %2059 = vmatprep.subr.bf16.mxu0 %v1745
    %2060 = vmatpush1.bf16.msra.mxu0 %v1744
    %2061 = vmatprep.subr.bf16.mxu0 %v1749
    %2062 = vmatpush1.bf16.msra.mxu0 %v1748
    %2063 = vmatprep.mubr.bf16.mxu0 %v105
    %2064 = vmatmul.mubr.bf16.gmra.mrb[0].mxu0 %v104
    %v2065 = vpop.f32.mrb[0].mxu0
    %v2066 = vadd.f32 %v2015, %v2065
    %v2067 = vpop.f32.mrb[0].mxu0
    %v2068 = vadd.f32 %v2017, %v2067
    %v2069 = vpop.f32.mrb[0].mxu0
    %v2070 = vadd.f32 %v2019, %v2069
    %v2071 = vpop.f32.mrb[0].mxu0
    %v2072 = vadd.f32 %v2021, %v2071
    %2073 = vmatprep.mubr.bf16.mxu0 %v109
    %2074 = vmatmul.mubr.bf16.gmra.mrb[0].mxu0 %v108
    %v2075 = vpop.f32.mrb[0].mxu0
    %v2076 = vadd.f32 %v2025, %v2075
    %v2077 = vpop.f32.mrb[0].mxu0
    %v2078 = vadd.f32 %v2027, %v2077
    %v2079 = vpop.f32.mrb[0].mxu0
    %v2080 = vpop.f32.mrb[0].mxu0
    %2081 = vdwg.mxu0
    %v2082 = vpack.c.bf16 %v1968, %v1964
    %v2083 = vpack.c.bf16 %v1970, %v1966
    %v2084 = vpack.c.bf16 %v2070, %v2066
    %v2085 = vpack.c.bf16 %v2072, %v2068
    %v2086 = vpack.c.bf16 %v1974, %v1974
    %v2087 = vpack.c.bf16 %v1976, %v1976
    %v2088 = vpack.c.bf16 %v2076, %v2076
    %v2089 = vpack.c.bf16 %v2078, %v2078
    %v2090 = vld [vmem:[#allocation5] sm:$0xff]
    %v2091 = vld [vmem:[#allocation5 + $0x8] sm:$0xff]
    %v2092 = vld [vmem:[#allocation5 + $0x10] sm:$0xff]
    %v2093 = vld [vmem:[#allocation5 + $0x18] sm:$0xff]
    %v2094 = vld [vmem:[#allocation5 + $0x20] sm:$0xff]
    %v2095 = vld [vmem:[#allocation5 + $0x28] sm:$0xff]
    %v2096 = vld [vmem:[#allocation5 + $0x30] sm:$0xff]
    %v2097 = vld [vmem:[#allocation5 + $0x38] sm:$0xff]
    %v2098 = vld [vmem:[#allocation5 + $0x40] sm:$0xff]
    %v2099 = vld [vmem:[#allocation5 + $0x48] sm:$0xff]
    %v2100 = vld [vmem:[#allocation5 + $0x50] sm:$0xff]
    %v2101 = vld [vmem:[#allocation5 + $0x58] sm:$0xff]
    %v2102 = vld [vmem:[#allocation5 + $0x60] sm:$0xff]
    %v2103 = vld [vmem:[#allocation5 + $0x68] sm:$0xff]
    %v2104 = vld [vmem:[#allocation5 + $0x70] sm:$0xff]
    %v2105 = vld [vmem:[#allocation5 + $0x78] sm:$0xff]
    %v2106 = vld [vmem:[#allocation5 + $0x80] sm:$0xff]
    %v2107 = vld [vmem:[#allocation5 + $0x88] sm:$0xff]
    %v2108 = vld [vmem:[#allocation5 + $0x90] sm:$0xff]
    %v2109 = vld [vmem:[#allocation5 + $0x98] sm:$0xff]
    %v2110 = vld [vmem:[#allocation5 + $0xa0] sm:$0xff]
    %v2111 = vld [vmem:[#allocation5 + $0xa8] sm:$0xff]
    %v2112 = vld [vmem:[#allocation5 + $0xb0] sm:$0xff]
    %v2113 = vld [vmem:[#allocation5 + $0xb8] sm:$0xff]
    %v2114 = vld [vmem:[#allocation5 + $0xc0] sm:$0xff]
    %v2115 = vld [vmem:[#allocation5 + $0xc8] sm:$0xff]
    %v2116 = vld [vmem:[#allocation5 + $0xd0] sm:$0xff]
    %v2117 = vld [vmem:[#allocation5 + $0xd8] sm:$0xff]
    %v2118 = vld [vmem:[#allocation5 + $0xe0] sm:$0xff]
    %v2119 = vld [vmem:[#allocation5 + $0xe8] sm:$0xff]
    %v2120 = vld [vmem:[#allocation5 + $0xf0] sm:$0xff]
    %v2121 = vld [vmem:[#allocation5 + $0xf8] sm:$0xff]
    %v2122 = vld [vmem:[#allocation5 + $0x100] sm:$0xff]
    %v2123 = vld [vmem:[#allocation5 + $0x108] sm:$0xff]
    %v2124 = vld [vmem:[#allocation5 + $0x110] sm:$0xff]
    %v2125 = vld [vmem:[#allocation5 + $0x118] sm:$0xff]
    %v2126 = vld [vmem:[#allocation5 + $0x120] sm:$0xff]
    %v2127 = vld [vmem:[#allocation5 + $0x128] sm:$0xff]
    %v2128 = vld [vmem:[#allocation5 + $0x130] sm:$0xff]
    %v2129 = vld [vmem:[#allocation5 + $0x138] sm:$0xff]
    %v2130 = vld [vmem:[#allocation5 + $0x140] sm:$0xff]
    %v2131 = vld [vmem:[#allocation5 + $0x148] sm:$0xff]
    %v2132 = vld [vmem:[#allocation5 + $0x150] sm:$0xff]
    %v2133 = vld [vmem:[#allocation5 + $0x158] sm:$0xff]
    %v2134 = vld [vmem:[#allocation5 + $0x160] sm:$0xff]
    %v2135 = vld [vmem:[#allocation5 + $0x168] sm:$0xff]
    %v2136 = vld [vmem:[#allocation5 + $0x170] sm:$0xff]
    %v2137 = vld [vmem:[#allocation5 + $0x178] sm:$0xff]
    %v2138 = vld [vmem:[#allocation5 + $0x180] sm:$0xff]
    %v2139 = vld [vmem:[#allocation5 + $0x188] sm:$0xff]
    %v2140 = vld [vmem:[#allocation5 + $0x190] sm:$0xff]
    %v2141 = vld [vmem:[#allocation5 + $0x198] sm:$0xff]
    %v2142 = vld [vmem:[#allocation5 + $0x1a0] sm:$0xff]
    %v2143 = vld [vmem:[#allocation5 + $0x1a8] sm:$0xff]
    %v2144 = vld [vmem:[#allocation5 + $0x1b0] sm:$0xff]
    %v2145 = vld [vmem:[#allocation5 + $0x1b8] sm:$0xff]
    %v2146 = vld [vmem:[#allocation5 + $0x1c0] sm:$0xff]
    %v2147 = vld [vmem:[#allocation5 + $0x1c8] sm:$0xff]
    %v2148 = vld [vmem:[#allocation5 + $0x1d0] sm:$0xff]
    %v2149 = vld [vmem:[#allocation5 + $0x1d8] sm:$0xff]
    %v2150 = vld [vmem:[#allocation5 + $0x1e0] sm:$0xff]
    %v2151 = vld [vmem:[#allocation5 + $0x1e8] sm:$0xff]
    %v2152 = vld [vmem:[#allocation5 + $0x1f0] sm:$0xff]
    %v2153 = vld [vmem:[#allocation5 + $0x1f8] sm:$0xff]
    %v2154 = vld [vmem:[#allocation5 + $0x200] sm:$0xff]
    %v2155 = vld [vmem:[#allocation5 + $0x208] sm:$0xff]
    %v2156 = vld [vmem:[#allocation5 + $0x210] sm:$0xff]
    %v2157 = vld [vmem:[#allocation5 + $0x218] sm:$0xff]
    %v2158 = vld [vmem:[#allocation5 + $0x220] sm:$0xff]
    %v2159 = vld [vmem:[#allocation5 + $0x228] sm:$0xff]
    %v2160 = vld [vmem:[#allocation5 + $0x230] sm:$0xff]
    %v2161 = vld [vmem:[#allocation5 + $0x238] sm:$0xff]
    %v2162 = vld [vmem:[#allocation5 + $0x240] sm:$0xff]
    %v2163 = vld [vmem:[#allocation5 + $0x248] sm:$0xff]
    %v2164 = vld [vmem:[#allocation5 + $0x250] sm:$0xff]
    %v2165 = vld [vmem:[#allocation5 + $0x258] sm:$0xff]
    %v2166 = vld [vmem:[#allocation5 + $0x260] sm:$0xff]
    %v2167 = vld [vmem:[#allocation5 + $0x268] sm:$0xff]
    %v2168 = vld [vmem:[#allocation5 + $0x270] sm:$0xff]
    %v2169 = vld [vmem:[#allocation5 + $0x278] sm:$0xff]
    %v2170 = vld [vmem:[#allocation5 + $0x280] sm:$0xff]
    %v2171 = vld [vmem:[#allocation5 + $0x288] sm:$0xff]
    %v2172 = vld [vmem:[#allocation5 + $0x290] sm:$0xff]
    %v2173 = vld [vmem:[#allocation5 + $0x298] sm:$0xff]
    %v2174 = vld [vmem:[#allocation5 + $0x2a0] sm:$0xff]
    %v2175 = vld [vmem:[#allocation5 + $0x2a8] sm:$0xff]
    %v2176 = vld [vmem:[#allocation5 + $0x2b0] sm:$0xff]
    %v2177 = vld [vmem:[#allocation5 + $0x2b8] sm:$0xff]
    %v2178 = vld [vmem:[#allocation5 + $0x2c0] sm:$0xff]
    %v2179 = vld [vmem:[#allocation5 + $0x2c8] sm:$0xff]
    %v2180 = vld [vmem:[#allocation5 + $0x2d0] sm:$0xff]
    %v2181 = vld [vmem:[#allocation5 + $0x2d8] sm:$0xff]
    %v2182 = vld [vmem:[#allocation5 + $0x2e0] sm:$0xff]
    %v2183 = vld [vmem:[#allocation5 + $0x2e8] sm:$0xff]
    %v2184 = vld [vmem:[#allocation5 + $0x2f0] sm:$0xff]
    %v2185 = vld [vmem:[#allocation5 + $0x2f8] sm:$0xff]
    %v2186 = vld [vmem:[#allocation5 + $0x300] sm:$0xff]
    %v2187 = vld [vmem:[#allocation5 + $0x308] sm:$0xff]
    %v2188 = vld [vmem:[#allocation5 + $0x310] sm:$0xff]
    %v2189 = vld [vmem:[#allocation5 + $0x318] sm:$0xff]
    %v2190 = vld [vmem:[#allocation5 + $0x320] sm:$0xff]
    %v2191 = vld [vmem:[#allocation5 + $0x328] sm:$0xff]
    %v2192 = vld [vmem:[#allocation5 + $0x330] sm:$0xff]
    %v2193 = vld [vmem:[#allocation5 + $0x338] sm:$0xff]
    %v2194 = vld [vmem:[#allocation5 + $0x340] sm:$0xff]
    %v2195 = vld [vmem:[#allocation5 + $0x348] sm:$0xff]
    %v2196 = vld [vmem:[#allocation5 + $0x350] sm:$0xff]
    %v2197 = vld [vmem:[#allocation5 + $0x358] sm:$0xff]
    %v2198 = vld [vmem:[#allocation5 + $0x360] sm:$0xff]
    %v2199 = vld [vmem:[#allocation5 + $0x368] sm:$0xff]
    %v2200 = vld [vmem:[#allocation5 + $0x370] sm:$0xff]
    %v2201 = vld [vmem:[#allocation5 + $0x378] sm:$0xff]
    %v2202 = vld [vmem:[#allocation5 + $0x380] sm:$0xff]
    %v2203 = vld [vmem:[#allocation5 + $0x388] sm:$0xff]
    %v2204 = vld [vmem:[#allocation5 + $0x390] sm:$0xff]
    %v2205 = vld [vmem:[#allocation5 + $0x398] sm:$0xff]
    %v2206 = vld [vmem:[#allocation5 + $0x3a0] sm:$0xff]
    %v2207 = vld [vmem:[#allocation5 + $0x3a8] sm:$0xff]
    %v2208 = vld [vmem:[#allocation5 + $0x3b0] sm:$0xff]
    %v2209 = vld [vmem:[#allocation5 + $0x3b8] sm:$0xff]
    %v2210 = vld [vmem:[#allocation5 + $0x3c0] sm:$0xff]
    %v2211 = vld [vmem:[#allocation5 + $0x3c8] sm:$0xff]
    %v2212 = vld [vmem:[#allocation5 + $0x3d0] sm:$0xff]
    %v2213 = vld [vmem:[#allocation5 + $0x3d8] sm:$0xff]
    %v2214 = vld [vmem:[#allocation5 + $0x3e0] sm:$0xff]
    %v2215 = vld [vmem:[#allocation5 + $0x3e8] sm:$0xff]
    %v2216 = vld [vmem:[#allocation5 + $0x3f0] sm:$0xff]
    %v2217 = vld [vmem:[#allocation5 + $0x3f8] sm:$0xff]
    %v2346 = vunpack.c.l.b16 %v2090
    %v2347 = vunpack.c.h.b16 %v2090
    %v2348 = vunpack.c.l.b16 %v2091
    %v2349 = vunpack.c.h.b16 %v2091
    %v2350 = vunpack.c.l.b16 %v2092
    %v2351 = vunpack.c.h.b16 %v2092
    %v2352 = vunpack.c.l.b16 %v2093
    %v2353 = vunpack.c.h.b16 %v2093
    %v2354 = vunpack.c.l.b16 %v2094
    %v2355 = vunpack.c.h.b16 %v2094
    %v2356 = vunpack.c.l.b16 %v2095
    %v2357 = vunpack.c.h.b16 %v2095
    %v2358 = vunpack.c.l.b16 %v2096
    %v2359 = vunpack.c.h.b16 %v2096
    %v2360 = vunpack.c.l.b16 %v2097
    %v2361 = vunpack.c.h.b16 %v2097
    %v2362 = vunpack.c.l.b16 %v2098
    %v2363 = vunpack.c.h.b16 %v2098
    %v2364 = vunpack.c.l.b16 %v2099
    %v2365 = vunpack.c.h.b16 %v2099
    %v2366 = vunpack.c.l.b16 %v2100
    %v2367 = vunpack.c.h.b16 %v2100
    %v2368 = vunpack.c.l.b16 %v2101
    %v2369 = vunpack.c.h.b16 %v2101
    %v2370 = vunpack.c.l.b16 %v2102
    %v2371 = vunpack.c.h.b16 %v2102
    %v2372 = vunpack.c.l.b16 %v2103
    %v2373 = vunpack.c.h.b16 %v2103
    %v2374 = vunpack.c.l.b16 %v2104
    %v2375 = vunpack.c.h.b16 %v2104
    %v2376 = vunpack.c.l.b16 %v2105
    %v2377 = vunpack.c.h.b16 %v2105
    %v2378 = vunpack.c.l.b16 %v2106
    %v2379 = vunpack.c.h.b16 %v2106
    %v2380 = vunpack.c.l.b16 %v2107
    %v2381 = vunpack.c.h.b16 %v2107
    %v2382 = vunpack.c.l.b16 %v2108
    %v2383 = vunpack.c.h.b16 %v2108
    %v2384 = vunpack.c.l.b16 %v2109
    %v2385 = vunpack.c.h.b16 %v2109
    %v2386 = vunpack.c.l.b16 %v2110
    %v2387 = vunpack.c.h.b16 %v2110
    %v2388 = vunpack.c.l.b16 %v2111
    %v2389 = vunpack.c.h.b16 %v2111
    %v2390 = vunpack.c.l.b16 %v2112
    %v2391 = vunpack.c.h.b16 %v2112
    %v2392 = vunpack.c.l.b16 %v2113
    %v2393 = vunpack.c.h.b16 %v2113
    %v2394 = vunpack.c.l.b16 %v2114
    %v2395 = vunpack.c.h.b16 %v2114
    %v2396 = vunpack.c.l.b16 %v2115
    %v2397 = vunpack.c.h.b16 %v2115
    %v2398 = vunpack.c.l.b16 %v2116
    %v2399 = vunpack.c.h.b16 %v2116
    %v2400 = vunpack.c.l.b16 %v2117
    %v2401 = vunpack.c.h.b16 %v2117
    %v2402 = vunpack.c.l.b16 %v2118
    %v2403 = vunpack.c.h.b16 %v2118
    %v2404 = vunpack.c.l.b16 %v2119
    %v2405 = vunpack.c.h.b16 %v2119
    %v2406 = vunpack.c.l.b16 %v2120
    %v2407 = vunpack.c.h.b16 %v2120
    %v2408 = vunpack.c.l.b16 %v2121
    %v2409 = vunpack.c.h.b16 %v2121
    %v2410 = vunpack.c.l.b16 %v2122
    %v2411 = vunpack.c.h.b16 %v2122
    %v2412 = vunpack.c.l.b16 %v2123
    %v2413 = vunpack.c.h.b16 %v2123
    %v2414 = vunpack.c.l.b16 %v2124
    %v2415 = vunpack.c.h.b16 %v2124
    %v2416 = vunpack.c.l.b16 %v2125
    %v2417 = vunpack.c.h.b16 %v2125
    %v2418 = vunpack.c.l.b16 %v2126
    %v2419 = vunpack.c.h.b16 %v2126
    %v2420 = vunpack.c.l.b16 %v2127
    %v2421 = vunpack.c.h.b16 %v2127
    %v2422 = vunpack.c.l.b16 %v2128
    %v2423 = vunpack.c.h.b16 %v2128
    %v2424 = vunpack.c.l.b16 %v2129
    %v2425 = vunpack.c.h.b16 %v2129
    %v2426 = vunpack.c.l.b16 %v2130
    %v2427 = vunpack.c.h.b16 %v2130
    %v2428 = vunpack.c.l.b16 %v2131
    %v2429 = vunpack.c.h.b16 %v2131
    %v2430 = vunpack.c.l.b16 %v2132
    %v2431 = vunpack.c.h.b16 %v2132
    %v2432 = vunpack.c.l.b16 %v2133
    %v2433 = vunpack.c.h.b16 %v2133
    %v2434 = vunpack.c.l.b16 %v2134
    %v2435 = vunpack.c.h.b16 %v2134
    %v2436 = vunpack.c.l.b16 %v2135
    %v2437 = vunpack.c.h.b16 %v2135
    %v2438 = vunpack.c.l.b16 %v2136
    %v2439 = vunpack.c.h.b16 %v2136
    %v2440 = vunpack.c.l.b16 %v2137
    %v2441 = vunpack.c.h.b16 %v2137
    %v2442 = vunpack.c.l.b16 %v2138
    %v2443 = vunpack.c.h.b16 %v2138
    %v2444 = vunpack.c.l.b16 %v2139
    %v2445 = vunpack.c.h.b16 %v2139
    %v2446 = vunpack.c.l.b16 %v2140
    %v2447 = vunpack.c.h.b16 %v2140
    %v2448 = vunpack.c.l.b16 %v2141
    %v2449 = vunpack.c.h.b16 %v2141
    %v2450 = vunpack.c.l.b16 %v2142
    %v2451 = vunpack.c.h.b16 %v2142
    %v2452 = vunpack.c.l.b16 %v2143
    %v2453 = vunpack.c.h.b16 %v2143
    %v2454 = vunpack.c.l.b16 %v2144
    %v2455 = vunpack.c.h.b16 %v2144
    %v2456 = vunpack.c.l.b16 %v2145
    %v2457 = vunpack.c.h.b16 %v2145
    %v2458 = vunpack.c.l.b16 %v2146
    %v2459 = vunpack.c.h.b16 %v2146
    %v2460 = vunpack.c.l.b16 %v2147
    %v2461 = vunpack.c.h.b16 %v2147
    %v2462 = vunpack.c.l.b16 %v2148
    %v2463 = vunpack.c.h.b16 %v2148
    %v2464 = vunpack.c.l.b16 %v2149
    %v2465 = vunpack.c.h.b16 %v2149
    %v2466 = vunpack.c.l.b16 %v2150
    %v2467 = vunpack.c.h.b16 %v2150
    %v2468 = vunpack.c.l.b16 %v2151
    %v2469 = vunpack.c.h.b16 %v2151
    %v2470 = vunpack.c.l.b16 %v2152
    %v2471 = vunpack.c.h.b16 %v2152
    %v2472 = vunpack.c.l.b16 %v2153
    %v2473 = vunpack.c.h.b16 %v2153
    %v2474 = vunpack.c.l.b16 %v2154
    %v2475 = vunpack.c.h.b16 %v2154
    %v2476 = vunpack.c.l.b16 %v2155
    %v2477 = vunpack.c.h.b16 %v2155
    %v2478 = vunpack.c.l.b16 %v2156
    %v2479 = vunpack.c.h.b16 %v2156
    %v2480 = vunpack.c.l.b16 %v2157
    %v2481 = vunpack.c.h.b16 %v2157
    %v2482 = vunpack.c.l.b16 %v2158
    %v2483 = vunpack.c.h.b16 %v2158
    %v2484 = vunpack.c.l.b16 %v2159
    %v2485 = vunpack.c.h.b16 %v2159
    %v2486 = vunpack.c.l.b16 %v2160
    %v2487 = vunpack.c.h.b16 %v2160
    %v2488 = vunpack.c.l.b16 %v2161
    %v2489 = vunpack.c.h.b16 %v2161
    %v2490 = vunpack.c.l.b16 %v2162
    %v2491 = vunpack.c.h.b16 %v2162
    %v2492 = vunpack.c.l.b16 %v2163
    %v2493 = vunpack.c.h.b16 %v2163
    %v2494 = vunpack.c.l.b16 %v2164
    %v2495 = vunpack.c.h.b16 %v2164
    %v2496 = vunpack.c.l.b16 %v2165
    %v2497 = vunpack.c.h.b16 %v2165
    %v2498 = vunpack.c.l.b16 %v2166
    %v2499 = vunpack.c.h.b16 %v2166
    %v2500 = vunpack.c.l.b16 %v2167
    %v2501 = vunpack.c.h.b16 %v2167
    %v2502 = vunpack.c.l.b16 %v2168
    %v2503 = vunpack.c.h.b16 %v2168
    %v2504 = vunpack.c.l.b16 %v2169
    %v2505 = vunpack.c.h.b16 %v2169
    %v2506 = vunpack.c.l.b16 %v2170
    %v2507 = vunpack.c.h.b16 %v2170
    %v2508 = vunpack.c.l.b16 %v2171
    %v2509 = vunpack.c.h.b16 %v2171
    %v2510 = vunpack.c.l.b16 %v2172
    %v2511 = vunpack.c.h.b16 %v2172
    %v2512 = vunpack.c.l.b16 %v2173
    %v2513 = vunpack.c.h.b16 %v2173
    %v2514 = vunpack.c.l.b16 %v2174
    %v2515 = vunpack.c.h.b16 %v2174
    %v2516 = vunpack.c.l.b16 %v2175
    %v2517 = vunpack.c.h.b16 %v2175
    %v2518 = vunpack.c.l.b16 %v2176
    %v2519 = vunpack.c.h.b16 %v2176
    %v2520 = vunpack.c.l.b16 %v2177
    %v2521 = vunpack.c.h.b16 %v2177
    %v2522 = vunpack.c.l.b16 %v2178
    %v2523 = vunpack.c.h.b16 %v2178
    %v2524 = vunpack.c.l.b16 %v2179
    %v2525 = vunpack.c.h.b16 %v2179
    %v2526 = vunpack.c.l.b16 %v2180
    %v2527 = vunpack.c.h.b16 %v2180
    %v2528 = vunpack.c.l.b16 %v2181
    %v2529 = vunpack.c.h.b16 %v2181
    %v2530 = vunpack.c.l.b16 %v2182
    %v2531 = vunpack.c.h.b16 %v2182
    %v2532 = vunpack.c.l.b16 %v2183
    %v2533 = vunpack.c.h.b16 %v2183
    %v2534 = vunpack.c.l.b16 %v2184
    %v2535 = vunpack.c.h.b16 %v2184
    %v2536 = vunpack.c.l.b16 %v2185
    %v2537 = vunpack.c.h.b16 %v2185
    %v2538 = vunpack.c.l.b16 %v2186
    %v2539 = vunpack.c.h.b16 %v2186
    %v2540 = vunpack.c.l.b16 %v2187
    %v2541 = vunpack.c.h.b16 %v2187
    %v2542 = vunpack.c.l.b16 %v2188
    %v2543 = vunpack.c.h.b16 %v2188
    %v2544 = vunpack.c.l.b16 %v2189
    %v2545 = vunpack.c.h.b16 %v2189
    %v2546 = vunpack.c.l.b16 %v2190
    %v2547 = vunpack.c.h.b16 %v2190
    %v2548 = vunpack.c.l.b16 %v2191
    %v2549 = vunpack.c.h.b16 %v2191
    %v2550 = vunpack.c.l.b16 %v2192
    %v2551 = vunpack.c.h.b16 %v2192
    %v2552 = vunpack.c.l.b16 %v2193
    %v2553 = vunpack.c.h.b16 %v2193
    %v2554 = vunpack.c.l.b16 %v2194
    %v2555 = vunpack.c.h.b16 %v2194
    %v2556 = vunpack.c.l.b16 %v2195
    %v2557 = vunpack.c.h.b16 %v2195
    %v2558 = vunpack.c.l.b16 %v2196
    %v2559 = vunpack.c.h.b16 %v2196
    %v2560 = vunpack.c.l.b16 %v2197
    %v2561 = vunpack.c.h.b16 %v2197
    %v2562 = vunpack.c.l.b16 %v2198
    %v2563 = vunpack.c.h.b16 %v2198
    %v2564 = vunpack.c.l.b16 %v2199
    %v2565 = vunpack.c.h.b16 %v2199
    %v2566 = vunpack.c.l.b16 %v2200
    %v2567 = vunpack.c.h.b16 %v2200
    %v2568 = vunpack.c.l.b16 %v2201
    %v2569 = vunpack.c.h.b16 %v2201
    %v2570 = vunpack.c.l.b16 %v2202
    %v2571 = vunpack.c.h.b16 %v2202
    %v2572 = vunpack.c.l.b16 %v2203
    %v2573 = vunpack.c.h.b16 %v2203
    %v2574 = vunpack.c.l.b16 %v2204
    %v2575 = vunpack.c.h.b16 %v2204
    %v2576 = vunpack.c.l.b16 %v2205
    %v2577 = vunpack.c.h.b16 %v2205
    %v2578 = vunpack.c.l.b16 %v2206
    %v2579 = vunpack.c.h.b16 %v2206
    %v2580 = vunpack.c.l.b16 %v2207
    %v2581 = vunpack.c.h.b16 %v2207
    %v2582 = vunpack.c.l.b16 %v2208
    %v2583 = vunpack.c.h.b16 %v2208
    %v2584 = vunpack.c.l.b16 %v2209
    %v2585 = vunpack.c.h.b16 %v2209
    %v2586 = vunpack.c.l.b16 %v2210
    %v2587 = vunpack.c.h.b16 %v2210
    %v2588 = vunpack.c.l.b16 %v2211
    %v2589 = vunpack.c.h.b16 %v2211
    %v2590 = vunpack.c.l.b16 %v2212
    %v2591 = vunpack.c.h.b16 %v2212
    %v2592 = vunpack.c.l.b16 %v2213
    %v2593 = vunpack.c.h.b16 %v2213
    %v2594 = vunpack.c.l.b16 %v2214
    %v2595 = vunpack.c.h.b16 %v2214
    %v2596 = vunpack.c.l.b16 %v2215
    %v2597 = vunpack.c.h.b16 %v2215
    %v2598 = vunpack.c.l.b16 %v2216
    %v2599 = vunpack.c.h.b16 %v2216
    %v2600 = vunpack.c.l.b16 %v2217
    %v2601 = vunpack.c.h.b16 %v2217
    %v2602 = vpack.c.b16 %v2350, %v2346
    %v2603 = vpack.c.b16 %v2351, %v2347
    %v2604 = vpack.c.b16 %v2352, %v2348
    %v2605 = vpack.c.b16 %v2353, %v2349
    %v2606 = vpack.c.b16 %v2358, %v2354
    %v2607 = vpack.c.b16 %v2359, %v2355
    %v2608 = vpack.c.b16 %v2360, %v2356
    %v2609 = vpack.c.b16 %v2361, %v2357
    %v2610 = vpack.c.b16 %v2366, %v2362
    %v2611 = vpack.c.b16 %v2367, %v2363
    %v2612 = vpack.c.b16 %v2368, %v2364
    %v2613 = vpack.c.b16 %v2369, %v2365
    %v2614 = vpack.c.b16 %v2374, %v2370
    %v2615 = vpack.c.b16 %v2375, %v2371
    %v2616 = vpack.c.b16 %v2376, %v2372
    %v2617 = vpack.c.b16 %v2377, %v2373
    %v2618 = vpack.c.b16 %v2382, %v2378
    %v2619 = vpack.c.b16 %v2383, %v2379
    %v2620 = vpack.c.b16 %v2384, %v2380
    %v2621 = vpack.c.b16 %v2385, %v2381
    %v2622 = vpack.c.b16 %v2390, %v2386
    %v2623 = vpack.c.b16 %v2391, %v2387
    %v2624 = vpack.c.b16 %v2392, %v2388
    %v2625 = vpack.c.b16 %v2393, %v2389
    %v2626 = vpack.c.b16 %v2398, %v2394
    %v2627 = vpack.c.b16 %v2399, %v2395
    %v2628 = vpack.c.b16 %v2400, %v2396
    %v2629 = vpack.c.b16 %v2401, %v2397
    %v2630 = vpack.c.b16 %v2406, %v2402
    %v2631 = vpack.c.b16 %v2407, %v2403
    %v2632 = vpack.c.b16 %v2408, %v2404
    %v2633 = vpack.c.b16 %v2409, %v2405
    %v2634 = vpack.c.b16 %v2414, %v2410
    %v2635 = vpack.c.b16 %v2415, %v2411
    %v2636 = vpack.c.b16 %v2416, %v2412
    %v2637 = vpack.c.b16 %v2417, %v2413
    %v2638 = vpack.c.b16 %v2422, %v2418
    %v2639 = vpack.c.b16 %v2423, %v2419
    %v2640 = vpack.c.b16 %v2424, %v2420
    %v2641 = vpack.c.b16 %v2425, %v2421
    %v2642 = vpack.c.b16 %v2430, %v2426
    %v2643 = vpack.c.b16 %v2431, %v2427
    %v2644 = vpack.c.b16 %v2432, %v2428
    %v2645 = vpack.c.b16 %v2433, %v2429
    %v2646 = vpack.c.b16 %v2438, %v2434
    %v2647 = vpack.c.b16 %v2439, %v2435
    %v2648 = vpack.c.b16 %v2440, %v2436
    %v2649 = vpack.c.b16 %v2441, %v2437
    %v2650 = vpack.c.b16 %v2446, %v2442
    %v2651 = vpack.c.b16 %v2447, %v2443
    %v2652 = vpack.c.b16 %v2448, %v2444
    %v2653 = vpack.c.b16 %v2449, %v2445
    %v2654 = vpack.c.b16 %v2454, %v2450
    %v2655 = vpack.c.b16 %v2455, %v2451
    %v2656 = vpack.c.b16 %v2456, %v2452
    %v2657 = vpack.c.b16 %v2457, %v2453
    %v2658 = vpack.c.b16 %v2462, %v2458
    %v2659 = vpack.c.b16 %v2463, %v2459
    %v2660 = vpack.c.b16 %v2464, %v2460
    %v2661 = vpack.c.b16 %v2465, %v2461
    %v2662 = vpack.c.b16 %v2470, %v2466
    %v2663 = vpack.c.b16 %v2471, %v2467
    %v2664 = vpack.c.b16 %v2472, %v2468
    %v2665 = vpack.c.b16 %v2473, %v2469
    %v2666 = vpack.c.b16 %v2478, %v2474
    %v2667 = vpack.c.b16 %v2479, %v2475
    %v2668 = vpack.c.b16 %v2480, %v2476
    %v2669 = vpack.c.b16 %v2481, %v2477
    %v2670 = vpack.c.b16 %v2486, %v2482
    %v2671 = vpack.c.b16 %v2487, %v2483
    %v2672 = vpack.c.b16 %v2488, %v2484
    %v2673 = vpack.c.b16 %v2489, %v2485
    %v2674 = vpack.c.b16 %v2494, %v2490
    %v2675 = vpack.c.b16 %v2495, %v2491
    %v2676 = vpack.c.b16 %v2496, %v2492
    %v2677 = vpack.c.b16 %v2497, %v2493
    %v2678 = vpack.c.b16 %v2502, %v2498
    %v2679 = vpack.c.b16 %v2503, %v2499
    %v2680 = vpack.c.b16 %v2504, %v2500
    %v2681 = vpack.c.b16 %v2505, %v2501
    %v2682 = vpack.c.b16 %v2510, %v2506
    %v2683 = vpack.c.b16 %v2511, %v2507
    %v2684 = vpack.c.b16 %v2512, %v2508
    %v2685 = vpack.c.b16 %v2513, %v2509
    %v2686 = vpack.c.b16 %v2518, %v2514
    %v2687 = vpack.c.b16 %v2519, %v2515
    %v2688 = vpack.c.b16 %v2520, %v2516
    %v2689 = vpack.c.b16 %v2521, %v2517
    %v2690 = vpack.c.b16 %v2526, %v2522
    %v2691 = vpack.c.b16 %v2527, %v2523
    %v2692 = vpack.c.b16 %v2528, %v2524
    %v2693 = vpack.c.b16 %v2529, %v2525
    %v2694 = vpack.c.b16 %v2534, %v2530
    %v2695 = vpack.c.b16 %v2535, %v2531
    %v2696 = vpack.c.b16 %v2536, %v2532
    %v2697 = vpack.c.b16 %v2537, %v2533
    %v2698 = vpack.c.b16 %v2542, %v2538
    %v2699 = vpack.c.b16 %v2543, %v2539
    %v2700 = vpack.c.b16 %v2544, %v2540
    %v2701 = vpack.c.b16 %v2545, %v2541
    %v2702 = vpack.c.b16 %v2550, %v2546
    %v2703 = vpack.c.b16 %v2551, %v2547
    %v2704 = vpack.c.b16 %v2552, %v2548
    %v2705 = vpack.c.b16 %v2553, %v2549
    %v2706 = vpack.c.b16 %v2558, %v2554
    %v2707 = vpack.c.b16 %v2559, %v2555
    %v2708 = vpack.c.b16 %v2560, %v2556
    %v2709 = vpack.c.b16 %v2561, %v2557
    %v2710 = vpack.c.b16 %v2566, %v2562
    %v2711 = vpack.c.b16 %v2567, %v2563
    %v2712 = vpack.c.b16 %v2568, %v2564
    %v2713 = vpack.c.b16 %v2569, %v2565
    %v2714 = vpack.c.b16 %v2574, %v2570
    %v2715 = vpack.c.b16 %v2575, %v2571
    %v2716 = vpack.c.b16 %v2576, %v2572
    %v2717 = vpack.c.b16 %v2577, %v2573
    %v2718 = vpack.c.b16 %v2582, %v2578
    %v2719 = vpack.c.b16 %v2583, %v2579
    %v2720 = vpack.c.b16 %v2584, %v2580
    %v2721 = vpack.c.b16 %v2585, %v2581
    %v2722 = vpack.c.b16 %v2590, %v2586
    %v2723 = vpack.c.b16 %v2591, %v2587
    %v2724 = vpack.c.b16 %v2592, %v2588
    %v2725 = vpack.c.b16 %v2593, %v2589
    %v2726 = vpack.c.b16 %v2598, %v2594
    %v2727 = vpack.c.b16 %v2599, %v2595
    %v2728 = vpack.c.b16 %v2600, %v2596
    %v2729 = vpack.c.b16 %v2601, %v2597
    %2858 = vmatprep.subr.bf16.mxu0 %v2603
    %2859 = vmatpush1.bf16.msra.mxu0 %v2602
    %2860 = vmatprep.subr.bf16.mxu0 %v2607
    %2861 = vmatpush1.bf16.msra.mxu0 %v2606
    %2862 = vmatprep.subr.bf16.mxu0 %v2611
    %2863 = vmatpush1.bf16.msra.mxu0 %v2610
    %2864 = vmatprep.subr.bf16.mxu0 %v2615
    %2865 = vmatpush1.bf16.msra.mxu0 %v2614
    %2866 = vmatprep.subr.bf16.mxu0 %v2619
    %2867 = vmatpush1.bf16.msra.mxu0 %v2618
    %2868 = vmatprep.subr.bf16.mxu0 %v2623
    %2869 = vmatpush1.bf16.msra.mxu0 %v2622
    %2870 = vmatprep.subr.bf16.mxu0 %v2627
    %2871 = vmatpush1.bf16.msra.mxu0 %v2626
    %2872 = vmatprep.subr.bf16.mxu0 %v2631
    %2873 = vmatpush1.bf16.msra.mxu0 %v2630
    %2874 = vmatprep.subr.bf16.mxu0 %v2635
    %2875 = vmatpush1.bf16.msra.mxu0 %v2634
    %2876 = vmatprep.subr.bf16.mxu0 %v2639
    %2877 = vmatpush1.bf16.msra.mxu0 %v2638
    %2878 = vmatprep.subr.bf16.mxu0 %v2643
    %2879 = vmatpush1.bf16.msra.mxu0 %v2642
    %2880 = vmatprep.subr.bf16.mxu0 %v2647
    %2881 = vmatpush1.bf16.msra.mxu0 %v2646
    %2882 = vmatprep.subr.bf16.mxu0 %v2651
    %2883 = vmatpush1.bf16.msra.mxu0 %v2650
    %2884 = vmatprep.subr.bf16.mxu0 %v2655
    %2885 = vmatpush1.bf16.msra.mxu0 %v2654
    %2886 = vmatprep.subr.bf16.mxu0 %v2659
    %2887 = vmatpush1.bf16.msra.mxu0 %v2658
    %2888 = vmatprep.subr.bf16.mxu0 %v2663
    %2889 = vmatpush1.bf16.msra.mxu0 %v2662
    %2890 = vmatprep.mubr.bf16.mxu0 %v123
    %2891 = vmatmul.mubr.bf16.gmra.mrb[0].mxu0 %v122
    %v2892 = vpop.f32.mrb[0].mxu0
    %v2893 = vadd.f32 0.0, %v2892
    %v2894 = vpop.f32.mrb[0].mxu0
    %v2895 = vadd.f32 0.0, %v2894
    %v2896 = vpop.f32.mrb[0].mxu0
    %v2897 = vadd.f32 0.0, %v2896
    %v2898 = vpop.f32.mrb[0].mxu0
    %v2899 = vadd.f32 0.0, %v2898
    %2900 = vmatprep.mubr.bf16.mxu0 %v127
    %2901 = vmatmul.mubr.bf16.gmra.mrb[0].mxu0 %v126
    %v2902 = vpop.f32.mrb[0].mxu0
    %v2903 = vadd.f32 0.0, %v2902
    %v2904 = vpop.f32.mrb[0].mxu0
    %v2905 = vadd.f32 0.0, %v2904
    %v2906 = vpop.f32.mrb[0].mxu0
    %v2907 = vpop.f32.mrb[0].mxu0
    %2908 = vdwg.mxu0
    %2909 = vmatprep.subr.bf16.mxu0 %v2667
    %2910 = vmatpush1.bf16.msra.mxu0 %v2666
    %2911 = vmatprep.subr.bf16.mxu0 %v2671
    %2912 = vmatpush1.bf16.msra.mxu0 %v2670
    %2913 = vmatprep.subr.bf16.mxu0 %v2675
    %2914 = vmatpush1.bf16.msra.mxu0 %v2674
    %2915 = vmatprep.subr.bf16.mxu0 %v2679
    %2916 = vmatpush1.bf16.msra.mxu0 %v2678
    %2917 = vmatprep.subr.bf16.mxu0 %v2683
    %2918 = vmatpush1.bf16.msra.mxu0 %v2682
    %2919 = vmatprep.subr.bf16.mxu0 %v2687
    %2920 = vmatpush1.bf16.msra.mxu0 %v2686
    %2921 = vmatprep.subr.bf16.mxu0 %v2691
    %2922 = vmatpush1.bf16.msra.mxu0 %v2690
    %2923 = vmatprep.subr.bf16.mxu0 %v2695
    %2924 = vmatpush1.bf16.msra.mxu0 %v2694
    %2925 = vmatprep.subr.bf16.mxu0 %v2699
    %2926 = vmatpush1.bf16.msra.mxu0 %v2698
    %2927 = vmatprep.subr.bf16.mxu0 %v2703
    %2928 = vmatpush1.bf16.msra.mxu0 %v2702
    %2929 = vmatprep.subr.bf16.mxu0 %v2707
    %2930 = vmatpush1.bf16.msra.mxu0 %v2706
    %2931 = vmatprep.subr.bf16.mxu0 %v2711
    %2932 = vmatpush1.bf16.msra.mxu0 %v2710
    %2933 = vmatprep.subr.bf16.mxu0 %v2715
    %2934 = vmatpush1.bf16.msra.mxu0 %v2714
    %2935 = vmatprep.subr.bf16.mxu0 %v2719
    %2936 = vmatpush1.bf16.msra.mxu0 %v2718
    %2937 = vmatprep.subr.bf16.mxu0 %v2723
    %2938 = vmatpush1.bf16.msra.mxu0 %v2722
    %2939 = vmatprep.subr.bf16.mxu0 %v2727
    %2940 = vmatpush1.bf16.msra.mxu0 %v2726
    %2941 = vmatprep.mubr.bf16.mxu0 %v125
    %2942 = vmatmul.mubr.bf16.gmra.mrb[0].mxu0 %v124
    %v2943 = vpop.f32.mrb[0].mxu0
    %v2944 = vadd.f32 %v2893, %v2943
    %v2945 = vpop.f32.mrb[0].mxu0
    %v2946 = vadd.f32 %v2895, %v2945
    %v2947 = vpop.f32.mrb[0].mxu0
    %v2948 = vadd.f32 %v2897, %v2947
    %v2949 = vpop.f32.mrb[0].mxu0
    %v2950 = vadd.f32 %v2899, %v2949
    %2951 = vmatprep.mubr.bf16.mxu0 %v129
    %2952 = vmatmul.mubr.bf16.gmra.mrb[0].mxu0 %v128
    %v2953 = vpop.f32.mrb[0].mxu0
    %v2954 = vadd.f32 %v2903, %v2953
    %v2955 = vpop.f32.mrb[0].mxu0
    %v2956 = vadd.f32 %v2905, %v2955
    %v2957 = vpop.f32.mrb[0].mxu0
    %v2958 = vpop.f32.mrb[0].mxu0
    %2959 = vdwg.mxu0
    %2960 = vmatprep.subr.bf16.mxu0 %v2605
    %2961 = vmatpush1.bf16.msra.mxu0 %v2604
    %2962 = vmatprep.subr.bf16.mxu0 %v2609
    %2963 = vmatpush1.bf16.msra.mxu0 %v2608
    %2964 = vmatprep.subr.bf16.mxu0 %v2613
    %2965 = vmatpush1.bf16.msra.mxu0 %v2612
    %2966 = vmatprep.subr.bf16.mxu0 %v2617
    %2967 = vmatpush1.bf16.msra.mxu0 %v2616
    %2968 = vmatprep.subr.bf16.mxu0 %v2621
    %2969 = vmatpush1.bf16.msra.mxu0 %v2620
    %2970 = vmatprep.subr.bf16.mxu0 %v2625
    %2971 = vmatpush1.bf16.msra.mxu0 %v2624
    %2972 = vmatprep.subr.bf16.mxu0 %v2629
    %2973 = vmatpush1.bf16.msra.mxu0 %v2628
    %2974 = vmatprep.subr.bf16.mxu0 %v2633
    %2975 = vmatpush1.bf16.msra.mxu0 %v2632
    %2976 = vmatprep.subr.bf16.mxu0 %v2637
    %2977 = vmatpush1.bf16.msra.mxu0 %v2636
    %2978 = vmatprep.subr.bf16.mxu0 %v2641
    %2979 = vmatpush1.bf16.msra.mxu0 %v2640
    %2980 = vmatprep.subr.bf16.mxu0 %v2645
    %2981 = vmatpush1.bf16.msra.mxu0 %v2644
    %2982 = vmatprep.subr.bf16.mxu0 %v2649
    %2983 = vmatpush1.bf16.msra.mxu0 %v2648
    %2984 = vmatprep.subr.bf16.mxu0 %v2653
    %2985 = vmatpush1.bf16.msra.mxu0 %v2652
    %2986 = vmatprep.subr.bf16.mxu0 %v2657
    %2987 = vmatpush1.bf16.msra.mxu0 %v2656
    %2988 = vmatprep.subr.bf16.mxu0 %v2661
    %2989 = vmatpush1.bf16.msra.mxu0 %v2660
    %2990 = vmatprep.subr.bf16.mxu0 %v2665
    %2991 = vmatpush1.bf16.msra.mxu0 %v2664
    %2992 = vmatprep.mubr.bf16.mxu0 %v123
    %2993 = vmatmul.mubr.bf16.gmra.mrb[0].mxu0 %v122
    %v2994 = vpop.f32.mrb[0].mxu0
    %v2995 = vadd.f32 0.0, %v2994
    %v2996 = vpop.f32.mrb[0].mxu0
    %v2997 = vadd.f32 0.0, %v2996
    %v2998 = vpop.f32.mrb[0].mxu0
    %v2999 = vadd.f32 0.0, %v2998
    %v3000 = vpop.f32.mrb[0].mxu0
    %v3001 = vadd.f32 0.0, %v3000
    %3002 = vmatprep.mubr.bf16.mxu0 %v127
    %3003 = vmatmul.mubr.bf16.gmra.mrb[0].mxu0 %v126
    %v3004 = vpop.f32.mrb[0].mxu0
    %v3005 = vadd.f32 0.0, %v3004
    %v3006 = vpop.f32.mrb[0].mxu0
    %v3007 = vadd.f32 0.0, %v3006
    %v3008 = vpop.f32.mrb[0].mxu0
    %v3009 = vpop.f32.mrb[0].mxu0
    %3010 = vdwg.mxu0
    %3011 = vmatprep.subr.bf16.mxu0 %v2669
    %3012 = vmatpush1.bf16.msra.mxu0 %v2668
    %3013 = vmatprep.subr.bf16.mxu0 %v2673
    %3014 = vmatpush1.bf16.msra.mxu0 %v2672
    %3015 = vmatprep.subr.bf16.mxu0 %v2677
    %3016 = vmatpush1.bf16.msra.mxu0 %v2676
    %3017 = vmatprep.subr.bf16.mxu0 %v2681
    %3018 = vmatpush1.bf16.msra.mxu0 %v2680
    %3019 = vmatprep.subr.bf16.mxu0 %v2685
    %3020 = vmatpush1.bf16.msra.mxu0 %v2684
    %3021 = vmatprep.subr.bf16.mxu0 %v2689
    %3022 = vmatpush1.bf16.msra.mxu0 %v2688
    %3023 = vmatprep.subr.bf16.mxu0 %v2693
    %3024 = vmatpush1.bf16.msra.mxu0 %v2692
    %3025 = vmatprep.subr.bf16.mxu0 %v2697
    %3026 = vmatpush1.bf16.msra.mxu0 %v2696
    %3027 = vmatprep.subr.bf16.mxu0 %v2701
    %3028 = vmatpush1.bf16.msra.mxu0 %v2700
    %3029 = vmatprep.subr.bf16.mxu0 %v2705
    %3030 = vmatpush1.bf16.msra.mxu0 %v2704
    %3031 = vmatprep.subr.bf16.mxu0 %v2709
    %3032 = vmatpush1.bf16.msra.mxu0 %v2708
    %3033 = vmatprep.subr.bf16.mxu0 %v2713
    %3034 = vmatpush1.bf16.msra.mxu0 %v2712
    %3035 = vmatprep.subr.bf16.mxu0 %v2717
    %3036 = vmatpush1.bf16.msra.mxu0 %v2716
    %3037 = vmatprep.subr.bf16.mxu0 %v2721
    %3038 = vmatpush1.bf16.msra.mxu0 %v2720
    %3039 = vmatprep.subr.bf16.mxu0 %v2725
    %3040 = vmatpush1.bf16.msra.mxu0 %v2724
    %3041 = vmatprep.subr.bf16.mxu0 %v2729
    %3042 = vmatpush1.bf16.msra.mxu0 %v2728
    %3043 = vmatprep.mubr.bf16.mxu0 %v125
    %3044 = vmatmul.mubr.bf16.gmra.mrb[0].mxu0 %v124
    %v3045 = vpop.f32.mrb[0].mxu0
    %v3046 = vadd.f32 %v2995, %v3045
    %v3047 = vpop.f32.mrb[0].mxu0
    %v3048 = vadd.f32 %v2997, %v3047
    %v3049 = vpop.f32.mrb[0].mxu0
    %v3050 = vadd.f32 %v2999, %v3049
    %v3051 = vpop.f32.mrb[0].mxu0
    %v3052 = vadd.f32 %v3001, %v3051
    %3053 = vmatprep.mubr.bf16.mxu0 %v129
    %3054 = vmatmul.mubr.bf16.gmra.mrb[0].mxu0 %v128
    %v3055 = vpop.f32.mrb[0].mxu0
    %v3056 = vadd.f32 %v3005, %v3055
    %v3057 = vpop.f32.mrb[0].mxu0
    %v3058 = vadd.f32 %v3007, %v3057
    %v3059 = vpop.f32.mrb[0].mxu0
    %v3060 = vpop.f32.mrb[0].mxu0
    %3061 = vdwg.mxu0
    %v3062 = vpack.c.bf16 %v2948, %v2944
    %v3063 = vpack.c.bf16 %v2950, %v2946
    %v3064 = vpack.c.bf16 %v3050, %v3046
    %v3065 = vpack.c.bf16 %v3052, %v3048
    %v3066 = vpack.c.bf16 %v2954, %v2954
    %v3067 = vpack.c.bf16 %v2956, %v2956
    %v3068 = vpack.c.bf16 %v3056, %v3056
    %v3069 = vpack.c.bf16 %v3058, %v3058
    %vm3070 = vcmask 523264
    %v3072 = vsel %vm3070, %v1102, 0
    %v3075 = vsel %vm3070, %v2082, 0
    %3077 = vmatprep.subr.bf16.mxu0 0
    %3078 = vmatpush1.bf16.xpose.msra.mxu0 %v3075
    %3079 = vmatprep.subr.bf16.mxu0 0
    %3080 = vmatpush1.bf16.xpose.msra.mxu0 0
    %3081 = vmatprep.subr.bf16.mxu0 0
    %3082 = vmatpush1.bf16.xpose.msra.mxu0 0
    %3083 = vmatprep.subr.bf16.mxu0 0
    %3084 = vmatpush1.bf16.xpose.msra.mxu0 0
    %3085 = vmatprep.subr.bf16.mxu0 0
    %3086 = vmatpush1.bf16.xpose.msra.mxu0 0
    %3087 = vmatprep.subr.bf16.mxu0 0
    %3088 = vmatpush1.bf16.xpose.msra.mxu0 0
    %3089 = vmatprep.subr.bf16.mxu0 0
    %3090 = vmatpush1.bf16.xpose.msra.mxu0 0
    %3091 = vmatprep.subr.bf16.mxu0 0
    %3092 = vmatpush1.bf16.xpose.msra.mxu0 0
    %3093 = vmatprep.subr.bf16.mxu0 0
    %3094 = vmatpush1.bf16.xpose.msra.mxu0 0
    %3095 = vmatprep.subr.bf16.mxu0 0
    %3096 = vmatpush1.bf16.xpose.msra.mxu0 0
    %3097 = vmatprep.subr.bf16.mxu0 0
    %3098 = vmatpush1.bf16.xpose.msra.mxu0 0
    %3099 = vmatprep.subr.bf16.mxu0 0
    %3100 = vmatpush1.bf16.xpose.msra.mxu0 0
    %3101 = vmatprep.subr.bf16.mxu0 0
    %3102 = vmatpush1.bf16.xpose.msra.mxu0 0
    %3103 = vmatprep.subr.bf16.mxu0 0
    %3104 = vmatpush1.bf16.xpose.msra.mxu0 0
    %3105 = vmatprep.subr.bf16.mxu0 0
    %3106 = vmatpush1.bf16.xpose.msra.mxu0 0
    %3107 = vmatprep.subr.bf16.mxu0 0
    %3108 = vmatpush1.bf16.xpose.msra.mxu0 0
    %3109 = vmatprep.mubr.bf16.mxu0 0
    %3110 = vmatmul.mubr.bf16.gmra.mrb[0].mxu0 %v3072
    %v3111 = vpop.f32.mrb[0].mxu0
    %v3112 = vadd.f32 0.0, %v3111
    %v3113 = vpop.f32.mrb[0].mxu0
    %v3114 = vpop.f32.mrb[0].mxu0
    %v3115 = vadd.f32 0.0, %v3114
    %v3116 = vpop.f32.mrb[0].mxu0
    %3117 = vdwg.mxu0
    %vm3118 = vcmask 80896
    %v3119 = vsel %vm3118, %v3112, -inf
    %3120 = vmax.xlane.f32.xlu0 %v3119
    %v3121 = vpop.xlane.xlu0 %3120
    %vm3122 = vcmask 74752
    %v3123 = vsel %vm3122, %v3115, -inf
    %3124 = vmax.xlane.f32.xlu0 %v3123
    %v3125 = vpop.xlane.xlu0 %3124
    %v3126 = vsub.f32 %v3112, %v3121
    %v3127 = vsub.f32 %v3115, %v3125
    %v3128 = vmul.f32 %v3126, 1.442695
    %v3129 = vpow.pop %v3128
    %v3130 = vmul.f32 %v3127, 1.442695
    %v3131 = vpow.pop %v3130
    %v3132 = vsel %vm3118, %v3129, 0.0
    %3133 = vadd.xlane.f32.xlu0 %v3132
    %v3134 = vpop.xlane.xlu0 %3133
    %v3135 = vsel %vm3122, %v3131, 0.0
    %3136 = vadd.xlane.f32.xlu0 %v3135
    %v3137 = vpop.xlane.xlu0 %3136
    %v3138 = vrcp.pop %v3134
    %v3139 = vmul.f32 %v3129, %v3138
    %v3140 = vrcp.pop %v3137
    %v3141 = vmul.f32 %v3131, %v3140
    %3142 = vst.msk [vmem:[%s8] sm:$0xff] %vm3118, %v3139
    %3143 = vst.msk [vmem:[%s8 + $0x8] sm:$0x3] %vm3122, %v3141
    %v3144 = vpack.c.bf16 %v3141, %v3139
    %v3146 = vsel %vm3118, %v3144, 0
    %vm3148 = vcmask 1044480
    %v3150 = vsel %vm3148, %v3062, 0
    %3152 = vmatprep.subr.bf16.mxu0 0
    %3153 = vmatpush1.bf16.msra.mxu0 %v3150
    %3154 = vmatprep.subr.bf16.mxu0 0
    %3155 = vmatpush1.bf16.msra.mxu0 0
    %3156 = vmatprep.subr.bf16.mxu0 0
    %3157 = vmatpush1.bf16.msra.mxu0 0
    %3158 = vmatprep.subr.bf16.mxu0 0
    %3159 = vmatpush1.bf16.msra.mxu0 0
    %3160 = vmatprep.subr.bf16.mxu0 0
    %3161 = vmatpush1.bf16.msra.mxu0 0
    %3162 = vmatprep.subr.bf16.mxu0 0
    %3163 = vmatpush1.bf16.msra.mxu0 0
    %3164 = vmatprep.subr.bf16.mxu0 0
    %3165 = vmatpush1.bf16.msra.mxu0 0
    %3166 = vmatprep.subr.bf16.mxu0 0
    %3167 = vmatpush1.bf16.msra.mxu0 0
    %3168 = vmatprep.subr.bf16.mxu0 0
    %3169 = vmatpush1.bf16.msra.mxu0 0
    %3170 = vmatprep.subr.bf16.mxu0 0
    %3171 = vmatpush1.bf16.msra.mxu0 0
    %3172 = vmatprep.subr.bf16.mxu0 0
    %3173 = vmatpush1.bf16.msra.mxu0 0
    %3174 = vmatprep.subr.bf16.mxu0 0
    %3175 = vmatpush1.bf16.msra.mxu0 0
    %3176 = vmatprep.subr.bf16.mxu0 0
    %3177 = vmatpush1.bf16.msra.mxu0 0
    %3178 = vmatprep.subr.bf16.mxu0 0
    %3179 = vmatpush1.bf16.msra.mxu0 0
    %3180 = vmatprep.subr.bf16.mxu0 0
    %3181 = vmatpush1.bf16.msra.mxu0 0
    %3182 = vmatprep.subr.bf16.mxu0 0
    %3183 = vmatpush1.bf16.msra.mxu0 0
    %3184 = vmatprep.mubr.bf16.mxu0 0
    %3185 = vmatmul.mubr.bf16.gmra.mrb[0].mxu0 %v3146
    %v3186 = vpop.f32.mrb[0].mxu0
    %v3187 = vadd.f32 0.0, %v3186
    %v3188 = vpop.f32.mrb[0].mxu0
    %v3189 = vpop.f32.mrb[0].mxu0
    %v3190 = vadd.f32 0.0, %v3189
    %v3191 = vpop.f32.mrb[0].mxu0
    %3192 = vdwg.mxu0
    %v3193 = vpack.c.bf16 %v3190, %v3187
    %v3195 = vunpack.c.l.b16 %v3193
    %v3196 = vunpack.c.h.b16 %v3193
    %v3197 = vpack.c.b16 %v3195, %v3195
    %v3198 = vpack.c.b16 %v3196, %v3196
    %vm3201 = vcmask 519168
    %3202 = vst.msk [vmem:[#allocation2] sm:$0xf] %vm3201, %v3197
    %vm3203 = vcmask 516096
    %3204 = vst.msk [vmem:[#allocation2 + $0x10] sm:$0x1] %vm3203, %v3198
    %3206 = vrot.lane.b32.xlu0 %v1102, 64
    %v3207 = vpop.permute.xlu0 %3206
    %3209 = vrot.lane.b32.xlu0 %v2082, 64
    %v3210 = vpop.permute.xlu0 %3209
    %v3212 = vsel %vm3070, %v3207, 0
    %v3215 = vsel %vm3070, %v3210, 0
    %3217 = vmatprep.subr.bf16.mxu0 0
    %3218 = vmatpush1.bf16.xpose.msra.mxu0 %v3215
    %3219 = vmatprep.subr.bf16.mxu0 0
    %3220 = vmatpush1.bf16.xpose.msra.mxu0 0
    %3221 = vmatprep.subr.bf16.mxu0 0
    %3222 = vmatpush1.bf16.xpose.msra.mxu0 0
    %3223 = vmatprep.subr.bf16.mxu0 0
    %3224 = vmatpush1.bf16.xpose.msra.mxu0 0
    %3225 = vmatprep.subr.bf16.mxu0 0
    %3226 = vmatpush1.bf16.xpose.msra.mxu0 0
    %3227 = vmatprep.subr.bf16.mxu0 0
    %3228 = vmatpush1.bf16.xpose.msra.mxu0 0
    %3229 = vmatprep.subr.bf16.mxu0 0
    %3230 = vmatpush1.bf16.xpose.msra.mxu0 0
    %3231 = vmatprep.subr.bf16.mxu0 0
    %3232 = vmatpush1.bf16.xpose.msra.mxu0 0
    %3233 = vmatprep.subr.bf16.mxu0 0
    %3234 = vmatpush1.bf16.xpose.msra.mxu0 0
    %3235 = vmatprep.subr.bf16.mxu0 0
    %3236 = vmatpush1.bf16.xpose.msra.mxu0 0
    %3237 = vmatprep.subr.bf16.mxu0 0
    %3238 = vmatpush1.bf16.xpose.msra.mxu0 0
    %3239 = vmatprep.subr.bf16.mxu0 0
    %3240 = vmatpush1.bf16.xpose.msra.mxu0 0
    %3241 = vmatprep.subr.bf16.mxu0 0
    %3242 = vmatpush1.bf16.xpose.msra.mxu0 0
    %3243 = vmatprep.subr.bf16.mxu0 0
    %3244 = vmatpush1.bf16.xpose.msra.mxu0 0
    %3245 = vmatprep.subr.bf16.mxu0 0
    %3246 = vmatpush1.bf16.xpose.msra.mxu0 0
    %3247 = vmatprep.subr.bf16.mxu0 0
    %3248 = vmatpush1.bf16.xpose.msra.mxu0 0
    %3249 = vmatprep.mubr.bf16.mxu0 0
    %3250 = vmatmul.mubr.bf16.gmra.mrb[0].mxu0 %v3212
    %v3251 = vpop.f32.mrb[0].mxu0
    %v3252 = vadd.f32 0.0, %v3251
    %v3253 = vpop.f32.mrb[0].mxu0
    %v3254 = vpop.f32.mrb[0].mxu0
    %v3255 = vadd.f32 0.0, %v3254
    %v3256 = vpop.f32.mrb[0].mxu0
    %3257 = vdwg.mxu0
    %v3258 = vsel %vm3118, %v3252, -inf
    %3259 = vmax.xlane.f32.xlu0 %v3258
    %v3260 = vpop.xlane.xlu0 %3259
    %v3261 = vsel %vm3122, %v3255, -inf
    %3262 = vmax.xlane.f32.xlu0 %v3261
    %v3263 = vpop.xlane.xlu0 %3262
    %v3264 = vsub.f32 %v3252, %v3260
    %v3265 = vsub.f32 %v3255, %v3263
    %v3266 = vmul.f32 %v3264, 1.442695
    %v3267 = vpow.pop %v3266
    %v3268 = vmul.f32 %v3265, 1.442695
    %v3269 = vpow.pop %v3268
    %v3270 = vsel %vm3118, %v3267, 0.0
    %3271 = vadd.xlane.f32.xlu0 %v3270
    %v3272 = vpop.xlane.xlu0 %3271
    %v3273 = vsel %vm3122, %v3269, 0.0
    %3274 = vadd.xlane.f32.xlu0 %v3273
    %v3275 = vpop.xlane.xlu0 %3274
    %v3276 = vrcp.pop %v3272
    %v3277 = vmul.f32 %v3267, %v3276
    %v3278 = vrcp.pop %v3275
    %v3279 = vmul.f32 %v3269, %v3278
    %s3280 = scalar_lea.vmem %s8, 16
    %3281 = vst.msk [vmem:[%s3280] sm:$0xff] %vm3118, %v3277
    %3282 = vst.msk [vmem:[%s3280 + $0x8] sm:$0x3] %vm3122, %v3279
    %v3283 = vpack.c.bf16 %v3279, %v3277
    %3285 = vrot.lane.b32.xlu0 %v3062, 64
    %v3286 = vpop.permute.xlu0 %3285
    %v3288 = vsel %vm3118, %v3283, 0
    %v3291 = vsel %vm3148, %v3286, 0
    %3293 = vmatprep.subr.bf16.mxu0 0
    %3294 = vmatpush1.bf16.msra.mxu0 %v3291
    %3295 = vmatprep.subr.bf16.mxu0 0
    %3296 = vmatpush1.bf16.msra.mxu0 0
    %3297 = vmatprep.subr.bf16.mxu0 0
    %3298 = vmatpush1.bf16.msra.mxu0 0
    %3299 = vmatprep.subr.bf16.mxu0 0
    %3300 = vmatpush1.bf16.msra.mxu0 0
    %3301 = vmatprep.subr.bf16.mxu0 0
    %3302 = vmatpush1.bf16.msra.mxu0 0
    %3303 = vmatprep.subr.bf16.mxu0 0
    %3304 = vmatpush1.bf16.msra.mxu0 0
    %3305 = vmatprep.subr.bf16.mxu0 0
    %3306 = vmatpush1.bf16.msra.mxu0 0
    %3307 = vmatprep.subr.bf16.mxu0 0
    %3308 = vmatpush1.bf16.msra.mxu0 0
    %3309 = vmatprep.subr.bf16.mxu0 0
    %3310 = vmatpush1.bf16.msra.mxu0 0
    %3311 = vmatprep.subr.bf16.mxu0 0
    %3312 = vmatpush1.bf16.msra.mxu0 0
    %3313 = vmatprep.subr.bf16.mxu0 0
    %3314 = vmatpush1.bf16.msra.mxu0 0
    %3315 = vmatprep.subr.bf16.mxu0 0
    %3316 = vmatpush1.bf16.msra.mxu0 0
    %3317 = vmatprep.subr.bf16.mxu0 0
    %3318 = vmatpush1.bf16.msra.mxu0 0
    %3319 = vmatprep.subr.bf16.mxu0 0
    %3320 = vmatpush1.bf16.msra.mxu0 0
    %3321 = vmatprep.subr.bf16.mxu0 0
    %3322 = vmatpush1.bf16.msra.mxu0 0
    %3323 = vmatprep.subr.bf16.mxu0 0
    %3324 = vmatpush1.bf16.msra.mxu0 0
    %3325 = vmatprep.mubr.bf16.mxu0 0
    %3326 = vmatmul.mubr.bf16.gmra.mrb[0].mxu0 %v3288
    %v3327 = vpop.f32.mrb[0].mxu0
    %v3328 = vadd.f32 0.0, %v3327
    %v3329 = vpop.f32.mrb[0].mxu0
    %v3330 = vpop.f32.mrb[0].mxu0
    %v3331 = vadd.f32 0.0, %v3330
    %v3332 = vpop.f32.mrb[0].mxu0
    %3333 = vdwg.mxu0
    %v3334 = vpack.c.bf16 %v3331, %v3328
    %v3336 = vunpack.c.l.b16 %v3334
    %v3337 = vunpack.c.h.b16 %v3334
    %v3338 = vpack.c.b16 %v3336, %v3336
    %v3339 = vpack.c.b16 %v3337, %v3337
    %3340 = vrot.lane.b32.xlu0 %v3338, 64
    %v3341 = vpop.permute.xlu0 %3340
    %3342 = vrot.lane.b32.xlu0 %v3339, 64
    %v3343 = vpop.permute.xlu0 %3342
    %vm3346 = vcmask 1043968
    %3347 = vst.msk [vmem:[#allocation2] sm:$0xf] %vm3346, %v3341
    %vm3348 = vcmask 1040896
    %3349 = vst.msk [vmem:[#allocation2 + $0x10] sm:$0x1] %vm3348, %v3343
    %v3351 = vsel %vm3070, %v1103, 0
    %v3354 = vsel %vm3070, %v2083, 0
    %3356 = vmatprep.subr.bf16.mxu0 0
    %3357 = vmatpush1.bf16.xpose.msra.mxu0 %v3354
    %3358 = vmatprep.subr.bf16.mxu0 0
    %3359 = vmatpush1.bf16.xpose.msra.mxu0 0
    %3360 = vmatprep.subr.bf16.mxu0 0
    %3361 = vmatpush1.bf16.xpose.msra.mxu0 0
    %3362 = vmatprep.subr.bf16.mxu0 0
    %3363 = vmatpush1.bf16.xpose.msra.mxu0 0
    %3364 = vmatprep.subr.bf16.mxu0 0
    %3365 = vmatpush1.bf16.xpose.msra.mxu0 0
    %3366 = vmatprep.subr.bf16.mxu0 0
    %3367 = vmatpush1.bf16.xpose.msra.mxu0 0
    %3368 = vmatprep.subr.bf16.mxu0 0
    %3369 = vmatpush1.bf16.xpose.msra.mxu0 0
    %3370 = vmatprep.subr.bf16.mxu0 0
    %3371 = vmatpush1.bf16.xpose.msra.mxu0 0
    %3372 = vmatprep.subr.bf16.mxu0 0
    %3373 = vmatpush1.bf16.xpose.msra.mxu0 0
    %3374 = vmatprep.subr.bf16.mxu0 0
    %3375 = vmatpush1.bf16.xpose.msra.mxu0 0
    %3376 = vmatprep.subr.bf16.mxu0 0
    %3377 = vmatpush1.bf16.xpose.msra.mxu0 0
    %3378 = vmatprep.subr.bf16.mxu0 0
    %3379 = vmatpush1.bf16.xpose.msra.mxu0 0
    %3380 = vmatprep.subr.bf16.mxu0 0
    %3381 = vmatpush1.bf16.xpose.msra.mxu0 0
    %3382 = vmatprep.subr.bf16.mxu0 0
    %3383 = vmatpush1.bf16.xpose.msra.mxu0 0
    %3384 = vmatprep.subr.bf16.mxu0 0
    %3385 = vmatpush1.bf16.xpose.msra.mxu0 0
    %3386 = vmatprep.subr.bf16.mxu0 0
    %3387 = vmatpush1.bf16.xpose.msra.mxu0 0
    %3388 = vmatprep.mubr.bf16.mxu0 0
    %3389 = vmatmul.mubr.bf16.gmra.mrb[0].mxu0 %v3351
    %v3390 = vpop.f32.mrb[0].mxu0
    %v3391 = vadd.f32 0.0, %v3390
    %v3392 = vpop.f32.mrb[0].mxu0
    %v3393 = vpop.f32.mrb[0].mxu0
    %v3394 = vadd.f32 0.0, %v3393
    %v3395 = vpop.f32.mrb[0].mxu0
    %3396 = vdwg.mxu0
    %v3397 = vsel %vm3118, %v3391, -inf
    %3398 = vmax.xlane.f32.xlu0 %v3397
    %v3399 = vpop.xlane.xlu0 %3398
    %v3400 = vsel %vm3122, %v3394, -inf
    %3401 = vmax.xlane.f32.xlu0 %v3400
    %v3402 = vpop.xlane.xlu0 %3401
    %v3403 = vsub.f32 %v3391, %v3399
    %v3404 = vsub.f32 %v3394, %v3402
    %v3405 = vmul.f32 %v3403, 1.442695
    %v3406 = vpow.pop %v3405
    %v3407 = vmul.f32 %v3404, 1.442695
    %v3408 = vpow.pop %v3407
    %v3409 = vsel %vm3118, %v3406, 0.0
    %3410 = vadd.xlane.f32.xlu0 %v3409
    %v3411 = vpop.xlane.xlu0 %3410
    %v3412 = vsel %vm3122, %v3408, 0.0
    %3413 = vadd.xlane.f32.xlu0 %v3412
    %v3414 = vpop.xlane.xlu0 %3413
    %v3415 = vrcp.pop %v3411
    %v3416 = vmul.f32 %v3406, %v3415
    %v3417 = vrcp.pop %v3414
    %v3418 = vmul.f32 %v3408, %v3417
    %s3419 = scalar_lea.vmem %s8, 32
    %3420 = vst.msk [vmem:[%s3419] sm:$0xff] %vm3118, %v3416
    %3421 = vst.msk [vmem:[%s3419 + $0x8] sm:$0x3] %vm3122, %v3418
    %v3422 = vpack.c.bf16 %v3418, %v3416
    %v3424 = vsel %vm3118, %v3422, 0
    %v3427 = vsel %vm3148, %v3063, 0
    %3429 = vmatprep.subr.bf16.mxu0 0
    %3430 = vmatpush1.bf16.msra.mxu0 %v3427
    %3431 = vmatprep.subr.bf16.mxu0 0
    %3432 = vmatpush1.bf16.msra.mxu0 0
    %3433 = vmatprep.subr.bf16.mxu0 0
    %3434 = vmatpush1.bf16.msra.mxu0 0
    %3435 = vmatprep.subr.bf16.mxu0 0
    %3436 = vmatpush1.bf16.msra.mxu0 0
    %3437 = vmatprep.subr.bf16.mxu0 0
    %3438 = vmatpush1.bf16.msra.mxu0 0
    %3439 = vmatprep.subr.bf16.mxu0 0
    %3440 = vmatpush1.bf16.msra.mxu0 0
    %3441 = vmatprep.subr.bf16.mxu0 0
    %3442 = vmatpush1.bf16.msra.mxu0 0
    %3443 = vmatprep.subr.bf16.mxu0 0
    %3444 = vmatpush1.bf16.msra.mxu0 0
    %3445 = vmatprep.subr.bf16.mxu0 0
    %3446 = vmatpush1.bf16.msra.mxu0 0
    %3447 = vmatprep.subr.bf16.mxu0 0
    %3448 = vmatpush1.bf16.msra.mxu0 0
    %3449 = vmatprep.subr.bf16.mxu0 0
    %3450 = vmatpush1.bf16.msra.mxu0 0
    %3451 = vmatprep.subr.bf16.mxu0 0
    %3452 = vmatpush1.bf16.msra.mxu0 0
    %3453 = vmatprep.subr.bf16.mxu0 0
    %3454 = vmatpush1.bf16.msra.mxu0 0
    %3455 = vmatprep.subr.bf16.mxu0 0
    %3456 = vmatpush1.bf16.msra.mxu0 0
    %3457 = vmatprep.subr.bf16.mxu0 0
    %3458 = vmatpush1.bf16.msra.mxu0 0
    %3459 = vmatprep.subr.bf16.mxu0 0
    %3460 = vmatpush1.bf16.msra.mxu0 0
    %3461 = vmatprep.mubr.bf16.mxu0 0
    %3462 = vmatmul.mubr.bf16.gmra.mrb[0].mxu0 %v3424
    %v3463 = vpop.f32.mrb[0].mxu0
    %v3464 = vadd.f32 0.0, %v3463
    %v3465 = vpop.f32.mrb[0].mxu0
    %v3466 = vpop.f32.mrb[0].mxu0
    %v3467 = vadd.f32 0.0, %v3466
    %v3468 = vpop.f32.mrb[0].mxu0
    %3469 = vdwg.mxu0
    %v3470 = vpack.c.bf16 %v3467, %v3464
    %v3472 = vunpack.c.l.b16 %v3470
    %v3473 = vunpack.c.h.b16 %v3470
    %v3474 = vpack.c.b16 %v3472, %v3472
    %v3475 = vpack.c.b16 %v3473, %v3473
    %3478 = vst.msk [vmem:[#allocation2 + $0x4] sm:$0xf] %vm3201, %v3474
    %3479 = vst.msk [vmem:[#allocation2 + $0x14] sm:$0x1] %vm3203, %v3475
    %3481 = vrot.lane.b32.xlu0 %v1103, 64
    %v3482 = vpop.permute.xlu0 %3481
    %3484 = vrot.lane.b32.xlu0 %v2083, 64
    %v3485 = vpop.permute.xlu0 %3484
    %v3487 = vsel %vm3070, %v3482, 0
    %v3490 = vsel %vm3070, %v3485, 0
    %3492 = vmatprep.subr.bf16.mxu0 0
    %3493 = vmatpush1.bf16.xpose.msra.mxu0 %v3490
    %3494 = vmatprep.subr.bf16.mxu0 0
    %3495 = vmatpush1.bf16.xpose.msra.mxu0 0
    %3496 = vmatprep.subr.bf16.mxu0 0
    %3497 = vmatpush1.bf16.xpose.msra.mxu0 0
    %3498 = vmatprep.subr.bf16.mxu0 0
    %3499 = vmatpush1.bf16.xpose.msra.mxu0 0
    %3500 = vmatprep.subr.bf16.mxu0 0
    %3501 = vmatpush1.bf16.xpose.msra.mxu0 0
    %3502 = vmatprep.subr.bf16.mxu0 0
    %3503 = vmatpush1.bf16.xpose.msra.mxu0 0
    %3504 = vmatprep.subr.bf16.mxu0 0
    %3505 = vmatpush1.bf16.xpose.msra.mxu0 0
    %3506 = vmatprep.subr.bf16.mxu0 0
    %3507 = vmatpush1.bf16.xpose.msra.mxu0 0
    %3508 = vmatprep.subr.bf16.mxu0 0
    %3509 = vmatpush1.bf16.xpose.msra.mxu0 0
    %3510 = vmatprep.subr.bf16.mxu0 0
    %3511 = vmatpush1.bf16.xpose.msra.mxu0 0
    %3512 = vmatprep.subr.bf16.mxu0 0
    %3513 = vmatpush1.bf16.xpose.msra.mxu0 0
    %3514 = vmatprep.subr.bf16.mxu0 0
    %3515 = vmatpush1.bf16.xpose.msra.mxu0 0
    %3516 = vmatprep.subr.bf16.mxu0 0
    %3517 = vmatpush1.bf16.xpose.msra.mxu0 0
    %3518 = vmatprep.subr.bf16.mxu0 0
    %3519 = vmatpush1.bf16.xpose.msra.mxu0 0
    %3520 = vmatprep.subr.bf16.mxu0 0
    %3521 = vmatpush1.bf16.xpose.msra.mxu0 0
    %3522 = vmatprep.subr.bf16.mxu0 0
    %3523 = vmatpush1.bf16.xpose.msra.mxu0 0
    %3524 = vmatprep.mubr.bf16.mxu0 0
    %3525 = vmatmul.mubr.bf16.gmra.mrb[0].mxu0 %v3487
    %v3526 = vpop.f32.mrb[0].mxu0
    %v3527 = vadd.f32 0.0, %v3526
    %v3528 = vpop.f32.mrb[0].mxu0
    %v3529 = vpop.f32.mrb[0].mxu0
    %v3530 = vadd.f32 0.0, %v3529
    %v3531 = vpop.f32.mrb[0].mxu0
    %3532 = vdwg.mxu0
    %v3533 = vsel %vm3118, %v3527, -inf
    %3534 = vmax.xlane.f32.xlu0 %v3533
    %v3535 = vpop.xlane.xlu0 %3534
    %v3536 = vsel %vm3122, %v3530, -inf
    %3537 = vmax.xlane.f32.xlu0 %v3536
    %v3538 = vpop.xlane.xlu0 %3537
    %v3539 = vsub.f32 %v3527, %v3535
    %v3540 = vsub.f32 %v3530, %v3538
    %v3541 = vmul.f32 %v3539, 1.442695
    %v3542 = vpow.pop %v3541
    %v3543 = vmul.f32 %v3540, 1.442695
    %v3544 = vpow.pop %v3543
    %v3545 = vsel %vm3118, %v3542, 0.0
    %3546 = vadd.xlane.f32.xlu0 %v3545
    %v3547 = vpop.xlane.xlu0 %3546
    %v3548 = vsel %vm3122, %v3544, 0.0
    %3549 = vadd.xlane.f32.xlu0 %v3548
    %v3550 = vpop.xlane.xlu0 %3549
    %v3551 = vrcp.pop %v3547
    %v3552 = vmul.f32 %v3542, %v3551
    %v3553 = vrcp.pop %v3550
    %v3554 = vmul.f32 %v3544, %v3553
    %s3555 = scalar_lea.vmem %s8, 48
    %3556 = vst.msk [vmem:[%s3555] sm:$0xff] %vm3118, %v3552
    %3557 = vst.msk [vmem:[%s3555 + $0x8] sm:$0x3] %vm3122, %v3554
    %v3558 = vpack.c.bf16 %v3554, %v3552
    %3560 = vrot.lane.b32.xlu0 %v3063, 64
    %v3561 = vpop.permute.xlu0 %3560
    %v3563 = vsel %vm3118, %v3558, 0
    %v3566 = vsel %vm3148, %v3561, 0
    %3568 = vmatprep.subr.bf16.mxu0 0
    %3569 = vmatpush1.bf16.msra.mxu0 %v3566
    %3570 = vmatprep.subr.bf16.mxu0 0
    %3571 = vmatpush1.bf16.msra.mxu0 0
    %3572 = vmatprep.subr.bf16.mxu0 0
    %3573 = vmatpush1.bf16.msra.mxu0 0
    %3574 = vmatprep.subr.bf16.mxu0 0
    %3575 = vmatpush1.bf16.msra.mxu0 0
    %3576 = vmatprep.subr.bf16.mxu0 0
    %3577 = vmatpush1.bf16.msra.mxu0 0
    %3578 = vmatprep.subr.bf16.mxu0 0
    %3579 = vmatpush1.bf16.msra.mxu0 0
    %3580 = vmatprep.subr.bf16.mxu0 0
    %3581 = vmatpush1.bf16.msra.mxu0 0
    %3582 = vmatprep.subr.bf16.mxu0 0
    %3583 = vmatpush1.bf16.msra.mxu0 0
    %3584 = vmatprep.subr.bf16.mxu0 0
    %3585 = vmatpush1.bf16.msra.mxu0 0
    %3586 = vmatprep.subr.bf16.mxu0 0
    %3587 = vmatpush1.bf16.msra.mxu0 0
    %3588 = vmatprep.subr.bf16.mxu0 0
    %3589 = vmatpush1.bf16.msra.mxu0 0
    %3590 = vmatprep.subr.bf16.mxu0 0
    %3591 = vmatpush1.bf16.msra.mxu0 0
    %3592 = vmatprep.subr.bf16.mxu0 0
    %3593 = vmatpush1.bf16.msra.mxu0 0
    %3594 = vmatprep.subr.bf16.mxu0 0
    %3595 = vmatpush1.bf16.msra.mxu0 0
    %3596 = vmatprep.subr.bf16.mxu0 0
    %3597 = vmatpush1.bf16.msra.mxu0 0
    %3598 = vmatprep.subr.bf16.mxu0 0
    %3599 = vmatpush1.bf16.msra.mxu0 0
    %3600 = vmatprep.mubr.bf16.mxu0 0
    %3601 = vmatmul.mubr.bf16.gmra.mrb[0].mxu0 %v3563
    %v3602 = vpop.f32.mrb[0].mxu0
    %v3603 = vadd.f32 0.0, %v3602
    %v3604 = vpop.f32.mrb[0].mxu0
    %v3605 = vpop.f32.mrb[0].mxu0
    %v3606 = vadd.f32 0.0, %v3605
    %v3607 = vpop.f32.mrb[0].mxu0
    %3608 = vdwg.mxu0
    %v3609 = vpack.c.bf16 %v3606, %v3603
    %v3611 = vunpack.c.l.b16 %v3609
    %v3612 = vunpack.c.h.b16 %v3609
    %v3613 = vpack.c.b16 %v3611, %v3611
    %v3614 = vpack.c.b16 %v3612, %v3612
    %3615 = vrot.lane.b32.xlu0 %v3613, 64
    %v3616 = vpop.permute.xlu0 %3615
    %3617 = vrot.lane.b32.xlu0 %v3614, 64
    %v3618 = vpop.permute.xlu0 %3617
    %3621 = vst.msk [vmem:[#allocation2 + $0x4] sm:$0xf] %vm3346, %v3616
    %3622 = vst.msk [vmem:[#allocation2 + $0x14] sm:$0x1] %vm3348, %v3618
    %v3624 = vsel %vm3070, %v1104, 0
    %v3627 = vsel %vm3070, %v2084, 0
    %3629 = vmatprep.subr.bf16.mxu0 0
    %3630 = vmatpush1.bf16.xpose.msra.mxu0 %v3627
    %3631 = vmatprep.subr.bf16.mxu0 0
    %3632 = vmatpush1.bf16.xpose.msra.mxu0 0
    %3633 = vmatprep.subr.bf16.mxu0 0
    %3634 = vmatpush1.bf16.xpose.msra.mxu0 0
    %3635 = vmatprep.subr.bf16.mxu0 0
    %3636 = vmatpush1.bf16.xpose.msra.mxu0 0
    %3637 = vmatprep.subr.bf16.mxu0 0
    %3638 = vmatpush1.bf16.xpose.msra.mxu0 0
    %3639 = vmatprep.subr.bf16.mxu0 0
    %3640 = vmatpush1.bf16.xpose.msra.mxu0 0
    %3641 = vmatprep.subr.bf16.mxu0 0
    %3642 = vmatpush1.bf16.xpose.msra.mxu0 0
    %3643 = vmatprep.subr.bf16.mxu0 0
    %3644 = vmatpush1.bf16.xpose.msra.mxu0 0
    %3645 = vmatprep.subr.bf16.mxu0 0
    %3646 = vmatpush1.bf16.xpose.msra.mxu0 0
    %3647 = vmatprep.subr.bf16.mxu0 0
    %3648 = vmatpush1.bf16.xpose.msra.mxu0 0
    %3649 = vmatprep.subr.bf16.mxu0 0
    %3650 = vmatpush1.bf16.xpose.msra.mxu0 0
    %3651 = vmatprep.subr.bf16.mxu0 0
    %3652 = vmatpush1.bf16.xpose.msra.mxu0 0
    %3653 = vmatprep.subr.bf16.mxu0 0
    %3654 = vmatpush1.bf16.xpose.msra.mxu0 0
    %3655 = vmatprep.subr.bf16.mxu0 0
    %3656 = vmatpush1.bf16.xpose.msra.mxu0 0
    %3657 = vmatprep.subr.bf16.mxu0 0
    %3658 = vmatpush1.bf16.xpose.msra.mxu0 0
    %3659 = vmatprep.subr.bf16.mxu0 0
    %3660 = vmatpush1.bf16.xpose.msra.mxu0 0
    %3661 = vmatprep.mubr.bf16.mxu0 0
    %3662 = vmatmul.mubr.bf16.gmra.mrb[0].mxu0 %v3624
    %v3663 = vpop.f32.mrb[0].mxu0
    %v3664 = vadd.f32 0.0, %v3663
    %v3665 = vpop.f32.mrb[0].mxu0
    %v3666 = vpop.f32.mrb[0].mxu0
    %v3667 = vadd.f32 0.0, %v3666
    %v3668 = vpop.f32.mrb[0].mxu0
    %3669 = vdwg.mxu0
    %v3670 = vsel %vm3118, %v3664, -inf
    %3671 = vmax.xlane.f32.xlu0 %v3670
    %v3672 = vpop.xlane.xlu0 %3671
    %v3673 = vsel %vm3122, %v3667, -inf
    %3674 = vmax.xlane.f32.xlu0 %v3673
    %v3675 = vpop.xlane.xlu0 %3674
    %v3676 = vsub.f32 %v3664, %v3672
    %v3677 = vsub.f32 %v3667, %v3675
    %v3678 = vmul.f32 %v3676, 1.442695
    %v3679 = vpow.pop %v3678
    %v3680 = vmul.f32 %v3677, 1.442695
    %v3681 = vpow.pop %v3680
    %v3682 = vsel %vm3118, %v3679, 0.0
    %3683 = vadd.xlane.f32.xlu0 %v3682
    %v3684 = vpop.xlane.xlu0 %3683
    %v3685 = vsel %vm3122, %v3681, 0.0
    %3686 = vadd.xlane.f32.xlu0 %v3685
    %v3687 = vpop.xlane.xlu0 %3686
    %v3688 = vrcp.pop %v3684
    %v3689 = vmul.f32 %v3679, %v3688
    %v3690 = vrcp.pop %v3687
    %v3691 = vmul.f32 %v3681, %v3690
    %s3692 = scalar_lea.vmem %s8, 64
    %3693 = vst.msk [vmem:[%s3692] sm:$0xff] %vm3118, %v3689
    %3694 = vst.msk [vmem:[%s3692 + $0x8] sm:$0x3] %vm3122, %v3691
    %v3695 = vpack.c.bf16 %v3691, %v3689
    %v3697 = vsel %vm3118, %v3695, 0
    %v3700 = vsel %vm3148, %v3064, 0
    %3702 = vmatprep.subr.bf16.mxu0 0
    %3703 = vmatpush1.bf16.msra.mxu0 %v3700
    %3704 = vmatprep.subr.bf16.mxu0 0
    %3705 = vmatpush1.bf16.msra.mxu0 0
    %3706 = vmatprep.subr.bf16.mxu0 0
    %3707 = vmatpush1.bf16.msra.mxu0 0
    %3708 = vmatprep.subr.bf16.mxu0 0
    %3709 = vmatpush1.bf16.msra.mxu0 0
    %3710 = vmatprep.subr.bf16.mxu0 0
    %3711 = vmatpush1.bf16.msra.mxu0 0
    %3712 = vmatprep.subr.bf16.mxu0 0
    %3713 = vmatpush1.bf16.msra.mxu0 0
    %3714 = vmatprep.subr.bf16.mxu0 0
    %3715 = vmatpush1.bf16.msra.mxu0 0
    %3716 = vmatprep.subr.bf16.mxu0 0
    %3717 = vmatpush1.bf16.msra.mxu0 0
    %3718 = vmatprep.subr.bf16.mxu0 0
    %3719 = vmatpush1.bf16.msra.mxu0 0
    %3720 = vmatprep.subr.bf16.mxu0 0
    %3721 = vmatpush1.bf16.msra.mxu0 0
    %3722 = vmatprep.subr.bf16.mxu0 0
    %3723 = vmatpush1.bf16.msra.mxu0 0
    %3724 = vmatprep.subr.bf16.mxu0 0
    %3725 = vmatpush1.bf16.msra.mxu0 0
    %3726 = vmatprep.subr.bf16.mxu0 0
    %3727 = vmatpush1.bf16.msra.mxu0 0
    %3728 = vmatprep.subr.bf16.mxu0 0
    %3729 = vmatpush1.bf16.msra.mxu0 0
    %3730 = vmatprep.subr.bf16.mxu0 0
    %3731 = vmatpush1.bf16.msra.mxu0 0
    %3732 = vmatprep.subr.bf16.mxu0 0
    %3733 = vmatpush1.bf16.msra.mxu0 0
    %3734 = vmatprep.mubr.bf16.mxu0 0
    %3735 = vmatmul.mubr.bf16.gmra.mrb[0].mxu0 %v3697
    %v3736 = vpop.f32.mrb[0].mxu0
    %v3737 = vadd.f32 0.0, %v3736
    %v3738 = vpop.f32.mrb[0].mxu0
    %v3739 = vpop.f32.mrb[0].mxu0
    %v3740 = vadd.f32 0.0, %v3739
    %v3741 = vpop.f32.mrb[0].mxu0
    %3742 = vdwg.mxu0
    %v3743 = vpack.c.bf16 %v3740, %v3737
    %v3745 = vunpack.c.l.b16 %v3743
    %v3746 = vunpack.c.h.b16 %v3743
    %v3747 = vpack.c.b16 %v3745, %v3745
    %v3748 = vpack.c.b16 %v3746, %v3746
    %3751 = vst.msk [vmem:[#allocation2 + $0x8] sm:$0xf] %vm3201, %v3747
    %3752 = vst.msk [vmem:[#allocation2 + $0x18] sm:$0x1] %vm3203, %v3748
    %3754 = vrot.lane.b32.xlu0 %v1104, 64
    %v3755 = vpop.permute.xlu0 %3754
    %3757 = vrot.lane.b32.xlu0 %v2084, 64
    %v3758 = vpop.permute.xlu0 %3757
    %v3760 = vsel %vm3070, %v3755, 0
    %v3763 = vsel %vm3070, %v3758, 0
    %3765 = vmatprep.subr.bf16.mxu0 0
    %3766 = vmatpush1.bf16.xpose.msra.mxu0 %v3763
    %3767 = vmatprep.subr.bf16.mxu0 0
    %3768 = vmatpush1.bf16.xpose.msra.mxu0 0
    %3769 = vmatprep.subr.bf16.mxu0 0
    %3770 = vmatpush1.bf16.xpose.msra.mxu0 0
    %3771 = vmatprep.subr.bf16.mxu0 0
    %3772 = vmatpush1.bf16.xpose.msra.mxu0 0
    %3773 = vmatprep.subr.bf16.mxu0 0
    %3774 = vmatpush1.bf16.xpose.msra.mxu0 0
    %3775 = vmatprep.subr.bf16.mxu0 0
    %3776 = vmatpush1.bf16.xpose.msra.mxu0 0
    %3777 = vmatprep.subr.bf16.mxu0 0
    %3778 = vmatpush1.bf16.xpose.msra.mxu0 0
    %3779 = vmatprep.subr.bf16.mxu0 0
    %3780 = vmatpush1.bf16.xpose.msra.mxu0 0
    %3781 = vmatprep.subr.bf16.mxu0 0
    %3782 = vmatpush1.bf16.xpose.msra.mxu0 0
    %3783 = vmatprep.subr.bf16.mxu0 0
    %3784 = vmatpush1.bf16.xpose.msra.mxu0 0
    %3785 = vmatprep.subr.bf16.mxu0 0
    %3786 = vmatpush1.bf16.xpose.msra.mxu0 0
    %3787 = vmatprep.subr.bf16.mxu0 0
    %3788 = vmatpush1.bf16.xpose.msra.mxu0 0
    %3789 = vmatprep.subr.bf16.mxu0 0
    %3790 = vmatpush1.bf16.xpose.msra.mxu0 0
    %3791 = vmatprep.subr.bf16.mxu0 0
    %3792 = vmatpush1.bf16.xpose.msra.mxu0 0
    %3793 = vmatprep.subr.bf16.mxu0 0
    %3794 = vmatpush1.bf16.xpose.msra.mxu0 0
    %3795 = vmatprep.subr.bf16.mxu0 0
    %3796 = vmatpush1.bf16.xpose.msra.mxu0 0
    %3797 = vmatprep.mubr.bf16.mxu0 0
    %3798 = vmatmul.mubr.bf16.gmra.mrb[0].mxu0 %v3760
    %v3799 = vpop.f32.mrb[0].mxu0
    %v3800 = vadd.f32 0.0, %v3799
    %v3801 = vpop.f32.mrb[0].mxu0
    %v3802 = vpop.f32.mrb[0].mxu0
    %v3803 = vadd.f32 0.0, %v3802
    %v3804 = vpop.f32.mrb[0].mxu0
    %3805 = vdwg.mxu0
    %v3806 = vsel %vm3118, %v3800, -inf
    %3807 = vmax.xlane.f32.xlu0 %v3806
    %v3808 = vpop.xlane.xlu0 %3807
    %v3809 = vsel %vm3122, %v3803, -inf
    %3810 = vmax.xlane.f32.xlu0 %v3809
    %v3811 = vpop.xlane.xlu0 %3810
    %v3812 = vsub.f32 %v3800, %v3808
    %v3813 = vsub.f32 %v3803, %v3811
    %v3814 = vmul.f32 %v3812, 1.442695
    %v3815 = vpow.pop %v3814
    %v3816 = vmul.f32 %v3813, 1.442695
    %v3817 = vpow.pop %v3816
    %v3818 = vsel %vm3118, %v3815, 0.0
    %3819 = vadd.xlane.f32.xlu0 %v3818
    %v3820 = vpop.xlane.xlu0 %3819
    %v3821 = vsel %vm3122, %v3817, 0.0
    %3822 = vadd.xlane.f32.xlu0 %v3821
    %v3823 = vpop.xlane.xlu0 %3822
    %v3824 = vrcp.pop %v3820
    %v3825 = vmul.f32 %v3815, %v3824
    %v3826 = vrcp.pop %v3823
    %v3827 = vmul.f32 %v3817, %v3826
    %s3828 = scalar_lea.vmem %s8, 80
    %3829 = vst.msk [vmem:[%s3828] sm:$0xff] %vm3118, %v3825
    %3830 = vst.msk [vmem:[%s3828 + $0x8] sm:$0x3] %vm3122, %v3827
    %v3831 = vpack.c.bf16 %v3827, %v3825
    %3833 = vrot.lane.b32.xlu0 %v3064, 64
    %v3834 = vpop.permute.xlu0 %3833
    %v3836 = vsel %vm3118, %v3831, 0
    %v3839 = vsel %vm3148, %v3834, 0
    %3841 = vmatprep.subr.bf16.mxu0 0
    %3842 = vmatpush1.bf16.msra.mxu0 %v3839
    %3843 = vmatprep.subr.bf16.mxu0 0
    %3844 = vmatpush1.bf16.msra.mxu0 0
    %3845 = vmatprep.subr.bf16.mxu0 0
    %3846 = vmatpush1.bf16.msra.mxu0 0
    %3847 = vmatprep.subr.bf16.mxu0 0
    %3848 = vmatpush1.bf16.msra.mxu0 0
    %3849 = vmatprep.subr.bf16.mxu0 0
    %3850 = vmatpush1.bf16.msra.mxu0 0
    %3851 = vmatprep.subr.bf16.mxu0 0
    %3852 = vmatpush1.bf16.msra.mxu0 0
    %3853 = vmatprep.subr.bf16.mxu0 0
    %3854 = vmatpush1.bf16.msra.mxu0 0
    %3855 = vmatprep.subr.bf16.mxu0 0
    %3856 = vmatpush1.bf16.msra.mxu0 0
    %3857 = vmatprep.subr.bf16.mxu0 0
    %3858 = vmatpush1.bf16.msra.mxu0 0
    %3859 = vmatprep.subr.bf16.mxu0 0
    %3860 = vmatpush1.bf16.msra.mxu0 0
    %3861 = vmatprep.subr.bf16.mxu0 0
    %3862 = vmatpush1.bf16.msra.mxu0 0
    %3863 = vmatprep.subr.bf16.mxu0 0
    %3864 = vmatpush1.bf16.msra.mxu0 0
    %3865 = vmatprep.subr.bf16.mxu0 0
    %3866 = vmatpush1.bf16.msra.mxu0 0
    %3867 = vmatprep.subr.bf16.mxu0 0
    %3868 = vmatpush1.bf16.msra.mxu0 0
    %3869 = vmatprep.subr.bf16.mxu0 0
    %3870 = vmatpush1.bf16.msra.mxu0 0
    %3871 = vmatprep.subr.bf16.mxu0 0
    %3872 = vmatpush1.bf16.msra.mxu0 0
    %3873 = vmatprep.mubr.bf16.mxu0 0
    %3874 = vmatmul.mubr.bf16.gmra.mrb[0].mxu0 %v3836
    %v3875 = vpop.f32.mrb[0].mxu0
    %v3876 = vadd.f32 0.0, %v3875
    %v3877 = vpop.f32.mrb[0].mxu0
    %v3878 = vpop.f32.mrb[0].mxu0
    %v3879 = vadd.f32 0.0, %v3878
    %v3880 = vpop.f32.mrb[0].mxu0
    %3881 = vdwg.mxu0
    %v3882 = vpack.c.bf16 %v3879, %v3876
    %v3884 = vunpack.c.l.b16 %v3882
    %v3885 = vunpack.c.h.b16 %v3882
    %v3886 = vpack.c.b16 %v3884, %v3884
    %v3887 = vpack.c.b16 %v3885, %v3885
    %3888 = vrot.lane.b32.xlu0 %v3886, 64
    %v3889 = vpop.permute.xlu0 %3888
    %3890 = vrot.lane.b32.xlu0 %v3887, 64
    %v3891 = vpop.permute.xlu0 %3890
    %3894 = vst.msk [vmem:[#allocation2 + $0x8] sm:$0xf] %vm3346, %v3889
    %3895 = vst.msk [vmem:[#allocation2 + $0x18] sm:$0x1] %vm3348, %v3891
    %v3897 = vsel %vm3070, %v1105, 0
    %v3900 = vsel %vm3070, %v2085, 0
    %3902 = vmatprep.subr.bf16.mxu0 0
    %3903 = vmatpush1.bf16.xpose.msra.mxu0 %v3900
    %3904 = vmatprep.subr.bf16.mxu0 0
    %3905 = vmatpush1.bf16.xpose.msra.mxu0 0
    %3906 = vmatprep.subr.bf16.mxu0 0
    %3907 = vmatpush1.bf16.xpose.msra.mxu0 0
    %3908 = vmatprep.subr.bf16.mxu0 0
    %3909 = vmatpush1.bf16.xpose.msra.mxu0 0
    %3910 = vmatprep.subr.bf16.mxu0 0
    %3911 = vmatpush1.bf16.xpose.msra.mxu0 0
    %3912 = vmatprep.subr.bf16.mxu0 0
    %3913 = vmatpush1.bf16.xpose.msra.mxu0 0
    %3914 = vmatprep.subr.bf16.mxu0 0
    %3915 = vmatpush1.bf16.xpose.msra.mxu0 0
    %3916 = vmatprep.subr.bf16.mxu0 0
    %3917 = vmatpush1.bf16.xpose.msra.mxu0 0
    %3918 = vmatprep.subr.bf16.mxu0 0
    %3919 = vmatpush1.bf16.xpose.msra.mxu0 0
    %3920 = vmatprep.subr.bf16.mxu0 0
    %3921 = vmatpush1.bf16.xpose.msra.mxu0 0
    %3922 = vmatprep.subr.bf16.mxu0 0
    %3923 = vmatpush1.bf16.xpose.msra.mxu0 0
    %3924 = vmatprep.subr.bf16.mxu0 0
    %3925 = vmatpush1.bf16.xpose.msra.mxu0 0
    %3926 = vmatprep.subr.bf16.mxu0 0
    %3927 = vmatpush1.bf16.xpose.msra.mxu0 0
    %3928 = vmatprep.subr.bf16.mxu0 0
    %3929 = vmatpush1.bf16.xpose.msra.mxu0 0
    %3930 = vmatprep.subr.bf16.mxu0 0
    %3931 = vmatpush1.bf16.xpose.msra.mxu0 0
    %3932 = vmatprep.subr.bf16.mxu0 0
    %3933 = vmatpush1.bf16.xpose.msra.mxu0 0
    %3934 = vmatprep.mubr.bf16.mxu0 0
    %3935 = vmatmul.mubr.bf16.gmra.mrb[0].mxu0 %v3897
    %v3936 = vpop.f32.mrb[0].mxu0
    %v3937 = vadd.f32 0.0, %v3936
    %v3938 = vpop.f32.mrb[0].mxu0
    %v3939 = vpop.f32.mrb[0].mxu0
    %v3940 = vadd.f32 0.0, %v3939
    %v3941 = vpop.f32.mrb[0].mxu0
    %3942 = vdwg.mxu0
    %v3943 = vsel %vm3118, %v3937, -inf
    %3944 = vmax.xlane.f32.xlu0 %v3943
    %v3945 = vpop.xlane.xlu0 %3944
    %v3946 = vsel %vm3122, %v3940, -inf
    %3947 = vmax.xlane.f32.xlu0 %v3946
    %v3948 = vpop.xlane.xlu0 %3947
    %v3949 = vsub.f32 %v3937, %v3945
    %v3950 = vsub.f32 %v3940, %v3948
    %v3951 = vmul.f32 %v3949, 1.442695
    %v3952 = vpow.pop %v3951
    %v3953 = vmul.f32 %v3950, 1.442695
    %v3954 = vpow.pop %v3953
    %v3955 = vsel %vm3118, %v3952, 0.0
    %3956 = vadd.xlane.f32.xlu0 %v3955
    %v3957 = vpop.xlane.xlu0 %3956
    %v3958 = vsel %vm3122, %v3954, 0.0
    %3959 = vadd.xlane.f32.xlu0 %v3958
    %v3960 = vpop.xlane.xlu0 %3959
    %v3961 = vrcp.pop %v3957
    %v3962 = vmul.f32 %v3952, %v3961
    %v3963 = vrcp.pop %v3960
    %v3964 = vmul.f32 %v3954, %v3963
    %s3965 = scalar_lea.vmem %s8, 96
    %3966 = vst.msk [vmem:[%s3965] sm:$0xff] %vm3118, %v3962
    %3967 = vst.msk [vmem:[%s3965 + $0x8] sm:$0x3] %vm3122, %v3964
    %v3968 = vpack.c.bf16 %v3964, %v3962
    %v3970 = vsel %vm3118, %v3968, 0
    %v3973 = vsel %vm3148, %v3065, 0
    %3975 = vmatprep.subr.bf16.mxu0 0
    %3976 = vmatpush1.bf16.msra.mxu0 %v3973
    %3977 = vmatprep.subr.bf16.mxu0 0
    %3978 = vmatpush1.bf16.msra.mxu0 0
    %3979 = vmatprep.subr.bf16.mxu0 0
    %3980 = vmatpush1.bf16.msra.mxu0 0
    %3981 = vmatprep.subr.bf16.mxu0 0
    %3982 = vmatpush1.bf16.msra.mxu0 0
    %3983 = vmatprep.subr.bf16.mxu0 0
    %3984 = vmatpush1.bf16.msra.mxu0 0
    %3985 = vmatprep.subr.bf16.mxu0 0
    %3986 = vmatpush1.bf16.msra.mxu0 0
    %3987 = vmatprep.subr.bf16.mxu0 0
    %3988 = vmatpush1.bf16.msra.mxu0 0
    %3989 = vmatprep.subr.bf16.mxu0 0
    %3990 = vmatpush1.bf16.msra.mxu0 0
    %3991 = vmatprep.subr.bf16.mxu0 0
    %3992 = vmatpush1.bf16.msra.mxu0 0
    %3993 = vmatprep.subr.bf16.mxu0 0
    %3994 = vmatpush1.bf16.msra.mxu0 0
    %3995 = vmatprep.subr.bf16.mxu0 0
    %3996 = vmatpush1.bf16.msra.mxu0 0
    %3997 = vmatprep.subr.bf16.mxu0 0
    %3998 = vmatpush1.bf16.msra.mxu0 0
    %3999 = vmatprep.subr.bf16.mxu0 0
    %4000 = vmatpush1.bf16.msra.mxu0 0
    %4001 = vmatprep.subr.bf16.mxu0 0
    %4002 = vmatpush1.bf16.msra.mxu0 0
    %4003 = vmatprep.subr.bf16.mxu0 0
    %4004 = vmatpush1.bf16.msra.mxu0 0
    %4005 = vmatprep.subr.bf16.mxu0 0
    %4006 = vmatpush1.bf16.msra.mxu0 0
    %4007 = vmatprep.mubr.bf16.mxu0 0
    %4008 = vmatmul.mubr.bf16.gmra.mrb[0].mxu0 %v3970
    %v4009 = vpop.f32.mrb[0].mxu0
    %v4010 = vadd.f32 0.0, %v4009
    %v4011 = vpop.f32.mrb[0].mxu0
    %v4012 = vpop.f32.mrb[0].mxu0
    %v4013 = vadd.f32 0.0, %v4012
    %v4014 = vpop.f32.mrb[0].mxu0
    %4015 = vdwg.mxu0
    %v4016 = vpack.c.bf16 %v4013, %v4010
    %v4018 = vunpack.c.l.b16 %v4016
    %v4019 = vunpack.c.h.b16 %v4016
    %v4020 = vpack.c.b16 %v4018, %v4018
    %v4021 = vpack.c.b16 %v4019, %v4019
    %4024 = vst.msk [vmem:[#allocation2 + $0xc] sm:$0xf] %vm3201, %v4020
    %4025 = vst.msk [vmem:[#allocation2 + $0x1c] sm:$0x1] %vm3203, %v4021
    %4027 = vrot.lane.b32.xlu0 %v1105, 64
    %v4028 = vpop.permute.xlu0 %4027
    %4030 = vrot.lane.b32.xlu0 %v2085, 64
    %v4031 = vpop.permute.xlu0 %4030
    %v4033 = vsel %vm3070, %v4028, 0
    %v4036 = vsel %vm3070, %v4031, 0
    %4038 = vmatprep.subr.bf16.mxu0 0
    %4039 = vmatpush1.bf16.xpose.msra.mxu0 %v4036
    %4040 = vmatprep.subr.bf16.mxu0 0
    %4041 = vmatpush1.bf16.xpose.msra.mxu0 0
    %4042 = vmatprep.subr.bf16.mxu0 0
    %4043 = vmatpush1.bf16.xpose.msra.mxu0 0
    %4044 = vmatprep.subr.bf16.mxu0 0
    %4045 = vmatpush1.bf16.xpose.msra.mxu0 0
    %4046 = vmatprep.subr.bf16.mxu0 0
    %4047 = vmatpush1.bf16.xpose.msra.mxu0 0
    %4048 = vmatprep.subr.bf16.mxu0 0
    %4049 = vmatpush1.bf16.xpose.msra.mxu0 0
    %4050 = vmatprep.subr.bf16.mxu0 0
    %4051 = vmatpush1.bf16.xpose.msra.mxu0 0
    %4052 = vmatprep.subr.bf16.mxu0 0
    %4053 = vmatpush1.bf16.xpose.msra.mxu0 0
    %4054 = vmatprep.subr.bf16.mxu0 0
    %4055 = vmatpush1.bf16.xpose.msra.mxu0 0
    %4056 = vmatprep.subr.bf16.mxu0 0
    %4057 = vmatpush1.bf16.xpose.msra.mxu0 0
    %4058 = vmatprep.subr.bf16.mxu0 0
    %4059 = vmatpush1.bf16.xpose.msra.mxu0 0
    %4060 = vmatprep.subr.bf16.mxu0 0
    %4061 = vmatpush1.bf16.xpose.msra.mxu0 0
    %4062 = vmatprep.subr.bf16.mxu0 0
    %4063 = vmatpush1.bf16.xpose.msra.mxu0 0
    %4064 = vmatprep.subr.bf16.mxu0 0
    %4065 = vmatpush1.bf16.xpose.msra.mxu0 0
    %4066 = vmatprep.subr.bf16.mxu0 0
    %4067 = vmatpush1.bf16.xpose.msra.mxu0 0
    %4068 = vmatprep.subr.bf16.mxu0 0
    %4069 = vmatpush1.bf16.xpose.msra.mxu0 0
    %4070 = vmatprep.mubr.bf16.mxu0 0
    %4071 = vmatmul.mubr.bf16.gmra.mrb[0].mxu0 %v4033
    %v4072 = vpop.f32.mrb[0].mxu0
    %v4073 = vadd.f32 0.0, %v4072
    %v4074 = vpop.f32.mrb[0].mxu0
    %v4075 = vpop.f32.mrb[0].mxu0
    %v4076 = vadd.f32 0.0, %v4075
    %v4077 = vpop.f32.mrb[0].mxu0
    %4078 = vdwg.mxu0
    %v4079 = vsel %vm3118, %v4073, -inf
    %4080 = vmax.xlane.f32.xlu0 %v4079
    %v4081 = vpop.xlane.xlu0 %4080
    %v4082 = vsel %vm3122, %v4076, -inf
    %4083 = vmax.xlane.f32.xlu0 %v4082
    %v4084 = vpop.xlane.xlu0 %4083
    %v4085 = vsub.f32 %v4073, %v4081
    %v4086 = vsub.f32 %v4076, %v4084
    %v4087 = vmul.f32 %v4085, 1.442695
    %v4088 = vpow.pop %v4087
    %v4089 = vmul.f32 %v4086, 1.442695
    %v4090 = vpow.pop %v4089
    %v4091 = vsel %vm3118, %v4088, 0.0
    %4092 = vadd.xlane.f32.xlu0 %v4091
    %v4093 = vpop.xlane.xlu0 %4092
    %v4094 = vsel %vm3122, %v4090, 0.0
    %4095 = vadd.xlane.f32.xlu0 %v4094
    %v4096 = vpop.xlane.xlu0 %4095
    %v4097 = vrcp.pop %v4093
    %v4098 = vmul.f32 %v4088, %v4097
    %v4099 = vrcp.pop %v4096
    %v4100 = vmul.f32 %v4090, %v4099
    %s4101 = scalar_lea.vmem %s8, 112
    %4102 = vst.msk [vmem:[%s4101] sm:$0xff] %vm3118, %v4098
    %4103 = vst.msk [vmem:[%s4101 + $0x8] sm:$0x3] %vm3122, %v4100
    %v4104 = vpack.c.bf16 %v4100, %v4098
    %4106 = vrot.lane.b32.xlu0 %v3065, 64
    %v4107 = vpop.permute.xlu0 %4106
    %v4109 = vsel %vm3118, %v4104, 0
    %v4112 = vsel %vm3148, %v4107, 0
    %4114 = vmatprep.subr.bf16.mxu0 0
    %4115 = vmatpush1.bf16.msra.mxu0 %v4112
    %4116 = vmatprep.subr.bf16.mxu0 0
    %4117 = vmatpush1.bf16.msra.mxu0 0
    %4118 = vmatprep.subr.bf16.mxu0 0
    %4119 = vmatpush1.bf16.msra.mxu0 0
    %4120 = vmatprep.subr.bf16.mxu0 0
    %4121 = vmatpush1.bf16.msra.mxu0 0
    %4122 = vmatprep.subr.bf16.mxu0 0
    %4123 = vmatpush1.bf16.msra.mxu0 0
    %4124 = vmatprep.subr.bf16.mxu0 0
    %4125 = vmatpush1.bf16.msra.mxu0 0
    %4126 = vmatprep.subr.bf16.mxu0 0
    %4127 = vmatpush1.bf16.msra.mxu0 0
    %4128 = vmatprep.subr.bf16.mxu0 0
    %4129 = vmatpush1.bf16.msra.mxu0 0
    %4130 = vmatprep.subr.bf16.mxu0 0
    %4131 = vmatpush1.bf16.msra.mxu0 0
    %4132 = vmatprep.subr.bf16.mxu0 0
    %4133 = vmatpush1.bf16.msra.mxu0 0
    %4134 = vmatprep.subr.bf16.mxu0 0
    %4135 = vmatpush1.bf16.msra.mxu0 0
    %4136 = vmatprep.subr.bf16.mxu0 0
    %4137 = vmatpush1.bf16.msra.mxu0 0
    %4138 = vmatprep.subr.bf16.mxu0 0
    %4139 = vmatpush1.bf16.msra.mxu0 0
    %4140 = vmatprep.subr.bf16.mxu0 0
    %4141 = vmatpush1.bf16.msra.mxu0 0
    %4142 = vmatprep.subr.bf16.mxu0 0
    %4143 = vmatpush1.bf16.msra.mxu0 0
    %4144 = vmatprep.subr.bf16.mxu0 0
    %4145 = vmatpush1.bf16.msra.mxu0 0
    %4146 = vmatprep.mubr.bf16.mxu0 0
    %4147 = vmatmul.mubr.bf16.gmra.mrb[0].mxu0 %v4109
    %v4148 = vpop.f32.mrb[0].mxu0
    %v4149 = vadd.f32 0.0, %v4148
    %v4150 = vpop.f32.mrb[0].mxu0
    %v4151 = vpop.f32.mrb[0].mxu0
    %v4152 = vadd.f32 0.0, %v4151
    %v4153 = vpop.f32.mrb[0].mxu0
    %4154 = vdwg.mxu0
    %v4155 = vpack.c.bf16 %v4152, %v4149
    %v4157 = vunpack.c.l.b16 %v4155
    %v4158 = vunpack.c.h.b16 %v4155
    %v4159 = vpack.c.b16 %v4157, %v4157
    %v4160 = vpack.c.b16 %v4158, %v4158
    %4161 = vrot.lane.b32.xlu0 %v4159, 64
    %v4162 = vpop.permute.xlu0 %4161
    %4163 = vrot.lane.b32.xlu0 %v4160, 64
    %v4164 = vpop.permute.xlu0 %4163
    %4167 = vst.msk [vmem:[#allocation2 + $0xc] sm:$0xf] %vm3346, %v4162
    %4168 = vst.msk [vmem:[#allocation2 + $0x1c] sm:$0x1] %vm3348, %v4164
    %vm4170 = vcmask 1042432
    %v4171 = vrot.slane %v1102, 5
    %v4172 = vrot.slane %v1106, 5
    %v4173 = vsel %vm4170, %v4171, %v4172
    %v4175 = vrot.slane %v2082, 5
    %v4176 = vrot.slane %v2086, 5
    %v4177 = vsel %vm4170, %v4175, %v4176
    %v4179 = vsel %vm3070, %v4173, 0
    %v4182 = vsel %vm3070, %v4177, 0
    %4184 = vmatprep.subr.bf16.mxu0 0
    %4185 = vmatpush1.bf16.xpose.msra.mxu0 %v4182
    %4186 = vmatprep.subr.bf16.mxu0 0
    %4187 = vmatpush1.bf16.xpose.msra.mxu0 0
    %4188 = vmatprep.subr.bf16.mxu0 0
    %4189 = vmatpush1.bf16.xpose.msra.mxu0 0
    %4190 = vmatprep.subr.bf16.mxu0 0
    %4191 = vmatpush1.bf16.xpose.msra.mxu0 0
    %4192 = vmatprep.subr.bf16.mxu0 0
    %4193 = vmatpush1.bf16.xpose.msra.mxu0 0
    %4194 = vmatprep.subr.bf16.mxu0 0
    %4195 = vmatpush1.bf16.xpose.msra.mxu0 0
    %4196 = vmatprep.subr.bf16.mxu0 0
    %4197 = vmatpush1.bf16.xpose.msra.mxu0 0
    %4198 = vmatprep.subr.bf16.mxu0 0
    %4199 = vmatpush1.bf16.xpose.msra.mxu0 0
    %4200 = vmatprep.subr.bf16.mxu0 0
    %4201 = vmatpush1.bf16.xpose.msra.mxu0 0
    %4202 = vmatprep.subr.bf16.mxu0 0
    %4203 = vmatpush1.bf16.xpose.msra.mxu0 0
    %4204 = vmatprep.subr.bf16.mxu0 0
    %4205 = vmatpush1.bf16.xpose.msra.mxu0 0
    %4206 = vmatprep.subr.bf16.mxu0 0
    %4207 = vmatpush1.bf16.xpose.msra.mxu0 0
    %4208 = vmatprep.subr.bf16.mxu0 0
    %4209 = vmatpush1.bf16.xpose.msra.mxu0 0
    %4210 = vmatprep.subr.bf16.mxu0 0
    %4211 = vmatpush1.bf16.xpose.msra.mxu0 0
    %4212 = vmatprep.subr.bf16.mxu0 0
    %4213 = vmatpush1.bf16.xpose.msra.mxu0 0
    %4214 = vmatprep.subr.bf16.mxu0 0
    %4215 = vmatpush1.bf16.xpose.msra.mxu0 0
    %4216 = vmatprep.mubr.bf16.mxu0 0
    %4217 = vmatmul.mubr.bf16.gmra.mrb[0].mxu0 %v4179
    %v4218 = vpop.f32.mrb[0].mxu0
    %v4219 = vadd.f32 0.0, %v4218
    %v4220 = vpop.f32.mrb[0].mxu0
    %v4221 = vpop.f32.mrb[0].mxu0
    %v4222 = vadd.f32 0.0, %v4221
    %v4223 = vpop.f32.mrb[0].mxu0
    %4224 = vdwg.mxu0
    %v4225 = vsel %vm3118, %v4219, -inf
    %4226 = vmax.xlane.f32.xlu0 %v4225
    %v4227 = vpop.xlane.xlu0 %4226
    %v4228 = vsel %vm3122, %v4222, -inf
    %4229 = vmax.xlane.f32.xlu0 %v4228
    %v4230 = vpop.xlane.xlu0 %4229
    %v4231 = vsub.f32 %v4219, %v4227
    %v4232 = vsub.f32 %v4222, %v4230
    %v4233 = vmul.f32 %v4231, 1.442695
    %v4234 = vpow.pop %v4233
    %v4235 = vmul.f32 %v4232, 1.442695
    %v4236 = vpow.pop %v4235
    %v4237 = vsel %vm3118, %v4234, 0.0
    %4238 = vadd.xlane.f32.xlu0 %v4237
    %v4239 = vpop.xlane.xlu0 %4238
    %v4240 = vsel %vm3122, %v4236, 0.0
    %4241 = vadd.xlane.f32.xlu0 %v4240
    %v4242 = vpop.xlane.xlu0 %4241
    %v4243 = vrcp.pop %v4239
    %v4244 = vmul.f32 %v4234, %v4243
    %v4245 = vrcp.pop %v4242
    %v4246 = vmul.f32 %v4236, %v4245
    %s4247 = scalar_lea.vmem %s8, 128
    %4248 = vst.msk [vmem:[%s4247] sm:$0xff] %vm3118, %v4244
    %4249 = vst.msk [vmem:[%s4247 + $0x8] sm:$0x3] %vm3122, %v4246
    %v4250 = vpack.c.bf16 %v4246, %v4244
    %v4252 = vrot.slane %v3062, 5
    %v4253 = vrot.slane %v3066, 5
    %v4254 = vsel %vm4170, %v4252, %v4253
    %v4256 = vsel %vm3118, %v4250, 0
    %v4259 = vsel %vm3148, %v4254, 0
    %4261 = vmatprep.subr.bf16.mxu0 0
    %4262 = vmatpush1.bf16.msra.mxu0 %v4259
    %4263 = vmatprep.subr.bf16.mxu0 0
    %4264 = vmatpush1.bf16.msra.mxu0 0
    %4265 = vmatprep.subr.bf16.mxu0 0
    %4266 = vmatpush1.bf16.msra.mxu0 0
    %4267 = vmatprep.subr.bf16.mxu0 0
    %4268 = vmatpush1.bf16.msra.mxu0 0
    %4269 = vmatprep.subr.bf16.mxu0 0
    %4270 = vmatpush1.bf16.msra.mxu0 0
    %4271 = vmatprep.subr.bf16.mxu0 0
    %4272 = vmatpush1.bf16.msra.mxu0 0
    %4273 = vmatprep.subr.bf16.mxu0 0
    %4274 = vmatpush1.bf16.msra.mxu0 0
    %4275 = vmatprep.subr.bf16.mxu0 0
    %4276 = vmatpush1.bf16.msra.mxu0 0
    %4277 = vmatprep.subr.bf16.mxu0 0
    %4278 = vmatpush1.bf16.msra.mxu0 0
    %4279 = vmatprep.subr.bf16.mxu0 0
    %4280 = vmatpush1.bf16.msra.mxu0 0
    %4281 = vmatprep.subr.bf16.mxu0 0
    %4282 = vmatpush1.bf16.msra.mxu0 0
    %4283 = vmatprep.subr.bf16.mxu0 0
    %4284 = vmatpush1.bf16.msra.mxu0 0
    %4285 = vmatprep.subr.bf16.mxu0 0
    %4286 = vmatpush1.bf16.msra.mxu0 0
    %4287 = vmatprep.subr.bf16.mxu0 0
    %4288 = vmatpush1.bf16.msra.mxu0 0
    %4289 = vmatprep.subr.bf16.mxu0 0
    %4290 = vmatpush1.bf16.msra.mxu0 0
    %4291 = vmatprep.subr.bf16.mxu0 0
    %4292 = vmatpush1.bf16.msra.mxu0 0
    %4293 = vmatprep.mubr.bf16.mxu0 0
    %4294 = vmatmul.mubr.bf16.gmra.mrb[0].mxu0 %v4256
    %v4295 = vpop.f32.mrb[0].mxu0
    %v4296 = vadd.f32 0.0, %v4295
    %v4297 = vpop.f32.mrb[0].mxu0
    %v4298 = vpop.f32.mrb[0].mxu0
    %v4299 = vadd.f32 0.0, %v4298
    %v4300 = vpop.f32.mrb[0].mxu0
    %4301 = vdwg.mxu0
    %v4302 = vpack.c.bf16 %v4299, %v4296
    %v4304 = vunpack.c.l.b16 %v4302
    %v4305 = vunpack.c.h.b16 %v4302
    %v4306 = vpack.c.b16 %v4304, %v4304
    %v4307 = vpack.c.b16 %v4305, %v4305
    %vm4308 = vcmask 1040384
    %vm4309 = vcmask 1044484
    %vm4310 = vmor %vm4308, %vm4309
    %v4311 = vrot.slane %v4306, 7
    %v4312 = vrot.slane %v4311, 4
    %v4313 = vrot.slane %v4307, 7
    %v4314 = vsel %vm4310, %v4312, %v4313
    %vm4317 = vcmask 519169
    %4318 = vst.msk [vmem:[#allocation2 + $0x10] sm:$0xe] %vm4317, %v4311
    %vm4319 = vcmask 517120
    %4320 = vst.msk [vmem:[#allocation2 + $0x20] sm:$0x3] %vm4319, %v4314
    %4321 = vrot.lane.b32.xlu0 %v4173, 64
    %v4322 = vpop.permute.xlu0 %4321
    %4323 = vrot.lane.b32.xlu0 %v4177, 64
    %v4324 = vpop.permute.xlu0 %4323
    %v4326 = vsel %vm3070, %v4322, 0
    %v4329 = vsel %vm3070, %v4324, 0
    %4331 = vmatprep.subr.bf16.mxu0 0
    %4332 = vmatpush1.bf16.xpose.msra.mxu0 %v4329
    %4333 = vmatprep.subr.bf16.mxu0 0
    %4334 = vmatpush1.bf16.xpose.msra.mxu0 0
    %4335 = vmatprep.subr.bf16.mxu0 0
    %4336 = vmatpush1.bf16.xpose.msra.mxu0 0
    %4337 = vmatprep.subr.bf16.mxu0 0
    %4338 = vmatpush1.bf16.xpose.msra.mxu0 0
    %4339 = vmatprep.subr.bf16.mxu0 0
    %4340 = vmatpush1.bf16.xpose.msra.mxu0 0
    %4341 = vmatprep.subr.bf16.mxu0 0
    %4342 = vmatpush1.bf16.xpose.msra.mxu0 0
    %4343 = vmatprep.subr.bf16.mxu0 0
    %4344 = vmatpush1.bf16.xpose.msra.mxu0 0
    %4345 = vmatprep.subr.bf16.mxu0 0
    %4346 = vmatpush1.bf16.xpose.msra.mxu0 0
    %4347 = vmatprep.subr.bf16.mxu0 0
    %4348 = vmatpush1.bf16.xpose.msra.mxu0 0
    %4349 = vmatprep.subr.bf16.mxu0 0
    %4350 = vmatpush1.bf16.xpose.msra.mxu0 0
    %4351 = vmatprep.subr.bf16.mxu0 0
    %4352 = vmatpush1.bf16.xpose.msra.mxu0 0
    %4353 = vmatprep.subr.bf16.mxu0 0
    %4354 = vmatpush1.bf16.xpose.msra.mxu0 0
    %4355 = vmatprep.subr.bf16.mxu0 0
    %4356 = vmatpush1.bf16.xpose.msra.mxu0 0
    %4357 = vmatprep.subr.bf16.mxu0 0
    %4358 = vmatpush1.bf16.xpose.msra.mxu0 0
    %4359 = vmatprep.subr.bf16.mxu0 0
    %4360 = vmatpush1.bf16.xpose.msra.mxu0 0
    %4361 = vmatprep.subr.bf16.mxu0 0
    %4362 = vmatpush1.bf16.xpose.msra.mxu0 0
    %4363 = vmatprep.mubr.bf16.mxu0 0
    %4364 = vmatmul.mubr.bf16.gmra.mrb[0].mxu0 %v4326
    %v4365 = vpop.f32.mrb[0].mxu0
    %v4366 = vadd.f32 0.0, %v4365
    %v4367 = vpop.f32.mrb[0].mxu0
    %v4368 = vpop.f32.mrb[0].mxu0
    %v4369 = vadd.f32 0.0, %v4368
    %v4370 = vpop.f32.mrb[0].mxu0
    %4371 = vdwg.mxu0
    %v4372 = vsel %vm3118, %v4366, -inf
    %4373 = vmax.xlane.f32.xlu0 %v4372
    %v4374 = vpop.xlane.xlu0 %4373
    %v4375 = vsel %vm3122, %v4369, -inf
    %4376 = vmax.xlane.f32.xlu0 %v4375
    %v4377 = vpop.xlane.xlu0 %4376
    %v4378 = vsub.f32 %v4366, %v4374
    %v4379 = vsub.f32 %v4369, %v4377
    %v4380 = vmul.f32 %v4378, 1.442695
    %v4381 = vpow.pop %v4380
    %v4382 = vmul.f32 %v4379, 1.442695
    %v4383 = vpow.pop %v4382
    %v4384 = vsel %vm3118, %v4381, 0.0
    %4385 = vadd.xlane.f32.xlu0 %v4384
    %v4386 = vpop.xlane.xlu0 %4385
    %v4387 = vsel %vm3122, %v4383, 0.0
    %4388 = vadd.xlane.f32.xlu0 %v4387
    %v4389 = vpop.xlane.xlu0 %4388
    %v4390 = vrcp.pop %v4386
    %v4391 = vmul.f32 %v4381, %v4390
    %v4392 = vrcp.pop %v4389
    %v4393 = vmul.f32 %v4383, %v4392
    %s4394 = scalar_lea.vmem %s8, 144
    %4395 = vst.msk [vmem:[%s4394] sm:$0xff] %vm3118, %v4391
    %4396 = vst.msk [vmem:[%s4394 + $0x8] sm:$0x3] %vm3122, %v4393
    %v4397 = vpack.c.bf16 %v4393, %v4391
    %4398 = vrot.lane.b32.xlu0 %v4254, 64
    %v4399 = vpop.permute.xlu0 %4398
    %v4401 = vsel %vm3118, %v4397, 0
    %v4404 = vsel %vm3148, %v4399, 0
    %4406 = vmatprep.subr.bf16.mxu0 0
    %4407 = vmatpush1.bf16.msra.mxu0 %v4404
    %4408 = vmatprep.subr.bf16.mxu0 0
    %4409 = vmatpush1.bf16.msra.mxu0 0
    %4410 = vmatprep.subr.bf16.mxu0 0
    %4411 = vmatpush1.bf16.msra.mxu0 0
    %4412 = vmatprep.subr.bf16.mxu0 0
    %4413 = vmatpush1.bf16.msra.mxu0 0
    %4414 = vmatprep.subr.bf16.mxu0 0
    %4415 = vmatpush1.bf16.msra.mxu0 0
    %4416 = vmatprep.subr.bf16.mxu0 0
    %4417 = vmatpush1.bf16.msra.mxu0 0
    %4418 = vmatprep.subr.bf16.mxu0 0
    %4419 = vmatpush1.bf16.msra.mxu0 0
    %4420 = vmatprep.subr.bf16.mxu0 0
    %4421 = vmatpush1.bf16.msra.mxu0 0
    %4422 = vmatprep.subr.bf16.mxu0 0
    %4423 = vmatpush1.bf16.msra.mxu0 0
    %4424 = vmatprep.subr.bf16.mxu0 0
    %4425 = vmatpush1.bf16.msra.mxu0 0
    %4426 = vmatprep.subr.bf16.mxu0 0
    %4427 = vmatpush1.bf16.msra.mxu0 0
    %4428 = vmatprep.subr.bf16.mxu0 0
    %4429 = vmatpush1.bf16.msra.mxu0 0
    %4430 = vmatprep.subr.bf16.mxu0 0
    %4431 = vmatpush1.bf16.msra.mxu0 0
    %4432 = vmatprep.subr.bf16.mxu0 0
    %4433 = vmatpush1.bf16.msra.mxu0 0
    %4434 = vmatprep.subr.bf16.mxu0 0
    %4435 = vmatpush1.bf16.msra.mxu0 0
    %4436 = vmatprep.subr.bf16.mxu0 0
    %4437 = vmatpush1.bf16.msra.mxu0 0
    %4438 = vmatprep.mubr.bf16.mxu0 0
    %4439 = vmatmul.mubr.bf16.gmra.mrb[0].mxu0 %v4401
    %v4440 = vpop.f32.mrb[0].mxu0
    %v4441 = vadd.f32 0.0, %v4440
    %v4442 = vpop.f32.mrb[0].mxu0
    %v4443 = vpop.f32.mrb[0].mxu0
    %v4444 = vadd.f32 0.0, %v4443
    %v4445 = vpop.f32.mrb[0].mxu0
    %4446 = vdwg.mxu0
    %v4447 = vpack.c.bf16 %v4444, %v4441
    %v4449 = vunpack.c.l.b16 %v4447
    %v4450 = vunpack.c.h.b16 %v4447
    %v4451 = vpack.c.b16 %v4449, %v4449
    %v4452 = vpack.c.b16 %v4450, %v4450
    %v4453 = vrot.slane %v4451, 7
    %v4454 = vrot.slane %v4453, 4
    %v4455 = vrot.slane %v4452, 7
    %v4456 = vsel %vm4310, %v4454, %v4455
    %4457 = vrot.lane.b32.xlu0 %v4453, 64
    %v4458 = vpop.permute.xlu0 %4457
    %4459 = vrot.lane.b32.xlu0 %v4456, 64
    %v4460 = vpop.permute.xlu0 %4459
    %vm4463 = vcmask 1043969
    %4464 = vst.msk [vmem:[#allocation2 + $0x10] sm:$0xe] %vm4463, %v4458
    %vm4465 = vcmask 1041920
    %4466 = vst.msk [vmem:[#allocation2 + $0x20] sm:$0x3] %vm4465, %v4460
    %v4468 = vrot.slane %v1103, 5
    %v4469 = vrot.slane %v1107, 5
    %v4470 = vsel %vm4170, %v4468, %v4469
    %v4472 = vrot.slane %v2083, 5
    %v4473 = vrot.slane %v2087, 5
    %v4474 = vsel %vm4170, %v4472, %v4473
    %v4476 = vsel %vm3070, %v4470, 0
    %v4479 = vsel %vm3070, %v4474, 0
    %4481 = vmatprep.subr.bf16.mxu0 0
    %4482 = vmatpush1.bf16.xpose.msra.mxu0 %v4479
    %4483 = vmatprep.subr.bf16.mxu0 0
    %4484 = vmatpush1.bf16.xpose.msra.mxu0 0
    %4485 = vmatprep.subr.bf16.mxu0 0
    %4486 = vmatpush1.bf16.xpose.msra.mxu0 0
    %4487 = vmatprep.subr.bf16.mxu0 0
    %4488 = vmatpush1.bf16.xpose.msra.mxu0 0
    %4489 = vmatprep.subr.bf16.mxu0 0
    %4490 = vmatpush1.bf16.xpose.msra.mxu0 0
    %4491 = vmatprep.subr.bf16.mxu0 0
    %4492 = vmatpush1.bf16.xpose.msra.mxu0 0
    %4493 = vmatprep.subr.bf16.mxu0 0
    %4494 = vmatpush1.bf16.xpose.msra.mxu0 0
    %4495 = vmatprep.subr.bf16.mxu0 0
    %4496 = vmatpush1.bf16.xpose.msra.mxu0 0
    %4497 = vmatprep.subr.bf16.mxu0 0
    %4498 = vmatpush1.bf16.xpose.msra.mxu0 0
    %4499 = vmatprep.subr.bf16.mxu0 0
    %4500 = vmatpush1.bf16.xpose.msra.mxu0 0
    %4501 = vmatprep.subr.bf16.mxu0 0
    %4502 = vmatpush1.bf16.xpose.msra.mxu0 0
    %4503 = vmatprep.subr.bf16.mxu0 0
    %4504 = vmatpush1.bf16.xpose.msra.mxu0 0
    %4505 = vmatprep.subr.bf16.mxu0 0
    %4506 = vmatpush1.bf16.xpose.msra.mxu0 0
    %4507 = vmatprep.subr.bf16.mxu0 0
    %4508 = vmatpush1.bf16.xpose.msra.mxu0 0
    %4509 = vmatprep.subr.bf16.mxu0 0
    %4510 = vmatpush1.bf16.xpose.msra.mxu0 0
    %4511 = vmatprep.subr.bf16.mxu0 0
    %4512 = vmatpush1.bf16.xpose.msra.mxu0 0
    %4513 = vmatprep.mubr.bf16.mxu0 0
    %4514 = vmatmul.mubr.bf16.gmra.mrb[0].mxu0 %v4476
    %v4515 = vpop.f32.mrb[0].mxu0
    %v4516 = vadd.f32 0.0, %v4515
    %v4517 = vpop.f32.mrb[0].mxu0
    %v4518 = vpop.f32.mrb[0].mxu0
    %v4519 = vadd.f32 0.0, %v4518
    %v4520 = vpop.f32.mrb[0].mxu0
    %4521 = vdwg.mxu0
    %v4522 = vsel %vm3118, %v4516, -inf
    %4523 = vmax.xlane.f32.xlu0 %v4522
    %v4524 = vpop.xlane.xlu0 %4523
    %v4525 = vsel %vm3122, %v4519, -inf
    %4526 = vmax.xlane.f32.xlu0 %v4525
    %v4527 = vpop.xlane.xlu0 %4526
    %v4528 = vsub.f32 %v4516, %v4524
    %v4529 = vsub.f32 %v4519, %v4527
    %v4530 = vmul.f32 %v4528, 1.442695
    %v4531 = vpow.pop %v4530
    %v4532 = vmul.f32 %v4529, 1.442695
    %v4533 = vpow.pop %v4532
    %v4534 = vsel %vm3118, %v4531, 0.0
    %4535 = vadd.xlane.f32.xlu0 %v4534
    %v4536 = vpop.xlane.xlu0 %4535
    %v4537 = vsel %vm3122, %v4533, 0.0
    %4538 = vadd.xlane.f32.xlu0 %v4537
    %v4539 = vpop.xlane.xlu0 %4538
    %v4540 = vrcp.pop %v4536
    %v4541 = vmul.f32 %v4531, %v4540
    %v4542 = vrcp.pop %v4539
    %v4543 = vmul.f32 %v4533, %v4542
    %s4544 = scalar_lea.vmem %s8, 160
    %4545 = vst.msk [vmem:[%s4544] sm:$0xff] %vm3118, %v4541
    %4546 = vst.msk [vmem:[%s4544 + $0x8] sm:$0x3] %vm3122, %v4543
    %v4547 = vpack.c.bf16 %v4543, %v4541
    %v4549 = vrot.slane %v3063, 5
    %v4550 = vrot.slane %v3067, 5
    %v4551 = vsel %vm4170, %v4549, %v4550
    %v4553 = vsel %vm3118, %v4547, 0
    %v4556 = vsel %vm3148, %v4551, 0
    %4558 = vmatprep.subr.bf16.mxu0 0
    %4559 = vmatpush1.bf16.msra.mxu0 %v4556
    %4560 = vmatprep.subr.bf16.mxu0 0
    %4561 = vmatpush1.bf16.msra.mxu0 0
    %4562 = vmatprep.subr.bf16.mxu0 0
    %4563 = vmatpush1.bf16.msra.mxu0 0
    %4564 = vmatprep.subr.bf16.mxu0 0
    %4565 = vmatpush1.bf16.msra.mxu0 0
    %4566 = vmatprep.subr.bf16.mxu0 0
    %4567 = vmatpush1.bf16.msra.mxu0 0
    %4568 = vmatprep.subr.bf16.mxu0 0
    %4569 = vmatpush1.bf16.msra.mxu0 0
    %4570 = vmatprep.subr.bf16.mxu0 0
    %4571 = vmatpush1.bf16.msra.mxu0 0
    %4572 = vmatprep.subr.bf16.mxu0 0
    %4573 = vmatpush1.bf16.msra.mxu0 0
    %4574 = vmatprep.subr.bf16.mxu0 0
    %4575 = vmatpush1.bf16.msra.mxu0 0
    %4576 = vmatprep.subr.bf16.mxu0 0
    %4577 = vmatpush1.bf16.msra.mxu0 0
    %4578 = vmatprep.subr.bf16.mxu0 0
    %4579 = vmatpush1.bf16.msra.mxu0 0
    %4580 = vmatprep.subr.bf16.mxu0 0
    %4581 = vmatpush1.bf16.msra.mxu0 0
    %4582 = vmatprep.subr.bf16.mxu0 0
    %4583 = vmatpush1.bf16.msra.mxu0 0
    %4584 = vmatprep.subr.bf16.mxu0 0
    %4585 = vmatpush1.bf16.msra.mxu0 0
    %4586 = vmatprep.subr.bf16.mxu0 0
    %4587 = vmatpush1.bf16.msra.mxu0 0
    %4588 = vmatprep.subr.bf16.mxu0 0
    %4589 = vmatpush1.bf16.msra.mxu0 0
    %4590 = vmatprep.mubr.bf16.mxu0 0
    %4591 = vmatmul.mubr.bf16.gmra.mrb[0].mxu0 %v4553
    %v4592 = vpop.f32.mrb[0].mxu0
    %v4593 = vadd.f32 0.0, %v4592
    %v4594 = vpop.f32.mrb[0].mxu0
    %v4595 = vpop.f32.mrb[0].mxu0
    %v4596 = vadd.f32 0.0, %v4595
    %v4597 = vpop.f32.mrb[0].mxu0
    %4598 = vdwg.mxu0
    %v4599 = vpack.c.bf16 %v4596, %v4593
    %v4601 = vunpack.c.l.b16 %v4599
    %v4602 = vunpack.c.h.b16 %v4599
    %v4603 = vpack.c.b16 %v4601, %v4601
    %v4604 = vpack.c.b16 %v4602, %v4602
    %v4605 = vrot.slane %v4603, 7
    %v4606 = vrot.slane %v4605, 4
    %v4607 = vrot.slane %v4604, 7
    %v4608 = vsel %vm4310, %v4606, %v4607
    %4611 = vst.msk [vmem:[#allocation2 + $0x14] sm:$0xe] %vm4317, %v4605
    %4612 = vst.msk [vmem:[#allocation2 + $0x24] sm:$0x3] %vm4319, %v4608
    %4613 = vrot.lane.b32.xlu0 %v4470, 64
    %v4614 = vpop.permute.xlu0 %4613
    %4615 = vrot.lane.b32.xlu0 %v4474, 64
    %v4616 = vpop.permute.xlu0 %4615
    %v4618 = vsel %vm3070, %v4614, 0
    %v4621 = vsel %vm3070, %v4616, 0
    %4623 = vmatprep.subr.bf16.mxu0 0
    %4624 = vmatpush1.bf16.xpose.msra.mxu0 %v4621
    %4625 = vmatprep.subr.bf16.mxu0 0
    %4626 = vmatpush1.bf16.xpose.msra.mxu0 0
    %4627 = vmatprep.subr.bf16.mxu0 0
    %4628 = vmatpush1.bf16.xpose.msra.mxu0 0
    %4629 = vmatprep.subr.bf16.mxu0 0
    %4630 = vmatpush1.bf16.xpose.msra.mxu0 0
    %4631 = vmatprep.subr.bf16.mxu0 0
    %4632 = vmatpush1.bf16.xpose.msra.mxu0 0
    %4633 = vmatprep.subr.bf16.mxu0 0
    %4634 = vmatpush1.bf16.xpose.msra.mxu0 0
    %4635 = vmatprep.subr.bf16.mxu0 0
    %4636 = vmatpush1.bf16.xpose.msra.mxu0 0
    %4637 = vmatprep.subr.bf16.mxu0 0
    %4638 = vmatpush1.bf16.xpose.msra.mxu0 0
    %4639 = vmatprep.subr.bf16.mxu0 0
    %4640 = vmatpush1.bf16.xpose.msra.mxu0 0
    %4641 = vmatprep.subr.bf16.mxu0 0
    %4642 = vmatpush1.bf16.xpose.msra.mxu0 0
    %4643 = vmatprep.subr.bf16.mxu0 0
    %4644 = vmatpush1.bf16.xpose.msra.mxu0 0
    %4645 = vmatprep.subr.bf16.mxu0 0
    %4646 = vmatpush1.bf16.xpose.msra.mxu0 0
    %4647 = vmatprep.subr.bf16.mxu0 0
    %4648 = vmatpush1.bf16.xpose.msra.mxu0 0
    %4649 = vmatprep.subr.bf16.mxu0 0
    %4650 = vmatpush1.bf16.xpose.msra.mxu0 0
    %4651 = vmatprep.subr.bf16.mxu0 0
    %4652 = vmatpush1.bf16.xpose.msra.mxu0 0
    %4653 = vmatprep.subr.bf16.mxu0 0
    %4654 = vmatpush1.bf16.xpose.msra.mxu0 0
    %4655 = vmatprep.mubr.bf16.mxu0 0
    %4656 = vmatmul.mubr.bf16.gmra.mrb[0].mxu0 %v4618
    %v4657 = vpop.f32.mrb[0].mxu0
    %v4658 = vadd.f32 0.0, %v4657
    %v4659 = vpop.f32.mrb[0].mxu0
    %v4660 = vpop.f32.mrb[0].mxu0
    %v4661 = vadd.f32 0.0, %v4660
    %v4662 = vpop.f32.mrb[0].mxu0
    %4663 = vdwg.mxu0
    %v4664 = vsel %vm3118, %v4658, -inf
    %4665 = vmax.xlane.f32.xlu0 %v4664
    %v4666 = vpop.xlane.xlu0 %4665
    %v4667 = vsel %vm3122, %v4661, -inf
    %4668 = vmax.xlane.f32.xlu0 %v4667
    %v4669 = vpop.xlane.xlu0 %4668
    %v4670 = vsub.f32 %v4658, %v4666
    %v4671 = vsub.f32 %v4661, %v4669
    %v4672 = vmul.f32 %v4670, 1.442695
    %v4673 = vpow.pop %v4672
    %v4674 = vmul.f32 %v4671, 1.442695
    %v4675 = vpow.pop %v4674
    %v4676 = vsel %vm3118, %v4673, 0.0
    %4677 = vadd.xlane.f32.xlu0 %v4676
    %v4678 = vpop.xlane.xlu0 %4677
    %v4679 = vsel %vm3122, %v4675, 0.0
    %4680 = vadd.xlane.f32.xlu0 %v4679
    %v4681 = vpop.xlane.xlu0 %4680
    %v4682 = vrcp.pop %v4678
    %v4683 = vmul.f32 %v4673, %v4682
    %v4684 = vrcp.pop %v4681
    %v4685 = vmul.f32 %v4675, %v4684
    %s4686 = scalar_lea.vmem %s8, 176
    %4687 = vst.msk [vmem:[%s4686] sm:$0xff] %vm3118, %v4683
    %4688 = vst.msk [vmem:[%s4686 + $0x8] sm:$0x3] %vm3122, %v4685
    %v4689 = vpack.c.bf16 %v4685, %v4683
    %4690 = vrot.lane.b32.xlu0 %v4551, 64
    %v4691 = vpop.permute.xlu0 %4690
    %v4693 = vsel %vm3118, %v4689, 0
    %v4696 = vsel %vm3148, %v4691, 0
    %4698 = vmatprep.subr.bf16.mxu0 0
    %4699 = vmatpush1.bf16.msra.mxu0 %v4696
    %4700 = vmatprep.subr.bf16.mxu0 0
    %4701 = vmatpush1.bf16.msra.mxu0 0
    %4702 = vmatprep.subr.bf16.mxu0 0
    %4703 = vmatpush1.bf16.msra.mxu0 0
    %4704 = vmatprep.subr.bf16.mxu0 0
    %4705 = vmatpush1.bf16.msra.mxu0 0
    %4706 = vmatprep.subr.bf16.mxu0 0
    %4707 = vmatpush1.bf16.msra.mxu0 0
    %4708 = vmatprep.subr.bf16.mxu0 0
    %4709 = vmatpush1.bf16.msra.mxu0 0
    %4710 = vmatprep.subr.bf16.mxu0 0
    %4711 = vmatpush1.bf16.msra.mxu0 0
    %4712 = vmatprep.subr.bf16.mxu0 0
    %4713 = vmatpush1.bf16.msra.mxu0 0
    %4714 = vmatprep.subr.bf16.mxu0 0
    %4715 = vmatpush1.bf16.msra.mxu0 0
    %4716 = vmatprep.subr.bf16.mxu0 0
    %4717 = vmatpush1.bf16.msra.mxu0 0
    %4718 = vmatprep.subr.bf16.mxu0 0
    %4719 = vmatpush1.bf16.msra.mxu0 0
    %4720 = vmatprep.subr.bf16.mxu0 0
    %4721 = vmatpush1.bf16.msra.mxu0 0
    %4722 = vmatprep.subr.bf16.mxu0 0
    %4723 = vmatpush1.bf16.msra.mxu0 0
    %4724 = vmatprep.subr.bf16.mxu0 0
    %4725 = vmatpush1.bf16.msra.mxu0 0
    %4726 = vmatprep.subr.bf16.mxu0 0
    %4727 = vmatpush1.bf16.msra.mxu0 0
    %4728 = vmatprep.subr.bf16.mxu0 0
    %4729 = vmatpush1.bf16.msra.mxu0 0
    %4730 = vmatprep.mubr.bf16.mxu0 0
    %4731 = vmatmul.mubr.bf16.gmra.mrb[0].mxu0 %v4693
    %v4732 = vpop.f32.mrb[0].mxu0
    %v4733 = vadd.f32 0.0, %v4732
    %v4734 = vpop.f32.mrb[0].mxu0
    %v4735 = vpop.f32.mrb[0].mxu0
    %v4736 = vadd.f32 0.0, %v4735
    %v4737 = vpop.f32.mrb[0].mxu0
    %4738 = vdwg.mxu0
    %v4739 = vpack.c.bf16 %v4736, %v4733
    %v4741 = vunpack.c.l.b16 %v4739
    %v4742 = vunpack.c.h.b16 %v4739
    %v4743 = vpack.c.b16 %v4741, %v4741
    %v4744 = vpack.c.b16 %v4742, %v4742
    %v4745 = vrot.slane %v4743, 7
    %v4746 = vrot.slane %v4745, 4
    %v4747 = vrot.slane %v4744, 7
    %v4748 = vsel %vm4310, %v4746, %v4747
    %4749 = vrot.lane.b32.xlu0 %v4745, 64
    %v4750 = vpop.permute.xlu0 %4749
    %4751 = vrot.lane.b32.xlu0 %v4748, 64
    %v4752 = vpop.permute.xlu0 %4751
    %4755 = vst.msk [vmem:[#allocation2 + $0x14] sm:$0xe] %vm4463, %v4750
    %4756 = vst.msk [vmem:[#allocation2 + $0x24] sm:$0x3] %vm4465, %v4752
    %v4758 = vrot.slane %v1104, 5
    %v4759 = vrot.slane %v1108, 5
    %v4760 = vsel %vm4170, %v4758, %v4759
    %v4762 = vrot.slane %v2084, 5
    %v4763 = vrot.slane %v2088, 5
    %v4764 = vsel %vm4170, %v4762, %v4763
    %v4766 = vsel %vm3070, %v4760, 0
    %v4769 = vsel %vm3070, %v4764, 0
    %4771 = vmatprep.subr.bf16.mxu0 0
    %4772 = vmatpush1.bf16.xpose.msra.mxu0 %v4769
    %4773 = vmatprep.subr.bf16.mxu0 0
    %4774 = vmatpush1.bf16.xpose.msra.mxu0 0
    %4775 = vmatprep.subr.bf16.mxu0 0
    %4776 = vmatpush1.bf16.xpose.msra.mxu0 0
    %4777 = vmatprep.subr.bf16.mxu0 0
    %4778 = vmatpush1.bf16.xpose.msra.mxu0 0
    %4779 = vmatprep.subr.bf16.mxu0 0
    %4780 = vmatpush1.bf16.xpose.msra.mxu0 0
    %4781 = vmatprep.subr.bf16.mxu0 0
    %4782 = vmatpush1.bf16.xpose.msra.mxu0 0
    %4783 = vmatprep.subr.bf16.mxu0 0
    %4784 = vmatpush1.bf16.xpose.msra.mxu0 0
    %4785 = vmatprep.subr.bf16.mxu0 0
    %4786 = vmatpush1.bf16.xpose.msra.mxu0 0
    %4787 = vmatprep.subr.bf16.mxu0 0
    %4788 = vmatpush1.bf16.xpose.msra.mxu0 0
    %4789 = vmatprep.subr.bf16.mxu0 0
    %4790 = vmatpush1.bf16.xpose.msra.mxu0 0
    %4791 = vmatprep.subr.bf16.mxu0 0
    %4792 = vmatpush1.bf16.xpose.msra.mxu0 0
    %4793 = vmatprep.subr.bf16.mxu0 0
    %4794 = vmatpush1.bf16.xpose.msra.mxu0 0
    %4795 = vmatprep.subr.bf16.mxu0 0
    %4796 = vmatpush1.bf16.xpose.msra.mxu0 0
    %4797 = vmatprep.subr.bf16.mxu0 0
    %4798 = vmatpush1.bf16.xpose.msra.mxu0 0
    %4799 = vmatprep.subr.bf16.mxu0 0
    %4800 = vmatpush1.bf16.xpose.msra.mxu0 0
    %4801 = vmatprep.subr.bf16.mxu0 0
    %4802 = vmatpush1.bf16.xpose.msra.mxu0 0
    %4803 = vmatprep.mubr.bf16.mxu0 0
    %4804 = vmatmul.mubr.bf16.gmra.mrb[0].mxu0 %v4766
    %v4805 = vpop.f32.mrb[0].mxu0
    %v4806 = vadd.f32 0.0, %v4805
    %v4807 = vpop.f32.mrb[0].mxu0
    %v4808 = vpop.f32.mrb[0].mxu0
    %v4809 = vadd.f32 0.0, %v4808
    %v4810 = vpop.f32.mrb[0].mxu0
    %4811 = vdwg.mxu0
    %v4812 = vsel %vm3118, %v4806, -inf
    %4813 = vmax.xlane.f32.xlu0 %v4812
    %v4814 = vpop.xlane.xlu0 %4813
    %v4815 = vsel %vm3122, %v4809, -inf
    %4816 = vmax.xlane.f32.xlu0 %v4815
    %v4817 = vpop.xlane.xlu0 %4816
    %v4818 = vsub.f32 %v4806, %v4814
    %v4819 = vsub.f32 %v4809, %v4817
    %v4820 = vmul.f32 %v4818, 1.442695
    %v4821 = vpow.pop %v4820
    %v4822 = vmul.f32 %v4819, 1.442695
    %v4823 = vpow.pop %v4822
    %v4824 = vsel %vm3118, %v4821, 0.0
    %4825 = vadd.xlane.f32.xlu0 %v4824
    %v4826 = vpop.xlane.xlu0 %4825
    %v4827 = vsel %vm3122, %v4823, 0.0
    %4828 = vadd.xlane.f32.xlu0 %v4827
    %v4829 = vpop.xlane.xlu0 %4828
    %v4830 = vrcp.pop %v4826
    %v4831 = vmul.f32 %v4821, %v4830
    %v4832 = vrcp.pop %v4829
    %v4833 = vmul.f32 %v4823, %v4832
    %s4834 = scalar_lea.vmem %s8, 192
    %4835 = vst.msk [vmem:[%s4834] sm:$0xff] %vm3118, %v4831
    %4836 = vst.msk [vmem:[%s4834 + $0x8] sm:$0x3] %vm3122, %v4833
    %v4837 = vpack.c.bf16 %v4833, %v4831
    %v4839 = vrot.slane %v3064, 5
    %v4840 = vrot.slane %v3068, 5
    %v4841 = vsel %vm4170, %v4839, %v4840
    %v4843 = vsel %vm3118, %v4837, 0
    %v4846 = vsel %vm3148, %v4841, 0
    %4848 = vmatprep.subr.bf16.mxu0 0
    %4849 = vmatpush1.bf16.msra.mxu0 %v4846
    %4850 = vmatprep.subr.bf16.mxu0 0
    %4851 = vmatpush1.bf16.msra.mxu0 0
    %4852 = vmatprep.subr.bf16.mxu0 0
    %4853 = vmatpush1.bf16.msra.mxu0 0
    %4854 = vmatprep.subr.bf16.mxu0 0
    %4855 = vmatpush1.bf16.msra.mxu0 0
    %4856 = vmatprep.subr.bf16.mxu0 0
    %4857 = vmatpush1.bf16.msra.mxu0 0
    %4858 = vmatprep.subr.bf16.mxu0 0
    %4859 = vmatpush1.bf16.msra.mxu0 0
    %4860 = vmatprep.subr.bf16.mxu0 0
    %4861 = vmatpush1.bf16.msra.mxu0 0
    %4862 = vmatprep.subr.bf16.mxu0 0
    %4863 = vmatpush1.bf16.msra.mxu0 0
    %4864 = vmatprep.subr.bf16.mxu0 0
    %4865 = vmatpush1.bf16.msra.mxu0 0
    %4866 = vmatprep.subr.bf16.mxu0 0
    %4867 = vmatpush1.bf16.msra.mxu0 0
    %4868 = vmatprep.subr.bf16.mxu0 0
    %4869 = vmatpush1.bf16.msra.mxu0 0
    %4870 = vmatprep.subr.bf16.mxu0 0
    %4871 = vmatpush1.bf16.msra.mxu0 0
    %4872 = vmatprep.subr.bf16.mxu0 0
    %4873 = vmatpush1.bf16.msra.mxu0 0
    %4874 = vmatprep.subr.bf16.mxu0 0
    %4875 = vmatpush1.bf16.msra.mxu0 0
    %4876 = vmatprep.subr.bf16.mxu0 0
    %4877 = vmatpush1.bf16.msra.mxu0 0
    %4878 = vmatprep.subr.bf16.mxu0 0
    %4879 = vmatpush1.bf16.msra.mxu0 0
    %4880 = vmatprep.mubr.bf16.mxu0 0
    %4881 = vmatmul.mubr.bf16.gmra.mrb[0].mxu0 %v4843
    %v4882 = vpop.f32.mrb[0].mxu0
    %v4883 = vadd.f32 0.0, %v4882
    %v4884 = vpop.f32.mrb[0].mxu0
    %v4885 = vpop.f32.mrb[0].mxu0
    %v4886 = vadd.f32 0.0, %v4885
    %v4887 = vpop.f32.mrb[0].mxu0
    %4888 = vdwg.mxu0
    %v4889 = vpack.c.bf16 %v4886, %v4883
    %v4891 = vunpack.c.l.b16 %v4889
    %v4892 = vunpack.c.h.b16 %v4889
    %v4893 = vpack.c.b16 %v4891, %v4891
    %v4894 = vpack.c.b16 %v4892, %v4892
    %v4895 = vrot.slane %v4893, 7
    %v4896 = vrot.slane %v4895, 4
    %v4897 = vrot.slane %v4894, 7
    %v4898 = vsel %vm4310, %v4896, %v4897
    %4901 = vst.msk [vmem:[#allocation2 + $0x18] sm:$0xe] %vm4317, %v4895
    %4902 = vst.msk [vmem:[#allocation2 + $0x28] sm:$0x3] %vm4319, %v4898
    %4903 = vrot.lane.b32.xlu0 %v4760, 64
    %v4904 = vpop.permute.xlu0 %4903
    %4905 = vrot.lane.b32.xlu0 %v4764, 64
    %v4906 = vpop.permute.xlu0 %4905
    %v4908 = vsel %vm3070, %v4904, 0
    %v4911 = vsel %vm3070, %v4906, 0
    %4913 = vmatprep.subr.bf16.mxu0 0
    %4914 = vmatpush1.bf16.xpose.msra.mxu0 %v4911
    %4915 = vmatprep.subr.bf16.mxu0 0
    %4916 = vmatpush1.bf16.xpose.msra.mxu0 0
    %4917 = vmatprep.subr.bf16.mxu0 0
    %4918 = vmatpush1.bf16.xpose.msra.mxu0 0
    %4919 = vmatprep.subr.bf16.mxu0 0
    %4920 = vmatpush1.bf16.xpose.msra.mxu0 0
    %4921 = vmatprep.subr.bf16.mxu0 0
    %4922 = vmatpush1.bf16.xpose.msra.mxu0 0
    %4923 = vmatprep.subr.bf16.mxu0 0
    %4924 = vmatpush1.bf16.xpose.msra.mxu0 0
    %4925 = vmatprep.subr.bf16.mxu0 0
    %4926 = vmatpush1.bf16.xpose.msra.mxu0 0
    %4927 = vmatprep.subr.bf16.mxu0 0
    %4928 = vmatpush1.bf16.xpose.msra.mxu0 0
    %4929 = vmatprep.subr.bf16.mxu0 0
    %4930 = vmatpush1.bf16.xpose.msra.mxu0 0
    %4931 = vmatprep.subr.bf16.mxu0 0
    %4932 = vmatpush1.bf16.xpose.msra.mxu0 0
    %4933 = vmatprep.subr.bf16.mxu0 0
    %4934 = vmatpush1.bf16.xpose.msra.mxu0 0
    %4935 = vmatprep.subr.bf16.mxu0 0
    %4936 = vmatpush1.bf16.xpose.msra.mxu0 0
    %4937 = vmatprep.subr.bf16.mxu0 0
    %4938 = vmatpush1.bf16.xpose.msra.mxu0 0
    %4939 = vmatprep.subr.bf16.mxu0 0
    %4940 = vmatpush1.bf16.xpose.msra.mxu0 0
    %4941 = vmatprep.subr.bf16.mxu0 0
    %4942 = vmatpush1.bf16.xpose.msra.mxu0 0
    %4943 = vmatprep.subr.bf16.mxu0 0
    %4944 = vmatpush1.bf16.xpose.msra.mxu0 0
    %4945 = vmatprep.mubr.bf16.mxu0 0
    %4946 = vmatmul.mubr.bf16.gmra.mrb[0].mxu0 %v4908
    %v4947 = vpop.f32.mrb[0].mxu0
    %v4948 = vadd.f32 0.0, %v4947
    %v4949 = vpop.f32.mrb[0].mxu0
    %v4950 = vpop.f32.mrb[0].mxu0
    %v4951 = vadd.f32 0.0, %v4950
    %v4952 = vpop.f32.mrb[0].mxu0
    %4953 = vdwg.mxu0
    %v4954 = vsel %vm3118, %v4948, -inf
    %4955 = vmax.xlane.f32.xlu0 %v4954
    %v4956 = vpop.xlane.xlu0 %4955
    %v4957 = vsel %vm3122, %v4951, -inf
    %4958 = vmax.xlane.f32.xlu0 %v4957
    %v4959 = vpop.xlane.xlu0 %4958
    %v4960 = vsub.f32 %v4948, %v4956
    %v4961 = vsub.f32 %v4951, %v4959
    %v4962 = vmul.f32 %v4960, 1.442695
    %v4963 = vpow.pop %v4962
    %v4964 = vmul.f32 %v4961, 1.442695
    %v4965 = vpow.pop %v4964
    %v4966 = vsel %vm3118, %v4963, 0.0
    %4967 = vadd.xlane.f32.xlu0 %v4966
    %v4968 = vpop.xlane.xlu0 %4967
    %v4969 = vsel %vm3122, %v4965, 0.0
    %4970 = vadd.xlane.f32.xlu0 %v4969
    %v4971 = vpop.xlane.xlu0 %4970
    %v4972 = vrcp.pop %v4968
    %v4973 = vmul.f32 %v4963, %v4972
    %v4974 = vrcp.pop %v4971
    %v4975 = vmul.f32 %v4965, %v4974
    %s4976 = scalar_lea.vmem %s8, 208
    %4977 = vst.msk [vmem:[%s4976] sm:$0xff] %vm3118, %v4973
    %4978 = vst.msk [vmem:[%s4976 + $0x8] sm:$0x3] %vm3122, %v4975
    %v4979 = vpack.c.bf16 %v4975, %v4973
    %4980 = vrot.lane.b32.xlu0 %v4841, 64
    %v4981 = vpop.permute.xlu0 %4980
    %v4983 = vsel %vm3118, %v4979, 0
    %v4986 = vsel %vm3148, %v4981, 0
    %4988 = vmatprep.subr.bf16.mxu0 0
    %4989 = vmatpush1.bf16.msra.mxu0 %v4986
    %4990 = vmatprep.subr.bf16.mxu0 0
    %4991 = vmatpush1.bf16.msra.mxu0 0
    %4992 = vmatprep.subr.bf16.mxu0 0
    %4993 = vmatpush1.bf16.msra.mxu0 0
    %4994 = vmatprep.subr.bf16.mxu0 0
    %4995 = vmatpush1.bf16.msra.mxu0 0
    %4996 = vmatprep.subr.bf16.mxu0 0
    %4997 = vmatpush1.bf16.msra.mxu0 0
    %4998 = vmatprep.subr.bf16.mxu0 0
    %4999 = vmatpush1.bf16.msra.mxu0 0
    %5000 = vmatprep.subr.bf16.mxu0 0
    %5001 = vmatpush1.bf16.msra.mxu0 0
    %5002 = vmatprep.subr.bf16.mxu0 0
    %5003 = vmatpush1.bf16.msra.mxu0 0
    %5004 = vmatprep.subr.bf16.mxu0 0
    %5005 = vmatpush1.bf16.msra.mxu0 0
    %5006 = vmatprep.subr.bf16.mxu0 0
    %5007 = vmatpush1.bf16.msra.mxu0 0
    %5008 = vmatprep.subr.bf16.mxu0 0
    %5009 = vmatpush1.bf16.msra.mxu0 0
    %5010 = vmatprep.subr.bf16.mxu0 0
    %5011 = vmatpush1.bf16.msra.mxu0 0
    %5012 = vmatprep.subr.bf16.mxu0 0
    %5013 = vmatpush1.bf16.msra.mxu0 0
    %5014 = vmatprep.subr.bf16.mxu0 0
    %5015 = vmatpush1.bf16.msra.mxu0 0
    %5016 = vmatprep.subr.bf16.mxu0 0
    %5017 = vmatpush1.bf16.msra.mxu0 0
    %5018 = vmatprep.subr.bf16.mxu0 0
    %5019 = vmatpush1.bf16.msra.mxu0 0
    %5020 = vmatprep.mubr.bf16.mxu0 0
    %5021 = vmatmul.mubr.bf16.gmra.mrb[0].mxu0 %v4983
    %v5022 = vpop.f32.mrb[0].mxu0
    %v5023 = vadd.f32 0.0, %v5022
    %v5024 = vpop.f32.mrb[0].mxu0
    %v5025 = vpop.f32.mrb[0].mxu0
    %v5026 = vadd.f32 0.0, %v5025
    %v5027 = vpop.f32.mrb[0].mxu0
    %5028 = vdwg.mxu0
    %v5029 = vpack.c.bf16 %v5026, %v5023
    %v5031 = vunpack.c.l.b16 %v5029
    %v5032 = vunpack.c.h.b16 %v5029
    %v5033 = vpack.c.b16 %v5031, %v5031
    %v5034 = vpack.c.b16 %v5032, %v5032
    %v5035 = vrot.slane %v5033, 7
    %v5036 = vrot.slane %v5035, 4
    %v5037 = vrot.slane %v5034, 7
    %v5038 = vsel %vm4310, %v5036, %v5037
    %5039 = vrot.lane.b32.xlu0 %v5035, 64
    %v5040 = vpop.permute.xlu0 %5039
    %5041 = vrot.lane.b32.xlu0 %v5038, 64
    %v5042 = vpop.permute.xlu0 %5041
    %5045 = vst.msk [vmem:[#allocation2 + $0x18] sm:$0xe] %vm4463, %v5040
    %5046 = vst.msk [vmem:[#allocation2 + $0x28] sm:$0x3] %vm4465, %v5042
    %v5048 = vrot.slane %v1105, 5
    %v5049 = vrot.slane %v1109, 5
    %v5050 = vsel %vm4170, %v5048, %v5049
    %v5052 = vrot.slane %v2085, 5
    %v5053 = vrot.slane %v2089, 5
    %v5054 = vsel %vm4170, %v5052, %v5053
    %v5056 = vsel %vm3070, %v5050, 0
    %v5059 = vsel %vm3070, %v5054, 0
    %5061 = vmatprep.subr.bf16.mxu0 0
    %5062 = vmatpush1.bf16.xpose.msra.mxu0 %v5059
    %5063 = vmatprep.subr.bf16.mxu0 0
    %5064 = vmatpush1.bf16.xpose.msra.mxu0 0
    %5065 = vmatprep.subr.bf16.mxu0 0
    %5066 = vmatpush1.bf16.xpose.msra.mxu0 0
    %5067 = vmatprep.subr.bf16.mxu0 0
    %5068 = vmatpush1.bf16.xpose.msra.mxu0 0
    %5069 = vmatprep.subr.bf16.mxu0 0
    %5070 = vmatpush1.bf16.xpose.msra.mxu0 0
    %5071 = vmatprep.subr.bf16.mxu0 0
    %5072 = vmatpush1.bf16.xpose.msra.mxu0 0
    %5073 = vmatprep.subr.bf16.mxu0 0
    %5074 = vmatpush1.bf16.xpose.msra.mxu0 0
    %5075 = vmatprep.subr.bf16.mxu0 0
    %5076 = vmatpush1.bf16.xpose.msra.mxu0 0
    %5077 = vmatprep.subr.bf16.mxu0 0
    %5078 = vmatpush1.bf16.xpose.msra.mxu0 0
    %5079 = vmatprep.subr.bf16.mxu0 0
    %5080 = vmatpush1.bf16.xpose.msra.mxu0 0
    %5081 = vmatprep.subr.bf16.mxu0 0
    %5082 = vmatpush1.bf16.xpose.msra.mxu0 0
    %5083 = vmatprep.subr.bf16.mxu0 0
    %5084 = vmatpush1.bf16.xpose.msra.mxu0 0
    %5085 = vmatprep.subr.bf16.mxu0 0
    %5086 = vmatpush1.bf16.xpose.msra.mxu0 0
    %5087 = vmatprep.subr.bf16.mxu0 0
    %5088 = vmatpush1.bf16.xpose.msra.mxu0 0
    %5089 = vmatprep.subr.bf16.mxu0 0
    %5090 = vmatpush1.bf16.xpose.msra.mxu0 0
    %5091 = vmatprep.subr.bf16.mxu0 0
    %5092 = vmatpush1.bf16.xpose.msra.mxu0 0
    %5093 = vmatprep.mubr.bf16.mxu0 0
    %5094 = vmatmul.mubr.bf16.gmra.mrb[0].mxu0 %v5056
    %v5095 = vpop.f32.mrb[0].mxu0
    %v5096 = vadd.f32 0.0, %v5095
    %v5097 = vpop.f32.mrb[0].mxu0
    %v5098 = vpop.f32.mrb[0].mxu0
    %v5099 = vadd.f32 0.0, %v5098
    %v5100 = vpop.f32.mrb[0].mxu0
    %5101 = vdwg.mxu0
    %v5102 = vsel %vm3118, %v5096, -inf
    %5103 = vmax.xlane.f32.xlu0 %v5102
    %v5104 = vpop.xlane.xlu0 %5103
    %v5105 = vsel %vm3122, %v5099, -inf
    %5106 = vmax.xlane.f32.xlu0 %v5105
    %v5107 = vpop.xlane.xlu0 %5106
    %v5108 = vsub.f32 %v5096, %v5104
    %v5109 = vsub.f32 %v5099, %v5107
    %v5110 = vmul.f32 %v5108, 1.442695
    %v5111 = vpow.pop %v5110
    %v5112 = vmul.f32 %v5109, 1.442695
    %v5113 = vpow.pop %v5112
    %v5114 = vsel %vm3118, %v5111, 0.0
    %5115 = vadd.xlane.f32.xlu0 %v5114
    %v5116 = vpop.xlane.xlu0 %5115
    %v5117 = vsel %vm3122, %v5113, 0.0
    %5118 = vadd.xlane.f32.xlu0 %v5117
    %v5119 = vpop.xlane.xlu0 %5118
    %v5120 = vrcp.pop %v5116
    %v5121 = vmul.f32 %v5111, %v5120
    %v5122 = vrcp.pop %v5119
    %v5123 = vmul.f32 %v5113, %v5122
    %s5124 = scalar_lea.vmem %s8, 224
    %5125 = vst.msk [vmem:[%s5124] sm:$0xff] %vm3118, %v5121
    %5126 = vst.msk [vmem:[%s5124 + $0x8] sm:$0x3] %vm3122, %v5123
    %v5127 = vpack.c.bf16 %v5123, %v5121
    %v5129 = vrot.slane %v3065, 5
    %v5130 = vrot.slane %v3069, 5
    %v5131 = vsel %vm4170, %v5129, %v5130
    %v5133 = vsel %vm3118, %v5127, 0
    %v5136 = vsel %vm3148, %v5131, 0
    %5138 = vmatprep.subr.bf16.mxu0 0
    %5139 = vmatpush1.bf16.msra.mxu0 %v5136
    %5140 = vmatprep.subr.bf16.mxu0 0
    %5141 = vmatpush1.bf16.msra.mxu0 0
    %5142 = vmatprep.subr.bf16.mxu0 0
    %5143 = vmatpush1.bf16.msra.mxu0 0
    %5144 = vmatprep.subr.bf16.mxu0 0
    %5145 = vmatpush1.bf16.msra.mxu0 0
    %5146 = vmatprep.subr.bf16.mxu0 0
    %5147 = vmatpush1.bf16.msra.mxu0 0
    %5148 = vmatprep.subr.bf16.mxu0 0
    %5149 = vmatpush1.bf16.msra.mxu0 0
    %5150 = vmatprep.subr.bf16.mxu0 0
    %5151 = vmatpush1.bf16.msra.mxu0 0
    %5152 = vmatprep.subr.bf16.mxu0 0
    %5153 = vmatpush1.bf16.msra.mxu0 0
    %5154 = vmatprep.subr.bf16.mxu0 0
    %5155 = vmatpush1.bf16.msra.mxu0 0
    %5156 = vmatprep.subr.bf16.mxu0 0
    %5157 = vmatpush1.bf16.msra.mxu0 0
    %5158 = vmatprep.subr.bf16.mxu0 0
    %5159 = vmatpush1.bf16.msra.mxu0 0
    %5160 = vmatprep.subr.bf16.mxu0 0
    %5161 = vmatpush1.bf16.msra.mxu0 0
    %5162 = vmatprep.subr.bf16.mxu0 0
    %5163 = vmatpush1.bf16.msra.mxu0 0
    %5164 = vmatprep.subr.bf16.mxu0 0
    %5165 = vmatpush1.bf16.msra.mxu0 0
    %5166 = vmatprep.subr.bf16.mxu0 0
    %5167 = vmatpush1.bf16.msra.mxu0 0
    %5168 = vmatprep.subr.bf16.mxu0 0
    %5169 = vmatpush1.bf16.msra.mxu0 0
    %5170 = vmatprep.mubr.bf16.mxu0 0
    %5171 = vmatmul.mubr.bf16.gmra.mrb[0].mxu0 %v5133
    %v5172 = vpop.f32.mrb[0].mxu0
    %v5173 = vadd.f32 0.0, %v5172
    %v5174 = vpop.f32.mrb[0].mxu0
    %v5175 = vpop.f32.mrb[0].mxu0
    %v5176 = vadd.f32 0.0, %v5175
    %v5177 = vpop.f32.mrb[0].mxu0
    %5178 = vdwg.mxu0
    %v5179 = vpack.c.bf16 %v5176, %v5173
    %v5181 = vunpack.c.l.b16 %v5179
    %v5182 = vunpack.c.h.b16 %v5179
    %v5183 = vpack.c.b16 %v5181, %v5181
    %v5184 = vpack.c.b16 %v5182, %v5182
    %v5185 = vrot.slane %v5183, 7
    %v5186 = vrot.slane %v5185, 4
    %v5187 = vrot.slane %v5184, 7
    %v5188 = vsel %vm4310, %v5186, %v5187
    %5191 = vst.msk [vmem:[#allocation2 + $0x1c] sm:$0xe] %vm4317, %v5185
    %5192 = vst.msk [vmem:[#allocation2 + $0x2c] sm:$0x3] %vm4319, %v5188
    %5193 = vrot.lane.b32.xlu0 %v5050, 64
    %v5194 = vpop.permute.xlu0 %5193
    %5195 = vrot.lane.b32.xlu0 %v5054, 64
    %v5196 = vpop.permute.xlu0 %5195
    %v5198 = vsel %vm3070, %v5194, 0
    %v5201 = vsel %vm3070, %v5196, 0
    %5203 = vmatprep.subr.bf16.mxu0 0
    %5204 = vmatpush1.bf16.xpose.msra.mxu0 %v5201
    %5205 = vmatprep.subr.bf16.mxu0 0
    %5206 = vmatpush1.bf16.xpose.msra.mxu0 0
    %5207 = vmatprep.subr.bf16.mxu0 0
    %5208 = vmatpush1.bf16.xpose.msra.mxu0 0
    %5209 = vmatprep.subr.bf16.mxu0 0
    %5210 = vmatpush1.bf16.xpose.msra.mxu0 0
    %5211 = vmatprep.subr.bf16.mxu0 0
    %5212 = vmatpush1.bf16.xpose.msra.mxu0 0
    %5213 = vmatprep.subr.bf16.mxu0 0
    %5214 = vmatpush1.bf16.xpose.msra.mxu0 0
    %5215 = vmatprep.subr.bf16.mxu0 0
    %5216 = vmatpush1.bf16.xpose.msra.mxu0 0
    %5217 = vmatprep.subr.bf16.mxu0 0
    %5218 = vmatpush1.bf16.xpose.msra.mxu0 0
    %5219 = vmatprep.subr.bf16.mxu0 0
    %5220 = vmatpush1.bf16.xpose.msra.mxu0 0
    %5221 = vmatprep.subr.bf16.mxu0 0
    %5222 = vmatpush1.bf16.xpose.msra.mxu0 0
    %5223 = vmatprep.subr.bf16.mxu0 0
    %5224 = vmatpush1.bf16.xpose.msra.mxu0 0
    %5225 = vmatprep.subr.bf16.mxu0 0
    %5226 = vmatpush1.bf16.xpose.msra.mxu0 0
    %5227 = vmatprep.subr.bf16.mxu0 0
    %5228 = vmatpush1.bf16.xpose.msra.mxu0 0
    %5229 = vmatprep.subr.bf16.mxu0 0
    %5230 = vmatpush1.bf16.xpose.msra.mxu0 0
    %5231 = vmatprep.subr.bf16.mxu0 0
    %5232 = vmatpush1.bf16.xpose.msra.mxu0 0
    %5233 = vmatprep.subr.bf16.mxu0 0
    %5234 = vmatpush1.bf16.xpose.msra.mxu0 0
    %5235 = vmatprep.mubr.bf16.mxu0 0
    %5236 = vmatmul.mubr.bf16.gmra.mrb[0].mxu0 %v5198
    %v5237 = vpop.f32.mrb[0].mxu0
    %v5238 = vadd.f32 0.0, %v5237
    %v5239 = vpop.f32.mrb[0].mxu0
    %v5240 = vpop.f32.mrb[0].mxu0
    %v5241 = vadd.f32 0.0, %v5240
    %v5242 = vpop.f32.mrb[0].mxu0
    %5243 = vdwg.mxu0
    %v5244 = vsel %vm3118, %v5238, -inf
    %5245 = vmax.xlane.f32.xlu0 %v5244
    %v5246 = vpop.xlane.xlu0 %5245
    %v5247 = vsel %vm3122, %v5241, -inf
    %5248 = vmax.xlane.f32.xlu0 %v5247
    %v5249 = vpop.xlane.xlu0 %5248
    %v5250 = vsub.f32 %v5238, %v5246
    %v5251 = vsub.f32 %v5241, %v5249
    %v5252 = vmul.f32 %v5250, 1.442695
    %v5253 = vpow.pop %v5252
    %v5254 = vmul.f32 %v5251, 1.442695
    %v5255 = vpow.pop %v5254
    %v5256 = vsel %vm3118, %v5253, 0.0
    %5257 = vadd.xlane.f32.xlu0 %v5256
    %v5258 = vpop.xlane.xlu0 %5257
    %v5259 = vsel %vm3122, %v5255, 0.0
    %5260 = vadd.xlane.f32.xlu0 %v5259
    %v5261 = vpop.xlane.xlu0 %5260
    %v5262 = vrcp.pop %v5258
    %v5263 = vmul.f32 %v5253, %v5262
    %v5264 = vrcp.pop %v5261
    %v5265 = vmul.f32 %v5255, %v5264
    %s5266 = scalar_lea.vmem %s8, 240
    %5267 = vst.msk [vmem:[%s5266] sm:$0xff] %vm3118, %v5263
    %5268 = vst.msk [vmem:[%s5266 + $0x8] sm:$0x3] %vm3122, %v5265
    %v5269 = vpack.c.bf16 %v5265, %v5263
    %5270 = vrot.lane.b32.xlu0 %v5131, 64
    %v5271 = vpop.permute.xlu0 %5270
    %v5273 = vsel %vm3118, %v5269, 0
    %v5276 = vsel %vm3148, %v5271, 0
    %5278 = vmatprep.subr.bf16.mxu0 0
    %5279 = vmatpush1.bf16.msra.mxu0 %v5276
    %5280 = vmatprep.subr.bf16.mxu0 0
    %5281 = vmatpush1.bf16.msra.mxu0 0
    %5282 = vmatprep.subr.bf16.mxu0 0
    %5283 = vmatpush1.bf16.msra.mxu0 0
    %5284 = vmatprep.subr.bf16.mxu0 0
    %5285 = vmatpush1.bf16.msra.mxu0 0
    %5286 = vmatprep.subr.bf16.mxu0 0
    %5287 = vmatpush1.bf16.msra.mxu0 0
    %5288 = vmatprep.subr.bf16.mxu0 0
    %5289 = vmatpush1.bf16.msra.mxu0 0
    %5290 = vmatprep.subr.bf16.mxu0 0
    %5291 = vmatpush1.bf16.msra.mxu0 0
    %5292 = vmatprep.subr.bf16.mxu0 0
    %5293 = vmatpush1.bf16.msra.mxu0 0
    %5294 = vmatprep.subr.bf16.mxu0 0
    %5295 = vmatpush1.bf16.msra.mxu0 0
    %5296 = vmatprep.subr.bf16.mxu0 0
    %5297 = vmatpush1.bf16.msra.mxu0 0
    %5298 = vmatprep.subr.bf16.mxu0 0
    %5299 = vmatpush1.bf16.msra.mxu0 0
    %5300 = vmatprep.subr.bf16.mxu0 0
    %5301 = vmatpush1.bf16.msra.mxu0 0
    %5302 = vmatprep.subr.bf16.mxu0 0
    %5303 = vmatpush1.bf16.msra.mxu0 0
    %5304 = vmatprep.subr.bf16.mxu0 0
    %5305 = vmatpush1.bf16.msra.mxu0 0
    %5306 = vmatprep.subr.bf16.mxu0 0
    %5307 = vmatpush1.bf16.msra.mxu0 0
    %5308 = vmatprep.subr.bf16.mxu0 0
    %5309 = vmatpush1.bf16.msra.mxu0 0
    %5310 = vmatprep.mubr.bf16.mxu0 0
    %5311 = vmatmul.mubr.bf16.gmra.mrb[0].mxu0 %v5273
    %v5312 = vpop.f32.mrb[0].mxu0
    %v5313 = vadd.f32 0.0, %v5312
    %v5314 = vpop.f32.mrb[0].mxu0
    %v5315 = vpop.f32.mrb[0].mxu0
    %v5316 = vadd.f32 0.0, %v5315
    %v5317 = vpop.f32.mrb[0].mxu0
    %5318 = vdwg.mxu0
    %v5319 = vpack.c.bf16 %v5316, %v5313
    %v5321 = vunpack.c.l.b16 %v5319
    %v5322 = vunpack.c.h.b16 %v5319
    %v5323 = vpack.c.b16 %v5321, %v5321
    %v5324 = vpack.c.b16 %v5322, %v5322
    %v5325 = vrot.slane %v5323, 7
    %v5326 = vrot.slane %v5325, 4
    %v5327 = vrot.slane %v5324, 7
    %v5328 = vsel %vm4310, %v5326, %v5327
    %5329 = vrot.lane.b32.xlu0 %v5325, 64
    %v5330 = vpop.permute.xlu0 %5329
    %5331 = vrot.lane.b32.xlu0 %v5328, 64
    %v5332 = vpop.permute.xlu0 %5331
    %5335 = vst.msk [vmem:[#allocation2 + $0x1c] sm:$0xe] %vm4463, %v5330
    %5336 = vst.msk [vmem:[#allocation2 + $0x2c] sm:$0x3] %vm4465, %v5332
    %v5337 = vld [vmem:[#allocation2] sm:$0xff]
    %v5338 = vld [vmem:[#allocation2 + $0x8] sm:$0xff]
    %v5339 = vld [vmem:[#allocation2 + $0x10] sm:$0xff]
    %v5340 = vld [vmem:[#allocation2 + $0x18] sm:$0xff]
    %v5341 = vld [vmem:[#allocation2 + $0x20] sm:$0x33]
    %v5342 = vld [vmem:[#allocation2 + $0x28] sm:$0x33]
    %v5343 = vld [vmem:[#allocation7] sm:$0xff]
    %v5344 = vld [vmem:[#allocation7 + $0x8] sm:$0xff]
    %v5345 = vld [vmem:[#allocation7 + $0x10] sm:$0xff]
    %v5346 = vld [vmem:[#allocation7 + $0x18] sm:$0xff]
    %v5347 = vld [vmem:[#allocation7 + $0x20] sm:$0xff]
    %v5348 = vld [vmem:[#allocation7 + $0x28] sm:$0xff]
    %v5349 = vld [vmem:[#allocation7 + $0x30] sm:$0xff]
    %v5350 = vld [vmem:[#allocation7 + $0x38] sm:$0xff]
    %v5351 = vld [vmem:[#allocation7 + $0x40] sm:$0xff]
    %v5352 = vld [vmem:[#allocation7 + $0x48] sm:$0xff]
    %v5353 = vld [vmem:[#allocation7 + $0x50] sm:$0xff]
    %v5354 = vld [vmem:[#allocation7 + $0x58] sm:$0xff]
    %v5355 = vld [vmem:[#allocation7 + $0x60] sm:$0xff]
    %v5356 = vld [vmem:[#allocation7 + $0x68] sm:$0xff]
    %v5357 = vld [vmem:[#allocation7 + $0x70] sm:$0xff]
    %v5358 = vld [vmem:[#allocation7 + $0x78] sm:$0xff]
    %v5359 = vld [vmem:[#allocation7 + $0x80] sm:$0xff]
    %v5360 = vld [vmem:[#allocation7 + $0x88] sm:$0xff]
    %v5361 = vld [vmem:[#allocation7 + $0x90] sm:$0xff]
    %v5362 = vld [vmem:[#allocation7 + $0x98] sm:$0xff]
    %v5363 = vld [vmem:[#allocation7 + $0xa0] sm:$0xff]
    %v5364 = vld [vmem:[#allocation7 + $0xa8] sm:$0xff]
    %v5365 = vld [vmem:[#allocation7 + $0xb0] sm:$0xff]
    %v5366 = vld [vmem:[#allocation7 + $0xb8] sm:$0xff]
    %v5367 = vld [vmem:[#allocation7 + $0xc0] sm:$0xff]
    %v5368 = vld [vmem:[#allocation7 + $0xc8] sm:$0xff]
    %v5369 = vld [vmem:[#allocation7 + $0xd0] sm:$0xff]
    %v5370 = vld [vmem:[#allocation7 + $0xd8] sm:$0xff]
    %v5371 = vld [vmem:[#allocation7 + $0xe0] sm:$0xff]
    %v5372 = vld [vmem:[#allocation7 + $0xe8] sm:$0xff]
    %v5373 = vld [vmem:[#allocation7 + $0xf0] sm:$0xff]
    %v5374 = vld [vmem:[#allocation7 + $0xf8] sm:$0xff]
    %v5375 = vld [vmem:[#allocation7 + $0x100] sm:$0xff]
    %v5376 = vld [vmem:[#allocation7 + $0x108] sm:$0xff]
    %v5377 = vld [vmem:[#allocation7 + $0x110] sm:$0xff]
    %v5378 = vld [vmem:[#allocation7 + $0x118] sm:$0xff]
    %v5379 = vld [vmem:[#allocation7 + $0x120] sm:$0xff]
    %v5380 = vld [vmem:[#allocation7 + $0x128] sm:$0xff]
    %v5381 = vld [vmem:[#allocation7 + $0x130] sm:$0xff]
    %v5382 = vld [vmem:[#allocation7 + $0x138] sm:$0xff]
    %v5383 = vld [vmem:[#allocation7 + $0x140] sm:$0xff]
    %v5384 = vld [vmem:[#allocation7 + $0x148] sm:$0xff]
    %v5385 = vld [vmem:[#allocation7 + $0x150] sm:$0xff]
    %v5386 = vld [vmem:[#allocation7 + $0x158] sm:$0xff]
    %v5387 = vld [vmem:[#allocation7 + $0x160] sm:$0xff]
    %v5388 = vld [vmem:[#allocation7 + $0x168] sm:$0xff]
    %v5389 = vld [vmem:[#allocation7 + $0x170] sm:$0xff]
    %v5390 = vld [vmem:[#allocation7 + $0x178] sm:$0xff]
    %v5391 = vld [vmem:[#allocation7 + $0x180] sm:$0xff]
    %v5392 = vld [vmem:[#allocation7 + $0x188] sm:$0xff]
    %v5393 = vld [vmem:[#allocation7 + $0x190] sm:$0xff]
    %v5394 = vld [vmem:[#allocation7 + $0x198] sm:$0xff]
    %v5395 = vld [vmem:[#allocation7 + $0x1a0] sm:$0xff]
    %v5396 = vld [vmem:[#allocation7 + $0x1a8] sm:$0xff]
    %v5397 = vld [vmem:[#allocation7 + $0x1b0] sm:$0xff]
    %v5398 = vld [vmem:[#allocation7 + $0x1b8] sm:$0xff]
    %v5399 = vld [vmem:[#allocation7 + $0x1c0] sm:$0xff]
    %v5400 = vld [vmem:[#allocation7 + $0x1c8] sm:$0xff]
    %v5401 = vld [vmem:[#allocation7 + $0x1d0] sm:$0xff]
    %v5402 = vld [vmem:[#allocation7 + $0x1d8] sm:$0xff]
    %v5403 = vld [vmem:[#allocation7 + $0x1e0] sm:$0xff]
    %v5404 = vld [vmem:[#allocation7 + $0x1e8] sm:$0xff]
    %v5405 = vld [vmem:[#allocation7 + $0x1f0] sm:$0xff]
    %v5406 = vld [vmem:[#allocation7 + $0x1f8] sm:$0xff]
    %v5407 = vld [vmem:[#allocation7 + $0x200] sm:$0xff]
    %v5408 = vld [vmem:[#allocation7 + $0x208] sm:$0xff]
    %v5409 = vld [vmem:[#allocation7 + $0x210] sm:$0xff]
    %v5410 = vld [vmem:[#allocation7 + $0x218] sm:$0xff]
    %v5411 = vld [vmem:[#allocation7 + $0x220] sm:$0xff]
    %v5412 = vld [vmem:[#allocation7 + $0x228] sm:$0xff]
    %v5413 = vld [vmem:[#allocation7 + $0x230] sm:$0xff]
    %v5414 = vld [vmem:[#allocation7 + $0x238] sm:$0xff]
    %v5415 = vld [vmem:[#allocation7 + $0x240] sm:$0xff]
    %v5416 = vld [vmem:[#allocation7 + $0x248] sm:$0xff]
    %v5417 = vld [vmem:[#allocation7 + $0x250] sm:$0xff]
    %v5418 = vld [vmem:[#allocation7 + $0x258] sm:$0xff]
    %v5419 = vld [vmem:[#allocation7 + $0x260] sm:$0xff]
    %v5420 = vld [vmem:[#allocation7 + $0x268] sm:$0xff]
    %v5421 = vld [vmem:[#allocation7 + $0x270] sm:$0xff]
    %v5422 = vld [vmem:[#allocation7 + $0x278] sm:$0xff]
    %v5423 = vld [vmem:[#allocation7 + $0x280] sm:$0xff]
    %v5424 = vld [vmem:[#allocation7 + $0x288] sm:$0xff]
    %v5425 = vld [vmem:[#allocation7 + $0x290] sm:$0xff]
    %v5426 = vld [vmem:[#allocation7 + $0x298] sm:$0xff]
    %v5427 = vld [vmem:[#allocation7 + $0x2a0] sm:$0xff]
    %v5428 = vld [vmem:[#allocation7 + $0x2a8] sm:$0xff]
    %v5429 = vld [vmem:[#allocation7 + $0x2b0] sm:$0xff]
    %v5430 = vld [vmem:[#allocation7 + $0x2b8] sm:$0xff]
    %v5431 = vld [vmem:[#allocation7 + $0x2c0] sm:$0xff]
    %v5432 = vld [vmem:[#allocation7 + $0x2c8] sm:$0xff]
    %v5433 = vld [vmem:[#allocation7 + $0x2d0] sm:$0xff]
    %v5434 = vld [vmem:[#allocation7 + $0x2d8] sm:$0xff]
    %v5435 = vld [vmem:[#allocation7 + $0x2e0] sm:$0xff]
    %v5436 = vld [vmem:[#allocation7 + $0x2e8] sm:$0xff]
    %v5437 = vld [vmem:[#allocation7 + $0x2f0] sm:$0xff]
    %v5438 = vld [vmem:[#allocation7 + $0x2f8] sm:$0xff]
    %v5439 = vld [vmem:[#allocation7 + $0x300] sm:$0xff]
    %v5440 = vld [vmem:[#allocation7 + $0x308] sm:$0xff]
    %v5441 = vld [vmem:[#allocation7 + $0x310] sm:$0xff]
    %v5442 = vld [vmem:[#allocation7 + $0x318] sm:$0xff]
    %v5443 = vld [vmem:[#allocation7 + $0x320] sm:$0xff]
    %v5444 = vld [vmem:[#allocation7 + $0x328] sm:$0xff]
    %v5445 = vld [vmem:[#allocation7 + $0x330] sm:$0xff]
    %v5446 = vld [vmem:[#allocation7 + $0x338] sm:$0xff]
    %v5447 = vld [vmem:[#allocation7 + $0x340] sm:$0xff]
    %v5448 = vld [vmem:[#allocation7 + $0x348] sm:$0xff]
    %v5449 = vld [vmem:[#allocation7 + $0x350] sm:$0xff]
    %v5450 = vld [vmem:[#allocation7 + $0x358] sm:$0xff]
    %v5451 = vld [vmem:[#allocation7 + $0x360] sm:$0xff]
    %v5452 = vld [vmem:[#allocation7 + $0x368] sm:$0xff]
    %v5453 = vld [vmem:[#allocation7 + $0x370] sm:$0xff]
    %v5454 = vld [vmem:[#allocation7 + $0x378] sm:$0xff]
    %v5455 = vld [vmem:[#allocation7 + $0x380] sm:$0xff]
    %v5456 = vld [vmem:[#allocation7 + $0x388] sm:$0xff]
    %v5457 = vld [vmem:[#allocation7 + $0x390] sm:$0xff]
    %v5458 = vld [vmem:[#allocation7 + $0x398] sm:$0xff]
    %v5459 = vld [vmem:[#allocation7 + $0x3a0] sm:$0xff]
    %v5460 = vld [vmem:[#allocation7 + $0x3a8] sm:$0xff]
    %v5461 = vld [vmem:[#allocation7 + $0x3b0] sm:$0xff]
    %v5462 = vld [vmem:[#allocation7 + $0x3b8] sm:$0xff]
    %v5463 = vld [vmem:[#allocation7 + $0x3c0] sm:$0xff]
    %v5464 = vld [vmem:[#allocation7 + $0x3c8] sm:$0xff]
    %v5465 = vld [vmem:[#allocation7 + $0x3d0] sm:$0xff]
    %v5466 = vld [vmem:[#allocation7 + $0x3d8] sm:$0xff]
    %v5467 = vld [vmem:[#allocation7 + $0x3e0] sm:$0xff]
    %v5468 = vld [vmem:[#allocation7 + $0x3e8] sm:$0xff]
    %v5469 = vld [vmem:[#allocation7 + $0x3f0] sm:$0xff]
    %v5470 = vld [vmem:[#allocation7 + $0x3f8] sm:$0xff]
    %v5477 = vunpack.c.l.b16 %v5337
    %v5478 = vunpack.c.h.b16 %v5337
    %v5479 = vunpack.c.l.b16 %v5338
    %v5480 = vunpack.c.h.b16 %v5338
    %v5481 = vunpack.c.l.b16 %v5339
    %v5482 = vunpack.c.h.b16 %v5339
    %v5483 = vunpack.c.l.b16 %v5340
    %v5484 = vunpack.c.h.b16 %v5340
    %v5485 = vunpack.c.l.b16 %v5341
    %v5486 = vunpack.c.h.b16 %v5341
    %v5487 = vunpack.c.l.b16 %v5342
    %v5488 = vunpack.c.h.b16 %v5342
    %v5489 = vpack.c.b16 %v5481, %v5477
    %v5490 = vpack.c.b16 %v5482, %v5478
    %v5491 = vpack.c.b16 %v5483, %v5479
    %v5492 = vpack.c.b16 %v5484, %v5480
    %v5493 = vpack.c.b16 %v5485, %v5485
    %v5494 = vpack.c.b16 %v5486, %v5486
    %v5495 = vpack.c.b16 %v5487, %v5487
    %v5496 = vpack.c.b16 %v5488, %v5488
    %v5633 = vunpack.c.l.b16 %v5343
    %v5634 = vunpack.c.h.b16 %v5343
    %v5635 = vunpack.c.l.b16 %v5344
    %v5636 = vunpack.c.h.b16 %v5344
    %v5637 = vunpack.c.l.b16 %v5345
    %v5638 = vunpack.c.h.b16 %v5345
    %v5639 = vunpack.c.l.b16 %v5346
    %v5640 = vunpack.c.h.b16 %v5346
    %v5641 = vunpack.c.l.b16 %v5347
    %v5642 = vunpack.c.h.b16 %v5347
    %v5643 = vunpack.c.l.b16 %v5348
    %v5644 = vunpack.c.h.b16 %v5348
    %v5645 = vunpack.c.l.b16 %v5349
    %v5646 = vunpack.c.h.b16 %v5349
    %v5647 = vunpack.c.l.b16 %v5350
    %v5648 = vunpack.c.h.b16 %v5350
    %v5649 = vunpack.c.l.b16 %v5351
    %v5650 = vunpack.c.h.b16 %v5351
    %v5651 = vunpack.c.l.b16 %v5352
    %v5652 = vunpack.c.h.b16 %v5352
    %v5653 = vunpack.c.l.b16 %v5353
    %v5654 = vunpack.c.h.b16 %v5353
    %v5655 = vunpack.c.l.b16 %v5354
    %v5656 = vunpack.c.h.b16 %v5354
    %v5657 = vunpack.c.l.b16 %v5355
    %v5658 = vunpack.c.h.b16 %v5355
    %v5659 = vunpack.c.l.b16 %v5356
    %v5660 = vunpack.c.h.b16 %v5356
    %v5661 = vunpack.c.l.b16 %v5357
    %v5662 = vunpack.c.h.b16 %v5357
    %v5663 = vunpack.c.l.b16 %v5358
    %v5664 = vunpack.c.h.b16 %v5358
    %v5665 = vunpack.c.l.b16 %v5359
    %v5666 = vunpack.c.h.b16 %v5359
    %v5667 = vunpack.c.l.b16 %v5360
    %v5668 = vunpack.c.h.b16 %v5360
    %v5669 = vunpack.c.l.b16 %v5361
    %v5670 = vunpack.c.h.b16 %v5361
    %v5671 = vunpack.c.l.b16 %v5362
    %v5672 = vunpack.c.h.b16 %v5362
    %v5673 = vunpack.c.l.b16 %v5363
    %v5674 = vunpack.c.h.b16 %v5363
    %v5675 = vunpack.c.l.b16 %v5364
    %v5676 = vunpack.c.h.b16 %v5364
    %v5677 = vunpack.c.l.b16 %v5365
    %v5678 = vunpack.c.h.b16 %v5365
    %v5679 = vunpack.c.l.b16 %v5366
    %v5680 = vunpack.c.h.b16 %v5366
    %v5681 = vunpack.c.l.b16 %v5367
    %v5682 = vunpack.c.h.b16 %v5367
    %v5683 = vunpack.c.l.b16 %v5368
    %v5684 = vunpack.c.h.b16 %v5368
    %v5685 = vunpack.c.l.b16 %v5369
    %v5686 = vunpack.c.h.b16 %v5369
    %v5687 = vunpack.c.l.b16 %v5370
    %v5688 = vunpack.c.h.b16 %v5370
    %v5689 = vunpack.c.l.b16 %v5371
    %v5690 = vunpack.c.h.b16 %v5371
    %v5691 = vunpack.c.l.b16 %v5372
    %v5692 = vunpack.c.h.b16 %v5372
    %v5693 = vunpack.c.l.b16 %v5373
    %v5694 = vunpack.c.h.b16 %v5373
    %v5695 = vunpack.c.l.b16 %v5374
    %v5696 = vunpack.c.h.b16 %v5374
    %v5697 = vunpack.c.l.b16 %v5375
    %v5698 = vunpack.c.h.b16 %v5375
    %v5699 = vunpack.c.l.b16 %v5376
    %v5700 = vunpack.c.h.b16 %v5376
    %v5701 = vunpack.c.l.b16 %v5377
    %v5702 = vunpack.c.h.b16 %v5377
    %v5703 = vunpack.c.l.b16 %v5378
    %v5704 = vunpack.c.h.b16 %v5378
    %v5705 = vunpack.c.l.b16 %v5379
    %v5706 = vunpack.c.h.b16 %v5379
    %v5707 = vunpack.c.l.b16 %v5380
    %v5708 = vunpack.c.h.b16 %v5380
    %v5709 = vunpack.c.l.b16 %v5381
    %v5710 = vunpack.c.h.b16 %v5381
    %v5711 = vunpack.c.l.b16 %v5382
    %v5712 = vunpack.c.h.b16 %v5382
    %v5713 = vunpack.c.l.b16 %v5383
    %v5714 = vunpack.c.h.b16 %v5383
    %v5715 = vunpack.c.l.b16 %v5384
    %v5716 = vunpack.c.h.b16 %v5384
    %v5717 = vunpack.c.l.b16 %v5385
    %v5718 = vunpack.c.h.b16 %v5385
    %v5719 = vunpack.c.l.b16 %v5386
    %v5720 = vunpack.c.h.b16 %v5386
    %v5721 = vunpack.c.l.b16 %v5387
    %v5722 = vunpack.c.h.b16 %v5387
    %v5723 = vunpack.c.l.b16 %v5388
    %v5724 = vunpack.c.h.b16 %v5388
    %v5725 = vunpack.c.l.b16 %v5389
    %v5726 = vunpack.c.h.b16 %v5389
    %v5727 = vunpack.c.l.b16 %v5390
    %v5728 = vunpack.c.h.b16 %v5390
    %v5729 = vunpack.c.l.b16 %v5391
    %v5730 = vunpack.c.h.b16 %v5391
    %v5731 = vunpack.c.l.b16 %v5392
    %v5732 = vunpack.c.h.b16 %v5392
    %v5733 = vunpack.c.l.b16 %v5393
    %v5734 = vunpack.c.h.b16 %v5393
    %v5735 = vunpack.c.l.b16 %v5394
    %v5736 = vunpack.c.h.b16 %v5394
    %v5737 = vunpack.c.l.b16 %v5395
    %v5738 = vunpack.c.h.b16 %v5395
    %v5739 = vunpack.c.l.b16 %v5396
    %v5740 = vunpack.c.h.b16 %v5396
    %v5741 = vunpack.c.l.b16 %v5397
    %v5742 = vunpack.c.h.b16 %v5397
    %v5743 = vunpack.c.l.b16 %v5398
    %v5744 = vunpack.c.h.b16 %v5398
    %v5745 = vunpack.c.l.b16 %v5399
    %v5746 = vunpack.c.h.b16 %v5399
    %v5747 = vunpack.c.l.b16 %v5400
    %v5748 = vunpack.c.h.b16 %v5400
    %v5749 = vunpack.c.l.b16 %v5401
    %v5750 = vunpack.c.h.b16 %v5401
    %v5751 = vunpack.c.l.b16 %v5402
    %v5752 = vunpack.c.h.b16 %v5402
    %v5753 = vunpack.c.l.b16 %v5403
    %v5754 = vunpack.c.h.b16 %v5403
    %v5755 = vunpack.c.l.b16 %v5404
    %v5756 = vunpack.c.h.b16 %v5404
    %v5757 = vunpack.c.l.b16 %v5405
    %v5758 = vunpack.c.h.b16 %v5405
    %v5759 = vunpack.c.l.b16 %v5406
    %v5760 = vunpack.c.h.b16 %v5406
    %v5761 = vunpack.c.l.b16 %v5407
    %v5762 = vunpack.c.h.b16 %v5407
    %v5763 = vunpack.c.l.b16 %v5408
    %v5764 = vunpack.c.h.b16 %v5408
    %v5765 = vunpack.c.l.b16 %v5409
    %v5766 = vunpack.c.h.b16 %v5409
    %v5767 = vunpack.c.l.b16 %v5410
    %v5768 = vunpack.c.h.b16 %v5410
    %v5769 = vunpack.c.l.b16 %v5411
    %v5770 = vunpack.c.h.b16 %v5411
    %v5771 = vunpack.c.l.b16 %v5412
    %v5772 = vunpack.c.h.b16 %v5412
    %v5773 = vunpack.c.l.b16 %v5413
    %v5774 = vunpack.c.h.b16 %v5413
    %v5775 = vunpack.c.l.b16 %v5414
    %v5776 = vunpack.c.h.b16 %v5414
    %v5777 = vunpack.c.l.b16 %v5415
    %v5778 = vunpack.c.h.b16 %v5415
    %v5779 = vunpack.c.l.b16 %v5416
    %v5780 = vunpack.c.h.b16 %v5416
    %v5781 = vunpack.c.l.b16 %v5417
    %v5782 = vunpack.c.h.b16 %v5417
    %v5783 = vunpack.c.l.b16 %v5418
    %v5784 = vunpack.c.h.b16 %v5418
    %v5785 = vunpack.c.l.b16 %v5419
    %v5786 = vunpack.c.h.b16 %v5419
    %v5787 = vunpack.c.l.b16 %v5420
    %v5788 = vunpack.c.h.b16 %v5420
    %v5789 = vunpack.c.l.b16 %v5421
    %v5790 = vunpack.c.h.b16 %v5421
    %v5791 = vunpack.c.l.b16 %v5422
    %v5792 = vunpack.c.h.b16 %v5422
    %v5793 = vunpack.c.l.b16 %v5423
    %v5794 = vunpack.c.h.b16 %v5423
    %v5795 = vunpack.c.l.b16 %v5424
    %v5796 = vunpack.c.h.b16 %v5424
    %v5797 = vunpack.c.l.b16 %v5425
    %v5798 = vunpack.c.h.b16 %v5425
    %v5799 = vunpack.c.l.b16 %v5426
    %v5800 = vunpack.c.h.b16 %v5426
    %v5801 = vunpack.c.l.b16 %v5427
    %v5802 = vunpack.c.h.b16 %v5427
    %v5803 = vunpack.c.l.b16 %v5428
    %v5804 = vunpack.c.h.b16 %v5428
    %v5805 = vunpack.c.l.b16 %v5429
    %v5806 = vunpack.c.h.b16 %v5429
    %v5807 = vunpack.c.l.b16 %v5430
    %v5808 = vunpack.c.h.b16 %v5430
    %v5809 = vunpack.c.l.b16 %v5431
    %v5810 = vunpack.c.h.b16 %v5431
    %v5811 = vunpack.c.l.b16 %v5432
    %v5812 = vunpack.c.h.b16 %v5432
    %v5813 = vunpack.c.l.b16 %v5433
    %v5814 = vunpack.c.h.b16 %v5433
    %v5815 = vunpack.c.l.b16 %v5434
    %v5816 = vunpack.c.h.b16 %v5434
    %v5817 = vunpack.c.l.b16 %v5435
    %v5818 = vunpack.c.h.b16 %v5435
    %v5819 = vunpack.c.l.b16 %v5436
    %v5820 = vunpack.c.h.b16 %v5436
    %v5821 = vunpack.c.l.b16 %v5437
    %v5822 = vunpack.c.h.b16 %v5437
    %v5823 = vunpack.c.l.b16 %v5438
    %v5824 = vunpack.c.h.b16 %v5438
    %v5825 = vunpack.c.l.b16 %v5439
    %v5826 = vunpack.c.h.b16 %v5439
    %v5827 = vunpack.c.l.b16 %v5440
    %v5828 = vunpack.c.h.b16 %v5440
    %v5829 = vunpack.c.l.b16 %v5441
    %v5830 = vunpack.c.h.b16 %v5441
    %v5831 = vunpack.c.l.b16 %v5442
    %v5832 = vunpack.c.h.b16 %v5442
    %v5833 = vunpack.c.l.b16 %v5443
    %v5834 = vunpack.c.h.b16 %v5443
    %v5835 = vunpack.c.l.b16 %v5444
    %v5836 = vunpack.c.h.b16 %v5444
    %v5837 = vunpack.c.l.b16 %v5445
    %v5838 = vunpack.c.h.b16 %v5445
    %v5839 = vunpack.c.l.b16 %v5446
    %v5840 = vunpack.c.h.b16 %v5446
    %v5841 = vunpack.c.l.b16 %v5447
    %v5842 = vunpack.c.h.b16 %v5447
    %v5843 = vunpack.c.l.b16 %v5448
    %v5844 = vunpack.c.h.b16 %v5448
    %v5845 = vunpack.c.l.b16 %v5449
    %v5846 = vunpack.c.h.b16 %v5449
    %v5847 = vunpack.c.l.b16 %v5450
    %v5848 = vunpack.c.h.b16 %v5450
    %v5849 = vunpack.c.l.b16 %v5451
    %v5850 = vunpack.c.h.b16 %v5451
    %v5851 = vunpack.c.l.b16 %v5452
    %v5852 = vunpack.c.h.b16 %v5452
    %v5853 = vunpack.c.l.b16 %v5453
    %v5854 = vunpack.c.h.b16 %v5453
    %v5855 = vunpack.c.l.b16 %v5454
    %v5856 = vunpack.c.h.b16 %v5454
    %v5857 = vunpack.c.l.b16 %v5455
    %v5858 = vunpack.c.h.b16 %v5455
    %v5859 = vunpack.c.l.b16 %v5456
    %v5860 = vunpack.c.h.b16 %v5456
    %v5861 = vunpack.c.l.b16 %v5457
    %v5862 = vunpack.c.h.b16 %v5457
    %v5863 = vunpack.c.l.b16 %v5458
    %v5864 = vunpack.c.h.b16 %v5458
    %v5865 = vunpack.c.l.b16 %v5459
    %v5866 = vunpack.c.h.b16 %v5459
    %v5867 = vunpack.c.l.b16 %v5460
    %v5868 = vunpack.c.h.b16 %v5460
    %v5869 = vunpack.c.l.b16 %v5461
    %v5870 = vunpack.c.h.b16 %v5461
    %v5871 = vunpack.c.l.b16 %v5462
    %v5872 = vunpack.c.h.b16 %v5462
    %v5873 = vunpack.c.l.b16 %v5463
    %v5874 = vunpack.c.h.b16 %v5463
    %v5875 = vunpack.c.l.b16 %v5464
    %v5876 = vunpack.c.h.b16 %v5464
    %v5877 = vunpack.c.l.b16 %v5465
    %v5878 = vunpack.c.h.b16 %v5465
    %v5879 = vunpack.c.l.b16 %v5466
    %v5880 = vunpack.c.h.b16 %v5466
    %v5881 = vunpack.c.l.b16 %v5467
    %v5882 = vunpack.c.h.b16 %v5467
    %v5883 = vunpack.c.l.b16 %v5468
    %v5884 = vunpack.c.h.b16 %v5468
    %v5885 = vunpack.c.l.b16 %v5469
    %v5886 = vunpack.c.h.b16 %v5469
    %v5887 = vunpack.c.l.b16 %v5470
    %v5888 = vunpack.c.h.b16 %v5470
    %v5889 = vpack.c.b16 %v5637, %v5633
    %v5890 = vpack.c.b16 %v5638, %v5634
    %v5891 = vpack.c.b16 %v5639, %v5635
    %v5892 = vpack.c.b16 %v5640, %v5636
    %v5893 = vpack.c.b16 %v5645, %v5641
    %v5894 = vpack.c.b16 %v5646, %v5642
    %v5895 = vpack.c.b16 %v5647, %v5643
    %v5896 = vpack.c.b16 %v5648, %v5644
    %v5897 = vpack.c.b16 %v5653, %v5649
    %v5898 = vpack.c.b16 %v5654, %v5650
    %v5899 = vpack.c.b16 %v5655, %v5651
    %v5900 = vpack.c.b16 %v5656, %v5652
    %v5901 = vpack.c.b16 %v5661, %v5657
    %v5902 = vpack.c.b16 %v5662, %v5658
    %v5903 = vpack.c.b16 %v5663, %v5659
    %v5904 = vpack.c.b16 %v5664, %v5660
    %v5905 = vpack.c.b16 %v5669, %v5665
    %v5906 = vpack.c.b16 %v5670, %v5666
    %v5907 = vpack.c.b16 %v5671, %v5667
    %v5908 = vpack.c.b16 %v5672, %v5668
    %v5909 = vpack.c.b16 %v5677, %v5673
    %v5910 = vpack.c.b16 %v5678, %v5674
    %v5911 = vpack.c.b16 %v5679, %v5675
    %v5912 = vpack.c.b16 %v5680, %v5676
    %v5913 = vpack.c.b16 %v5685, %v5681
    %v5914 = vpack.c.b16 %v5686, %v5682
    %v5915 = vpack.c.b16 %v5687, %v5683
    %v5916 = vpack.c.b16 %v5688, %v5684
    %v5917 = vpack.c.b16 %v5693, %v5689
    %v5918 = vpack.c.b16 %v5694, %v5690
    %v5919 = vpack.c.b16 %v5695, %v5691
    %v5920 = vpack.c.b16 %v5696, %v5692
    %v5921 = vpack.c.b16 %v5701, %v5697
    %v5922 = vpack.c.b16 %v5702, %v5698
    %v5923 = vpack.c.b16 %v5703, %v5699
    %v5924 = vpack.c.b16 %v5704, %v5700
    %v5925 = vpack.c.b16 %v5709, %v5705
    %v5926 = vpack.c.b16 %v5710, %v5706
    %v5927 = vpack.c.b16 %v5711, %v5707
    %v5928 = vpack.c.b16 %v5712, %v5708
    %v5929 = vpack.c.b16 %v5717, %v5713
    %v5930 = vpack.c.b16 %v5718, %v5714
    %v5931 = vpack.c.b16 %v5719, %v5715
    %v5932 = vpack.c.b16 %v5720, %v5716
    %v5933 = vpack.c.b16 %v5725, %v5721
    %v5934 = vpack.c.b16 %v5726, %v5722
    %v5935 = vpack.c.b16 %v5727, %v5723
    %v5936 = vpack.c.b16 %v5728, %v5724
    %v5937 = vpack.c.b16 %v5733, %v5729
    %v5938 = vpack.c.b16 %v5734, %v5730
    %v5939 = vpack.c.b16 %v5735, %v5731
    %v5940 = vpack.c.b16 %v5736, %v5732
    %v5941 = vpack.c.b16 %v5741, %v5737
    %v5942 = vpack.c.b16 %v5742, %v5738
    %v5943 = vpack.c.b16 %v5743, %v5739
    %v5944 = vpack.c.b16 %v5744, %v5740
    %v5945 = vpack.c.b16 %v5749, %v5745
    %v5946 = vpack.c.b16 %v5750, %v5746
    %v5947 = vpack.c.b16 %v5751, %v5747
    %v5948 = vpack.c.b16 %v5752, %v5748
    %v5949 = vpack.c.b16 %v5757, %v5753
    %v5950 = vpack.c.b16 %v5758, %v5754
    %v5951 = vpack.c.b16 %v5759, %v5755
    %v5952 = vpack.c.b16 %v5760, %v5756
    %v5953 = vpack.c.b16 %v5765, %v5761
    %v5954 = vpack.c.b16 %v5766, %v5762
    %v5955 = vpack.c.b16 %v5767, %v5763
    %v5956 = vpack.c.b16 %v5768, %v5764
    %v5957 = vpack.c.b16 %v5773, %v5769
    %v5958 = vpack.c.b16 %v5774, %v5770
    %v5959 = vpack.c.b16 %v5775, %v5771
    %v5960 = vpack.c.b16 %v5776, %v5772
    %v5961 = vpack.c.b16 %v5781, %v5777
    %v5962 = vpack.c.b16 %v5782, %v5778
    %v5963 = vpack.c.b16 %v5783, %v5779
    %v5964 = vpack.c.b16 %v5784, %v5780
    %v5965 = vpack.c.b16 %v5789, %v5785
    %v5966 = vpack.c.b16 %v5790, %v5786
    %v5967 = vpack.c.b16 %v5791, %v5787
    %v5968 = vpack.c.b16 %v5792, %v5788
    %v5969 = vpack.c.b16 %v5797, %v5793
    %v5970 = vpack.c.b16 %v5798, %v5794
    %v5971 = vpack.c.b16 %v5799, %v5795
    %v5972 = vpack.c.b16 %v5800, %v5796
    %v5973 = vpack.c.b16 %v5805, %v5801
    %v5974 = vpack.c.b16 %v5806, %v5802
    %v5975 = vpack.c.b16 %v5807, %v5803
    %v5976 = vpack.c.b16 %v5808, %v5804
    %v5977 = vpack.c.b16 %v5813, %v5809
    %v5978 = vpack.c.b16 %v5814, %v5810
    %v5979 = vpack.c.b16 %v5815, %v5811
    %v5980 = vpack.c.b16 %v5816, %v5812
    %v5981 = vpack.c.b16 %v5821, %v5817
    %v5982 = vpack.c.b16 %v5822, %v5818
    %v5983 = vpack.c.b16 %v5823, %v5819
    %v5984 = vpack.c.b16 %v5824, %v5820
    %v5985 = vpack.c.b16 %v5829, %v5825
    %v5986 = vpack.c.b16 %v5830, %v5826
    %v5987 = vpack.c.b16 %v5831, %v5827
    %v5988 = vpack.c.b16 %v5832, %v5828
    %v5989 = vpack.c.b16 %v5837, %v5833
    %v5990 = vpack.c.b16 %v5838, %v5834
    %v5991 = vpack.c.b16 %v5839, %v5835
    %v5992 = vpack.c.b16 %v5840, %v5836
    %v5993 = vpack.c.b16 %v5845, %v5841
    %v5994 = vpack.c.b16 %v5846, %v5842
    %v5995 = vpack.c.b16 %v5847, %v5843
    %v5996 = vpack.c.b16 %v5848, %v5844
    %v5997 = vpack.c.b16 %v5853, %v5849
    %v5998 = vpack.c.b16 %v5854, %v5850
    %v5999 = vpack.c.b16 %v5855, %v5851
    %v6000 = vpack.c.b16 %v5856, %v5852
    %v6001 = vpack.c.b16 %v5861, %v5857
    %v6002 = vpack.c.b16 %v5862, %v5858
    %v6003 = vpack.c.b16 %v5863, %v5859
    %v6004 = vpack.c.b16 %v5864, %v5860
    %v6005 = vpack.c.b16 %v5869, %v5865
    %v6006 = vpack.c.b16 %v5870, %v5866
    %v6007 = vpack.c.b16 %v5871, %v5867
    %v6008 = vpack.c.b16 %v5872, %v5868
    %v6009 = vpack.c.b16 %v5877, %v5873
    %v6010 = vpack.c.b16 %v5878, %v5874
    %v6011 = vpack.c.b16 %v5879, %v5875
    %v6012 = vpack.c.b16 %v5880, %v5876
    %v6013 = vpack.c.b16 %v5885, %v5881
    %v6014 = vpack.c.b16 %v5886, %v5882
    %v6015 = vpack.c.b16 %v5887, %v5883
    %v6016 = vpack.c.b16 %v5888, %v5884
    %6145 = vmatprep.subr.bf16.mxu0 %v5890
    %6146 = vmatpush1.bf16.msra.mxu0 %v5889
    %6147 = vmatprep.subr.bf16.mxu0 %v5894
    %6148 = vmatpush1.bf16.msra.mxu0 %v5893
    %6149 = vmatprep.subr.bf16.mxu0 %v5898
    %6150 = vmatpush1.bf16.msra.mxu0 %v5897
    %6151 = vmatprep.subr.bf16.mxu0 %v5902
    %6152 = vmatpush1.bf16.msra.mxu0 %v5901
    %6153 = vmatprep.subr.bf16.mxu0 %v5906
    %6154 = vmatpush1.bf16.msra.mxu0 %v5905
    %6155 = vmatprep.subr.bf16.mxu0 %v5910
    %6156 = vmatpush1.bf16.msra.mxu0 %v5909
    %6157 = vmatprep.subr.bf16.mxu0 %v5914
    %6158 = vmatpush1.bf16.msra.mxu0 %v5913
    %6159 = vmatprep.subr.bf16.mxu0 %v5918
    %6160 = vmatpush1.bf16.msra.mxu0 %v5917
    %6161 = vmatprep.subr.bf16.mxu0 %v5922
    %6162 = vmatpush1.bf16.msra.mxu0 %v5921
    %6163 = vmatprep.subr.bf16.mxu0 %v5926
    %6164 = vmatpush1.bf16.msra.mxu0 %v5925
    %6165 = vmatprep.subr.bf16.mxu0 %v5930
    %6166 = vmatpush1.bf16.msra.mxu0 %v5929
    %6167 = vmatprep.subr.bf16.mxu0 %v5934
    %6168 = vmatpush1.bf16.msra.mxu0 %v5933
    %6169 = vmatprep.subr.bf16.mxu0 %v5938
    %6170 = vmatpush1.bf16.msra.mxu0 %v5937
    %6171 = vmatprep.subr.bf16.mxu0 %v5942
    %6172 = vmatpush1.bf16.msra.mxu0 %v5941
    %6173 = vmatprep.subr.bf16.mxu0 %v5946
    %6174 = vmatpush1.bf16.msra.mxu0 %v5945
    %6175 = vmatprep.subr.bf16.mxu0 %v5950
    %6176 = vmatpush1.bf16.msra.mxu0 %v5949
    %6177 = vmatprep.mubr.bf16.mxu0 %v5490
    %6178 = vmatmul.mubr.bf16.gmra.mrb[0].mxu0 %v5489
    %v6179 = vpop.f32.mrb[0].mxu0
    %v6180 = vadd.f32 0.0, %v6179
    %v6181 = vpop.f32.mrb[0].mxu0
    %v6182 = vadd.f32 0.0, %v6181
    %v6183 = vpop.f32.mrb[0].mxu0
    %v6184 = vadd.f32 0.0, %v6183
    %v6185 = vpop.f32.mrb[0].mxu0
    %v6186 = vadd.f32 0.0, %v6185
    %6187 = vmatprep.mubr.bf16.mxu0 %v5494
    %6188 = vmatmul.mubr.bf16.gmra.mrb[0].mxu0 %v5493
    %v6189 = vpop.f32.mrb[0].mxu0
    %v6190 = vadd.f32 0.0, %v6189
    %v6191 = vpop.f32.mrb[0].mxu0
    %v6192 = vadd.f32 0.0, %v6191
    %v6193 = vpop.f32.mrb[0].mxu0
    %v6194 = vpop.f32.mrb[0].mxu0
    %6195 = vdwg.mxu0
    %6196 = vmatprep.subr.bf16.mxu0 %v5954
    %6197 = vmatpush1.bf16.msra.mxu0 %v5953
    %6198 = vmatprep.subr.bf16.mxu0 %v5958
    %6199 = vmatpush1.bf16.msra.mxu0 %v5957
    %6200 = vmatprep.subr.bf16.mxu0 %v5962
    %6201 = vmatpush1.bf16.msra.mxu0 %v5961
    %6202 = vmatprep.subr.bf16.mxu0 %v5966
    %6203 = vmatpush1.bf16.msra.mxu0 %v5965
    %6204 = vmatprep.subr.bf16.mxu0 %v5970
    %6205 = vmatpush1.bf16.msra.mxu0 %v5969
    %6206 = vmatprep.subr.bf16.mxu0 %v5974
    %6207 = vmatpush1.bf16.msra.mxu0 %v5973
    %6208 = vmatprep.subr.bf16.mxu0 %v5978
    %6209 = vmatpush1.bf16.msra.mxu0 %v5977
    %6210 = vmatprep.subr.bf16.mxu0 %v5982
    %6211 = vmatpush1.bf16.msra.mxu0 %v5981
    %6212 = vmatprep.subr.bf16.mxu0 %v5986
    %6213 = vmatpush1.bf16.msra.mxu0 %v5985
    %6214 = vmatprep.subr.bf16.mxu0 %v5990
    %6215 = vmatpush1.bf16.msra.mxu0 %v5989
    %6216 = vmatprep.subr.bf16.mxu0 %v5994
    %6217 = vmatpush1.bf16.msra.mxu0 %v5993
    %6218 = vmatprep.subr.bf16.mxu0 %v5998
    %6219 = vmatpush1.bf16.msra.mxu0 %v5997
    %6220 = vmatprep.subr.bf16.mxu0 %v6002
    %6221 = vmatpush1.bf16.msra.mxu0 %v6001
    %6222 = vmatprep.subr.bf16.mxu0 %v6006
    %6223 = vmatpush1.bf16.msra.mxu0 %v6005
    %6224 = vmatprep.subr.bf16.mxu0 %v6010
    %6225 = vmatpush1.bf16.msra.mxu0 %v6009
    %6226 = vmatprep.subr.bf16.mxu0 %v6014
    %6227 = vmatpush1.bf16.msra.mxu0 %v6013
    %6228 = vmatprep.mubr.bf16.mxu0 %v5492
    %6229 = vmatmul.mubr.bf16.gmra.mrb[0].mxu0 %v5491
    %v6230 = vpop.f32.mrb[0].mxu0
    %v6231 = vadd.f32 %v6180, %v6230
    %v6232 = vpop.f32.mrb[0].mxu0
    %v6233 = vadd.f32 %v6182, %v6232
    %v6234 = vpop.f32.mrb[0].mxu0
    %v6235 = vadd.f32 %v6184, %v6234
    %v6236 = vpop.f32.mrb[0].mxu0
    %v6237 = vadd.f32 %v6186, %v6236
    %6238 = vmatprep.mubr.bf16.mxu0 %v5496
    %6239 = vmatmul.mubr.bf16.gmra.mrb[0].mxu0 %v5495
    %v6240 = vpop.f32.mrb[0].mxu0
    %v6241 = vadd.f32 %v6190, %v6240
    %v6242 = vpop.f32.mrb[0].mxu0
    %v6243 = vadd.f32 %v6192, %v6242
    %v6244 = vpop.f32.mrb[0].mxu0
    %v6245 = vpop.f32.mrb[0].mxu0
    %6246 = vdwg.mxu0
    %6247 = vmatprep.subr.bf16.mxu0 %v5892
    %6248 = vmatpush1.bf16.msra.mxu0 %v5891
    %6249 = vmatprep.subr.bf16.mxu0 %v5896
    %6250 = vmatpush1.bf16.msra.mxu0 %v5895
    %6251 = vmatprep.subr.bf16.mxu0 %v5900
    %6252 = vmatpush1.bf16.msra.mxu0 %v5899
    %6253 = vmatprep.subr.bf16.mxu0 %v5904
    %6254 = vmatpush1.bf16.msra.mxu0 %v5903
    %6255 = vmatprep.subr.bf16.mxu0 %v5908
    %6256 = vmatpush1.bf16.msra.mxu0 %v5907
    %6257 = vmatprep.subr.bf16.mxu0 %v5912
    %6258 = vmatpush1.bf16.msra.mxu0 %v5911
    %6259 = vmatprep.subr.bf16.mxu0 %v5916
    %6260 = vmatpush1.bf16.msra.mxu0 %v5915
    %6261 = vmatprep.subr.bf16.mxu0 %v5920
    %6262 = vmatpush1.bf16.msra.mxu0 %v5919
    %6263 = vmatprep.subr.bf16.mxu0 %v5924
    %6264 = vmatpush1.bf16.msra.mxu0 %v5923
    %6265 = vmatprep.subr.bf16.mxu0 %v5928
    %6266 = vmatpush1.bf16.msra.mxu0 %v5927
    %6267 = vmatprep.subr.bf16.mxu0 %v5932
    %6268 = vmatpush1.bf16.msra.mxu0 %v5931
    %6269 = vmatprep.subr.bf16.mxu0 %v5936
    %6270 = vmatpush1.bf16.msra.mxu0 %v5935
    %6271 = vmatprep.subr.bf16.mxu0 %v5940
    %6272 = vmatpush1.bf16.msra.mxu0 %v5939
    %6273 = vmatprep.subr.bf16.mxu0 %v5944
    %6274 = vmatpush1.bf16.msra.mxu0 %v5943
    %6275 = vmatprep.subr.bf16.mxu0 %v5948
    %6276 = vmatpush1.bf16.msra.mxu0 %v5947
    %6277 = vmatprep.subr.bf16.mxu0 %v5952
    %6278 = vmatpush1.bf16.msra.mxu0 %v5951
    %6279 = vmatprep.mubr.bf16.mxu0 %v5490
    %6280 = vmatmul.mubr.bf16.gmra.mrb[0].mxu0 %v5489
    %v6281 = vpop.f32.mrb[0].mxu0
    %v6282 = vadd.f32 0.0, %v6281
    %v6283 = vpop.f32.mrb[0].mxu0
    %v6284 = vadd.f32 0.0, %v6283
    %v6285 = vpop.f32.mrb[0].mxu0
    %v6286 = vadd.f32 0.0, %v6285
    %v6287 = vpop.f32.mrb[0].mxu0
    %v6288 = vadd.f32 0.0, %v6287
    %6289 = vmatprep.mubr.bf16.mxu0 %v5494
    %6290 = vmatmul.mubr.bf16.gmra.mrb[0].mxu0 %v5493
    %v6291 = vpop.f32.mrb[0].mxu0
    %v6292 = vadd.f32 0.0, %v6291
    %v6293 = vpop.f32.mrb[0].mxu0
    %v6294 = vadd.f32 0.0, %v6293
    %v6295 = vpop.f32.mrb[0].mxu0
    %v6296 = vpop.f32.mrb[0].mxu0
    %6297 = vdwg.mxu0
    %6298 = vmatprep.subr.bf16.mxu0 %v5956
    %6299 = vmatpush1.bf16.msra.mxu0 %v5955
    %6300 = vmatprep.subr.bf16.mxu0 %v5960
    %6301 = vmatpush1.bf16.msra.mxu0 %v5959
    %6302 = vmatprep.subr.bf16.mxu0 %v5964
    %6303 = vmatpush1.bf16.msra.mxu0 %v5963
    %6304 = vmatprep.subr.bf16.mxu0 %v5968
    %6305 = vmatpush1.bf16.msra.mxu0 %v5967
    %6306 = vmatprep.subr.bf16.mxu0 %v5972
    %6307 = vmatpush1.bf16.msra.mxu0 %v5971
    %6308 = vmatprep.subr.bf16.mxu0 %v5976
    %6309 = vmatpush1.bf16.msra.mxu0 %v5975
    %6310 = vmatprep.subr.bf16.mxu0 %v5980
    %6311 = vmatpush1.bf16.msra.mxu0 %v5979
    %6312 = vmatprep.subr.bf16.mxu0 %v5984
    %6313 = vmatpush1.bf16.msra.mxu0 %v5983
    %6314 = vmatprep.subr.bf16.mxu0 %v5988
    %6315 = vmatpush1.bf16.msra.mxu0 %v5987
    %6316 = vmatprep.subr.bf16.mxu0 %v5992
    %6317 = vmatpush1.bf16.msra.mxu0 %v5991
    %6318 = vmatprep.subr.bf16.mxu0 %v5996
    %6319 = vmatpush1.bf16.msra.mxu0 %v5995
    %6320 = vmatprep.subr.bf16.mxu0 %v6000
    %6321 = vmatpush1.bf16.msra.mxu0 %v5999
    %6322 = vmatprep.subr.bf16.mxu0 %v6004
    %6323 = vmatpush1.bf16.msra.mxu0 %v6003
    %6324 = vmatprep.subr.bf16.mxu0 %v6008
    %6325 = vmatpush1.bf16.msra.mxu0 %v6007
    %6326 = vmatprep.subr.bf16.mxu0 %v6012
    %6327 = vmatpush1.bf16.msra.mxu0 %v6011
    %6328 = vmatprep.subr.bf16.mxu0 %v6016
    %6329 = vmatpush1.bf16.msra.mxu0 %v6015
    %6330 = vmatprep.mubr.bf16.mxu0 %v5492
    %6331 = vmatmul.mubr.bf16.gmra.mrb[0].mxu0 %v5491
    %v6332 = vpop.f32.mrb[0].mxu0
    %v6333 = vadd.f32 %v6282, %v6332
    %v6334 = vpop.f32.mrb[0].mxu0
    %v6335 = vadd.f32 %v6284, %v6334
    %v6336 = vpop.f32.mrb[0].mxu0
    %v6337 = vadd.f32 %v6286, %v6336
    %v6338 = vpop.f32.mrb[0].mxu0
    %v6339 = vadd.f32 %v6288, %v6338
    %6340 = vmatprep.mubr.bf16.mxu0 %v5496
    %6341 = vmatmul.mubr.bf16.gmra.mrb[0].mxu0 %v5495
    %v6342 = vpop.f32.mrb[0].mxu0
    %v6343 = vadd.f32 %v6292, %v6342
    %v6344 = vpop.f32.mrb[0].mxu0
    %v6345 = vadd.f32 %v6294, %v6344
    %v6346 = vpop.f32.mrb[0].mxu0
    %v6347 = vpop.f32.mrb[0].mxu0
    %6348 = vdwg.mxu0
    %6349 = vst [vmem:[%s7] sm:$0xff] %v6231
    %6350 = vst [vmem:[%s7 + $0x8] sm:$0xff] %v6233
    %6351 = vst [vmem:[%s7 + $0x10] sm:$0xff] %v6333
    %6352 = vst [vmem:[%s7 + $0x18] sm:$0xff] %v6335
    %6353 = vst [vmem:[%s7 + $0x20] sm:$0xff] %v6235
    %6354 = vst [vmem:[%s7 + $0x28] sm:$0xff] %v6237
    %6355 = vst [vmem:[%s7 + $0x30] sm:$0xff] %v6337
    %6356 = vst [vmem:[%s7 + $0x38] sm:$0xff] %v6339
    %6357 = vst [vmem:[%s7 + $0x40] sm:$0xf] %v6241
    %6358 = vst [vmem:[%s7 + $0x48] sm:$0xf] %v6243
    %6359 = vst [vmem:[%s7 + $0x50] sm:$0xf] %v6343
    %6360 = vst [vmem:[%s7 + $0x58] sm:$0xf] %v6345
    // Predicated region
    $region42: #{multi_head_attention.1} parent=1 // pred_check
      _
    $region43: #{multi_head_attention.1} parent=1 // pred_check_branch
      %6362 = sbr.rel (0) target = $region45
    $region44: #{multi_head_attention.1} parent=1 // pred_region
      _
    $region45: #{multi_head_attention.1} parent=1 // pred_fallthru
      _
    // Predicated region
    $region46: #{multi_head_attention.1} parent=1 // pred_check
      _
    $region47: #{multi_head_attention.1} parent=1 // pred_check_branch
      %6364 = sbr.rel (0) target = $region49
    $region48: #{multi_head_attention.1} parent=1 // pred_region
      _
    $region49: #{multi_head_attention.1} parent=1 // pred_fallthru
      _
    // Predicated region
    $region50: #{multi_head_attention.1} parent=1 // pred_check
      _
    $region51: #{multi_head_attention.1} parent=1 // pred_check_branch
      %6366 = sbr.rel (0) target = $region53
    $region52: #{multi_head_attention.1} parent=1 // pred_region
      _
    $region53: #{multi_head_attention.1} parent=1 // pred_fallthru
      _
    // Predicated region
    $region54: #{multi_head_attention.1} parent=1 // pred_check
      _
    $region55: #{multi_head_attention.1} parent=1 // pred_check_branch
      %6368 = sbr.rel (0) target = $region57
    $region56: #{multi_head_attention.1} parent=1 // pred_region
      _
    $region57: #{multi_head_attention.1} parent=1 // pred_fallthru
      _
    %6369 = vsyncpa [#allocation4], 1
    %6370 = vsyncpa [#allocation6], 1

</llo_original>
